<compile_context>
chip_gen: v7x
topology: tpu7x:2x2x1
jax: 0.10.0
libtpu: 0.0.40
codegen_flags: <defaults>
</compile_context>

<pallas_src>
import jax
import jax.numpy as jnp
from jax.experimental import pallas as pl
from jax.experimental.pallas import tpu as pltpu

# Matmul operand dtype.  Set to jnp.bfloat16 on v6e/v7x to halve conv-input
# HBM traffic (accumulation stays f32 via preferred_element_type).  Kept f32
# here so the numerical check vs. the f32 reference stays tight and so the
# v5e VPU path sees f32 elementwise math.
_MATMUL_DTYPE = jnp.float32
_EPS = 1e-5


# ---------------------------------------------------------------------------
# Kernel bodies
# ---------------------------------------------------------------------------
def _conv1x1_kernel(x_ref, w_ref, b_ref, o_ref, ps_ref, pss_ref):
    # x: (1, Cin, TILE_S)  w: (Cout, Cin)  b: (Cout, 1)
    # o: (1, Cout, TILE_S) ps/pss: (1, 1, Cout, 1)  (BN partial sums epilogue)
    acc = jnp.dot(w_ref[...], x_ref[0], preferred_element_type=jnp.float32)
    acc = acc + b_ref[...]
    o_ref[0] = acc
    ps_ref[0, 0] = jnp.sum(acc, axis=1, keepdims=True)
    pss_ref[0, 0] = jnp.sum(acc * acc, axis=1, keepdims=True)


def _make_conv9_kernel(H, W):
    """9-tap conv (3x3x1 or 1x3x3) producing one (Cout, H*W) depth slice.

    Three tap positions along the outer axis arrive as three refs chosen by
    BlockSpec index maps; three tap positions along H are static in-VMEM lane
    slices of the (C, (H+2)*W) block (im2col built in VMEM, never in HBM).
    """
    HW = H * W

    def kernel(xa_ref, xb_ref, xc_ref, w_ref, b_ref, o_ref, ps_ref, pss_ref):
        acc = None
        for i, xr in enumerate((xa_ref, xb_ref, xc_ref)):
            x2d = xr[0, 0]                                # (C, (H+2)*W)
            for j in range(3):
                tap = x2d[:, j * W: j * W + HW]           # (C, H*W) static slice
                contrib = jnp.dot(w_ref[3 * i + j], tap,
                                  preferred_element_type=jnp.float32)
                acc = contrib if acc is None else acc + contrib
        acc = acc + b_ref[...]
        o_ref[0] = acc
        ps_ref[0, 0] = jnp.sum(acc, axis=1, keepdims=True)
        pss_ref[0, 0] = jnp.sum(acc * acc, axis=1, keepdims=True)

    return kernel


def _bn_act_kernel(y_ref, sc_ref, sh_ref, o_ref):
    # y/o: (1, C, TILE_S); sc/sh: (C, 1) resident blocks (constant index map).
    o_ref[0] = jnp.maximum(y_ref[0] * sc_ref[...] + sh_ref[...], 0.0)


def _bn_act_add_kernel(y_ref, sc_ref, sh_ref, r_ref, o_ref, osum_ref):
    # Fused BN affine + ReLU + HDC residual add.
    a = jnp.maximum(y_ref[0] * sc_ref[...] + sh_ref[...], 0.0)
    o_ref[0] = a
    osum_ref[0] = a + r_ref[0]


# ---------------------------------------------------------------------------
# pallas_call wrappers
# ---------------------------------------------------------------------------
def _pick_tile_s(S, max_tile=2048):
    """Largest multiple of 128 that divides S, capped (cap re-derived for VMEM)."""
    best = None
    t = 128
    while t <= min(S, max_tile):
        if S % t == 0:
            best = t
        t += 128
    return best if best is not None else S


def _pointwise_conv(x_flat, w, b, tile_s):
    N, Cin, S = x_flat.shape
    Cout = w.shape[0]
    gs = S // tile_s
    w2 = w.reshape(Cout, Cin).astype(_MATMUL_DTYPE)
    b2 = b.reshape(Cout, 1).astype(jnp.float32)
    cost = pl.CostEstimate(
        flops=2 * N * S * Cin * Cout, transcendentals=0,
        bytes_accessed=4 * (N * Cin * S + Cin * Cout + N * Cout * S))
    return pl.pallas_call(
        _conv1x1_kernel,
        out_shape=(jax.ShapeDtypeStruct((N, Cout, S), jnp.float32),
                   jax.ShapeDtypeStruct((N, gs, Cout, 1), jnp.float32),
                   jax.ShapeDtypeStruct((N, gs, Cout, 1), jnp.float32)),
        grid=(N, gs),
        in_specs=[
            pl.BlockSpec((1, Cin, tile_s), lambda n, s: (n, 0, s)),
            pl.BlockSpec((Cout, Cin), lambda n, s: (0, 0)),
            pl.BlockSpec((Cout, 1), lambda n, s: (0, 0)),
        ],
        out_specs=(
            pl.BlockSpec((1, Cout, tile_s), lambda n, s: (n, 0, s)),
            pl.BlockSpec((1, 1, Cout, 1), lambda n, s: (n, s, 0, 0)),
            pl.BlockSpec((1, 1, Cout, 1), lambda n, s: (n, s, 0, 0)),
        ),
        compiler_params=pltpu.CompilerParams(
            dimension_semantics=("parallel", "parallel")),
        cost_estimate=cost,
    )(x_flat.astype(_MATMUL_DTYPE), w2, b2)


def _conv9_pallas(xa, xb, xc, w9, b, D, H, W, d_offsets):
    N, Dp, C, L = xa.shape          # L = (H + 2) * W
    Cout = w9.shape[1]
    HW = H * W
    S = D * HW
    b2 = b.reshape(Cout, 1).astype(jnp.float32)
    kernel = _make_conv9_kernel(H, W)

    def xspec(off):
        return pl.BlockSpec((1, 1, C, L), lambda n, d: (n, d + off, 0, 0))

    cost = pl.CostEstimate(
        flops=2 * 9 * N * S * C * Cout, transcendentals=0,
        bytes_accessed=4 * (3 * N * Dp * C * L + 9 * Cout * C + N * Cout * S))
    return pl.pallas_call(
        kernel,
        out_shape=(jax.ShapeDtypeStruct((N, Cout, S), jnp.float32),
                   jax.ShapeDtypeStruct((N, D, Cout, 1), jnp.float32),
                   jax.ShapeDtypeStruct((N, D, Cout, 1), jnp.float32)),
        grid=(N, D),
        in_specs=[
            xspec(d_offsets[0]), xspec(d_offsets[1]), xspec(d_offsets[2]),
            pl.BlockSpec((9, Cout, C), lambda n, d: (0, 0, 0)),
            pl.BlockSpec((Cout, 1), lambda n, d: (0, 0)),
        ],
        out_specs=(
            pl.BlockSpec((1, Cout, HW), lambda n, d: (n, 0, d)),
            pl.BlockSpec((1, 1, Cout, 1), lambda n, d: (n, d, 0, 0)),
            pl.BlockSpec((1, 1, Cout, 1), lambda n, d: (n, d, 0, 0)),
        ),
        compiler_params=pltpu.CompilerParams(
            dimension_semantics=("parallel", "parallel")),
        cost_estimate=cost,
    )(xa, xb, xc, w9, b2)


def _prep_dh(x_flat, w, D, H, W):
    # Conv3d kernel (3,3,1), padding (1,1,0): D taps via index-map shifts of
    # the same padded array, H taps via in-VMEM lane slices.
    N, C, _ = x_flat.shape
    Cout = w.shape[0]
    x5 = x_flat.reshape(N, C, D, H, W)
    xp = jnp.pad(x5, ((0, 0), (0, 0), (1, 1), (1, 1), (0, 0)))
    xp = jnp.transpose(xp, (0, 2, 1, 3, 4)).reshape(N, D + 2, C, (H + 2) * W)
    xp = xp.astype(_MATMUL_DTYPE)
    w9 = jnp.transpose(w[..., 0], (2, 3, 0, 1)).reshape(9, Cout, C)  # [kd*3+kh]
    return (xp, xp, xp), w9.astype(_MATMUL_DTYPE), (0, 1, 2)


def _prep_hw(x_flat, w, D, H, W):
    # Conv3d kernel (1,3,3), padding (0,1,1): W taps via three W-shifted views
    # (XLA glue; TODO(synk): fold these into the kernel as well), H taps via
    # in-VMEM lane slices.
    N, C, _ = x_flat.shape
    Cout = w.shape[0]
    x5 = x_flat.reshape(N, C, D, H, W)
    xq = jnp.pad(x5, ((0, 0), (0, 0), (0, 0), (1, 1), (1, 1)))
    xq = jnp.transpose(xq, (0, 2, 1, 3, 4))            # (N, D, C, H+2, W+2)
    shifts = tuple(
        xq[..., k:k + W].reshape(N, D, C, (H + 2) * W).astype(_MATMUL_DTYPE)
        for k in range(3))
    w9 = jnp.transpose(w[:, :, 0], (3, 2, 0, 1)).reshape(9, Cout, C)  # [kw*3+kh]
    return shifts, w9.astype(_MATMUL_DTYPE), (0, 0, 0)


def _bn_scale_shift(ps, pss, gamma, beta, count, eps=_EPS):
    s = jnp.sum(ps, axis=(0, 1))[:, 0]
    q = jnp.sum(pss, axis=(0, 1))[:, 0]
    mean = s / count
    var = jnp.maximum(q / count - mean * mean, 0.0)   # biased batch variance
    inv = gamma.astype(jnp.float32) / jnp.sqrt(var + eps)
    scale = inv.reshape(-1, 1)
    shift = (beta.astype(jnp.float32) - mean * inv).reshape(-1, 1)
    return scale, shift


def _bn_act(conv, scale, shift, tile_s):
    N, C, S = conv.shape
    return pl.pallas_call(
        _bn_act_kernel,
        out_shape=jax.ShapeDtypeStruct((N, C, S), jnp.float32),
        grid=(N, S // tile_s),
        in_specs=[
            pl.BlockSpec((1, C, tile_s), lambda n, s: (n, 0, s)),
            pl.BlockSpec((C, 1), lambda n, s: (0, 0)),
            pl.BlockSpec((C, 1), lambda n, s: (0, 0)),
        ],
        out_specs=pl.BlockSpec((1, C, tile_s), lambda n, s: (n, 0, s)),
        compiler_params=pltpu.CompilerParams(
            dimension_semantics=("parallel", "parallel")),
    )(conv, scale, shift)


def _bn_act_add(conv, scale, shift, res, tile_s):
    N, C, S = conv.shape
    return pl.pallas_call(
        _bn_act_add_kernel,
        out_shape=(jax.ShapeDtypeStruct((N, C, S), jnp.float32),
                   jax.ShapeDtypeStruct((N, C, S), jnp.float32)),
        grid=(N, S // tile_s),
        in_specs=[
            pl.BlockSpec((1, C, tile_s), lambda n, s: (n, 0, s)),
            pl.BlockSpec((C, 1), lambda n, s: (0, 0)),
            pl.BlockSpec((C, 1), lambda n, s: (0, 0)),
            pl.BlockSpec((1, C, tile_s), lambda n, s: (n, 0, s)),
        ],
        out_specs=(
            pl.BlockSpec((1, C, tile_s), lambda n, s: (n, 0, s)),
            pl.BlockSpec((1, C, tile_s), lambda n, s: (n, 0, s)),
        ),
        compiler_params=pltpu.CompilerParams(
            dimension_semantics=("parallel", "parallel")),
    )(conv, scale, shift, res)


# ---------------------------------------------------------------------------
# HDC_module forward (training-mode BN, ReLU activation)
# ---------------------------------------------------------------------------
def hdc_module_forward(x, params, eps=_EPS):
    N, in_dim, D, H, W = x.shape
    out_dim = params['conv_1x1x1_1']['w'].shape[0]
    inter = out_dim // 4
    S = D * H * W
    tile_s = _pick_tile_s(S)
    count = N * S
    xf = x.reshape(N, in_dim, S).astype(jnp.float32)

    def pw_block(name, inp, residual=None):
        p = params[name]
        conv, ps, pss = _pointwise_conv(inp, p['w'], p['b'], tile_s)
        sc, sh = _bn_scale_shift(ps, pss, p['gamma'], p['beta'], count, eps)
        if residual is None:
            return _bn_act(conv, sc, sh, tile_s)
        return _bn_act_add(conv, sc, sh, residual, tile_s)

    def c9_block(name, inp, mode, residual=None):
        p = params[name]
        prep = _prep_dh if mode == 'dh' else _prep_hw
        (xa, xb, xc), w9, offs = prep(inp, p['w'], D, H, W)
        conv, ps, pss = _conv9_pallas(xa, xb, xc, w9, p['b'], D, H, W, offs)
        sc, sh = _bn_scale_shift(ps, pss, p['gamma'], p['beta'], count, eps)
        if residual is None:
            return _bn_act(conv, sc, sh, tile_s)
        return _bn_act_add(conv, sc, sh, residual, tile_s)

    # conv_1x1x1_1 + channel split
    x_1 = pw_block('conv_1x1x1_1', xf)                   # (N, out_dim, S)
    x1 = x_1[:, 0 * inter:1 * inter]
    x2i = x_1[:, 1 * inter:2 * inter]
    x3i = x_1[:, 2 * inter:3 * inter]
    x4i = x_1[:, 3 * inter:4 * inter]

    # hierarchical 3x3x1 path; the "+ next slice" adds are fused into the BN kernel
    x2, x2p3 = c9_block('conv_3x3x1_1', x2i, 'dh', residual=x3i)
    x3, x3p4 = c9_block('conv_3x3x1_2', x2p3, 'dh', residual=x4i)
    x4 = c9_block('conv_3x3x1_3', x3p4, 'dh')

    xcat = jnp.concatenate([x1, x2, x3, x4], axis=1)     # (N, out_dim, S)

    if in_dim > out_dim:
        x_res = pw_block('conv_1x1x1_3', xf)
    else:
        x_res = xf                                       # requires in_dim == out_dim
    # conv_1x1x1_2 with the residual add (x + x_1) fused into its BN kernel.
    _, x_sum = pw_block('conv_1x1x1_2', xcat, residual=x_res)

    out = c9_block('conv_1x3x3', x_sum, 'hw')            # (N, out_dim, S)
    return out.reshape(N, out_dim, D, H, W)


# ---------------------------------------------------------------------------
# Pure-JAX reference (matches PyTorch HDC_module.forward in training mode)
# ---------------------------------------------------------------------------
def _conv_bn_relu_ref(x, p, padding, eps=_EPS):
    conv = jax.lax.conv_general_dilated(
        x, p['w'], window_strides=(1, 1, 1), padding=padding,
        dimension_numbers=("NCDHW", "OIDHW", "NCDHW"),
        precision=jax.lax.Precision.HIGHEST) + p['b'].reshape(1, -1, 1, 1, 1)
    mean = jnp.mean(conv, axis=(0, 2, 3, 4), keepdims=True)
    var = jnp.var(conv, axis=(0, 2, 3, 4), keepdims=True)
    xn = (conv - mean) / jnp.sqrt(var + eps)
    out = xn * p['gamma'].reshape(1, -1, 1, 1, 1) + p['beta'].reshape(1, -1, 1, 1, 1)
    return jnp.maximum(out, 0.0)


def hdc_reference(x, params, eps=_EPS):
    in_dim = x.shape[1]
    out_dim = params['conv_1x1x1_1']['w'].shape[0]
    inter = out_dim // 4
    P111 = ((0, 0), (0, 0), (0, 0))
    P331 = ((1, 1), (1, 1), (0, 0))
    P133 = ((0, 0), (1, 1), (1, 1))
    x_1 = _conv_bn_relu_ref(x, params['conv_1x1x1_1'], P111, eps)
    x1 = x_1[:, 0:inter]
    x2 = x_1[:, inter:2 * inter]
    x3 = x_1[:, 2 * inter:3 * inter]
    x4 = x_1[:, 3 * inter:4 * inter]
    x2 = _conv_bn_relu_ref(x2, params['conv_3x3x1_1'], P331, eps)
    x3 = _conv_bn_relu_ref(x2 + x3, params['conv_3x3x1_2'], P331, eps)
    x4 = _conv_bn_relu_ref(x3 + x4, params['conv_3x3x1_3'], P331, eps)
    xc = jnp.concatenate([x1, x2, x3, x4], axis=1)
    x_1 = _conv_bn_relu_ref(xc, params['conv_1x1x1_2'], P111, eps)
    if in_dim > out_dim:
        x = _conv_bn_relu_ref(x, params['conv_1x1x1_3'], P111, eps)
    return _conv_bn_relu_ref(x + x_1, params['conv_1x3x3'], P133, eps)


# ---------------------------------------------------------------------------
if __name__ == "__main__":
    N, in_dim, out_dim, D, H, W = 2, 16, 8, 16, 16, 16
    inter = out_dim // 4

    def init_conv(key, cout, cin, kd, kh, kw):
        k1, k2, k3, k4 = jax.random.split(key, 4)
        return dict(
            w=0.2 * jax.random.normal(k1, (cout, cin, kd, kh, kw), jnp.float32),
            b=0.1 * jax.random.normal(k2, (cout,), jnp.float32),
            gamma=1.0 + 0.1 * jax.random.normal(k3, (cout,), jnp.float32),
            beta=0.1 * jax.random.normal(k4, (cout,), jnp.float32),
        )

    keys = jax.random.split(jax.random.PRNGKey(0), 8)
    params = {
        'conv_1x1x1_1': init_conv(keys[0], out_dim, in_dim, 1, 1, 1),
        'conv_3x3x1_1': init_conv(keys[1], inter, inter, 3, 3, 1),
        'conv_3x3x1_2': init_conv(keys[2], inter, inter, 3, 3, 1),
        'conv_3x3x1_3': init_conv(keys[3], inter, inter, 3, 3, 1),
        'conv_1x1x1_2': init_conv(keys[4], out_dim, out_dim, 1, 1, 1),
        'conv_1x1x1_3': init_conv(keys[5], out_dim, in_dim, 1, 1, 1),
        'conv_1x3x3': init_conv(keys[6], out_dim, out_dim, 1, 3, 3),
    }
    x = jax.random.normal(keys[7], (N, in_dim, D, H, W), jnp.float32)

    y = jax.block_until_ready(jax.jit(hdc_module_forward)(x, params))
    y_ref = jax.block_until_ready(hdc_reference(x, params))

    assert y.shape == (N, out_dim, D, H, W), y.shape
    err = float(jnp.max(jnp.abs(y - y_ref)))
    assert err < 2e-2, f"max abs err = {err}"
    print("KERNEL_OK")
</pallas_src>

<mosaic_0001>
module attributes {stable_mosaic.version = 11 : i64} {
  func.func @_conv1x1_kernel(%arg0: i32, %arg1: i32, %arg2: memref<1x16x2048xf32, #tpu.memory_space<vmem>>, %arg3: memref<8x16xf32, #tpu.memory_space<vmem>>, %arg4: memref<8x1xf32, #tpu.memory_space<vmem>>, %arg5: memref<1x8x2048xf32, #tpu.memory_space<vmem>>, %arg6: memref<1x1x8x1xf32, #tpu.memory_space<vmem>>, %arg7: memref<1x1x8x1xf32, #tpu.memory_space<vmem>>) attributes {dimension_semantics = [#tpu.dimension_semantics<parallel>, #tpu.dimension_semantics<parallel>], iteration_bounds = array<i64: 2, 2>, scalar_prefetch = 0 : i64, scratch_operands = 0 : i64, tpu.core_type = #tpu.core_type<tc>, window_params = [{transform_indices = @transform_0, window_bounds = array<i64: 1, 16, 2048>}, {pipeline_mode = #tpu.pipeline_mode<synchronous>, transform_indices = @transform_1, window_bounds = array<i64: 8, 16>}, {pipeline_mode = #tpu.pipeline_mode<synchronous>, transform_indices = @transform_2, window_bounds = array<i64: 8, 1>}, {transform_indices = @transform_3, window_bounds = array<i64: 1, 8, 2048>}, {transform_indices = @transform_4, window_bounds = array<i64: 1, 1, 8, 1>}, {transform_indices = @transform_5, window_bounds = array<i64: 1, 1, 8, 1>}]} {
    %c0 = arith.constant 0 : index
    %c0_0 = arith.constant 0 : index
    %0 = vector.load %arg3[%c0, %c0_0] : memref<8x16xf32, #tpu.memory_space<vmem>>, vector<8x16xf32>
    %c0_1 = arith.constant 0 : index
    %c0_2 = arith.constant 0 : index
    %c0_3 = arith.constant 0 : index
    %1 = vector.load %arg2[%c0_1, %c0_2, %c0_3] : memref<1x16x2048xf32, #tpu.memory_space<vmem>>, vector<1x16x2048xf32>
    %2 = vector.shape_cast %1 : vector<1x16x2048xf32> to vector<16x2048xf32>
    %cst = arith.constant dense<0.000000e+00> : vector<8x2048xf32>
    %3 = tpu.matmul %0, %2, %cst {dimension_numbers = #tpu.dot_dimension_numbers<[1], [0], [0], [1], [0, 0, 1, 1], [], []>} : vector<8x16xf32>, vector<16x2048xf32>, vector<8x2048xf32> -> vector<8x2048xf32>
    %c0_4 = arith.constant 0 : index
    %c0_5 = arith.constant 0 : index
    %4 = vector.load %arg4[%c0_4, %c0_5] : memref<8x1xf32, #tpu.memory_space<vmem>>, vector<8x1xf32>
    %5 = vector.broadcast %4 : vector<8x1xf32> to vector<8x2048xf32>
    %6 = arith.addf %3, %5 : vector<8x2048xf32>
    %c0_6 = arith.constant 0 : index
    %c0_7 = arith.constant 0 : index
    %c0_8 = arith.constant 0 : index
    %7 = vector.load %arg5[%c0_6, %c0_7, %c0_8] : memref<1x8x2048xf32, #tpu.memory_space<vmem>>, vector<1x8x2048xf32>
    %8 = vector.shape_cast %7 : vector<1x8x2048xf32> to vector<8x2048xf32>
    %9 = vector.shape_cast %6 : vector<8x2048xf32> to vector<1x8x2048xf32>
    tpu.vector_store %arg5[%c0_6, %c0_7, %c0_8], %9 {strides = array<i32>} : memref<1x8x2048xf32, #tpu.memory_space<vmem>>, vector<1x8x2048xf32>,
    %cst_9 = arith.constant dense<0.000000e+00> : vector<8xf32>
    %10 = vector.multi_reduction <add>, %6, %cst_9 [1] : vector<8x2048xf32> to vector<8xf32>
    %11 = vector.shape_cast %10 : vector<8xf32> to vector<8x1xf32>
    %c0_10 = arith.constant 0 : index
    %c0_11 = arith.constant 0 : index
    %c0_12 = arith.constant 0 : index
    %c0_13 = arith.constant 0 : index
    %12 = vector.load %arg6[%c0_10, %c0_11, %c0_12, %c0_13] : memref<1x1x8x1xf32, #tpu.memory_space<vmem>>, vector<1x1x8x1xf32>
    %13 = vector.shape_cast %12 : vector<1x1x8x1xf32> to vector<8x1xf32>
    %14 = vector.shape_cast %11 : vector<8x1xf32> to vector<1x1x8x1xf32>
    tpu.vector_store %arg6[%c0_10, %c0_11, %c0_12, %c0_13], %14 {strides = array<i32>} : memref<1x1x8x1xf32, #tpu.memory_space<vmem>>, vector<1x1x8x1xf32>,
    %15 = arith.mulf %6, %6 : vector<8x2048xf32>
    %cst_14 = arith.constant dense<0.000000e+00> : vector<8xf32>
    %16 = vector.multi_reduction <add>, %15, %cst_14 [1] : vector<8x2048xf32> to vector<8xf32>
    %17 = vector.shape_cast %16 : vector<8xf32> to vector<8x1xf32>
    %c0_15 = arith.constant 0 : index
    %c0_16 = arith.constant 0 : index
    %c0_17 = arith.constant 0 : index
    %c0_18 = arith.constant 0 : index
    %18 = vector.load %arg7[%c0_15, %c0_16, %c0_17, %c0_18] : memref<1x1x8x1xf32, #tpu.memory_space<vmem>>, vector<1x1x8x1xf32>
    %19 = vector.shape_cast %18 : vector<1x1x8x1xf32> to vector<8x1xf32>
    %20 = vector.shape_cast %17 : vector<8x1xf32> to vector<1x1x8x1xf32>
    tpu.vector_store %arg7[%c0_15, %c0_16, %c0_17, %c0_18], %20 {strides = array<i32>} : memref<1x1x8x1xf32, #tpu.memory_space<vmem>>, vector<1x1x8x1xf32>,
    return
  }
  func.func @transform_0(%arg0: i32, %arg1: i32) -> (i32, i32, i32) {
    %c0_i32 = arith.constant 0 : i32
    %c0_i32_0 = arith.constant 0 : i32
    return %arg0, %c0_i32, %arg1 : i32, i32, i32
  }
  func.func @transform_1(%arg0: i32, %arg1: i32) -> (i32, i32) {
    %c0_i32 = arith.constant 0 : i32
    %c0_i32_0 = arith.constant 0 : i32
    %c0_i32_1 = arith.constant 0 : i32
    return %c0_i32, %c0_i32_0 : i32, i32
  }
  func.func @transform_2(%arg0: i32, %arg1: i32) -> (i32, i32) {
    %c0_i32 = arith.constant 0 : i32
    %c0_i32_0 = arith.constant 0 : i32
    %c0_i32_1 = arith.constant 0 : i32
    return %c0_i32, %c0_i32_0 : i32, i32
  }
  func.func @transform_3(%arg0: i32, %arg1: i32) -> (i32, i32, i32) {
    %c0_i32 = arith.constant 0 : i32
    %c0_i32_0 = arith.constant 0 : i32
    return %arg0, %c0_i32, %arg1 : i32, i32, i32
  }
  func.func @transform_4(%arg0: i32, %arg1: i32) -> (i32, i32, i32, i32) {
    %c0_i32 = arith.constant 0 : i32
    %c0_i32_0 = arith.constant 0 : i32
    %c0_i32_1 = arith.constant 0 : i32
    return %arg0, %arg1, %c0_i32, %c0_i32_0 : i32, i32, i32, i32
  }
  func.func @transform_5(%arg0: i32, %arg1: i32) -> (i32, i32, i32, i32) {
    %c0_i32 = arith.constant 0 : i32
    %c0_i32_0 = arith.constant 0 : i32
    %c0_i32_1 = arith.constant 0 : i32
    return %arg0, %arg1, %c0_i32, %c0_i32_0 : i32, i32, i32, i32
  }
}

module attributes {stable_mosaic.version = 11 : i64} {
  func.func @_bn_act_kernel(%arg0: i32, %arg1: i32, %arg2: memref<1x8x2048xf32, #tpu.memory_space<vmem>>, %arg3: memref<8x1xf32, #tpu.memory_space<vmem>>, %arg4: memref<8x1xf32, #tpu.memory_space<vmem>>, %arg5: memref<1x8x2048xf32, #tpu.memory_space<vmem>>) attributes {dimension_semantics = [#tpu.dimension_semantics<parallel>, #tpu.dimension_semantics<parallel>], iteration_bounds = array<i64: 2, 2>, scalar_prefetch = 0 : i64, scratch_operands = 0 : i64, tpu.core_type = #tpu.core_type<tc>, window_params = [{transform_indices = @transform_0, window_bounds = array<i64: 1, 8, 2048>}, {pipeline_mode = #tpu.pipeline_mode<synchronous>, transform_indices = @transform_1, window_bounds = array<i64: 8, 1>}, {pipeline_mode = #tpu.pipeline_mode<synchronous>, transform_indices = @transform_2, window_bounds = array<i64: 8, 1>}, {transform_indices = @transform_3, window_bounds = array<i64: 1, 8, 2048>}]} {
    %c0 = arith.constant 0 : index
    %c0_0 = arith.constant 0 : index
    %c0_1 = arith.constant 0 : index
    %0 = vector.load %arg2[%c0, %c0_0, %c0_1] : memref<1x8x2048xf32, #tpu.memory_space<vmem>>, vector<1x8x2048xf32>
    %1 = vector.shape_cast %0 : vector<1x8x2048xf32> to vector<8x2048xf32>
    %c0_2 = arith.constant 0 : index
    %c0_3 = arith.constant 0 : index
    %2 = vector.load %arg3[%c0_2, %c0_3] : memref<8x1xf32, #tpu.memory_space<vmem>>, vector<8x1xf32>
    %3 = vector.broadcast %2 : vector<8x1xf32> to vector<8x2048xf32>
    %4 = arith.mulf %1, %3 : vector<8x2048xf32>
    %c0_4 = arith.constant 0 : index
    %c0_5 = arith.constant 0 : index
    %5 = vector.load %arg4[%c0_4, %c0_5] : memref<8x1xf32, #tpu.memory_space<vmem>>, vector<8x1xf32>
    %6 = vector.broadcast %5 : vector<8x1xf32> to vector<8x2048xf32>
    %7 = arith.addf %4, %6 : vector<8x2048xf32>
    %cst = arith.constant 0.000000e+00 : f32
    %8 = vector.broadcast %cst : f32 to vector<8x2048xf32>
    %9 = arith.maximumf %7, %8 : vector<8x2048xf32>
    %c0_6 = arith.constant 0 : index
    %c0_7 = arith.constant 0 : index
    %c0_8 = arith.constant 0 : index
    %10 = vector.load %arg5[%c0_6, %c0_7, %c0_8] : memref<1x8x2048xf32, #tpu.memory_space<vmem>>, vector<1x8x2048xf32>
    %11 = vector.shape_cast %10 : vector<1x8x2048xf32> to vector<8x2048xf32>
    %12 = vector.shape_cast %9 : vector<8x2048xf32> to vector<1x8x2048xf32>
    tpu.vector_store %arg5[%c0_6, %c0_7, %c0_8], %12 {strides = array<i32>} : memref<1x8x2048xf32, #tpu.memory_space<vmem>>, vector<1x8x2048xf32>,
    return
  }
  func.func @transform_0(%arg0: i32, %arg1: i32) -> (i32, i32, i32) {
    %c0_i32 = arith.constant 0 : i32
    %c0_i32_0 = arith.constant 0 : i32
    return %arg0, %c0_i32, %arg1 : i32, i32, i32
  }
  func.func @transform_1(%arg0: i32, %arg1: i32) -> (i32, i32) {
    %c0_i32 = arith.constant 0 : i32
    %c0_i32_0 = arith.constant 0 : i32
    %c0_i32_1 = arith.constant 0 : i32
    return %c0_i32, %c0_i32_0 : i32, i32
  }
  func.func @transform_2(%arg0: i32, %arg1: i32) -> (i32, i32) {
    %c0_i32 = arith.constant 0 : i32
    %c0_i32_0 = arith.constant 0 : i32
    %c0_i32_1 = arith.constant 0 : i32
    return %c0_i32, %c0_i32_0 : i32, i32
  }
  func.func @transform_3(%arg0: i32, %arg1: i32) -> (i32, i32, i32) {
    %c0_i32 = arith.constant 0 : i32
    %c0_i32_0 = arith.constant 0 : i32
    return %arg0, %c0_i32, %arg1 : i32, i32, i32
  }
}

module attributes {stable_mosaic.version = 11 : i64} {
  func.func @kernel(%arg0: i32, %arg1: i32, %arg2: memref<1x1x2x288xf32, #tpu.memory_space<vmem>>, %arg3: memref<1x1x2x288xf32, #tpu.memory_space<vmem>>, %arg4: memref<1x1x2x288xf32, #tpu.memory_space<vmem>>, %arg5: memref<9x2x2xf32, #tpu.memory_space<vmem>>, %arg6: memref<2x1xf32, #tpu.memory_space<vmem>>, %arg7: memref<1x2x256xf32, #tpu.memory_space<vmem>>, %arg8: memref<1x1x2x1xf32, #tpu.memory_space<vmem>>, %arg9: memref<1x1x2x1xf32, #tpu.memory_space<vmem>>) attributes {dimension_semantics = [#tpu.dimension_semantics<parallel>, #tpu.dimension_semantics<parallel>], iteration_bounds = array<i64: 2, 16>, scalar_prefetch = 0 : i64, scratch_operands = 0 : i64, tpu.core_type = #tpu.core_type<tc>, window_params = [{transform_indices = @transform_0, window_bounds = array<i64: 1, 1, 2, 288>}, {transform_indices = @transform_1, window_bounds = array<i64: 1, 1, 2, 288>}, {transform_indices = @transform_2, window_bounds = array<i64: 1, 1, 2, 288>}, {pipeline_mode = #tpu.pipeline_mode<synchronous>, transform_indices = @transform_3, window_bounds = array<i64: 9, 2, 2>}, {pipeline_mode = #tpu.pipeline_mode<synchronous>, transform_indices = @transform_4, window_bounds = array<i64: 2, 1>}, {transform_indices = @transform_5, window_bounds = array<i64: 1, 2, 256>}, {transform_indices = @transform_6, window_bounds = array<i64: 1, 1, 2, 1>}, {transform_indices = @transform_7, window_bounds = array<i64: 1, 1, 2, 1>}]} {
    %c0 = arith.constant 0 : index
    %c0_0 = arith.constant 0 : index
    %c0_1 = arith.constant 0 : index
    %c0_2 = arith.constant 0 : index
    %0 = vector.load %arg2[%c0, %c0_0, %c0_1, %c0_2] : memref<1x1x2x288xf32, #tpu.memory_space<vmem>>, vector<1x1x2x288xf32>
    %1 = vector.shape_cast %0 : vector<1x1x2x288xf32> to vector<2x288xf32>
    %2 = vector.extract_strided_slice %1 {offsets = [0, 0], sizes = [2, 256], strides = [1, 1]} : vector<2x288xf32> to vector<2x256xf32>
    %c0_3 = arith.constant 0 : index
    %c0_4 = arith.constant 0 : index
    %c0_5 = arith.constant 0 : index
    %3 = vector.load %arg5[%c0_3, %c0_4, %c0_5] : memref<9x2x2xf32, #tpu.memory_space<vmem>>, vector<1x2x2xf32>
    %4 = vector.shape_cast %3 : vector<1x2x2xf32> to vector<2x2xf32>
    %cst = arith.constant dense<0.000000e+00> : vector<2x256xf32>
    %5 = tpu.matmul %4, %2, %cst {dimension_numbers = #tpu.dot_dimension_numbers<[1], [0], [0], [1], [0, 0, 1, 1], [], []>} : vector<2x2xf32>, vector<2x256xf32>, vector<2x256xf32> -> vector<2x256xf32>
    %6 = vector.extract_strided_slice %1 {offsets = [0, 16], sizes = [2, 256], strides = [1, 1]} : vector<2x288xf32> to vector<2x256xf32>
    %c1 = arith.constant 1 : index
    %c0_6 = arith.constant 0 : index
    %c0_7 = arith.constant 0 : index
    %7 = vector.load %arg5[%c1, %c0_6, %c0_7] : memref<9x2x2xf32, #tpu.memory_space<vmem>>, vector<1x2x2xf32>
    %8 = vector.shape_cast %7 : vector<1x2x2xf32> to vector<2x2xf32>
    %cst_8 = arith.constant dense<0.000000e+00> : vector<2x256xf32>
    %9 = tpu.matmul %8, %6, %cst_8 {dimension_numbers = #tpu.dot_dimension_numbers<[1], [0], [0], [1], [0, 0, 1, 1], [], []>} : vector<2x2xf32>, vector<2x256xf32>, vector<2x256xf32> -> vector<2x256xf32>
    %10 = arith.addf %5, %9 : vector<2x256xf32>
    %11 = vector.extract_strided_slice %1 {offsets = [0, 32], sizes = [2, 256], strides = [1, 1]} : vector<2x288xf32> to vector<2x256xf32>
    %c2 = arith.constant 2 : index
    %c0_9 = arith.constant 0 : index
    %c0_10 = arith.constant 0 : index
    %12 = vector.load %arg5[%c2, %c0_9, %c0_10] : memref<9x2x2xf32, #tpu.memory_space<vmem>>, vector<1x2x2xf32>
    %13 = vector.shape_cast %12 : vector<1x2x2xf32> to vector<2x2xf32>
    %cst_11 = arith.constant dense<0.000000e+00> : vector<2x256xf32>
    %14 = tpu.matmul %13, %11, %cst_11 {dimension_numbers = #tpu.dot_dimension_numbers<[1], [0], [0], [1], [0, 0, 1, 1], [], []>} : vector<2x2xf32>, vector<2x256xf32>, vector<2x256xf32> -> vector<2x256xf32>
    %15 = arith.addf %10, %14 : vector<2x256xf32>
    %c0_12 = arith.constant 0 : index
    %c0_13 = arith.constant 0 : index
    %c0_14 = arith.constant 0 : index
    %c0_15 = arith.constant 0 : index
    %16 = vector.load %arg3[%c0_12, %c0_13, %c0_14, %c0_15] : memref<1x1x2x288xf32, #tpu.memory_space<vmem>>, vector<1x1x2x288xf32>
    %17 = vector.shape_cast %16 : vector<1x1x2x288xf32> to vector<2x288xf32>
    %18 = vector.extract_strided_slice %17 {offsets = [0, 0], sizes = [2, 256], strides = [1, 1]} : vector<2x288xf32> to vector<2x256xf32>
    %c3 = arith.constant 3 : index
    %c0_16 = arith.constant 0 : index
    %c0_17 = arith.constant 0 : index
    %19 = vector.load %arg5[%c3, %c0_16, %c0_17] : memref<9x2x2xf32, #tpu.memory_space<vmem>>, vector<1x2x2xf32>
    %20 = vector.shape_cast %19 : vector<1x2x2xf32> to vector<2x2xf32>
    %cst_18 = arith.constant dense<0.000000e+00> : vector<2x256xf32>
    %21 = tpu.matmul %20, %18, %cst_18 {dimension_numbers = #tpu.dot_dimension_numbers<[1], [0], [0], [1], [0, 0, 1, 1], [], []>} : vector<2x2xf32>, vector<2x256xf32>, vector<2x256xf32> -> vector<2x256xf32>
    %22 = arith.addf %15, %21 : vector<2x256xf32>
    %23 = vector.extract_strided_slice %17 {offsets = [0, 16], sizes = [2, 256], strides = [1, 1]} : vector<2x288xf32> to vector<2x256xf32>
    %c4 = arith.constant 4 : index
    %c0_19 = arith.constant 0 : index
    %c0_20 = arith.constant 0 : index
    %24 = vector.load %arg5[%c4, %c0_19, %c0_20] : memref<9x2x2xf32, #tpu.memory_space<vmem>>, vector<1x2x2xf32>
    %25 = vector.shape_cast %24 : vector<1x2x2xf32> to vector<2x2xf32>
    %cst_21 = arith.constant dense<0.000000e+00> : vector<2x256xf32>
    %26 = tpu.matmul %25, %23, %cst_21 {dimension_numbers = #tpu.dot_dimension_numbers<[1], [0], [0], [1], [0, 0, 1, 1], [], []>} : vector<2x2xf32>, vector<2x256xf32>, vector<2x256xf32> -> vector<2x256xf32>
    %27 = arith.addf %22, %26 : vector<2x256xf32>
    %28 = vector.extract_strided_slice %17 {offsets = [0, 32], sizes = [2, 256], strides = [1, 1]} : vector<2x288xf32> to vector<2x256xf32>
    %c5 = arith.constant 5 : index
    %c0_22 = arith.constant 0 : index
    %c0_23 = arith.constant 0 : index
    %29 = vector.load %arg5[%c5, %c0_22, %c0_23] : memref<9x2x2xf32, #tpu.memory_space<vmem>>, vector<1x2x2xf32>
    %30 = vector.shape_cast %29 : vector<1x2x2xf32> to vector<2x2xf32>
    %cst_24 = arith.constant dense<0.000000e+00> : vector<2x256xf32>
    %31 = tpu.matmul %30, %28, %cst_24 {dimension_numbers = #tpu.dot_dimension_numbers<[1], [0], [0], [1], [0, 0, 1, 1], [], []>} : vector<2x2xf32>, vector<2x256xf32>, vector<2x256xf32> -> vector<2x256xf32>
    %32 = arith.addf %27, %31 : vector<2x256xf32>
    %c0_25 = arith.constant 0 : index
    %c0_26 = arith.constant 0 : index
    %c0_27 = arith.constant 0 : index
    %c0_28 = arith.constant 0 : index
    %33 = vector.load %arg4[%c0_25, %c0_26, %c0_27, %c0_28] : memref<1x1x2x288xf32, #tpu.memory_space<vmem>>, vector<1x1x2x288xf32>
    %34 = vector.shape_cast %33 : vector<1x1x2x288xf32> to vector<2x288xf32>
    %35 = vector.extract_strided_slice %34 {offsets = [0, 0], sizes = [2, 256], strides = [1, 1]} : vector<2x288xf32> to vector<2x256xf32>
    %c6 = arith.constant 6 : index
    %c0_29 = arith.constant 0 : index
    %c0_30 = arith.constant 0 : index
    %36 = vector.load %arg5[%c6, %c0_29, %c0_30] : memref<9x2x2xf32, #tpu.memory_space<vmem>>, vector<1x2x2xf32>
    %37 = vector.shape_cast %36 : vector<1x2x2xf32> to vector<2x2xf32>
    %cst_31 = arith.constant dense<0.000000e+00> : vector<2x256xf32>
    %38 = tpu.matmul %37, %35, %cst_31 {dimension_numbers = #tpu.dot_dimension_numbers<[1], [0], [0], [1], [0, 0, 1, 1], [], []>} : vector<2x2xf32>, vector<2x256xf32>, vector<2x256xf32> -> vector<2x256xf32>
    %39 = arith.addf %32, %38 : vector<2x256xf32>
    %40 = vector.extract_strided_slice %34 {offsets = [0, 16], sizes = [2, 256], strides = [1, 1]} : vector<2x288xf32> to vector<2x256xf32>
    %c7 = arith.constant 7 : index
    %c0_32 = arith.constant 0 : index
    %c0_33 = arith.constant 0 : index
    %41 = vector.load %arg5[%c7, %c0_32, %c0_33] : memref<9x2x2xf32, #tpu.memory_space<vmem>>, vector<1x2x2xf32>
    %42 = vector.shape_cast %41 : vector<1x2x2xf32> to vector<2x2xf32>
    %cst_34 = arith.constant dense<0.000000e+00> : vector<2x256xf32>
    %43 = tpu.matmul %42, %40, %cst_34 {dimension_numbers = #tpu.dot_dimension_numbers<[1], [0], [0], [1], [0, 0, 1, 1], [], []>} : vector<2x2xf32>, vector<2x256xf32>, vector<2x256xf32> -> vector<2x256xf32>
    %44 = arith.addf %39, %43 : vector<2x256xf32>
    %45 = vector.extract_strided_slice %34 {offsets = [0, 32], sizes = [2, 256], strides = [1, 1]} : vector<2x288xf32> to vector<2x256xf32>
    %c8 = arith.constant 8 : index
    %c0_35 = arith.constant 0 : index
    %c0_36 = arith.constant 0 : index
    %46 = vector.load %arg5[%c8, %c0_35, %c0_36] : memref<9x2x2xf32, #tpu.memory_space<vmem>>, vector<1x2x2xf32>
    %47 = vector.shape_cast %46 : vector<1x2x2xf32> to vector<2x2xf32>
    %cst_37 = arith.constant dense<0.000000e+00> : vector<2x256xf32>
    %48 = tpu.matmul %47, %45, %cst_37 {dimension_numbers = #tpu.dot_dimension_numbers<[1], [0], [0], [1], [0, 0, 1, 1], [], []>} : vector<2x2xf32>, vector<2x256xf32>, vector<2x256xf32> -> vector<2x256xf32>
    %49 = arith.addf %44, %48 : vector<2x256xf32>
    %c0_38 = arith.constant 0 : index
    %c0_39 = arith.constant 0 : index
    %50 = vector.load %arg6[%c0_38, %c0_39] : memref<2x1xf32, #tpu.memory_space<vmem>>, vector<2x1xf32>
    %51 = vector.broadcast %50 : vector<2x1xf32> to vector<2x256xf32>
    %52 = arith.addf %49, %51 : vector<2x256xf32>
    %c0_40 = arith.constant 0 : index
    %c0_41 = arith.constant 0 : index
    %c0_42 = arith.constant 0 : index
    %53 = vector.load %arg7[%c0_40, %c0_41, %c0_42] : memref<1x2x256xf32, #tpu.memory_space<vmem>>, vector<1x2x256xf32>
    %54 = vector.shape_cast %53 : vector<1x2x256xf32> to vector<2x256xf32>
    %55 = vector.shape_cast %52 : vector<2x256xf32> to vector<1x2x256xf32>
    tpu.vector_store %arg7[%c0_40, %c0_41, %c0_42], %55 {strides = array<i32>} : memref<1x2x256xf32, #tpu.memory_space<vmem>>, vector<1x2x256xf32>,
    %cst_43 = arith.constant dense<0.000000e+00> : vector<2xf32>
    %56 = vector.multi_reduction <add>, %52, %cst_43 [1] : vector<2x256xf32> to vector<2xf32>
    %57 = vector.shape_cast %56 : vector<2xf32> to vector<2x1xf32>
    %c0_44 = arith.constant 0 : index
    %c0_45 = arith.constant 0 : index
    %c0_46 = arith.constant 0 : index
    %c0_47 = arith.constant 0 : index
    %58 = vector.load %arg8[%c0_44, %c0_45, %c0_46, %c0_47] : memref<1x1x2x1xf32, #tpu.memory_space<vmem>>, vector<1x1x2x1xf32>
    %59 = vector.shape_cast %58 : vector<1x1x2x1xf32> to vector<2x1xf32>
    %60 = vector.shape_cast %57 : vector<2x1xf32> to vector<1x1x2x1xf32>
    tpu.vector_store %arg8[%c0_44, %c0_45, %c0_46, %c0_47], %60 {strides = array<i32>} : memref<1x1x2x1xf32, #tpu.memory_space<vmem>>, vector<1x1x2x1xf32>,
    %61 = arith.mulf %52, %52 : vector<2x256xf32>
    %cst_48 = arith.constant dense<0.000000e+00> : vector<2xf32>
    %62 = vector.multi_reduction <add>, %61, %cst_48 [1] : vector<2x256xf32> to vector<2xf32>
    %63 = vector.shape_cast %62 : vector<2xf32> to vector<2x1xf32>
    %c0_49 = arith.constant 0 : index
    %c0_50 = arith.constant 0 : index
    %c0_51 = arith.constant 0 : index
    %c0_52 = arith.constant 0 : index
    %64 = vector.load %arg9[%c0_49, %c0_50, %c0_51, %c0_52] : memref<1x1x2x1xf32, #tpu.memory_space<vmem>>, vector<1x1x2x1xf32>
    %65 = vector.shape_cast %64 : vector<1x1x2x1xf32> to vector<2x1xf32>
    %66 = vector.shape_cast %63 : vector<2x1xf32> to vector<1x1x2x1xf32>
    tpu.vector_store %arg9[%c0_49, %c0_50, %c0_51, %c0_52], %66 {strides = array<i32>} : memref<1x1x2x1xf32, #tpu.memory_space<vmem>>, vector<1x1x2x1xf32>,
    return
  }
  func.func @transform_0(%arg0: i32, %arg1: i32) -> (i32, i32, i32, i32) {
    %c0_i32 = arith.constant 0 : i32
    %0 = arith.addi %arg1, %c0_i32 : i32
    %c0_i32_0 = arith.constant 0 : i32
    %c0_i32_1 = arith.constant 0 : i32
    %c0_i32_2 = arith.constant 0 : i32
    return %arg0, %0, %c0_i32_0, %c0_i32_1 : i32, i32, i32, i32
  }
  func.func @transform_1(%arg0: i32, %arg1: i32) -> (i32, i32, i32, i32) {
    %c1_i32 = arith.constant 1 : i32
    %0 = arith.addi %arg1, %c1_i32 : i32
    %c0_i32 = arith.constant 0 : i32
    %c0_i32_0 = arith.constant 0 : i32
    %c0_i32_1 = arith.constant 0 : i32
    return %arg0, %0, %c0_i32, %c0_i32_0 : i32, i32, i32, i32
  }
  func.func @transform_2(%arg0: i32, %arg1: i32) -> (i32, i32, i32, i32) {
    %c2_i32 = arith.constant 2 : i32
    %0 = arith.addi %arg1, %c2_i32 : i32
    %c0_i32 = arith.constant 0 : i32
    %c0_i32_0 = arith.constant 0 : i32
    %c0_i32_1 = arith.constant 0 : i32
    return %arg0, %0, %c0_i32, %c0_i32_0 : i32, i32, i32, i32
  }
  func.func @transform_3(%arg0: i32, %arg1: i32) -> (i32, i32, i32) {
    %c0_i32 = arith.constant 0 : i32
    %c0_i32_0 = arith.constant 0 : i32
    %c0_i32_1 = arith.constant 0 : i32
    %c0_i32_2 = arith.constant 0 : i32
    return %c0_i32, %c0_i32_0, %c0_i32_1 : i32, i32, i32
  }
  func.func @transform_4(%arg0: i32, %arg1: i32) -> (i32, i32) {
    %c0_i32 = arith.constant 0 : i32
    %c0_i32_0 = arith.constant 0 : i32
    %c0_i32_1 = arith.constant 0 : i32
    return %c0_i32, %c0_i32_0 : i32, i32
  }
  func.func @transform_5(%arg0: i32, %arg1: i32) -> (i32, i32, i32) {
    %c0_i32 = arith.constant 0 : i32
    %c0_i32_0 = arith.constant 0 : i32
    return %arg0, %c0_i32, %arg1 : i32, i32, i32
  }
  func.func @transform_6(%arg0: i32, %arg1: i32) -> (i32, i32, i32, i32) {
    %c0_i32 = arith.constant 0 : i32
    %c0_i32_0 = arith.constant 0 : i32
    %c0_i32_1 = arith.constant 0 : i32
    return %arg0, %arg1, %c0_i32, %c0_i32_0 : i32, i32, i32, i32
  }
  func.func @transform_7(%arg0: i32, %arg1: i32) -> (i32, i32, i32, i32) {
    %c0_i32 = arith.constant 0 : i32
    %c0_i32_0 = arith.constant 0 : i32
    %c0_i32_1 = arith.constant 0 : i32
    return %arg0, %arg1, %c0_i32, %c0_i32_0 : i32, i32, i32, i32
  }
}

module attributes {stable_mosaic.version = 11 : i64} {
  func.func @_bn_act_add_kernel(%arg0: i32, %arg1: i32, %arg2: memref<1x2x2048xf32, #tpu.memory_space<vmem>>, %arg3: memref<2x1xf32, #tpu.memory_space<vmem>>, %arg4: memref<2x1xf32, #tpu.memory_space<vmem>>, %arg5: memref<1x2x2048xf32, #tpu.memory_space<vmem>>, %arg6: memref<1x2x2048xf32, #tpu.memory_space<vmem>>, %arg7: memref<1x2x2048xf32, #tpu.memory_space<vmem>>) attributes {dimension_semantics = [#tpu.dimension_semantics<parallel>, #tpu.dimension_semantics<parallel>], iteration_bounds = array<i64: 2, 2>, scalar_prefetch = 0 : i64, scratch_operands = 0 : i64, tpu.core_type = #tpu.core_type<tc>, window_params = [{transform_indices = @transform_0, window_bounds = array<i64: 1, 2, 2048>}, {pipeline_mode = #tpu.pipeline_mode<synchronous>, transform_indices = @transform_1, window_bounds = array<i64: 2, 1>}, {pipeline_mode = #tpu.pipeline_mode<synchronous>, transform_indices = @transform_2, window_bounds = array<i64: 2, 1>}, {transform_indices = @transform_3, window_bounds = array<i64: 1, 2, 2048>}, {transform_indices = @transform_4, window_bounds = array<i64: 1, 2, 2048>}, {transform_indices = @transform_5, window_bounds = array<i64: 1, 2, 2048>}]} {
    %c0 = arith.constant 0 : index
    %c0_0 = arith.constant 0 : index
    %c0_1 = arith.constant 0 : index
    %0 = vector.load %arg2[%c0, %c0_0, %c0_1] : memref<1x2x2048xf32, #tpu.memory_space<vmem>>, vector<1x2x2048xf32>
    %1 = vector.shape_cast %0 : vector<1x2x2048xf32> to vector<2x2048xf32>
    %c0_2 = arith.constant 0 : index
    %c0_3 = arith.constant 0 : index
    %2 = vector.load %arg3[%c0_2, %c0_3] : memref<2x1xf32, #tpu.memory_space<vmem>>, vector<2x1xf32>
    %3 = vector.broadcast %2 : vector<2x1xf32> to vector<2x2048xf32>
    %4 = arith.mulf %1, %3 : vector<2x2048xf32>
    %c0_4 = arith.constant 0 : index
    %c0_5 = arith.constant 0 : index
    %5 = vector.load %arg4[%c0_4, %c0_5] : memref<2x1xf32, #tpu.memory_space<vmem>>, vector<2x1xf32>
    %6 = vector.broadcast %5 : vector<2x1xf32> to vector<2x2048xf32>
    %7 = arith.addf %4, %6 : vector<2x2048xf32>
    %cst = arith.constant 0.000000e+00 : f32
    %8 = vector.broadcast %cst : f32 to vector<2x2048xf32>
    %9 = arith.maximumf %7, %8 : vector<2x2048xf32>
    %c0_6 = arith.constant 0 : index
    %c0_7 = arith.constant 0 : index
    %c0_8 = arith.constant 0 : index
    %10 = vector.load %arg6[%c0_6, %c0_7, %c0_8] : memref<1x2x2048xf32, #tpu.memory_space<vmem>>, vector<1x2x2048xf32>
    %11 = vector.shape_cast %10 : vector<1x2x2048xf32> to vector<2x2048xf32>
    %12 = vector.shape_cast %9 : vector<2x2048xf32> to vector<1x2x2048xf32>
    tpu.vector_store %arg6[%c0_6, %c0_7, %c0_8], %12 {strides = array<i32>} : memref<1x2x2048xf32, #tpu.memory_space<vmem>>, vector<1x2x2048xf32>,
    %c0_9 = arith.constant 0 : index
    %c0_10 = arith.constant 0 : index
    %c0_11 = arith.constant 0 : index
    %13 = vector.load %arg5[%c0_9, %c0_10, %c0_11] : memref<1x2x2048xf32, #tpu.memory_space<vmem>>, vector<1x2x2048xf32>
    %14 = vector.shape_cast %13 : vector<1x2x2048xf32> to vector<2x2048xf32>
    %15 = arith.addf %9, %14 : vector<2x2048xf32>
    %c0_12 = arith.constant 0 : index
    %c0_13 = arith.constant 0 : index
    %c0_14 = arith.constant 0 : index
    %16 = vector.load %arg7[%c0_12, %c0_13, %c0_14] : memref<1x2x2048xf32, #tpu.memory_space<vmem>>, vector<1x2x2048xf32>
    %17 = vector.shape_cast %16 : vector<1x2x2048xf32> to vector<2x2048xf32>
    %18 = vector.shape_cast %15 : vector<2x2048xf32> to vector<1x2x2048xf32>
    tpu.vector_store %arg7[%c0_12, %c0_13, %c0_14], %18 {strides = array<i32>} : memref<1x2x2048xf32, #tpu.memory_space<vmem>>, vector<1x2x2048xf32>,
    return
  }
  func.func @transform_0(%arg0: i32, %arg1: i32) -> (i32, i32, i32) {
    %c0_i32 = arith.constant 0 : i32
    %c0_i32_0 = arith.constant 0 : i32
    return %arg0, %c0_i32, %arg1 : i32, i32, i32
  }
  func.func @transform_1(%arg0: i32, %arg1: i32) -> (i32, i32) {
    %c0_i32 = arith.constant 0 : i32
    %c0_i32_0 = arith.constant 0 : i32
    %c0_i32_1 = arith.constant 0 : i32
    return %c0_i32, %c0_i32_0 : i32, i32
  }
  func.func @transform_2(%arg0: i32, %arg1: i32) -> (i32, i32) {
    %c0_i32 = arith.constant 0 : i32
    %c0_i32_0 = arith.constant 0 : i32
    %c0_i32_1 = arith.constant 0 : i32
    return %c0_i32, %c0_i32_0 : i32, i32
  }
  func.func @transform_3(%arg0: i32, %arg1: i32) -> (i32, i32, i32) {
    %c0_i32 = arith.constant 0 : i32
    %c0_i32_0 = arith.constant 0 : i32
    return %arg0, %c0_i32, %arg1 : i32, i32, i32
  }
  func.func @transform_4(%arg0: i32, %arg1: i32) -> (i32, i32, i32) {
    %c0_i32 = arith.constant 0 : i32
    %c0_i32_0 = arith.constant 0 : i32
    return %arg0, %c0_i32, %arg1 : i32, i32, i32
  }
  func.func @transform_5(%arg0: i32, %arg1: i32) -> (i32, i32, i32) {
    %c0_i32 = arith.constant 0 : i32
    %c0_i32_0 = arith.constant 0 : i32
    return %arg0, %c0_i32, %arg1 : i32, i32, i32
  }
}

module attributes {stable_mosaic.version = 11 : i64} {
  func.func @_bn_act_kernel(%arg0: i32, %arg1: i32, %arg2: memref<1x2x2048xf32, #tpu.memory_space<vmem>>, %arg3: memref<2x1xf32, #tpu.memory_space<vmem>>, %arg4: memref<2x1xf32, #tpu.memory_space<vmem>>, %arg5: memref<1x2x2048xf32, #tpu.memory_space<vmem>>) attributes {dimension_semantics = [#tpu.dimension_semantics<parallel>, #tpu.dimension_semantics<parallel>], iteration_bounds = array<i64: 2, 2>, scalar_prefetch = 0 : i64, scratch_operands = 0 : i64, tpu.core_type = #tpu.core_type<tc>, window_params = [{transform_indices = @transform_0, window_bounds = array<i64: 1, 2, 2048>}, {pipeline_mode = #tpu.pipeline_mode<synchronous>, transform_indices = @transform_1, window_bounds = array<i64: 2, 1>}, {pipeline_mode = #tpu.pipeline_mode<synchronous>, transform_indices = @transform_2, window_bounds = array<i64: 2, 1>}, {transform_indices = @transform_3, window_bounds = array<i64: 1, 2, 2048>}]} {
    %c0 = arith.constant 0 : index
    %c0_0 = arith.constant 0 : index
    %c0_1 = arith.constant 0 : index
    %0 = vector.load %arg2[%c0, %c0_0, %c0_1] : memref<1x2x2048xf32, #tpu.memory_space<vmem>>, vector<1x2x2048xf32>
    %1 = vector.shape_cast %0 : vector<1x2x2048xf32> to vector<2x2048xf32>
    %c0_2 = arith.constant 0 : index
    %c0_3 = arith.constant 0 : index
    %2 = vector.load %arg3[%c0_2, %c0_3] : memref<2x1xf32, #tpu.memory_space<vmem>>, vector<2x1xf32>
    %3 = vector.broadcast %2 : vector<2x1xf32> to vector<2x2048xf32>
    %4 = arith.mulf %1, %3 : vector<2x2048xf32>
    %c0_4 = arith.constant 0 : index
    %c0_5 = arith.constant 0 : index
    %5 = vector.load %arg4[%c0_4, %c0_5] : memref<2x1xf32, #tpu.memory_space<vmem>>, vector<2x1xf32>
    %6 = vector.broadcast %5 : vector<2x1xf32> to vector<2x2048xf32>
    %7 = arith.addf %4, %6 : vector<2x2048xf32>
    %cst = arith.constant 0.000000e+00 : f32
    %8 = vector.broadcast %cst : f32 to vector<2x2048xf32>
    %9 = arith.maximumf %7, %8 : vector<2x2048xf32>
    %c0_6 = arith.constant 0 : index
    %c0_7 = arith.constant 0 : index
    %c0_8 = arith.constant 0 : index
    %10 = vector.load %arg5[%c0_6, %c0_7, %c0_8] : memref<1x2x2048xf32, #tpu.memory_space<vmem>>, vector<1x2x2048xf32>
    %11 = vector.shape_cast %10 : vector<1x2x2048xf32> to vector<2x2048xf32>
    %12 = vector.shape_cast %9 : vector<2x2048xf32> to vector<1x2x2048xf32>
    tpu.vector_store %arg5[%c0_6, %c0_7, %c0_8], %12 {strides = array<i32>} : memref<1x2x2048xf32, #tpu.memory_space<vmem>>, vector<1x2x2048xf32>,
    return
  }
  func.func @transform_0(%arg0: i32, %arg1: i32) -> (i32, i32, i32) {
    %c0_i32 = arith.constant 0 : i32
    %c0_i32_0 = arith.constant 0 : i32
    return %arg0, %c0_i32, %arg1 : i32, i32, i32
  }
  func.func @transform_1(%arg0: i32, %arg1: i32) -> (i32, i32) {
    %c0_i32 = arith.constant 0 : i32
    %c0_i32_0 = arith.constant 0 : i32
    %c0_i32_1 = arith.constant 0 : i32
    return %c0_i32, %c0_i32_0 : i32, i32
  }
  func.func @transform_2(%arg0: i32, %arg1: i32) -> (i32, i32) {
    %c0_i32 = arith.constant 0 : i32
    %c0_i32_0 = arith.constant 0 : i32
    %c0_i32_1 = arith.constant 0 : i32
    return %c0_i32, %c0_i32_0 : i32, i32
  }
  func.func @transform_3(%arg0: i32, %arg1: i32) -> (i32, i32, i32) {
    %c0_i32 = arith.constant 0 : i32
    %c0_i32_0 = arith.constant 0 : i32
    return %arg0, %c0_i32, %arg1 : i32, i32, i32
  }
}

module attributes {stable_mosaic.version = 11 : i64} {
  func.func @_conv1x1_kernel(%arg0: i32, %arg1: i32, %arg2: memref<1x8x2048xf32, #tpu.memory_space<vmem>>, %arg3: memref<8x8xf32, #tpu.memory_space<vmem>>, %arg4: memref<8x1xf32, #tpu.memory_space<vmem>>, %arg5: memref<1x8x2048xf32, #tpu.memory_space<vmem>>, %arg6: memref<1x1x8x1xf32, #tpu.memory_space<vmem>>, %arg7: memref<1x1x8x1xf32, #tpu.memory_space<vmem>>) attributes {dimension_semantics = [#tpu.dimension_semantics<parallel>, #tpu.dimension_semantics<parallel>], iteration_bounds = array<i64: 2, 2>, scalar_prefetch = 0 : i64, scratch_operands = 0 : i64, tpu.core_type = #tpu.core_type<tc>, window_params = [{transform_indices = @transform_0, window_bounds = array<i64: 1, 8, 2048>}, {pipeline_mode = #tpu.pipeline_mode<synchronous>, transform_indices = @transform_1, window_bounds = array<i64: 8, 8>}, {pipeline_mode = #tpu.pipeline_mode<synchronous>, transform_indices = @transform_2, window_bounds = array<i64: 8, 1>}, {transform_indices = @transform_3, window_bounds = array<i64: 1, 8, 2048>}, {transform_indices = @transform_4, window_bounds = array<i64: 1, 1, 8, 1>}, {transform_indices = @transform_5, window_bounds = array<i64: 1, 1, 8, 1>}]} {
    %c0 = arith.constant 0 : index
    %c0_0 = arith.constant 0 : index
    %0 = vector.load %arg3[%c0, %c0_0] : memref<8x8xf32, #tpu.memory_space<vmem>>, vector<8x8xf32>
    %c0_1 = arith.constant 0 : index
    %c0_2 = arith.constant 0 : index
    %c0_3 = arith.constant 0 : index
    %1 = vector.load %arg2[%c0_1, %c0_2, %c0_3] : memref<1x8x2048xf32, #tpu.memory_space<vmem>>, vector<1x8x2048xf32>
    %2 = vector.shape_cast %1 : vector<1x8x2048xf32> to vector<8x2048xf32>
    %cst = arith.constant dense<0.000000e+00> : vector<8x2048xf32>
    %3 = tpu.matmul %0, %2, %cst {dimension_numbers = #tpu.dot_dimension_numbers<[1], [0], [0], [1], [0, 0, 1, 1], [], []>} : vector<8x8xf32>, vector<8x2048xf32>, vector<8x2048xf32> -> vector<8x2048xf32>
    %c0_4 = arith.constant 0 : index
    %c0_5 = arith.constant 0 : index
    %4 = vector.load %arg4[%c0_4, %c0_5] : memref<8x1xf32, #tpu.memory_space<vmem>>, vector<8x1xf32>
    %5 = vector.broadcast %4 : vector<8x1xf32> to vector<8x2048xf32>
    %6 = arith.addf %3, %5 : vector<8x2048xf32>
    %c0_6 = arith.constant 0 : index
    %c0_7 = arith.constant 0 : index
    %c0_8 = arith.constant 0 : index
    %7 = vector.load %arg5[%c0_6, %c0_7, %c0_8] : memref<1x8x2048xf32, #tpu.memory_space<vmem>>, vector<1x8x2048xf32>
    %8 = vector.shape_cast %7 : vector<1x8x2048xf32> to vector<8x2048xf32>
    %9 = vector.shape_cast %6 : vector<8x2048xf32> to vector<1x8x2048xf32>
    tpu.vector_store %arg5[%c0_6, %c0_7, %c0_8], %9 {strides = array<i32>} : memref<1x8x2048xf32, #tpu.memory_space<vmem>>, vector<1x8x2048xf32>,
    %cst_9 = arith.constant dense<0.000000e+00> : vector<8xf32>
    %10 = vector.multi_reduction <add>, %6, %cst_9 [1] : vector<8x2048xf32> to vector<8xf32>
    %11 = vector.shape_cast %10 : vector<8xf32> to vector<8x1xf32>
    %c0_10 = arith.constant 0 : index
    %c0_11 = arith.constant 0 : index
    %c0_12 = arith.constant 0 : index
    %c0_13 = arith.constant 0 : index
    %12 = vector.load %arg6[%c0_10, %c0_11, %c0_12, %c0_13] : memref<1x1x8x1xf32, #tpu.memory_space<vmem>>, vector<1x1x8x1xf32>
    %13 = vector.shape_cast %12 : vector<1x1x8x1xf32> to vector<8x1xf32>
    %14 = vector.shape_cast %11 : vector<8x1xf32> to vector<1x1x8x1xf32>
    tpu.vector_store %arg6[%c0_10, %c0_11, %c0_12, %c0_13], %14 {strides = array<i32>} : memref<1x1x8x1xf32, #tpu.memory_space<vmem>>, vector<1x1x8x1xf32>,
    %15 = arith.mulf %6, %6 : vector<8x2048xf32>
    %cst_14 = arith.constant dense<0.000000e+00> : vector<8xf32>
    %16 = vector.multi_reduction <add>, %15, %cst_14 [1] : vector<8x2048xf32> to vector<8xf32>
    %17 = vector.shape_cast %16 : vector<8xf32> to vector<8x1xf32>
    %c0_15 = arith.constant 0 : index
    %c0_16 = arith.constant 0 : index
    %c0_17 = arith.constant 0 : index
    %c0_18 = arith.constant 0 : index
    %18 = vector.load %arg7[%c0_15, %c0_16, %c0_17, %c0_18] : memref<1x1x8x1xf32, #tpu.memory_space<vmem>>, vector<1x1x8x1xf32>
    %19 = vector.shape_cast %18 : vector<1x1x8x1xf32> to vector<8x1xf32>
    %20 = vector.shape_cast %17 : vector<8x1xf32> to vector<1x1x8x1xf32>
    tpu.vector_store %arg7[%c0_15, %c0_16, %c0_17, %c0_18], %20 {strides = array<i32>} : memref<1x1x8x1xf32, #tpu.memory_space<vmem>>, vector<1x1x8x1xf32>,
    return
  }
  func.func @transform_0(%arg0: i32, %arg1: i32) -> (i32, i32, i32) {
    %c0_i32 = arith.constant 0 : i32
    %c0_i32_0 = arith.constant 0 : i32
    return %arg0, %c0_i32, %arg1 : i32, i32, i32
  }
  func.func @transform_1(%arg0: i32, %arg1: i32) -> (i32, i32) {
    %c0_i32 = arith.constant 0 : i32
    %c0_i32_0 = arith.constant 0 : i32
    %c0_i32_1 = arith.constant 0 : i32
    return %c0_i32, %c0_i32_0 : i32, i32
  }
  func.func @transform_2(%arg0: i32, %arg1: i32) -> (i32, i32) {
    %c0_i32 = arith.constant 0 : i32
    %c0_i32_0 = arith.constant 0 : i32
    %c0_i32_1 = arith.constant 0 : i32
    return %c0_i32, %c0_i32_0 : i32, i32
  }
  func.func @transform_3(%arg0: i32, %arg1: i32) -> (i32, i32, i32) {
    %c0_i32 = arith.constant 0 : i32
    %c0_i32_0 = arith.constant 0 : i32
    return %arg0, %c0_i32, %arg1 : i32, i32, i32
  }
  func.func @transform_4(%arg0: i32, %arg1: i32) -> (i32, i32, i32, i32) {
    %c0_i32 = arith.constant 0 : i32
    %c0_i32_0 = arith.constant 0 : i32
    %c0_i32_1 = arith.constant 0 : i32
    return %arg0, %arg1, %c0_i32, %c0_i32_0 : i32, i32, i32, i32
  }
  func.func @transform_5(%arg0: i32, %arg1: i32) -> (i32, i32, i32, i32) {
    %c0_i32 = arith.constant 0 : i32
    %c0_i32_0 = arith.constant 0 : i32
    %c0_i32_1 = arith.constant 0 : i32
    return %arg0, %arg1, %c0_i32, %c0_i32_0 : i32, i32, i32, i32
  }
}

module attributes {stable_mosaic.version = 11 : i64} {
  func.func @_bn_act_add_kernel(%arg0: i32, %arg1: i32, %arg2: memref<1x8x2048xf32, #tpu.memory_space<vmem>>, %arg3: memref<8x1xf32, #tpu.memory_space<vmem>>, %arg4: memref<8x1xf32, #tpu.memory_space<vmem>>, %arg5: memref<1x8x2048xf32, #tpu.memory_space<vmem>>, %arg6: memref<1x8x2048xf32, #tpu.memory_space<vmem>>, %arg7: memref<1x8x2048xf32, #tpu.memory_space<vmem>>) attributes {dimension_semantics = [#tpu.dimension_semantics<parallel>, #tpu.dimension_semantics<parallel>], iteration_bounds = array<i64: 2, 2>, scalar_prefetch = 0 : i64, scratch_operands = 0 : i64, tpu.core_type = #tpu.core_type<tc>, window_params = [{transform_indices = @transform_0, window_bounds = array<i64: 1, 8, 2048>}, {pipeline_mode = #tpu.pipeline_mode<synchronous>, transform_indices = @transform_1, window_bounds = array<i64: 8, 1>}, {pipeline_mode = #tpu.pipeline_mode<synchronous>, transform_indices = @transform_2, window_bounds = array<i64: 8, 1>}, {transform_indices = @transform_3, window_bounds = array<i64: 1, 8, 2048>}, {transform_indices = @transform_4, window_bounds = array<i64: 1, 8, 2048>}, {transform_indices = @transform_5, window_bounds = array<i64: 1, 8, 2048>}]} {
    %c0 = arith.constant 0 : index
    %c0_0 = arith.constant 0 : index
    %c0_1 = arith.constant 0 : index
    %0 = vector.load %arg2[%c0, %c0_0, %c0_1] : memref<1x8x2048xf32, #tpu.memory_space<vmem>>, vector<1x8x2048xf32>
    %1 = vector.shape_cast %0 : vector<1x8x2048xf32> to vector<8x2048xf32>
    %c0_2 = arith.constant 0 : index
    %c0_3 = arith.constant 0 : index
    %2 = vector.load %arg3[%c0_2, %c0_3] : memref<8x1xf32, #tpu.memory_space<vmem>>, vector<8x1xf32>
    %3 = vector.broadcast %2 : vector<8x1xf32> to vector<8x2048xf32>
    %4 = arith.mulf %1, %3 : vector<8x2048xf32>
    %c0_4 = arith.constant 0 : index
    %c0_5 = arith.constant 0 : index
    %5 = vector.load %arg4[%c0_4, %c0_5] : memref<8x1xf32, #tpu.memory_space<vmem>>, vector<8x1xf32>
    %6 = vector.broadcast %5 : vector<8x1xf32> to vector<8x2048xf32>
    %7 = arith.addf %4, %6 : vector<8x2048xf32>
    %cst = arith.constant 0.000000e+00 : f32
    %8 = vector.broadcast %cst : f32 to vector<8x2048xf32>
    %9 = arith.maximumf %7, %8 : vector<8x2048xf32>
    %c0_6 = arith.constant 0 : index
    %c0_7 = arith.constant 0 : index
    %c0_8 = arith.constant 0 : index
    %10 = vector.load %arg6[%c0_6, %c0_7, %c0_8] : memref<1x8x2048xf32, #tpu.memory_space<vmem>>, vector<1x8x2048xf32>
    %11 = vector.shape_cast %10 : vector<1x8x2048xf32> to vector<8x2048xf32>
    %12 = vector.shape_cast %9 : vector<8x2048xf32> to vector<1x8x2048xf32>
    tpu.vector_store %arg6[%c0_6, %c0_7, %c0_8], %12 {strides = array<i32>} : memref<1x8x2048xf32, #tpu.memory_space<vmem>>, vector<1x8x2048xf32>,
    %c0_9 = arith.constant 0 : index
    %c0_10 = arith.constant 0 : index
    %c0_11 = arith.constant 0 : index
    %13 = vector.load %arg5[%c0_9, %c0_10, %c0_11] : memref<1x8x2048xf32, #tpu.memory_space<vmem>>, vector<1x8x2048xf32>
    %14 = vector.shape_cast %13 : vector<1x8x2048xf32> to vector<8x2048xf32>
    %15 = arith.addf %9, %14 : vector<8x2048xf32>
    %c0_12 = arith.constant 0 : index
    %c0_13 = arith.constant 0 : index
    %c0_14 = arith.constant 0 : index
    %16 = vector.load %arg7[%c0_12, %c0_13, %c0_14] : memref<1x8x2048xf32, #tpu.memory_space<vmem>>, vector<1x8x2048xf32>
    %17 = vector.shape_cast %16 : vector<1x8x2048xf32> to vector<8x2048xf32>
    %18 = vector.shape_cast %15 : vector<8x2048xf32> to vector<1x8x2048xf32>
    tpu.vector_store %arg7[%c0_12, %c0_13, %c0_14], %18 {strides = array<i32>} : memref<1x8x2048xf32, #tpu.memory_space<vmem>>, vector<1x8x2048xf32>,
    return
  }
  func.func @transform_0(%arg0: i32, %arg1: i32) -> (i32, i32, i32) {
    %c0_i32 = arith.constant 0 : i32
    %c0_i32_0 = arith.constant 0 : i32
    return %arg0, %c0_i32, %arg1 : i32, i32, i32
  }
  func.func @transform_1(%arg0: i32, %arg1: i32) -> (i32, i32) {
    %c0_i32 = arith.constant 0 : i32
    %c0_i32_0 = arith.constant 0 : i32
    %c0_i32_1 = arith.constant 0 : i32
    return %c0_i32, %c0_i32_0 : i32, i32
  }
  func.func @transform_2(%arg0: i32, %arg1: i32) -> (i32, i32) {
    %c0_i32 = arith.constant 0 : i32
    %c0_i32_0 = arith.constant 0 : i32
    %c0_i32_1 = arith.constant 0 : i32
    return %c0_i32, %c0_i32_0 : i32, i32
  }
  func.func @transform_3(%arg0: i32, %arg1: i32) -> (i32, i32, i32) {
    %c0_i32 = arith.constant 0 : i32
    %c0_i32_0 = arith.constant 0 : i32
    return %arg0, %c0_i32, %arg1 : i32, i32, i32
  }
  func.func @transform_4(%arg0: i32, %arg1: i32) -> (i32, i32, i32) {
    %c0_i32 = arith.constant 0 : i32
    %c0_i32_0 = arith.constant 0 : i32
    return %arg0, %c0_i32, %arg1 : i32, i32, i32
  }
  func.func @transform_5(%arg0: i32, %arg1: i32) -> (i32, i32, i32) {
    %c0_i32 = arith.constant 0 : i32
    %c0_i32_0 = arith.constant 0 : i32
    return %arg0, %c0_i32, %arg1 : i32, i32, i32
  }
}

module attributes {stable_mosaic.version = 11 : i64} {
  func.func @kernel(%arg0: i32, %arg1: i32, %arg2: memref<1x1x8x288xf32, #tpu.memory_space<vmem>>, %arg3: memref<1x1x8x288xf32, #tpu.memory_space<vmem>>, %arg4: memref<1x1x8x288xf32, #tpu.memory_space<vmem>>, %arg5: memref<9x8x8xf32, #tpu.memory_space<vmem>>, %arg6: memref<8x1xf32, #tpu.memory_space<vmem>>, %arg7: memref<1x8x256xf32, #tpu.memory_space<vmem>>, %arg8: memref<1x1x8x1xf32, #tpu.memory_space<vmem>>, %arg9: memref<1x1x8x1xf32, #tpu.memory_space<vmem>>) attributes {dimension_semantics = [#tpu.dimension_semantics<parallel>, #tpu.dimension_semantics<parallel>], iteration_bounds = array<i64: 2, 16>, scalar_prefetch = 0 : i64, scratch_operands = 0 : i64, tpu.core_type = #tpu.core_type<tc>, window_params = [{transform_indices = @transform_0, window_bounds = array<i64: 1, 1, 8, 288>}, {transform_indices = @transform_1, window_bounds = array<i64: 1, 1, 8, 288>}, {transform_indices = @transform_2, window_bounds = array<i64: 1, 1, 8, 288>}, {pipeline_mode = #tpu.pipeline_mode<synchronous>, transform_indices = @transform_3, window_bounds = array<i64: 9, 8, 8>}, {pipeline_mode = #tpu.pipeline_mode<synchronous>, transform_indices = @transform_4, window_bounds = array<i64: 8, 1>}, {transform_indices = @transform_5, window_bounds = array<i64: 1, 8, 256>}, {transform_indices = @transform_6, window_bounds = array<i64: 1, 1, 8, 1>}, {transform_indices = @transform_7, window_bounds = array<i64: 1, 1, 8, 1>}]} {
    %c0 = arith.constant 0 : index
    %c0_0 = arith.constant 0 : index
    %c0_1 = arith.constant 0 : index
    %c0_2 = arith.constant 0 : index
    %0 = vector.load %arg2[%c0, %c0_0, %c0_1, %c0_2] : memref<1x1x8x288xf32, #tpu.memory_space<vmem>>, vector<1x1x8x288xf32>
    %1 = vector.shape_cast %0 : vector<1x1x8x288xf32> to vector<8x288xf32>
    %2 = vector.extract_strided_slice %1 {offsets = [0, 0], sizes = [8, 256], strides = [1, 1]} : vector<8x288xf32> to vector<8x256xf32>
    %c0_3 = arith.constant 0 : index
    %c0_4 = arith.constant 0 : index
    %c0_5 = arith.constant 0 : index
    %3 = vector.load %arg5[%c0_3, %c0_4, %c0_5] : memref<9x8x8xf32, #tpu.memory_space<vmem>>, vector<1x8x8xf32>
    %4 = vector.shape_cast %3 : vector<1x8x8xf32> to vector<8x8xf32>
    %cst = arith.constant dense<0.000000e+00> : vector<8x256xf32>
    %5 = tpu.matmul %4, %2, %cst {dimension_numbers = #tpu.dot_dimension_numbers<[1], [0], [0], [1], [0, 0, 1, 1], [], []>} : vector<8x8xf32>, vector<8x256xf32>, vector<8x256xf32> -> vector<8x256xf32>
    %6 = vector.extract_strided_slice %1 {offsets = [0, 16], sizes = [8, 256], strides = [1, 1]} : vector<8x288xf32> to vector<8x256xf32>
    %c1 = arith.constant 1 : index
    %c0_6 = arith.constant 0 : index
    %c0_7 = arith.constant 0 : index
    %7 = vector.load %arg5[%c1, %c0_6, %c0_7] : memref<9x8x8xf32, #tpu.memory_space<vmem>>, vector<1x8x8xf32>
    %8 = vector.shape_cast %7 : vector<1x8x8xf32> to vector<8x8xf32>
    %cst_8 = arith.constant dense<0.000000e+00> : vector<8x256xf32>
    %9 = tpu.matmul %8, %6, %cst_8 {dimension_numbers = #tpu.dot_dimension_numbers<[1], [0], [0], [1], [0, 0, 1, 1], [], []>} : vector<8x8xf32>, vector<8x256xf32>, vector<8x256xf32> -> vector<8x256xf32>
    %10 = arith.addf %5, %9 : vector<8x256xf32>
    %11 = vector.extract_strided_slice %1 {offsets = [0, 32], sizes = [8, 256], strides = [1, 1]} : vector<8x288xf32> to vector<8x256xf32>
    %c2 = arith.constant 2 : index
    %c0_9 = arith.constant 0 : index
    %c0_10 = arith.constant 0 : index
    %12 = vector.load %arg5[%c2, %c0_9, %c0_10] : memref<9x8x8xf32, #tpu.memory_space<vmem>>, vector<1x8x8xf32>
    %13 = vector.shape_cast %12 : vector<1x8x8xf32> to vector<8x8xf32>
    %cst_11 = arith.constant dense<0.000000e+00> : vector<8x256xf32>
    %14 = tpu.matmul %13, %11, %cst_11 {dimension_numbers = #tpu.dot_dimension_numbers<[1], [0], [0], [1], [0, 0, 1, 1], [], []>} : vector<8x8xf32>, vector<8x256xf32>, vector<8x256xf32> -> vector<8x256xf32>
    %15 = arith.addf %10, %14 : vector<8x256xf32>
    %c0_12 = arith.constant 0 : index
    %c0_13 = arith.constant 0 : index
    %c0_14 = arith.constant 0 : index
    %c0_15 = arith.constant 0 : index
    %16 = vector.load %arg3[%c0_12, %c0_13, %c0_14, %c0_15] : memref<1x1x8x288xf32, #tpu.memory_space<vmem>>, vector<1x1x8x288xf32>
    %17 = vector.shape_cast %16 : vector<1x1x8x288xf32> to vector<8x288xf32>
    %18 = vector.extract_strided_slice %17 {offsets = [0, 0], sizes = [8, 256], strides = [1, 1]} : vector<8x288xf32> to vector<8x256xf32>
    %c3 = arith.constant 3 : index
    %c0_16 = arith.constant 0 : index
    %c0_17 = arith.constant 0 : index
    %19 = vector.load %arg5[%c3, %c0_16, %c0_17] : memref<9x8x8xf32, #tpu.memory_space<vmem>>, vector<1x8x8xf32>
    %20 = vector.shape_cast %19 : vector<1x8x8xf32> to vector<8x8xf32>
    %cst_18 = arith.constant dense<0.000000e+00> : vector<8x256xf32>
    %21 = tpu.matmul %20, %18, %cst_18 {dimension_numbers = #tpu.dot_dimension_numbers<[1], [0], [0], [1], [0, 0, 1, 1], [], []>} : vector<8x8xf32>, vector<8x256xf32>, vector<8x256xf32> -> vector<8x256xf32>
    %22 = arith.addf %15, %21 : vector<8x256xf32>
    %23 = vector.extract_strided_slice %17 {offsets = [0, 16], sizes = [8, 256], strides = [1, 1]} : vector<8x288xf32> to vector<8x256xf32>
    %c4 = arith.constant 4 : index
    %c0_19 = arith.constant 0 : index
    %c0_20 = arith.constant 0 : index
    %24 = vector.load %arg5[%c4, %c0_19, %c0_20] : memref<9x8x8xf32, #tpu.memory_space<vmem>>, vector<1x8x8xf32>
    %25 = vector.shape_cast %24 : vector<1x8x8xf32> to vector<8x8xf32>
    %cst_21 = arith.constant dense<0.000000e+00> : vector<8x256xf32>
    %26 = tpu.matmul %25, %23, %cst_21 {dimension_numbers = #tpu.dot_dimension_numbers<[1], [0], [0], [1], [0, 0, 1, 1], [], []>} : vector<8x8xf32>, vector<8x256xf32>, vector<8x256xf32> -> vector<8x256xf32>
    %27 = arith.addf %22, %26 : vector<8x256xf32>
    %28 = vector.extract_strided_slice %17 {offsets = [0, 32], sizes = [8, 256], strides = [1, 1]} : vector<8x288xf32> to vector<8x256xf32>
    %c5 = arith.constant 5 : index
    %c0_22 = arith.constant 0 : index
    %c0_23 = arith.constant 0 : index
    %29 = vector.load %arg5[%c5, %c0_22, %c0_23] : memref<9x8x8xf32, #tpu.memory_space<vmem>>, vector<1x8x8xf32>
    %30 = vector.shape_cast %29 : vector<1x8x8xf32> to vector<8x8xf32>
    %cst_24 = arith.constant dense<0.000000e+00> : vector<8x256xf32>
    %31 = tpu.matmul %30, %28, %cst_24 {dimension_numbers = #tpu.dot_dimension_numbers<[1], [0], [0], [1], [0, 0, 1, 1], [], []>} : vector<8x8xf32>, vector<8x256xf32>, vector<8x256xf32> -> vector<8x256xf32>
    %32 = arith.addf %27, %31 : vector<8x256xf32>
    %c0_25 = arith.constant 0 : index
    %c0_26 = arith.constant 0 : index
    %c0_27 = arith.constant 0 : index
    %c0_28 = arith.constant 0 : index
    %33 = vector.load %arg4[%c0_25, %c0_26, %c0_27, %c0_28] : memref<1x1x8x288xf32, #tpu.memory_space<vmem>>, vector<1x1x8x288xf32>
    %34 = vector.shape_cast %33 : vector<1x1x8x288xf32> to vector<8x288xf32>
    %35 = vector.extract_strided_slice %34 {offsets = [0, 0], sizes = [8, 256], strides = [1, 1]} : vector<8x288xf32> to vector<8x256xf32>
    %c6 = arith.constant 6 : index
    %c0_29 = arith.constant 0 : index
    %c0_30 = arith.constant 0 : index
    %36 = vector.load %arg5[%c6, %c0_29, %c0_30] : memref<9x8x8xf32, #tpu.memory_space<vmem>>, vector<1x8x8xf32>
    %37 = vector.shape_cast %36 : vector<1x8x8xf32> to vector<8x8xf32>
    %cst_31 = arith.constant dense<0.000000e+00> : vector<8x256xf32>
    %38 = tpu.matmul %37, %35, %cst_31 {dimension_numbers = #tpu.dot_dimension_numbers<[1], [0], [0], [1], [0, 0, 1, 1], [], []>} : vector<8x8xf32>, vector<8x256xf32>, vector<8x256xf32> -> vector<8x256xf32>
    %39 = arith.addf %32, %38 : vector<8x256xf32>
    %40 = vector.extract_strided_slice %34 {offsets = [0, 16], sizes = [8, 256], strides = [1, 1]} : vector<8x288xf32> to vector<8x256xf32>
    %c7 = arith.constant 7 : index
    %c0_32 = arith.constant 0 : index
    %c0_33 = arith.constant 0 : index
    %41 = vector.load %arg5[%c7, %c0_32, %c0_33] : memref<9x8x8xf32, #tpu.memory_space<vmem>>, vector<1x8x8xf32>
    %42 = vector.shape_cast %41 : vector<1x8x8xf32> to vector<8x8xf32>
    %cst_34 = arith.constant dense<0.000000e+00> : vector<8x256xf32>
    %43 = tpu.matmul %42, %40, %cst_34 {dimension_numbers = #tpu.dot_dimension_numbers<[1], [0], [0], [1], [0, 0, 1, 1], [], []>} : vector<8x8xf32>, vector<8x256xf32>, vector<8x256xf32> -> vector<8x256xf32>
    %44 = arith.addf %39, %43 : vector<8x256xf32>
    %45 = vector.extract_strided_slice %34 {offsets = [0, 32], sizes = [8, 256], strides = [1, 1]} : vector<8x288xf32> to vector<8x256xf32>
    %c8 = arith.constant 8 : index
    %c0_35 = arith.constant 0 : index
    %c0_36 = arith.constant 0 : index
    %46 = vector.load %arg5[%c8, %c0_35, %c0_36] : memref<9x8x8xf32, #tpu.memory_space<vmem>>, vector<1x8x8xf32>
    %47 = vector.shape_cast %46 : vector<1x8x8xf32> to vector<8x8xf32>
    %cst_37 = arith.constant dense<0.000000e+00> : vector<8x256xf32>
    %48 = tpu.matmul %47, %45, %cst_37 {dimension_numbers = #tpu.dot_dimension_numbers<[1], [0], [0], [1], [0, 0, 1, 1], [], []>} : vector<8x8xf32>, vector<8x256xf32>, vector<8x256xf32> -> vector<8x256xf32>
    %49 = arith.addf %44, %48 : vector<8x256xf32>
    %c0_38 = arith.constant 0 : index
    %c0_39 = arith.constant 0 : index
    %50 = vector.load %arg6[%c0_38, %c0_39] : memref<8x1xf32, #tpu.memory_space<vmem>>, vector<8x1xf32>
    %51 = vector.broadcast %50 : vector<8x1xf32> to vector<8x256xf32>
    %52 = arith.addf %49, %51 : vector<8x256xf32>
    %c0_40 = arith.constant 0 : index
    %c0_41 = arith.constant 0 : index
    %c0_42 = arith.constant 0 : index
    %53 = vector.load %arg7[%c0_40, %c0_41, %c0_42] : memref<1x8x256xf32, #tpu.memory_space<vmem>>, vector<1x8x256xf32>
    %54 = vector.shape_cast %53 : vector<1x8x256xf32> to vector<8x256xf32>
    %55 = vector.shape_cast %52 : vector<8x256xf32> to vector<1x8x256xf32>
    tpu.vector_store %arg7[%c0_40, %c0_41, %c0_42], %55 {strides = array<i32>} : memref<1x8x256xf32, #tpu.memory_space<vmem>>, vector<1x8x256xf32>,
    %cst_43 = arith.constant dense<0.000000e+00> : vector<8xf32>
    %56 = vector.multi_reduction <add>, %52, %cst_43 [1] : vector<8x256xf32> to vector<8xf32>
    %57 = vector.shape_cast %56 : vector<8xf32> to vector<8x1xf32>
    %c0_44 = arith.constant 0 : index
    %c0_45 = arith.constant 0 : index
    %c0_46 = arith.constant 0 : index
    %c0_47 = arith.constant 0 : index
    %58 = vector.load %arg8[%c0_44, %c0_45, %c0_46, %c0_47] : memref<1x1x8x1xf32, #tpu.memory_space<vmem>>, vector<1x1x8x1xf32>
    %59 = vector.shape_cast %58 : vector<1x1x8x1xf32> to vector<8x1xf32>
    %60 = vector.shape_cast %57 : vector<8x1xf32> to vector<1x1x8x1xf32>
    tpu.vector_store %arg8[%c0_44, %c0_45, %c0_46, %c0_47], %60 {strides = array<i32>} : memref<1x1x8x1xf32, #tpu.memory_space<vmem>>, vector<1x1x8x1xf32>,
    %61 = arith.mulf %52, %52 : vector<8x256xf32>
    %cst_48 = arith.constant dense<0.000000e+00> : vector<8xf32>
    %62 = vector.multi_reduction <add>, %61, %cst_48 [1] : vector<8x256xf32> to vector<8xf32>
    %63 = vector.shape_cast %62 : vector<8xf32> to vector<8x1xf32>
    %c0_49 = arith.constant 0 : index
    %c0_50 = arith.constant 0 : index
    %c0_51 = arith.constant 0 : index
    %c0_52 = arith.constant 0 : index
    %64 = vector.load %arg9[%c0_49, %c0_50, %c0_51, %c0_52] : memref<1x1x8x1xf32, #tpu.memory_space<vmem>>, vector<1x1x8x1xf32>
    %65 = vector.shape_cast %64 : vector<1x1x8x1xf32> to vector<8x1xf32>
    %66 = vector.shape_cast %63 : vector<8x1xf32> to vector<1x1x8x1xf32>
    tpu.vector_store %arg9[%c0_49, %c0_50, %c0_51, %c0_52], %66 {strides = array<i32>} : memref<1x1x8x1xf32, #tpu.memory_space<vmem>>, vector<1x1x8x1xf32>,
    return
  }
  func.func @transform_0(%arg0: i32, %arg1: i32) -> (i32, i32, i32, i32) {
    %c0_i32 = arith.constant 0 : i32
    %0 = arith.addi %arg1, %c0_i32 : i32
    %c0_i32_0 = arith.constant 0 : i32
    %c0_i32_1 = arith.constant 0 : i32
    %c0_i32_2 = arith.constant 0 : i32
    return %arg0, %0, %c0_i32_0, %c0_i32_1 : i32, i32, i32, i32
  }
  func.func @transform_1(%arg0: i32, %arg1: i32) -> (i32, i32, i32, i32) {
    %c0_i32 = arith.constant 0 : i32
    %0 = arith.addi %arg1, %c0_i32 : i32
    %c0_i32_0 = arith.constant 0 : i32
    %c0_i32_1 = arith.constant 0 : i32
    %c0_i32_2 = arith.constant 0 : i32
    return %arg0, %0, %c0_i32_0, %c0_i32_1 : i32, i32, i32, i32
  }
  func.func @transform_2(%arg0: i32, %arg1: i32) -> (i32, i32, i32, i32) {
    %c0_i32 = arith.constant 0 : i32
    %0 = arith.addi %arg1, %c0_i32 : i32
    %c0_i32_0 = arith.constant 0 : i32
    %c0_i32_1 = arith.constant 0 : i32
    %c0_i32_2 = arith.constant 0 : i32
    return %arg0, %0, %c0_i32_0, %c0_i32_1 : i32, i32, i32, i32
  }
  func.func @transform_3(%arg0: i32, %arg1: i32) -> (i32, i32, i32) {
    %c0_i32 = arith.constant 0 : i32
    %c0_i32_0 = arith.constant 0 : i32
    %c0_i32_1 = arith.constant 0 : i32
    %c0_i32_2 = arith.constant 0 : i32
    return %c0_i32, %c0_i32_0, %c0_i32_1 : i32, i32, i32
  }
  func.func @transform_4(%arg0: i32, %arg1: i32) -> (i32, i32) {
    %c0_i32 = arith.constant 0 : i32
    %c0_i32_0 = arith.constant 0 : i32
    %c0_i32_1 = arith.constant 0 : i32
    return %c0_i32, %c0_i32_0 : i32, i32
  }
  func.func @transform_5(%arg0: i32, %arg1: i32) -> (i32, i32, i32) {
    %c0_i32 = arith.constant 0 : i32
    %c0_i32_0 = arith.constant 0 : i32
    return %arg0, %c0_i32, %arg1 : i32, i32, i32
  }
  func.func @transform_6(%arg0: i32, %arg1: i32) -> (i32, i32, i32, i32) {
    %c0_i32 = arith.constant 0 : i32
    %c0_i32_0 = arith.constant 0 : i32
    %c0_i32_1 = arith.constant 0 : i32
    return %arg0, %arg1, %c0_i32, %c0_i32_0 : i32, i32, i32, i32
  }
  func.func @transform_7(%arg0: i32, %arg1: i32) -> (i32, i32, i32, i32) {
    %c0_i32 = arith.constant 0 : i32
    %c0_i32_0 = arith.constant 0 : i32
    %c0_i32_1 = arith.constant 0 : i32
    return %arg0, %arg1, %c0_i32, %c0_i32_0 : i32, i32, i32, i32
  }
}

</mosaic_0001>

<llo_original>
// kernel: hdc_module_forward.15
$region0: #{hdc_module_forward.15}
  #allocation0 [shape = 'u32[]', space=smem, size = 0x4, offset = 0x4, fixed_abs, tag = 'smem constant byte address 0x4 - core index']
  #allocation1 [shape = 'u32[144,128]{1,0:T(1,128)}', space=vmem, size = 0x12000, scoped, tag = 'internal scratch']
  %s0 = inlined_call_operand.vmem [shape: f32[2,8,4096], index: 0, kind: input, shape index: {}]
  %s1 = inlined_call_operand.vmem [shape: f32[8,1], index: 1, kind: input, shape index: {}]
  %s2 = inlined_call_operand.vmem [shape: f32[8,1], index: 2, kind: input, shape index: {}]
  %s3 = inlined_call_operand.vmem [shape: f32[2,8,4096], index: 3, kind: output, shape index: {}]
  %s4 = sld [smem:[#allocation0]]
  $region45: #{hdc_module_forward.15} parent=0
    _
  %s6 = ssub.s32 1, %s4
  %s7 = scalar_select 0, %s6, %s4
  loop: start=0, step=1, limit=6
  $region2: #{hdc_module_forward.15} parent=0 // loop_pre_header
    _
  $region3: #{hdc_module_forward.15} parent=0 // loop_header
    %s9 = sphi 0, %s13
    %p10 = scmp.ge.s32.totalorder %s9, 6
    %s16 = sphi 0, %s28
    %s17 = sphi 0, %s24
    %s18 = sphi 0, %s16
    %s19 = sphi 0, %s17
    %s20 = sphi 0, %s18
    %s21 = sphi 0, %s19
    %s33 = sphi 0, %s35
    %s36 = sphi 0, %s33
    %s37 = sphi 0, %s36
    %s53 = sphi 0, %s37
    %s57 = sphi 0, %s57
    %s59 = sphi 0, %s57
    %s60 = sphi 0, %s59
    %s74 = sphi 0, %s60
    %s78 = sphi 0, %s78
    %s80 = sphi 0, %s78
    %s81 = sphi 0, %s80
    %s95 = sphi 0, %s81
    %s103 = sphi 0, %s105
    %s106 = sphi 0, %s103
    %s107 = sphi 0, %s106
    %s123 = sphi 0, %s107
  $region4: #{hdc_module_forward.15} parent=0 // loop_header_branch
    %12 = sbr.rel (%p10) target = $region8
  $region5: #{hdc_module_forward.15} parent=0 // loop_body
    %s14 = ssub.s32 %s9, 1
    %s15 = ssub.s32 %s9, 2
    %s22 = sadd.s32 1, %s17
    %p23 = scmp.ge.s32.totalorder %s22, 2
    %s24 = scalar_select %p23, 0, %s22
    %s25 = sadd.s32 1, %s16
    %s26 = scalar_select %p23, %s25, %s16
    %p27 = scmp.ge.s32.totalorder %s26, 2
    %s28 = scalar_select %p27, 0, %s26
    %s29 = ssub.s32 %s16, %s28
    %s30 = ssub.s32 %s17, %s24
    %s31 = sor.u32 %s29, %s30
    %p32 = scmp.eq.s32.totalorder %s31, 0
    %s34 = sadd.s32 %s33, 1
    %s35 = scalar_select %p32, %s33, %s34
    %p38 = pneg %p32
    %p39 = scmp.eq.s32.totalorder %s9, 3
    %p40 = por %p38, %p39
    %p41 = scmp.ne.s32.totalorder %s33, %s36
    %p42 = scmp.eq.s32.totalorder %s9, 0
    %p43 = por %p41, %p42
    %p44 = scmp.ne.s32.totalorder %s33, %s36
    %p45 = scmp.eq.s32.totalorder %s14, 3
    %p46 = por %p44, %p45
    %p47 = scmp.ne.s32.totalorder %s36, %s37
    %p48 = scmp.eq.s32.totalorder %s14, 0
    %p49 = por %p47, %p48
    %p50 = scmp.ne.s32.totalorder %s36, %s37
    %p51 = scmp.eq.s32.totalorder %s15, 3
    %p52 = por %p50, %p51
    %p54 = scmp.ne.s32.totalorder %s37, %s53
    %p55 = scmp.eq.s32.totalorder %s15, 0
    %p56 = por %p54, %p55
    %s58 = sadd.s32 %s57, 1
    %p61 = scmp.eq.s32.totalorder %s9, 3
    %p62 = scmp.ne.s32.totalorder %s57, %s59
    %p63 = scmp.eq.s32.totalorder %s9, 0
    %p64 = por %p62, %p63
    %p65 = scmp.ne.s32.totalorder %s57, %s59
    %p66 = scmp.eq.s32.totalorder %s14, 3
    %p67 = por %p65, %p66
    %p68 = scmp.ne.s32.totalorder %s59, %s60
    %p69 = scmp.eq.s32.totalorder %s14, 0
    %p70 = por %p68, %p69
    %p71 = scmp.ne.s32.totalorder %s59, %s60
    %p72 = scmp.eq.s32.totalorder %s15, 3
    %p73 = por %p71, %p72
    %p75 = scmp.ne.s32.totalorder %s60, %s74
    %p76 = scmp.eq.s32.totalorder %s15, 0
    %p77 = por %p75, %p76
    %s79 = sadd.s32 %s78, 1
    %p82 = scmp.eq.s32.totalorder %s9, 3
    %p83 = scmp.ne.s32.totalorder %s78, %s80
    %p84 = scmp.eq.s32.totalorder %s9, 0
    %p85 = por %p83, %p84
    %p86 = scmp.ne.s32.totalorder %s78, %s80
    %p87 = scmp.eq.s32.totalorder %s14, 3
    %p88 = por %p86, %p87
    %p89 = scmp.ne.s32.totalorder %s80, %s81
    %p90 = scmp.eq.s32.totalorder %s14, 0
    %p91 = por %p89, %p90
    %p92 = scmp.ne.s32.totalorder %s80, %s81
    %p93 = scmp.eq.s32.totalorder %s15, 3
    %p94 = por %p92, %p93
    %p96 = scmp.ne.s32.totalorder %s81, %s95
    %p97 = scmp.eq.s32.totalorder %s15, 0
    %p98 = por %p96, %p97
    %s99 = ssub.s32 %s16, %s28
    %s100 = ssub.s32 %s17, %s24
    %s101 = sor.u32 %s99, %s100
    %p102 = scmp.eq.s32.totalorder %s101, 0
    %s104 = sadd.s32 %s103, 1
    %s105 = scalar_select %p102, %s103, %s104
    %p108 = pneg %p102
    %p109 = scmp.eq.s32.totalorder %s9, 3
    %p110 = por %p108, %p109
    %p111 = scmp.ne.s32.totalorder %s103, %s106
    %p112 = scmp.eq.s32.totalorder %s9, 0
    %p113 = por %p111, %p112
    %p114 = scmp.ne.s32.totalorder %s103, %s106
    %p115 = scmp.eq.s32.totalorder %s14, 3
    %p116 = por %p114, %p115
    %p117 = scmp.ne.s32.totalorder %s106, %s107
    %p118 = scmp.eq.s32.totalorder %s14, 0
    %p119 = por %p117, %p118
    %p120 = scmp.ne.s32.totalorder %s106, %s107
    %p121 = scmp.eq.s32.totalorder %s15, 3
    %p122 = por %p120, %p121
    %p124 = scmp.ne.s32.totalorder %s107, %s123
    %p125 = scmp.eq.s32.totalorder %s15, 0
    %p126 = por %p124, %p125
    %p127 = scmp.le.s32.totalorder 1, %s9
    %p128 = scmp.lt.s32.totalorder %s9, 5
    %p129 = pnand %p127, %p128
    %p130 = pneg %p129
    // Predicated region
    $region9: #{hdc_module_forward.15} parent=5 // pred_check
      _
    $region10: #{hdc_module_forward.15} parent=5 // pred_check_branch
      %132 = sbr.rel (%p129) target = $region12
    $region11: #{hdc_module_forward.15} parent=5 // pred_region
      %s133 = ssub.s32 %s9, 1
      // Predicated region
      $region13: #{hdc_module_forward.15} parent=11 // pred_check
        %p134 = pneg %p70
      $region14: #{hdc_module_forward.15} parent=11 // pred_check_branch
        %136 = sbr.rel (%p134) target = $region16
      $region15: #{hdc_module_forward.15} parent=11 // pred_region
        _
      $region16: #{hdc_module_forward.15} parent=11 // pred_fallthru
        _
      // Predicated region
      $region17: #{hdc_module_forward.15} parent=11 // pred_check
        %p137 = pneg %p91
      $region18: #{hdc_module_forward.15} parent=11 // pred_check_branch
        %139 = sbr.rel (%p137) target = $region20
      $region19: #{hdc_module_forward.15} parent=11 // pred_region
        _
      $region20: #{hdc_module_forward.15} parent=11 // pred_fallthru
        _
    $region12: #{hdc_module_forward.15} parent=5 // pred_fallthru
      _
    %p140 = scmp.lt.s32.totalorder %s9, 4
    // Predicated region
    $region21: #{hdc_module_forward.15} parent=5 // pred_check
      %p141 = pneg %p140
    $region22: #{hdc_module_forward.15} parent=5 // pred_check_branch
      %143 = sbr.rel (%p141) target = $region24
    $region23: #{hdc_module_forward.15} parent=5 // pred_region
      // Predicated region
      $region25: #{hdc_module_forward.15} parent=23 // pred_check
        %p144 = pneg %p43
      $region26: #{hdc_module_forward.15} parent=23 // pred_check_branch
        %146 = sbr.rel (%p144) target = $region28
      $region27: #{hdc_module_forward.15} parent=23 // pred_region
        %s147 = smul.u32 16, %s17
        %p148 = scmp.lt.s32.totalorder %s16, 1
        %s149 = scalar_select %p148, %s16, 1
        %p150 = scmp.lt.s32.totalorder %s147, 31
        %s151 = scalar_select %p150, %s147, 31
        %s152 = smul.addr %s149, 32
        %s153 = sadd.s32 %s151, %s152
        %s154 = smul.addr %s153, 8
        %s155 = scalar_lea.vmem %s0, %s154
        %s156 = smul.u32 16, %s17
      $region28: #{hdc_module_forward.15} parent=23 // pred_fallthru
        _
    $region24: #{hdc_module_forward.15} parent=5 // pred_fallthru
      _
    %p157 = scmp.le.s32.totalorder 1, %s9
    %p158 = scmp.lt.s32.totalorder %s9, 5
    %p159 = pnand %p157, %p158
    %p160 = pneg %p159
    // Predicated region
    $region29: #{hdc_module_forward.15} parent=5 // pred_check
      _
    $region30: #{hdc_module_forward.15} parent=5 // pred_check_branch
      %162 = sbr.rel (%p159) target = $region32
    $region31: #{hdc_module_forward.15} parent=5 // pred_region
      %s163 = ssub.s32 %s9, 1
      %s164 = smul.u32 16, %s19
      %p165 = scmp.lt.s32.totalorder %s18, 1
      %s166 = scalar_select %p165, %s18, 1
      %p167 = scmp.lt.s32.totalorder %s164, 31
      %s168 = scalar_select %p167, %s164, 31
      %s169 = smul.addr %s166, 32
      %s170 = sadd.s32 %s168, %s169
      %s171 = smul.addr %s170, 8
      %s172 = scalar_lea.vmem %s0, %s171
      %p173 = pneg %p49
      %p174 = pneg %p46
      %p175 = pneg %p70
      %p176 = pneg %p67
      %p177 = pneg %p91
      %p178 = pneg %p88
      %p179 = pneg %p119
      %p180 = pneg %p116
      %s181 = smul.u32 16, %s19
      %p182 = scmp.lt.s32.totalorder %s18, 1
      %s183 = scalar_select %p182, %s18, 1
      %p184 = scmp.lt.s32.totalorder %s181, 31
      %s185 = scalar_select %p184, %s181, 31
      %s186 = smul.addr %s183, 32
      %s187 = sadd.s32 %s185, %s186
      %s188 = smul.addr %s187, 8
      %s189 = scalar_lea.vmem %s3, %s188
      %s190 = smul.u32 16, %s19
      %p191 = scmp.lt.s32.totalorder %s18, 1
      %s192 = scalar_select %p191, %s18, 1
      %p193 = scmp.lt.s32.totalorder %s190, 31
      %s194 = scalar_select %p193, %s190, 31
      %s195 = smul.addr %s192, 32
      %s196 = sadd.s32 %s194, %s195
      %s197 = smul.addr %s196, 8
      %s198 = scalar_lea.vmem %s0, %s197
      %s199 = smul.u32 16, %s19
      %s200 = smul.u32 16, %s19
      %p201 = scmp.lt.s32.totalorder %s18, 1
      %s202 = scalar_select %p201, %s18, 1
      %p203 = scmp.lt.s32.totalorder %s200, 31
      %s204 = scalar_select %p203, %s200, 31
      %s205 = smul.addr %s202, 32
      %s206 = sadd.s32 %s204, %s205
      %s207 = smul.addr %s206, 8
      %s208 = scalar_lea.vmem %s3, %s207
      %s209 = smul.u32 16, %s19
      %v210 = vld [vmem:[%s198] sm:$0xff]
      %v211 = vld [vmem:[%s198 + $0x8] sm:$0xff]
      %v212 = vld [vmem:[%s198 + $0x10] sm:$0xff]
      %v213 = vld [vmem:[%s198 + $0x18] sm:$0xff]
      %v214 = vld [vmem:[%s198 + $0x20] sm:$0xff]
      %v215 = vld [vmem:[%s198 + $0x28] sm:$0xff]
      %v216 = vld [vmem:[%s198 + $0x30] sm:$0xff]
      %v217 = vld [vmem:[%s198 + $0x38] sm:$0xff]
      %v218 = vld [vmem:[%s198 + $0x40] sm:$0xff]
      %v219 = vld [vmem:[%s198 + $0x48] sm:$0xff]
      %v220 = vld [vmem:[%s198 + $0x50] sm:$0xff]
      %v221 = vld [vmem:[%s198 + $0x58] sm:$0xff]
      %v222 = vld [vmem:[%s198 + $0x60] sm:$0xff]
      %v223 = vld [vmem:[%s198 + $0x68] sm:$0xff]
      %v224 = vld [vmem:[%s198 + $0x70] sm:$0xff]
      %v225 = vld [vmem:[%s198 + $0x78] sm:$0xff]
      %v226 = vld [vmem:[%s1] sm:$0xff]
      %228 = vset.pattern.permute.xlu0 0
      %229 = vperm.xlu0 %228, %v226
      %v230 = vpop.permute.xlu0 %229
      %v232 = vmul.f32 %v210, %v230
      %v233 = vmul.f32 %v211, %v230
      %v234 = vmul.f32 %v212, %v230
      %v235 = vmul.f32 %v213, %v230
      %v236 = vmul.f32 %v214, %v230
      %v237 = vmul.f32 %v215, %v230
      %v238 = vmul.f32 %v216, %v230
      %v239 = vmul.f32 %v217, %v230
      %v240 = vmul.f32 %v218, %v230
      %v241 = vmul.f32 %v219, %v230
      %v242 = vmul.f32 %v220, %v230
      %v243 = vmul.f32 %v221, %v230
      %v244 = vmul.f32 %v222, %v230
      %v245 = vmul.f32 %v223, %v230
      %v246 = vmul.f32 %v224, %v230
      %v247 = vmul.f32 %v225, %v230
      %v248 = vld [vmem:[%s2] sm:$0xff]
      %250 = vset.pattern.permute.xlu0 0
      %251 = vperm.xlu0 %250, %v248
      %v252 = vpop.permute.xlu0 %251
      %v254 = vadd.f32 %v232, %v252
      %v255 = vadd.f32 %v233, %v252
      %v256 = vadd.f32 %v234, %v252
      %v257 = vadd.f32 %v235, %v252
      %v258 = vadd.f32 %v236, %v252
      %v259 = vadd.f32 %v237, %v252
      %v260 = vadd.f32 %v238, %v252
      %v261 = vadd.f32 %v239, %v252
      %v262 = vadd.f32 %v240, %v252
      %v263 = vadd.f32 %v241, %v252
      %v264 = vadd.f32 %v242, %v252
      %v265 = vadd.f32 %v243, %v252
      %v266 = vadd.f32 %v244, %v252
      %v267 = vadd.f32 %v245, %v252
      %v268 = vadd.f32 %v246, %v252
      %v269 = vadd.f32 %v247, %v252
      %v270 = vmax.f32 %v254, 0.0
      %v271 = vmax.f32 %v255, 0.0
      %v272 = vmax.f32 %v256, 0.0
      %v273 = vmax.f32 %v257, 0.0
      %v274 = vmax.f32 %v258, 0.0
      %v275 = vmax.f32 %v259, 0.0
      %v276 = vmax.f32 %v260, 0.0
      %v277 = vmax.f32 %v261, 0.0
      %v278 = vmax.f32 %v262, 0.0
      %v279 = vmax.f32 %v263, 0.0
      %v280 = vmax.f32 %v264, 0.0
      %v281 = vmax.f32 %v265, 0.0
      %v282 = vmax.f32 %v266, 0.0
      %v283 = vmax.f32 %v267, 0.0
      %v284 = vmax.f32 %v268, 0.0
      %v285 = vmax.f32 %v269, 0.0
      %286 = vst [vmem:[%s208] sm:$0xff] %v270
      %287 = vst [vmem:[%s208 + $0x8] sm:$0xff] %v271
      %288 = vst [vmem:[%s208 + $0x10] sm:$0xff] %v272
      %289 = vst [vmem:[%s208 + $0x18] sm:$0xff] %v273
      %290 = vst [vmem:[%s208 + $0x20] sm:$0xff] %v274
      %291 = vst [vmem:[%s208 + $0x28] sm:$0xff] %v275
      %292 = vst [vmem:[%s208 + $0x30] sm:$0xff] %v276
      %293 = vst [vmem:[%s208 + $0x38] sm:$0xff] %v277
      %294 = vst [vmem:[%s208 + $0x40] sm:$0xff] %v278
      %295 = vst [vmem:[%s208 + $0x48] sm:$0xff] %v279
      %296 = vst [vmem:[%s208 + $0x50] sm:$0xff] %v280
      %297 = vst [vmem:[%s208 + $0x58] sm:$0xff] %v281
      %298 = vst [vmem:[%s208 + $0x60] sm:$0xff] %v282
      %299 = vst [vmem:[%s208 + $0x68] sm:$0xff] %v283
      %300 = vst [vmem:[%s208 + $0x70] sm:$0xff] %v284
      %301 = vst [vmem:[%s208 + $0x78] sm:$0xff] %v285
      %s302 = smul.u32 16, %s19
      %p303 = scmp.lt.s32.totalorder %s18, 1
      %s304 = scalar_select %p303, %s18, 1
      %p305 = scmp.lt.s32.totalorder %s302, 31
      %s306 = scalar_select %p305, %s302, 31
      %s307 = smul.addr %s304, 32
      %s308 = sadd.s32 %s306, %s307
      %s309 = smul.addr %s308, 8
      %s310 = scalar_lea.vmem %s3, %s309
      // Predicated region
      $region33: #{hdc_module_forward.15} parent=31 // pred_check
        %p311 = pneg %p116
      $region34: #{hdc_module_forward.15} parent=31 // pred_check_branch
        %313 = sbr.rel (%p311) target = $region36
      $region35: #{hdc_module_forward.15} parent=31 // pred_region
        %s314 = smul.u32 16, %s19
      $region36: #{hdc_module_forward.15} parent=31 // pred_fallthru
        _
    $region32: #{hdc_module_forward.15} parent=5 // pred_fallthru
      _
    %p315 = scmp.le.s32.totalorder 2, %s9
    // Predicated region
    $region37: #{hdc_module_forward.15} parent=5 // pred_check
      %p316 = pneg %p315
    $region38: #{hdc_module_forward.15} parent=5 // pred_check_branch
      %318 = sbr.rel (%p316) target = $region40
    $region39: #{hdc_module_forward.15} parent=5 // pred_region
      %s319 = ssub.s32 %s9, 2
      // Predicated region
      $region41: #{hdc_module_forward.15} parent=39 // pred_check
        %p320 = pneg %p122
      $region42: #{hdc_module_forward.15} parent=39 // pred_check_branch
        %322 = sbr.rel (%p320) target = $region44
      $region43: #{hdc_module_forward.15} parent=39 // pred_region
        %s323 = smul.u32 16, %s21
        %p324 = scmp.lt.s32.totalorder %s20, 1
        %s325 = scalar_select %p324, %s20, 1
        %p326 = scmp.lt.s32.totalorder %s323, 31
        %s327 = scalar_select %p326, %s323, 31
        %s328 = smul.addr %s325, 32
        %s329 = sadd.s32 %s327, %s328
        %s330 = smul.addr %s329, 8
        %s331 = scalar_lea.vmem %s3, %s330
      $region44: #{hdc_module_forward.15} parent=39 // pred_fallthru
        _
    $region40: #{hdc_module_forward.15} parent=5 // pred_fallthru
      _
  $region6: #{hdc_module_forward.15} parent=0 // loop_footer
    %s13 = sadd.s32 1, %s9
  $region7: #{hdc_module_forward.15} parent=0 // loop_footer_branch
    %8 = sbr.rel target = $region3
  $region8: #{hdc_module_forward.15} parent=0 // loop_exit
    _

// kernel: hdc_module_forward.14
$region0: #{hdc_module_forward.14}
  #allocation0 [shape = 'u32[]', space=smem, size = 0x4, offset = 0x4, fixed_abs, tag = 'smem constant byte address 0x4 - core index']
  #allocation1 [shape = 'u32[144,128]{1,0:T(1,128)}', space=vmem, size = 0x12000, scoped, tag = 'internal scratch']
  %s0 = inlined_call_operand.vmem [shape: f32[2,16,4096], index: 0, kind: input, shape index: {}]
  %s1 = inlined_call_operand.vmem [shape: f32[8,16], index: 1, kind: input, shape index: {}]
  %s2 = inlined_call_operand.vmem [shape: f32[8,1], index: 2, kind: input, shape index: {}]
  %s3 = inlined_call_operand.vmem [shape: f32[2,8,4096], index: 3, kind: output, shape index: {0}]
  %s4 = inlined_call_operand.vmem [shape: f32[2,2,8,1], index: 4, kind: output, shape index: {1}]
  %s5 = inlined_call_operand.vmem [shape: f32[2,2,8,1], index: 5, kind: output, shape index: {2}]
  %6 = xla_tuple %s3, %s4, %s5
  %s7 = sld [smem:[#allocation0]]
  $region84: #{hdc_module_forward.14} parent=0
    _
  %s9 = ssub.s32 1, %s7
  %s10 = scalar_select 0, %s9, %s7
  $region1: #{hdc_module_forward.14} parent=0
    #allocation2 [shape = 'u8[262144]{0}', space=vmem, size = 0x40000, scoped, tag = 'input window, operand 0']
    loop: start=0, step=1, limit=6
    $region2: #{hdc_module_forward.14} parent=1 // loop_pre_header
      _
    $region3: #{hdc_module_forward.14} parent=1 // loop_header
      %s12 = sphi 0, %s16
      %p13 = scmp.ge.s32.totalorder %s12, 6
      %s19 = sphi 0, %s31
      %s20 = sphi 0, %s27
      %s21 = sphi 0, %s19
      %s22 = sphi 0, %s20
      %s23 = sphi 0, %s21
      %s24 = sphi 0, %s22
      %s36 = sphi 0, %s38
      %s39 = sphi 0, %s36
      %s40 = sphi 0, %s39
      %s56 = sphi 0, %s40
      %s60 = sphi 0, %s60
      %s62 = sphi 0, %s60
      %s63 = sphi 0, %s62
      %s77 = sphi 0, %s63
      %s81 = sphi 0, %s81
      %s83 = sphi 0, %s81
      %s84 = sphi 0, %s83
      %s98 = sphi 0, %s84
      %s106 = sphi 0, %s108
      %s109 = sphi 0, %s106
      %s110 = sphi 0, %s109
      %s126 = sphi 0, %s110
      %s134 = sphi 0, %s136
      %s137 = sphi 0, %s134
      %s138 = sphi 0, %s137
      %s154 = sphi 0, %s138
      %s162 = sphi 0, %s164
      %s165 = sphi 0, %s162
      %s166 = sphi 0, %s165
      %s182 = sphi 0, %s166
    $region4: #{hdc_module_forward.14} parent=1 // loop_header_branch
      %15 = sbr.rel (%p13) target = $region8
    $region5: #{hdc_module_forward.14} parent=1 // loop_body
      %s17 = ssub.s32 %s12, 1
      %s18 = ssub.s32 %s12, 2
      %s25 = sadd.s32 1, %s20
      %p26 = scmp.ge.s32.totalorder %s25, 2
      %s27 = scalar_select %p26, 0, %s25
      %s28 = sadd.s32 1, %s19
      %s29 = scalar_select %p26, %s28, %s19
      %p30 = scmp.ge.s32.totalorder %s29, 2
      %s31 = scalar_select %p30, 0, %s29
      %s32 = ssub.s32 %s19, %s31
      %s33 = ssub.s32 %s20, %s27
      %s34 = sor.u32 %s32, %s33
      %p35 = scmp.eq.s32.totalorder %s34, 0
      %s37 = sadd.s32 %s36, 1
      %s38 = scalar_select %p35, %s36, %s37
      %p41 = pneg %p35
      %p42 = scmp.eq.s32.totalorder %s12, 3
      %p43 = por %p41, %p42
      %p44 = scmp.ne.s32.totalorder %s36, %s39
      %p45 = scmp.eq.s32.totalorder %s12, 0
      %p46 = por %p44, %p45
      %p47 = scmp.ne.s32.totalorder %s36, %s39
      %p48 = scmp.eq.s32.totalorder %s17, 3
      %p49 = por %p47, %p48
      %p50 = scmp.ne.s32.totalorder %s39, %s40
      %p51 = scmp.eq.s32.totalorder %s17, 0
      %p52 = por %p50, %p51
      %p53 = scmp.ne.s32.totalorder %s39, %s40
      %p54 = scmp.eq.s32.totalorder %s18, 3
      %p55 = por %p53, %p54
      %p57 = scmp.ne.s32.totalorder %s40, %s56
      %p58 = scmp.eq.s32.totalorder %s18, 0
      %p59 = por %p57, %p58
      %s61 = sadd.s32 %s60, 1
      %p64 = scmp.eq.s32.totalorder %s12, 3
      %p65 = scmp.ne.s32.totalorder %s60, %s62
      %p66 = scmp.eq.s32.totalorder %s12, 0
      %p67 = por %p65, %p66
      %p68 = scmp.ne.s32.totalorder %s60, %s62
      %p69 = scmp.eq.s32.totalorder %s17, 3
      %p70 = por %p68, %p69
      %p71 = scmp.ne.s32.totalorder %s62, %s63
      %p72 = scmp.eq.s32.totalorder %s17, 0
      %p73 = por %p71, %p72
      %p74 = scmp.ne.s32.totalorder %s62, %s63
      %p75 = scmp.eq.s32.totalorder %s18, 3
      %p76 = por %p74, %p75
      %p78 = scmp.ne.s32.totalorder %s63, %s77
      %p79 = scmp.eq.s32.totalorder %s18, 0
      %p80 = por %p78, %p79
      %s82 = sadd.s32 %s81, 1
      %p85 = scmp.eq.s32.totalorder %s12, 3
      %p86 = scmp.ne.s32.totalorder %s81, %s83
      %p87 = scmp.eq.s32.totalorder %s12, 0
      %p88 = por %p86, %p87
      %p89 = scmp.ne.s32.totalorder %s81, %s83
      %p90 = scmp.eq.s32.totalorder %s17, 3
      %p91 = por %p89, %p90
      %p92 = scmp.ne.s32.totalorder %s83, %s84
      %p93 = scmp.eq.s32.totalorder %s17, 0
      %p94 = por %p92, %p93
      %p95 = scmp.ne.s32.totalorder %s83, %s84
      %p96 = scmp.eq.s32.totalorder %s18, 3
      %p97 = por %p95, %p96
      %p99 = scmp.ne.s32.totalorder %s84, %s98
      %p100 = scmp.eq.s32.totalorder %s18, 0
      %p101 = por %p99, %p100
      %s102 = ssub.s32 %s19, %s31
      %s103 = ssub.s32 %s20, %s27
      %s104 = sor.u32 %s102, %s103
      %p105 = scmp.eq.s32.totalorder %s104, 0
      %s107 = sadd.s32 %s106, 1
      %s108 = scalar_select %p105, %s106, %s107
      %p111 = pneg %p105
      %p112 = scmp.eq.s32.totalorder %s12, 3
      %p113 = por %p111, %p112
      %p114 = scmp.ne.s32.totalorder %s106, %s109
      %p115 = scmp.eq.s32.totalorder %s12, 0
      %p116 = por %p114, %p115
      %p117 = scmp.ne.s32.totalorder %s106, %s109
      %p118 = scmp.eq.s32.totalorder %s17, 3
      %p119 = por %p117, %p118
      %p120 = scmp.ne.s32.totalorder %s109, %s110
      %p121 = scmp.eq.s32.totalorder %s17, 0
      %p122 = por %p120, %p121
      %p123 = scmp.ne.s32.totalorder %s109, %s110
      %p124 = scmp.eq.s32.totalorder %s18, 3
      %p125 = por %p123, %p124
      %p127 = scmp.ne.s32.totalorder %s110, %s126
      %p128 = scmp.eq.s32.totalorder %s18, 0
      %p129 = por %p127, %p128
      %s130 = ssub.s32 %s19, %s31
      %s131 = ssub.s32 %s20, %s27
      %s132 = sor.u32 %s130, %s131
      %p133 = scmp.eq.s32.totalorder %s132, 0
      %s135 = sadd.s32 %s134, 1
      %s136 = scalar_select %p133, %s134, %s135
      %p139 = pneg %p133
      %p140 = scmp.eq.s32.totalorder %s12, 3
      %p141 = por %p139, %p140
      %p142 = scmp.ne.s32.totalorder %s134, %s137
      %p143 = scmp.eq.s32.totalorder %s12, 0
      %p144 = por %p142, %p143
      %p145 = scmp.ne.s32.totalorder %s134, %s137
      %p146 = scmp.eq.s32.totalorder %s17, 3
      %p147 = por %p145, %p146
      %p148 = scmp.ne.s32.totalorder %s137, %s138
      %p149 = scmp.eq.s32.totalorder %s17, 0
      %p150 = por %p148, %p149
      %p151 = scmp.ne.s32.totalorder %s137, %s138
      %p152 = scmp.eq.s32.totalorder %s18, 3
      %p153 = por %p151, %p152
      %p155 = scmp.ne.s32.totalorder %s138, %s154
      %p156 = scmp.eq.s32.totalorder %s18, 0
      %p157 = por %p155, %p156
      %s158 = ssub.s32 %s19, %s31
      %s159 = ssub.s32 %s20, %s27
      %s160 = sor.u32 %s158, %s159
      %p161 = scmp.eq.s32.totalorder %s160, 0
      %s163 = sadd.s32 %s162, 1
      %s164 = scalar_select %p161, %s162, %s163
      %p167 = pneg %p161
      %p168 = scmp.eq.s32.totalorder %s12, 3
      %p169 = por %p167, %p168
      %p170 = scmp.ne.s32.totalorder %s162, %s165
      %p171 = scmp.eq.s32.totalorder %s12, 0
      %p172 = por %p170, %p171
      %p173 = scmp.ne.s32.totalorder %s162, %s165
      %p174 = scmp.eq.s32.totalorder %s17, 3
      %p175 = por %p173, %p174
      %p176 = scmp.ne.s32.totalorder %s165, %s166
      %p177 = scmp.eq.s32.totalorder %s17, 0
      %p178 = por %p176, %p177
      %p179 = scmp.ne.s32.totalorder %s165, %s166
      %p180 = scmp.eq.s32.totalorder %s18, 3
      %p181 = por %p179, %p180
      %p183 = scmp.ne.s32.totalorder %s166, %s182
      %p184 = scmp.eq.s32.totalorder %s18, 0
      %p185 = por %p183, %p184
      %p186 = scmp.le.s32.totalorder 1, %s12
      %p187 = scmp.lt.s32.totalorder %s12, 5
      %p188 = pnand %p186, %p187
      %p189 = pneg %p188
      // Predicated region
      $region9: #{hdc_module_forward.14} parent=5 // pred_check
        _
      $region10: #{hdc_module_forward.14} parent=5 // pred_check_branch
        %191 = sbr.rel (%p188) target = $region12
      $region11: #{hdc_module_forward.14} parent=5 // pred_region
        %s192 = ssub.s32 %s12, 1
        // Predicated region
        $region13: #{hdc_module_forward.14} parent=11 // pred_check
          %p193 = pneg %p73
        $region14: #{hdc_module_forward.14} parent=11 // pred_check_branch
          %195 = sbr.rel (%p193) target = $region16
        $region15: #{hdc_module_forward.14} parent=11 // pred_region
          _
        $region16: #{hdc_module_forward.14} parent=11 // pred_fallthru
          _
        // Predicated region
        $region17: #{hdc_module_forward.14} parent=11 // pred_check
          %p196 = pneg %p94
        $region18: #{hdc_module_forward.14} parent=11 // pred_check_branch
          %198 = sbr.rel (%p196) target = $region20
        $region19: #{hdc_module_forward.14} parent=11 // pred_region
          _
        $region20: #{hdc_module_forward.14} parent=11 // pred_fallthru
          _
      $region12: #{hdc_module_forward.14} parent=5 // pred_fallthru
        _
      %p199 = scmp.lt.s32.totalorder %s12, 4
      // Predicated region
      $region21: #{hdc_module_forward.14} parent=5 // pred_check
        %p200 = pneg %p199
      $region22: #{hdc_module_forward.14} parent=5 // pred_check_branch
        %202 = sbr.rel (%p200) target = $region24
      $region23: #{hdc_module_forward.14} parent=5 // pred_region
        // Predicated region
        $region25: #{hdc_module_forward.14} parent=23 // pred_check
          %p203 = pneg %p46
        $region26: #{hdc_module_forward.14} parent=23 // pred_check_branch
          %205 = sbr.rel (%p203) target = $region28
        $region27: #{hdc_module_forward.14} parent=23 // pred_region
          %s206 = sand.u32 %s36, 1
          %s207 = sand.u32 %s36, 1
          %s208 = smul.addr %s207, 256
          %s209 = scalar_lea.vmem [#allocation2], %s208
          %s210 = smul.u32 16, %s20
          %s211 = smul.addr %s19, 64
          %s212 = sadd.s32 %s210, %s211
          %s213 = smul.addr %s212, 8
          %s214 = scalar_lea.vmem %s0, %s213
          // Predicated region
          $region29: #{hdc_module_forward.14} parent=27 // pred_check
            _
          $region30: #{hdc_module_forward.14} parent=27 // pred_check_branch
            %216 = sbr.rel (0) target = $region32
          $region31: #{hdc_module_forward.14} parent=27 // pred_region
            // Predicated region
            $region33: #{hdc_module_forward.14} parent=31 // pred_check
              _
            $region34: #{hdc_module_forward.14} parent=31 // pred_check_branch
              %218 = sbr.rel (0) target = $region36
            $region35: #{hdc_module_forward.14} parent=31 // pred_region
              loop: start=0, step=1, limit=1
              $region37: #{hdc_module_forward.14} parent=35 // loop_pre_header
                _
              $region38: #{hdc_module_forward.14} parent=35 // loop_header
                %s220 = sphi 0, %s224
                %p221 = scmp.ge.s32.totalorder %s220, 1
                %s225 = sphi %s214, %s214
                %s226 = sphi %s209, %s209
              $region39: #{hdc_module_forward.14} parent=35 // loop_header_branch
                %223 = sbr.rel (%p221) target = $region43
              $region40: #{hdc_module_forward.14} parent=35 // loop_body
                %v227 = vld [vmem:[%s225] sm:$0xff]
                %228 = vst [vmem:[%s226] sm:$0xff] %v227
                %v229 = vld [vmem:[%s225 + $0x8] sm:$0xff]
                %230 = vst [vmem:[%s226 + $0x8] sm:$0xff] %v229
                %v231 = vld [vmem:[%s225 + $0x10] sm:$0xff]
                %232 = vst [vmem:[%s226 + $0x10] sm:$0xff] %v231
                %v233 = vld [vmem:[%s225 + $0x18] sm:$0xff]
                %234 = vst [vmem:[%s226 + $0x18] sm:$0xff] %v233
                %v235 = vld [vmem:[%s225 + $0x20] sm:$0xff]
                %236 = vst [vmem:[%s226 + $0x20] sm:$0xff] %v235
                %v237 = vld [vmem:[%s225 + $0x28] sm:$0xff]
                %238 = vst [vmem:[%s226 + $0x28] sm:$0xff] %v237
                %v239 = vld [vmem:[%s225 + $0x30] sm:$0xff]
                %240 = vst [vmem:[%s226 + $0x30] sm:$0xff] %v239
                %v241 = vld [vmem:[%s225 + $0x38] sm:$0xff]
                %242 = vst [vmem:[%s226 + $0x38] sm:$0xff] %v241
                %v243 = vld [vmem:[%s225 + $0x40] sm:$0xff]
                %244 = vst [vmem:[%s226 + $0x40] sm:$0xff] %v243
                %v245 = vld [vmem:[%s225 + $0x48] sm:$0xff]
                %246 = vst [vmem:[%s226 + $0x48] sm:$0xff] %v245
                %v247 = vld [vmem:[%s225 + $0x50] sm:$0xff]
                %248 = vst [vmem:[%s226 + $0x50] sm:$0xff] %v247
                %v249 = vld [vmem:[%s225 + $0x58] sm:$0xff]
                %250 = vst [vmem:[%s226 + $0x58] sm:$0xff] %v249
                %v251 = vld [vmem:[%s225 + $0x60] sm:$0xff]
                %252 = vst [vmem:[%s226 + $0x60] sm:$0xff] %v251
                %v253 = vld [vmem:[%s225 + $0x68] sm:$0xff]
                %254 = vst [vmem:[%s226 + $0x68] sm:$0xff] %v253
                %v255 = vld [vmem:[%s225 + $0x70] sm:$0xff]
                %256 = vst [vmem:[%s226 + $0x70] sm:$0xff] %v255
                %v257 = vld [vmem:[%s225 + $0x78] sm:$0xff]
                %258 = vst [vmem:[%s226 + $0x78] sm:$0xff] %v257
                %v259 = vld [vmem:[%s225 + $0x100] sm:$0xff]
                %260 = vst [vmem:[%s226 + $0x80] sm:$0xff] %v259
                %v261 = vld [vmem:[%s225 + $0x108] sm:$0xff]
                %262 = vst [vmem:[%s226 + $0x88] sm:$0xff] %v261
                %v263 = vld [vmem:[%s225 + $0x110] sm:$0xff]
                %264 = vst [vmem:[%s226 + $0x90] sm:$0xff] %v263
                %v265 = vld [vmem:[%s225 + $0x118] sm:$0xff]
                %266 = vst [vmem:[%s226 + $0x98] sm:$0xff] %v265
                %v267 = vld [vmem:[%s225 + $0x120] sm:$0xff]
                %268 = vst [vmem:[%s226 + $0xa0] sm:$0xff] %v267
                %v269 = vld [vmem:[%s225 + $0x128] sm:$0xff]
                %270 = vst [vmem:[%s226 + $0xa8] sm:$0xff] %v269
                %v271 = vld [vmem:[%s225 + $0x130] sm:$0xff]
                %272 = vst [vmem:[%s226 + $0xb0] sm:$0xff] %v271
                %v273 = vld [vmem:[%s225 + $0x138] sm:$0xff]
                %274 = vst [vmem:[%s226 + $0xb8] sm:$0xff] %v273
                %v275 = vld [vmem:[%s225 + $0x140] sm:$0xff]
                %276 = vst [vmem:[%s226 + $0xc0] sm:$0xff] %v275
                %v277 = vld [vmem:[%s225 + $0x148] sm:$0xff]
                %278 = vst [vmem:[%s226 + $0xc8] sm:$0xff] %v277
                %v279 = vld [vmem:[%s225 + $0x150] sm:$0xff]
                %280 = vst [vmem:[%s226 + $0xd0] sm:$0xff] %v279
                %v281 = vld [vmem:[%s225 + $0x158] sm:$0xff]
                %282 = vst [vmem:[%s226 + $0xd8] sm:$0xff] %v281
                %v283 = vld [vmem:[%s225 + $0x160] sm:$0xff]
                %284 = vst [vmem:[%s226 + $0xe0] sm:$0xff] %v283
                %v285 = vld [vmem:[%s225 + $0x168] sm:$0xff]
                %286 = vst [vmem:[%s226 + $0xe8] sm:$0xff] %v285
                %v287 = vld [vmem:[%s225 + $0x170] sm:$0xff]
                %288 = vst [vmem:[%s226 + $0xf0] sm:$0xff] %v287
                %v289 = vld [vmem:[%s225 + $0x178] sm:$0xff]
                %290 = vst [vmem:[%s226 + $0xf8] sm:$0xff] %v289
              $region41: #{hdc_module_forward.14} parent=35 // loop_footer
                %s224 = sadd.s32 1, %s220
              $region42: #{hdc_module_forward.14} parent=35 // loop_footer_branch
                %219 = sbr.rel target = $region38
              $region43: #{hdc_module_forward.14} parent=35 // loop_exit
                _
            $region36: #{hdc_module_forward.14} parent=31 // pred_fallthru
              _
            // Predicated region
            $region44: #{hdc_module_forward.14} parent=31 // pred_check
              _
            $region45: #{hdc_module_forward.14} parent=31 // pred_check_branch
              %292 = sbr.rel target = $region47
            $region46: #{hdc_module_forward.14} parent=31 // pred_region
              _
            $region47: #{hdc_module_forward.14} parent=31 // pred_fallthru
              _
          $region32: #{hdc_module_forward.14} parent=27 // pred_fallthru
            _
          %293 = vnop
        $region28: #{hdc_module_forward.14} parent=23 // pred_fallthru
          _
      $region24: #{hdc_module_forward.14} parent=5 // pred_fallthru
        _
      %p294 = scmp.le.s32.totalorder 1, %s12
      %p295 = scmp.lt.s32.totalorder %s12, 5
      %p296 = pnand %p294, %p295
      %p297 = pneg %p296
      // Predicated region
      $region48: #{hdc_module_forward.14} parent=5 // pred_check
        _
      $region49: #{hdc_module_forward.14} parent=5 // pred_check_branch
        %299 = sbr.rel (%p296) target = $region51
      $region50: #{hdc_module_forward.14} parent=5 // pred_region
        %s300 = ssub.s32 %s12, 1
        %s301 = sand.u32 %s39, 1
        %s302 = sand.u32 %s39, 1
        %s303 = smul.addr %s302, 256
        %s304 = scalar_lea.vmem [#allocation2], %s303
        // Predicated region
        $region52: #{hdc_module_forward.14} parent=50 // pred_check
          %p305 = pneg %p52
        $region53: #{hdc_module_forward.14} parent=50 // pred_check_branch
          %307 = sbr.rel (%p305) target = $region55
        $region54: #{hdc_module_forward.14} parent=50 // pred_region
          _
        $region55: #{hdc_module_forward.14} parent=50 // pred_fallthru
          _
        %s308 = sand.u32 %s39, 1
        %s309 = sand.u32 %s39, 1
        %s310 = smul.addr %s309, 256
        %s311 = scalar_lea.vmem [#allocation2], %s310
        %p312 = pneg %p52
        %p313 = pneg %p49
        %p314 = pneg %p73
        %p315 = pneg %p70
        %p316 = pneg %p94
        %p317 = pneg %p91
        %p318 = pneg %p122
        %p319 = pneg %p119
        %s320 = smul.u32 16, %s22
        %p321 = scmp.lt.s32.totalorder %s21, 1
        %s322 = scalar_select %p321, %s21, 1
        %p323 = scmp.lt.s32.totalorder %s320, 31
        %s324 = scalar_select %p323, %s320, 31
        %s325 = smul.addr %s322, 32
        %s326 = sadd.s32 %s324, %s325
        %s327 = smul.addr %s326, 8
        %s328 = scalar_lea.vmem %s3, %s327
        %p329 = pneg %p150
        %p330 = pneg %p147
        %p331 = scmp.lt.s32.totalorder %s21, 1
        %s332 = scalar_select %p331, %s21, 1
        %p333 = scmp.lt.s32.totalorder %s22, 1
        %s334 = scalar_select %p333, %s22, 1
        %s335 = smul.addr %s332, 2
        %s336 = sadd.s32 %s334, %s335
        %s337 = smul.addr %s336, 8
        %s338 = scalar_lea.vmem %s4, %s337
        %p339 = pneg %p178
        %p340 = pneg %p175
        %p341 = scmp.lt.s32.totalorder %s21, 1
        %s342 = scalar_select %p341, %s21, 1
        %p343 = scmp.lt.s32.totalorder %s22, 1
        %s344 = scalar_select %p343, %s22, 1
        %s345 = smul.addr %s342, 2
        %s346 = sadd.s32 %s344, %s345
        %s347 = smul.addr %s346, 8
        %s348 = scalar_lea.vmem %s5, %s347
        %s349 = smul.u32 16, %s22
        %s350 = smul.u32 16, %s22
        %p351 = scmp.lt.s32.totalorder %s21, 1
        %s352 = scalar_select %p351, %s21, 1
        %p353 = scmp.lt.s32.totalorder %s350, 31
        %s354 = scalar_select %p353, %s350, 31
        %s355 = smul.addr %s352, 32
        %s356 = sadd.s32 %s354, %s355
        %s357 = smul.addr %s356, 8
        %s358 = scalar_lea.vmem %s3, %s357
        %s359 = smul.u32 16, %s22
        %p360 = scmp.lt.s32.totalorder %s21, 1
        %s361 = scalar_select %p360, %s21, 1
        %p362 = scmp.lt.s32.totalorder %s22, 1
        %s363 = scalar_select %p362, %s22, 1
        %s364 = smul.addr %s361, 2
        %s365 = sadd.s32 %s363, %s364
        %s366 = smul.addr %s365, 8
        %s367 = scalar_lea.vmem %s4, %s366
        %p368 = scmp.lt.s32.totalorder %s21, 1
        %s369 = scalar_select %p368, %s21, 1
        %p370 = scmp.lt.s32.totalorder %s22, 1
        %s371 = scalar_select %p370, %s22, 1
        %s372 = smul.addr %s369, 2
        %s373 = sadd.s32 %s371, %s372
        %s374 = smul.addr %s373, 8
        %s375 = scalar_lea.vmem %s5, %s374
        %v376 = vld [vmem:[%s1] sm:$0xff]
        %v377 = vld [vmem:[%s304] sm:$0xff]
        %v378 = vld [vmem:[%s304 + $0x8] sm:$0xff]
        %v379 = vld [vmem:[%s304 + $0x10] sm:$0xff]
        %v380 = vld [vmem:[%s304 + $0x18] sm:$0xff]
        %v381 = vld [vmem:[%s304 + $0x20] sm:$0xff]
        %v382 = vld [vmem:[%s304 + $0x28] sm:$0xff]
        %v383 = vld [vmem:[%s304 + $0x30] sm:$0xff]
        %v384 = vld [vmem:[%s304 + $0x38] sm:$0xff]
        %v385 = vld [vmem:[%s304 + $0x40] sm:$0xff]
        %v386 = vld [vmem:[%s304 + $0x48] sm:$0xff]
        %v387 = vld [vmem:[%s304 + $0x50] sm:$0xff]
        %v388 = vld [vmem:[%s304 + $0x58] sm:$0xff]
        %v389 = vld [vmem:[%s304 + $0x60] sm:$0xff]
        %v390 = vld [vmem:[%s304 + $0x68] sm:$0xff]
        %v391 = vld [vmem:[%s304 + $0x70] sm:$0xff]
        %v392 = vld [vmem:[%s304 + $0x78] sm:$0xff]
        %v393 = vld [vmem:[%s304 + $0x80] sm:$0xff]
        %v394 = vld [vmem:[%s304 + $0x88] sm:$0xff]
        %v395 = vld [vmem:[%s304 + $0x90] sm:$0xff]
        %v396 = vld [vmem:[%s304 + $0x98] sm:$0xff]
        %v397 = vld [vmem:[%s304 + $0xa0] sm:$0xff]
        %v398 = vld [vmem:[%s304 + $0xa8] sm:$0xff]
        %v399 = vld [vmem:[%s304 + $0xb0] sm:$0xff]
        %v400 = vld [vmem:[%s304 + $0xb8] sm:$0xff]
        %v401 = vld [vmem:[%s304 + $0xc0] sm:$0xff]
        %v402 = vld [vmem:[%s304 + $0xc8] sm:$0xff]
        %v403 = vld [vmem:[%s304 + $0xd0] sm:$0xff]
        %v404 = vld [vmem:[%s304 + $0xd8] sm:$0xff]
        %v405 = vld [vmem:[%s304 + $0xe0] sm:$0xff]
        %v406 = vld [vmem:[%s304 + $0xe8] sm:$0xff]
        %v407 = vld [vmem:[%s304 + $0xf0] sm:$0xff]
        %v408 = vld [vmem:[%s304 + $0xf8] sm:$0xff]
        %v409 = vld [vmem:[%s2] sm:$0xff]
        %411 = vset.pattern.permute.xlu0 0
        %412 = vperm.xlu0 %411, %v409
        %v413 = vpop.permute.xlu0 %412
        %vm415 = vcmask 130048
        %v417 = vsel %vm415, %v376, 0
        %419 = vmatprep.subr.mxu0 %v378
        %420 = vmatpush1.msra.mxu0 %v377
        %421 = vmatprep.subr.mxu0 %v394
        %422 = vmatpush1.msra.mxu0 %v393
        %423 = vmatprep.subr.mxu0 0.0
        %424 = vmatpush1.msra.mxu0 0.0
        %425 = vmatprep.subr.mxu0 0.0
        %426 = vmatpush1.msra.mxu0 0.0
        %427 = vmatprep.subr.mxu0 0.0
        %428 = vmatpush1.msra.mxu0 0.0
        %429 = vmatprep.subr.mxu0 0.0
        %430 = vmatpush1.msra.mxu0 0.0
        %431 = vmatprep.subr.mxu0 0.0
        %432 = vmatpush1.msra.mxu0 0.0
        %433 = vmatprep.subr.mxu0 0.0
        %434 = vmatpush1.msra.mxu0 0.0
        %435 = vmatprep.subr.mxu0 0.0
        %436 = vmatpush1.msra.mxu0 0.0
        %437 = vmatprep.subr.mxu0 0.0
        %438 = vmatpush1.msra.mxu0 0.0
        %439 = vmatprep.subr.mxu0 0.0
        %440 = vmatpush1.msra.mxu0 0.0
        %441 = vmatprep.subr.mxu0 0.0
        %442 = vmatpush1.msra.mxu0 0.0
        %443 = vmatprep.subr.mxu0 0.0
        %444 = vmatpush1.msra.mxu0 0.0
        %445 = vmatprep.subr.mxu0 0.0
        %446 = vmatpush1.msra.mxu0 0.0
        %447 = vmatprep.subr.mxu0 0.0
        %448 = vmatpush1.msra.mxu0 0.0
        %449 = vmatprep.subr.mxu0 0.0
        %450 = vmatpush1.msra.mxu0 0.0
        %451 = vmatprep.subr.mxu0 0.0
        %452 = vmatpush1.msra.mxu0 0.0
        %453 = vmatprep.subr.mxu0 0.0
        %454 = vmatpush1.msra.mxu0 0.0
        %455 = vmatprep.subr.mxu0 0.0
        %456 = vmatpush1.msra.mxu0 0.0
        %457 = vmatprep.subr.mxu0 0.0
        %458 = vmatpush1.msra.mxu0 0.0
        %459 = vmatprep.subr.mxu0 0.0
        %460 = vmatpush1.msra.mxu0 0.0
        %461 = vmatprep.subr.mxu0 0.0
        %462 = vmatpush1.msra.mxu0 0.0
        %463 = vmatprep.subr.mxu0 0.0
        %464 = vmatpush1.msra.mxu0 0.0
        %465 = vmatprep.subr.mxu0 0.0
        %466 = vmatpush1.msra.mxu0 0.0
        %467 = vmatprep.subr.mxu0 0.0
        %468 = vmatpush1.msra.mxu0 0.0
        %469 = vmatprep.subr.mxu0 0.0
        %470 = vmatpush1.msra.mxu0 0.0
        %471 = vmatprep.subr.mxu0 0.0
        %472 = vmatpush1.msra.mxu0 0.0
        %473 = vmatprep.subr.mxu0 0.0
        %474 = vmatpush1.msra.mxu0 0.0
        %475 = vmatprep.subr.mxu0 0.0
        %476 = vmatpush1.msra.mxu0 0.0
        %477 = vmatprep.subr.mxu0 0.0
        %478 = vmatpush1.msra.mxu0 0.0
        %479 = vmatprep.subr.mxu0 0.0
        %480 = vmatpush1.msra.mxu0 0.0
        %481 = vmatprep.subr.mxu0 0.0
        %482 = vmatpush1.msra.mxu0 0.0
        %483 = vmatprep.mubr.f32.mxu0 0.0
        %484 = vmatmul.mubr.f32.gmra.mrb[0].mxu0 %v417
        %v485 = vpop.f32.mrb[0].mxu0
        %v486 = vadd.f32 %v413, %v485
        %v487 = vpop.f32.mrb[0].mxu0
        %v488 = vadd.f32 %v413, %v487
        %489 = vdwg.mxu0
        %490 = vmatprep.subr.mxu0 %v380
        %491 = vmatpush1.msra.mxu0 %v379
        %492 = vmatprep.subr.mxu0 %v396
        %493 = vmatpush1.msra.mxu0 %v395
        %494 = vmatprep.subr.mxu0 0.0
        %495 = vmatpush1.msra.mxu0 0.0
        %496 = vmatprep.subr.mxu0 0.0
        %497 = vmatpush1.msra.mxu0 0.0
        %498 = vmatprep.subr.mxu0 0.0
        %499 = vmatpush1.msra.mxu0 0.0
        %500 = vmatprep.subr.mxu0 0.0
        %501 = vmatpush1.msra.mxu0 0.0
        %502 = vmatprep.subr.mxu0 0.0
        %503 = vmatpush1.msra.mxu0 0.0
        %504 = vmatprep.subr.mxu0 0.0
        %505 = vmatpush1.msra.mxu0 0.0
        %506 = vmatprep.subr.mxu0 0.0
        %507 = vmatpush1.msra.mxu0 0.0
        %508 = vmatprep.subr.mxu0 0.0
        %509 = vmatpush1.msra.mxu0 0.0
        %510 = vmatprep.subr.mxu0 0.0
        %511 = vmatpush1.msra.mxu0 0.0
        %512 = vmatprep.subr.mxu0 0.0
        %513 = vmatpush1.msra.mxu0 0.0
        %514 = vmatprep.subr.mxu0 0.0
        %515 = vmatpush1.msra.mxu0 0.0
        %516 = vmatprep.subr.mxu0 0.0
        %517 = vmatpush1.msra.mxu0 0.0
        %518 = vmatprep.subr.mxu0 0.0
        %519 = vmatpush1.msra.mxu0 0.0
        %520 = vmatprep.subr.mxu0 0.0
        %521 = vmatpush1.msra.mxu0 0.0
        %522 = vmatprep.subr.mxu0 0.0
        %523 = vmatpush1.msra.mxu0 0.0
        %524 = vmatprep.subr.mxu0 0.0
        %525 = vmatpush1.msra.mxu0 0.0
        %526 = vmatprep.subr.mxu0 0.0
        %527 = vmatpush1.msra.mxu0 0.0
        %528 = vmatprep.subr.mxu0 0.0
        %529 = vmatpush1.msra.mxu0 0.0
        %530 = vmatprep.subr.mxu0 0.0
        %531 = vmatpush1.msra.mxu0 0.0
        %532 = vmatprep.subr.mxu0 0.0
        %533 = vmatpush1.msra.mxu0 0.0
        %534 = vmatprep.subr.mxu0 0.0
        %535 = vmatpush1.msra.mxu0 0.0
        %536 = vmatprep.subr.mxu0 0.0
        %537 = vmatpush1.msra.mxu0 0.0
        %538 = vmatprep.subr.mxu0 0.0
        %539 = vmatpush1.msra.mxu0 0.0
        %540 = vmatprep.subr.mxu0 0.0
        %541 = vmatpush1.msra.mxu0 0.0
        %542 = vmatprep.subr.mxu0 0.0
        %543 = vmatpush1.msra.mxu0 0.0
        %544 = vmatprep.subr.mxu0 0.0
        %545 = vmatpush1.msra.mxu0 0.0
        %546 = vmatprep.subr.mxu0 0.0
        %547 = vmatpush1.msra.mxu0 0.0
        %548 = vmatprep.subr.mxu0 0.0
        %549 = vmatpush1.msra.mxu0 0.0
        %550 = vmatprep.subr.mxu0 0.0
        %551 = vmatpush1.msra.mxu0 0.0
        %552 = vmatprep.subr.mxu0 0.0
        %553 = vmatpush1.msra.mxu0 0.0
        %554 = vmatprep.mubr.f32.mxu0 0.0
        %555 = vmatmul.mubr.f32.gmra.mrb[0].mxu0 %v417
        %v556 = vpop.f32.mrb[0].mxu0
        %v557 = vadd.f32 %v413, %v556
        %v558 = vpop.f32.mrb[0].mxu0
        %v559 = vadd.f32 %v413, %v558
        %560 = vdwg.mxu0
        %561 = vmatprep.subr.mxu0 %v382
        %562 = vmatpush1.msra.mxu0 %v381
        %563 = vmatprep.subr.mxu0 %v398
        %564 = vmatpush1.msra.mxu0 %v397
        %565 = vmatprep.subr.mxu0 0.0
        %566 = vmatpush1.msra.mxu0 0.0
        %567 = vmatprep.subr.mxu0 0.0
        %568 = vmatpush1.msra.mxu0 0.0
        %569 = vmatprep.subr.mxu0 0.0
        %570 = vmatpush1.msra.mxu0 0.0
        %571 = vmatprep.subr.mxu0 0.0
        %572 = vmatpush1.msra.mxu0 0.0
        %573 = vmatprep.subr.mxu0 0.0
        %574 = vmatpush1.msra.mxu0 0.0
        %575 = vmatprep.subr.mxu0 0.0
        %576 = vmatpush1.msra.mxu0 0.0
        %577 = vmatprep.subr.mxu0 0.0
        %578 = vmatpush1.msra.mxu0 0.0
        %579 = vmatprep.subr.mxu0 0.0
        %580 = vmatpush1.msra.mxu0 0.0
        %581 = vmatprep.subr.mxu0 0.0
        %582 = vmatpush1.msra.mxu0 0.0
        %583 = vmatprep.subr.mxu0 0.0
        %584 = vmatpush1.msra.mxu0 0.0
        %585 = vmatprep.subr.mxu0 0.0
        %586 = vmatpush1.msra.mxu0 0.0
        %587 = vmatprep.subr.mxu0 0.0
        %588 = vmatpush1.msra.mxu0 0.0
        %589 = vmatprep.subr.mxu0 0.0
        %590 = vmatpush1.msra.mxu0 0.0
        %591 = vmatprep.subr.mxu0 0.0
        %592 = vmatpush1.msra.mxu0 0.0
        %593 = vmatprep.subr.mxu0 0.0
        %594 = vmatpush1.msra.mxu0 0.0
        %595 = vmatprep.subr.mxu0 0.0
        %596 = vmatpush1.msra.mxu0 0.0
        %597 = vmatprep.subr.mxu0 0.0
        %598 = vmatpush1.msra.mxu0 0.0
        %599 = vmatprep.subr.mxu0 0.0
        %600 = vmatpush1.msra.mxu0 0.0
        %601 = vmatprep.subr.mxu0 0.0
        %602 = vmatpush1.msra.mxu0 0.0
        %603 = vmatprep.subr.mxu0 0.0
        %604 = vmatpush1.msra.mxu0 0.0
        %605 = vmatprep.subr.mxu0 0.0
        %606 = vmatpush1.msra.mxu0 0.0
        %607 = vmatprep.subr.mxu0 0.0
        %608 = vmatpush1.msra.mxu0 0.0
        %609 = vmatprep.subr.mxu0 0.0
        %610 = vmatpush1.msra.mxu0 0.0
        %611 = vmatprep.subr.mxu0 0.0
        %612 = vmatpush1.msra.mxu0 0.0
        %613 = vmatprep.subr.mxu0 0.0
        %614 = vmatpush1.msra.mxu0 0.0
        %615 = vmatprep.subr.mxu0 0.0
        %616 = vmatpush1.msra.mxu0 0.0
        %617 = vmatprep.subr.mxu0 0.0
        %618 = vmatpush1.msra.mxu0 0.0
        %619 = vmatprep.subr.mxu0 0.0
        %620 = vmatpush1.msra.mxu0 0.0
        %621 = vmatprep.subr.mxu0 0.0
        %622 = vmatpush1.msra.mxu0 0.0
        %623 = vmatprep.subr.mxu0 0.0
        %624 = vmatpush1.msra.mxu0 0.0
        %625 = vmatprep.mubr.f32.mxu0 0.0
        %626 = vmatmul.mubr.f32.gmra.mrb[0].mxu0 %v417
        %v627 = vpop.f32.mrb[0].mxu0
        %v628 = vadd.f32 %v413, %v627
        %v629 = vpop.f32.mrb[0].mxu0
        %v630 = vadd.f32 %v413, %v629
        %631 = vdwg.mxu0
        %632 = vmatprep.subr.mxu0 %v384
        %633 = vmatpush1.msra.mxu0 %v383
        %634 = vmatprep.subr.mxu0 %v400
        %635 = vmatpush1.msra.mxu0 %v399
        %636 = vmatprep.subr.mxu0 0.0
        %637 = vmatpush1.msra.mxu0 0.0
        %638 = vmatprep.subr.mxu0 0.0
        %639 = vmatpush1.msra.mxu0 0.0
        %640 = vmatprep.subr.mxu0 0.0
        %641 = vmatpush1.msra.mxu0 0.0
        %642 = vmatprep.subr.mxu0 0.0
        %643 = vmatpush1.msra.mxu0 0.0
        %644 = vmatprep.subr.mxu0 0.0
        %645 = vmatpush1.msra.mxu0 0.0
        %646 = vmatprep.subr.mxu0 0.0
        %647 = vmatpush1.msra.mxu0 0.0
        %648 = vmatprep.subr.mxu0 0.0
        %649 = vmatpush1.msra.mxu0 0.0
        %650 = vmatprep.subr.mxu0 0.0
        %651 = vmatpush1.msra.mxu0 0.0
        %652 = vmatprep.subr.mxu0 0.0
        %653 = vmatpush1.msra.mxu0 0.0
        %654 = vmatprep.subr.mxu0 0.0
        %655 = vmatpush1.msra.mxu0 0.0
        %656 = vmatprep.subr.mxu0 0.0
        %657 = vmatpush1.msra.mxu0 0.0
        %658 = vmatprep.subr.mxu0 0.0
        %659 = vmatpush1.msra.mxu0 0.0
        %660 = vmatprep.subr.mxu0 0.0
        %661 = vmatpush1.msra.mxu0 0.0
        %662 = vmatprep.subr.mxu0 0.0
        %663 = vmatpush1.msra.mxu0 0.0
        %664 = vmatprep.subr.mxu0 0.0
        %665 = vmatpush1.msra.mxu0 0.0
        %666 = vmatprep.subr.mxu0 0.0
        %667 = vmatpush1.msra.mxu0 0.0
        %668 = vmatprep.subr.mxu0 0.0
        %669 = vmatpush1.msra.mxu0 0.0
        %670 = vmatprep.subr.mxu0 0.0
        %671 = vmatpush1.msra.mxu0 0.0
        %672 = vmatprep.subr.mxu0 0.0
        %673 = vmatpush1.msra.mxu0 0.0
        %674 = vmatprep.subr.mxu0 0.0
        %675 = vmatpush1.msra.mxu0 0.0
        %676 = vmatprep.subr.mxu0 0.0
        %677 = vmatpush1.msra.mxu0 0.0
        %678 = vmatprep.subr.mxu0 0.0
        %679 = vmatpush1.msra.mxu0 0.0
        %680 = vmatprep.subr.mxu0 0.0
        %681 = vmatpush1.msra.mxu0 0.0
        %682 = vmatprep.subr.mxu0 0.0
        %683 = vmatpush1.msra.mxu0 0.0
        %684 = vmatprep.subr.mxu0 0.0
        %685 = vmatpush1.msra.mxu0 0.0
        %686 = vmatprep.subr.mxu0 0.0
        %687 = vmatpush1.msra.mxu0 0.0
        %688 = vmatprep.subr.mxu0 0.0
        %689 = vmatpush1.msra.mxu0 0.0
        %690 = vmatprep.subr.mxu0 0.0
        %691 = vmatpush1.msra.mxu0 0.0
        %692 = vmatprep.subr.mxu0 0.0
        %693 = vmatpush1.msra.mxu0 0.0
        %694 = vmatprep.subr.mxu0 0.0
        %695 = vmatpush1.msra.mxu0 0.0
        %696 = vmatprep.mubr.f32.mxu0 0.0
        %697 = vmatmul.mubr.f32.gmra.mrb[0].mxu0 %v417
        %v698 = vpop.f32.mrb[0].mxu0
        %v699 = vadd.f32 %v413, %v698
        %v700 = vpop.f32.mrb[0].mxu0
        %v701 = vadd.f32 %v413, %v700
        %702 = vdwg.mxu0
        %703 = vmatprep.subr.mxu0 %v386
        %704 = vmatpush1.msra.mxu0 %v385
        %705 = vmatprep.subr.mxu0 %v402
        %706 = vmatpush1.msra.mxu0 %v401
        %707 = vmatprep.subr.mxu0 0.0
        %708 = vmatpush1.msra.mxu0 0.0
        %709 = vmatprep.subr.mxu0 0.0
        %710 = vmatpush1.msra.mxu0 0.0
        %711 = vmatprep.subr.mxu0 0.0
        %712 = vmatpush1.msra.mxu0 0.0
        %713 = vmatprep.subr.mxu0 0.0
        %714 = vmatpush1.msra.mxu0 0.0
        %715 = vmatprep.subr.mxu0 0.0
        %716 = vmatpush1.msra.mxu0 0.0
        %717 = vmatprep.subr.mxu0 0.0
        %718 = vmatpush1.msra.mxu0 0.0
        %719 = vmatprep.subr.mxu0 0.0
        %720 = vmatpush1.msra.mxu0 0.0
        %721 = vmatprep.subr.mxu0 0.0
        %722 = vmatpush1.msra.mxu0 0.0
        %723 = vmatprep.subr.mxu0 0.0
        %724 = vmatpush1.msra.mxu0 0.0
        %725 = vmatprep.subr.mxu0 0.0
        %726 = vmatpush1.msra.mxu0 0.0
        %727 = vmatprep.subr.mxu0 0.0
        %728 = vmatpush1.msra.mxu0 0.0
        %729 = vmatprep.subr.mxu0 0.0
        %730 = vmatpush1.msra.mxu0 0.0
        %731 = vmatprep.subr.mxu0 0.0
        %732 = vmatpush1.msra.mxu0 0.0
        %733 = vmatprep.subr.mxu0 0.0
        %734 = vmatpush1.msra.mxu0 0.0
        %735 = vmatprep.subr.mxu0 0.0
        %736 = vmatpush1.msra.mxu0 0.0
        %737 = vmatprep.subr.mxu0 0.0
        %738 = vmatpush1.msra.mxu0 0.0
        %739 = vmatprep.subr.mxu0 0.0
        %740 = vmatpush1.msra.mxu0 0.0
        %741 = vmatprep.subr.mxu0 0.0
        %742 = vmatpush1.msra.mxu0 0.0
        %743 = vmatprep.subr.mxu0 0.0
        %744 = vmatpush1.msra.mxu0 0.0
        %745 = vmatprep.subr.mxu0 0.0
        %746 = vmatpush1.msra.mxu0 0.0
        %747 = vmatprep.subr.mxu0 0.0
        %748 = vmatpush1.msra.mxu0 0.0
        %749 = vmatprep.subr.mxu0 0.0
        %750 = vmatpush1.msra.mxu0 0.0
        %751 = vmatprep.subr.mxu0 0.0
        %752 = vmatpush1.msra.mxu0 0.0
        %753 = vmatprep.subr.mxu0 0.0
        %754 = vmatpush1.msra.mxu0 0.0
        %755 = vmatprep.subr.mxu0 0.0
        %756 = vmatpush1.msra.mxu0 0.0
        %757 = vmatprep.subr.mxu0 0.0
        %758 = vmatpush1.msra.mxu0 0.0
        %759 = vmatprep.subr.mxu0 0.0
        %760 = vmatpush1.msra.mxu0 0.0
        %761 = vmatprep.subr.mxu0 0.0
        %762 = vmatpush1.msra.mxu0 0.0
        %763 = vmatprep.subr.mxu0 0.0
        %764 = vmatpush1.msra.mxu0 0.0
        %765 = vmatprep.subr.mxu0 0.0
        %766 = vmatpush1.msra.mxu0 0.0
        %767 = vmatprep.mubr.f32.mxu0 0.0
        %768 = vmatmul.mubr.f32.gmra.mrb[0].mxu0 %v417
        %v769 = vpop.f32.mrb[0].mxu0
        %v770 = vadd.f32 %v413, %v769
        %v771 = vpop.f32.mrb[0].mxu0
        %v772 = vadd.f32 %v413, %v771
        %773 = vdwg.mxu0
        %774 = vmatprep.subr.mxu0 %v388
        %775 = vmatpush1.msra.mxu0 %v387
        %776 = vmatprep.subr.mxu0 %v404
        %777 = vmatpush1.msra.mxu0 %v403
        %778 = vmatprep.subr.mxu0 0.0
        %779 = vmatpush1.msra.mxu0 0.0
        %780 = vmatprep.subr.mxu0 0.0
        %781 = vmatpush1.msra.mxu0 0.0
        %782 = vmatprep.subr.mxu0 0.0
        %783 = vmatpush1.msra.mxu0 0.0
        %784 = vmatprep.subr.mxu0 0.0
        %785 = vmatpush1.msra.mxu0 0.0
        %786 = vmatprep.subr.mxu0 0.0
        %787 = vmatpush1.msra.mxu0 0.0
        %788 = vmatprep.subr.mxu0 0.0
        %789 = vmatpush1.msra.mxu0 0.0
        %790 = vmatprep.subr.mxu0 0.0
        %791 = vmatpush1.msra.mxu0 0.0
        %792 = vmatprep.subr.mxu0 0.0
        %793 = vmatpush1.msra.mxu0 0.0
        %794 = vmatprep.subr.mxu0 0.0
        %795 = vmatpush1.msra.mxu0 0.0
        %796 = vmatprep.subr.mxu0 0.0
        %797 = vmatpush1.msra.mxu0 0.0
        %798 = vmatprep.subr.mxu0 0.0
        %799 = vmatpush1.msra.mxu0 0.0
        %800 = vmatprep.subr.mxu0 0.0
        %801 = vmatpush1.msra.mxu0 0.0
        %802 = vmatprep.subr.mxu0 0.0
        %803 = vmatpush1.msra.mxu0 0.0
        %804 = vmatprep.subr.mxu0 0.0
        %805 = vmatpush1.msra.mxu0 0.0
        %806 = vmatprep.subr.mxu0 0.0
        %807 = vmatpush1.msra.mxu0 0.0
        %808 = vmatprep.subr.mxu0 0.0
        %809 = vmatpush1.msra.mxu0 0.0
        %810 = vmatprep.subr.mxu0 0.0
        %811 = vmatpush1.msra.mxu0 0.0
        %812 = vmatprep.subr.mxu0 0.0
        %813 = vmatpush1.msra.mxu0 0.0
        %814 = vmatprep.subr.mxu0 0.0
        %815 = vmatpush1.msra.mxu0 0.0
        %816 = vmatprep.subr.mxu0 0.0
        %817 = vmatpush1.msra.mxu0 0.0
        %818 = vmatprep.subr.mxu0 0.0
        %819 = vmatpush1.msra.mxu0 0.0
        %820 = vmatprep.subr.mxu0 0.0
        %821 = vmatpush1.msra.mxu0 0.0
        %822 = vmatprep.subr.mxu0 0.0
        %823 = vmatpush1.msra.mxu0 0.0
        %824 = vmatprep.subr.mxu0 0.0
        %825 = vmatpush1.msra.mxu0 0.0
        %826 = vmatprep.subr.mxu0 0.0
        %827 = vmatpush1.msra.mxu0 0.0
        %828 = vmatprep.subr.mxu0 0.0
        %829 = vmatpush1.msra.mxu0 0.0
        %830 = vmatprep.subr.mxu0 0.0
        %831 = vmatpush1.msra.mxu0 0.0
        %832 = vmatprep.subr.mxu0 0.0
        %833 = vmatpush1.msra.mxu0 0.0
        %834 = vmatprep.subr.mxu0 0.0
        %835 = vmatpush1.msra.mxu0 0.0
        %836 = vmatprep.subr.mxu0 0.0
        %837 = vmatpush1.msra.mxu0 0.0
        %838 = vmatprep.mubr.f32.mxu0 0.0
        %839 = vmatmul.mubr.f32.gmra.mrb[0].mxu0 %v417
        %v840 = vpop.f32.mrb[0].mxu0
        %v841 = vadd.f32 %v413, %v840
        %v842 = vpop.f32.mrb[0].mxu0
        %v843 = vadd.f32 %v413, %v842
        %844 = vdwg.mxu0
        %845 = vmatprep.subr.mxu0 %v390
        %846 = vmatpush1.msra.mxu0 %v389
        %847 = vmatprep.subr.mxu0 %v406
        %848 = vmatpush1.msra.mxu0 %v405
        %849 = vmatprep.subr.mxu0 0.0
        %850 = vmatpush1.msra.mxu0 0.0
        %851 = vmatprep.subr.mxu0 0.0
        %852 = vmatpush1.msra.mxu0 0.0
        %853 = vmatprep.subr.mxu0 0.0
        %854 = vmatpush1.msra.mxu0 0.0
        %855 = vmatprep.subr.mxu0 0.0
        %856 = vmatpush1.msra.mxu0 0.0
        %857 = vmatprep.subr.mxu0 0.0
        %858 = vmatpush1.msra.mxu0 0.0
        %859 = vmatprep.subr.mxu0 0.0
        %860 = vmatpush1.msra.mxu0 0.0
        %861 = vmatprep.subr.mxu0 0.0
        %862 = vmatpush1.msra.mxu0 0.0
        %863 = vmatprep.subr.mxu0 0.0
        %864 = vmatpush1.msra.mxu0 0.0
        %865 = vmatprep.subr.mxu0 0.0
        %866 = vmatpush1.msra.mxu0 0.0
        %867 = vmatprep.subr.mxu0 0.0
        %868 = vmatpush1.msra.mxu0 0.0
        %869 = vmatprep.subr.mxu0 0.0
        %870 = vmatpush1.msra.mxu0 0.0
        %871 = vmatprep.subr.mxu0 0.0
        %872 = vmatpush1.msra.mxu0 0.0
        %873 = vmatprep.subr.mxu0 0.0
        %874 = vmatpush1.msra.mxu0 0.0
        %875 = vmatprep.subr.mxu0 0.0
        %876 = vmatpush1.msra.mxu0 0.0
        %877 = vmatprep.subr.mxu0 0.0
        %878 = vmatpush1.msra.mxu0 0.0
        %879 = vmatprep.subr.mxu0 0.0
        %880 = vmatpush1.msra.mxu0 0.0
        %881 = vmatprep.subr.mxu0 0.0
        %882 = vmatpush1.msra.mxu0 0.0
        %883 = vmatprep.subr.mxu0 0.0
        %884 = vmatpush1.msra.mxu0 0.0
        %885 = vmatprep.subr.mxu0 0.0
        %886 = vmatpush1.msra.mxu0 0.0
        %887 = vmatprep.subr.mxu0 0.0
        %888 = vmatpush1.msra.mxu0 0.0
        %889 = vmatprep.subr.mxu0 0.0
        %890 = vmatpush1.msra.mxu0 0.0
        %891 = vmatprep.subr.mxu0 0.0
        %892 = vmatpush1.msra.mxu0 0.0
        %893 = vmatprep.subr.mxu0 0.0
        %894 = vmatpush1.msra.mxu0 0.0
        %895 = vmatprep.subr.mxu0 0.0
        %896 = vmatpush1.msra.mxu0 0.0
        %897 = vmatprep.subr.mxu0 0.0
        %898 = vmatpush1.msra.mxu0 0.0
        %899 = vmatprep.subr.mxu0 0.0
        %900 = vmatpush1.msra.mxu0 0.0
        %901 = vmatprep.subr.mxu0 0.0
        %902 = vmatpush1.msra.mxu0 0.0
        %903 = vmatprep.subr.mxu0 0.0
        %904 = vmatpush1.msra.mxu0 0.0
        %905 = vmatprep.subr.mxu0 0.0
        %906 = vmatpush1.msra.mxu0 0.0
        %907 = vmatprep.subr.mxu0 0.0
        %908 = vmatpush1.msra.mxu0 0.0
        %909 = vmatprep.mubr.f32.mxu0 0.0
        %910 = vmatmul.mubr.f32.gmra.mrb[0].mxu0 %v417
        %v911 = vpop.f32.mrb[0].mxu0
        %v912 = vadd.f32 %v413, %v911
        %v913 = vpop.f32.mrb[0].mxu0
        %v914 = vadd.f32 %v413, %v913
        %915 = vdwg.mxu0
        %916 = vmatprep.subr.mxu0 %v392
        %917 = vmatpush1.msra.mxu0 %v391
        %918 = vmatprep.subr.mxu0 %v408
        %919 = vmatpush1.msra.mxu0 %v407
        %920 = vmatprep.subr.mxu0 0.0
        %921 = vmatpush1.msra.mxu0 0.0
        %922 = vmatprep.subr.mxu0 0.0
        %923 = vmatpush1.msra.mxu0 0.0
        %924 = vmatprep.subr.mxu0 0.0
        %925 = vmatpush1.msra.mxu0 0.0
        %926 = vmatprep.subr.mxu0 0.0
        %927 = vmatpush1.msra.mxu0 0.0
        %928 = vmatprep.subr.mxu0 0.0
        %929 = vmatpush1.msra.mxu0 0.0
        %930 = vmatprep.subr.mxu0 0.0
        %931 = vmatpush1.msra.mxu0 0.0
        %932 = vmatprep.subr.mxu0 0.0
        %933 = vmatpush1.msra.mxu0 0.0
        %934 = vmatprep.subr.mxu0 0.0
        %935 = vmatpush1.msra.mxu0 0.0
        %936 = vmatprep.subr.mxu0 0.0
        %937 = vmatpush1.msra.mxu0 0.0
        %938 = vmatprep.subr.mxu0 0.0
        %939 = vmatpush1.msra.mxu0 0.0
        %940 = vmatprep.subr.mxu0 0.0
        %941 = vmatpush1.msra.mxu0 0.0
        %942 = vmatprep.subr.mxu0 0.0
        %943 = vmatpush1.msra.mxu0 0.0
        %944 = vmatprep.subr.mxu0 0.0
        %945 = vmatpush1.msra.mxu0 0.0
        %946 = vmatprep.subr.mxu0 0.0
        %947 = vmatpush1.msra.mxu0 0.0
        %948 = vmatprep.subr.mxu0 0.0
        %949 = vmatpush1.msra.mxu0 0.0
        %950 = vmatprep.subr.mxu0 0.0
        %951 = vmatpush1.msra.mxu0 0.0
        %952 = vmatprep.subr.mxu0 0.0
        %953 = vmatpush1.msra.mxu0 0.0
        %954 = vmatprep.subr.mxu0 0.0
        %955 = vmatpush1.msra.mxu0 0.0
        %956 = vmatprep.subr.mxu0 0.0
        %957 = vmatpush1.msra.mxu0 0.0
        %958 = vmatprep.subr.mxu0 0.0
        %959 = vmatpush1.msra.mxu0 0.0
        %960 = vmatprep.subr.mxu0 0.0
        %961 = vmatpush1.msra.mxu0 0.0
        %962 = vmatprep.subr.mxu0 0.0
        %963 = vmatpush1.msra.mxu0 0.0
        %964 = vmatprep.subr.mxu0 0.0
        %965 = vmatpush1.msra.mxu0 0.0
        %966 = vmatprep.subr.mxu0 0.0
        %967 = vmatpush1.msra.mxu0 0.0
        %968 = vmatprep.subr.mxu0 0.0
        %969 = vmatpush1.msra.mxu0 0.0
        %970 = vmatprep.subr.mxu0 0.0
        %971 = vmatpush1.msra.mxu0 0.0
        %972 = vmatprep.subr.mxu0 0.0
        %973 = vmatpush1.msra.mxu0 0.0
        %974 = vmatprep.subr.mxu0 0.0
        %975 = vmatpush1.msra.mxu0 0.0
        %976 = vmatprep.subr.mxu0 0.0
        %977 = vmatpush1.msra.mxu0 0.0
        %978 = vmatprep.subr.mxu0 0.0
        %979 = vmatpush1.msra.mxu0 0.0
        %980 = vmatprep.mubr.f32.mxu0 0.0
        %981 = vmatmul.mubr.f32.gmra.mrb[0].mxu0 %v417
        %v982 = vpop.f32.mrb[0].mxu0
        %v983 = vadd.f32 %v413, %v982
        %v984 = vpop.f32.mrb[0].mxu0
        %v985 = vadd.f32 %v413, %v984
        %986 = vdwg.mxu0
        %987 = vst [vmem:[%s358] sm:$0xff] %v486
        %988 = vst [vmem:[%s358 + $0x8] sm:$0xff] %v488
        %989 = vst [vmem:[%s358 + $0x10] sm:$0xff] %v557
        %990 = vst [vmem:[%s358 + $0x18] sm:$0xff] %v559
        %991 = vst [vmem:[%s358 + $0x20] sm:$0xff] %v628
        %992 = vst [vmem:[%s358 + $0x28] sm:$0xff] %v630
        %993 = vst [vmem:[%s358 + $0x30] sm:$0xff] %v699
        %994 = vst [vmem:[%s358 + $0x38] sm:$0xff] %v701
        %995 = vst [vmem:[%s358 + $0x40] sm:$0xff] %v770
        %996 = vst [vmem:[%s358 + $0x48] sm:$0xff] %v772
        %997 = vst [vmem:[%s358 + $0x50] sm:$0xff] %v841
        %998 = vst [vmem:[%s358 + $0x58] sm:$0xff] %v843
        %999 = vst [vmem:[%s358 + $0x60] sm:$0xff] %v912
        %1000 = vst [vmem:[%s358 + $0x68] sm:$0xff] %v914
        %1001 = vst [vmem:[%s358 + $0x70] sm:$0xff] %v983
        %1002 = vst [vmem:[%s358 + $0x78] sm:$0xff] %v985
        %v1003 = vadd.f32 %v486, %v488
        %v1004 = vadd.f32 %v1003, %v557
        %v1005 = vadd.f32 %v1004, %v559
        %v1006 = vadd.f32 %v1005, %v628
        %v1007 = vadd.f32 %v1006, %v630
        %v1008 = vadd.f32 %v1007, %v699
        %v1009 = vadd.f32 %v1008, %v701
        %v1010 = vadd.f32 %v1009, %v770
        %v1011 = vadd.f32 %v1010, %v772
        %v1012 = vadd.f32 %v1011, %v841
        %v1013 = vadd.f32 %v1012, %v843
        %v1014 = vadd.f32 %v1013, %v912
        %v1015 = vadd.f32 %v1014, %v914
        %v1016 = vadd.f32 %v1015, %v983
        %v1017 = vadd.f32 %v1016, %v985
        %1018 = vadd.xlane.f32.xlu0 %v1017
        %v1019 = vpop.xlane.xlu0 %1018
        %vm1020 = vcmask 7168
        %1021 = vst.msk [vmem:[%s367] sm:$0xff] %vm1020, %v1019
        %v1022 = vmul.f32 %v486, %v486
        %v1023 = vmul.f32 %v488, %v488
        %v1024 = vmul.f32 %v557, %v557
        %v1025 = vmul.f32 %v559, %v559
        %v1026 = vmul.f32 %v628, %v628
        %v1027 = vmul.f32 %v630, %v630
        %v1028 = vmul.f32 %v699, %v699
        %v1029 = vmul.f32 %v701, %v701
        %v1030 = vmul.f32 %v770, %v770
        %v1031 = vmul.f32 %v772, %v772
        %v1032 = vmul.f32 %v841, %v841
        %v1033 = vmul.f32 %v843, %v843
        %v1034 = vmul.f32 %v912, %v912
        %v1035 = vmul.f32 %v914, %v914
        %v1036 = vmul.f32 %v983, %v983
        %v1037 = vmul.f32 %v985, %v985
        %v1038 = vadd.f32 %v1022, %v1023
        %v1039 = vadd.f32 %v1038, %v1024
        %v1040 = vadd.f32 %v1039, %v1025
        %v1041 = vadd.f32 %v1040, %v1026
        %v1042 = vadd.f32 %v1041, %v1027
        %v1043 = vadd.f32 %v1042, %v1028
        %v1044 = vadd.f32 %v1043, %v1029
        %v1045 = vadd.f32 %v1044, %v1030
        %v1046 = vadd.f32 %v1045, %v1031
        %v1047 = vadd.f32 %v1046, %v1032
        %v1048 = vadd.f32 %v1047, %v1033
        %v1049 = vadd.f32 %v1048, %v1034
        %v1050 = vadd.f32 %v1049, %v1035
        %v1051 = vadd.f32 %v1050, %v1036
        %v1052 = vadd.f32 %v1051, %v1037
        %1053 = vadd.xlane.f32.xlu0 %v1052
        %v1054 = vpop.xlane.xlu0 %1053
        %1055 = vst.msk [vmem:[%s375] sm:$0xff] %vm1020, %v1054
        %s1056 = smul.u32 16, %s22
        %p1057 = scmp.lt.s32.totalorder %s21, 1
        %s1058 = scalar_select %p1057, %s21, 1
        %p1059 = scmp.lt.s32.totalorder %s1056, 31
        %s1060 = scalar_select %p1059, %s1056, 31
        %s1061 = smul.addr %s1058, 32
        %s1062 = sadd.s32 %s1060, %s1061
        %s1063 = smul.addr %s1062, 8
        %s1064 = scalar_lea.vmem %s3, %s1063
        %p1065 = scmp.lt.s32.totalorder %s21, 1
        %s1066 = scalar_select %p1065, %s21, 1
        %p1067 = scmp.lt.s32.totalorder %s22, 1
        %s1068 = scalar_select %p1067, %s22, 1
        %s1069 = smul.addr %s1066, 2
        %s1070 = sadd.s32 %s1068, %s1069
        %s1071 = smul.addr %s1070, 8
        %s1072 = scalar_lea.vmem %s4, %s1071
        %p1073 = scmp.lt.s32.totalorder %s21, 1
        %s1074 = scalar_select %p1073, %s21, 1
        %p1075 = scmp.lt.s32.totalorder %s22, 1
        %s1076 = scalar_select %p1075, %s22, 1
        %s1077 = smul.addr %s1074, 2
        %s1078 = sadd.s32 %s1076, %s1077
        %s1079 = smul.addr %s1078, 8
        %s1080 = scalar_lea.vmem %s5, %s1079
        // Predicated region
        $region56: #{hdc_module_forward.14} parent=50 // pred_check
          %p1081 = pneg %p119
        $region57: #{hdc_module_forward.14} parent=50 // pred_check_branch
          %1083 = sbr.rel (%p1081) target = $region59
        $region58: #{hdc_module_forward.14} parent=50 // pred_region
          %s1084 = smul.u32 16, %s22
        $region59: #{hdc_module_forward.14} parent=50 // pred_fallthru
          _
        // Predicated region
        $region60: #{hdc_module_forward.14} parent=50 // pred_check
          %p1085 = pneg %p147
        $region61: #{hdc_module_forward.14} parent=50 // pred_check_branch
          %1087 = sbr.rel (%p1085) target = $region63
        $region62: #{hdc_module_forward.14} parent=50 // pred_region
          _
        $region63: #{hdc_module_forward.14} parent=50 // pred_fallthru
          _
        // Predicated region
        $region64: #{hdc_module_forward.14} parent=50 // pred_check
          %p1088 = pneg %p175
        $region65: #{hdc_module_forward.14} parent=50 // pred_check_branch
          %1090 = sbr.rel (%p1088) target = $region67
        $region66: #{hdc_module_forward.14} parent=50 // pred_region
          _
        $region67: #{hdc_module_forward.14} parent=50 // pred_fallthru
          _
      $region51: #{hdc_module_forward.14} parent=5 // pred_fallthru
        _
      %p1091 = scmp.le.s32.totalorder 2, %s12
      // Predicated region
      $region68: #{hdc_module_forward.14} parent=5 // pred_check
        %p1092 = pneg %p1091
      $region69: #{hdc_module_forward.14} parent=5 // pred_check_branch
        %1094 = sbr.rel (%p1092) target = $region71
      $region70: #{hdc_module_forward.14} parent=5 // pred_region
        %s1095 = ssub.s32 %s12, 2
        // Predicated region
        $region72: #{hdc_module_forward.14} parent=70 // pred_check
          %p1096 = pneg %p125
        $region73: #{hdc_module_forward.14} parent=70 // pred_check_branch
          %1098 = sbr.rel (%p1096) target = $region75
        $region74: #{hdc_module_forward.14} parent=70 // pred_region
          %s1099 = smul.u32 16, %s24
          %p1100 = scmp.lt.s32.totalorder %s23, 1
          %s1101 = scalar_select %p1100, %s23, 1
          %p1102 = scmp.lt.s32.totalorder %s1099, 31
          %s1103 = scalar_select %p1102, %s1099, 31
          %s1104 = smul.addr %s1101, 32
          %s1105 = sadd.s32 %s1103, %s1104
          %s1106 = smul.addr %s1105, 8
          %s1107 = scalar_lea.vmem %s3, %s1106
        $region75: #{hdc_module_forward.14} parent=70 // pred_fallthru
          _
        // Predicated region
        $region76: #{hdc_module_forward.14} parent=70 // pred_check
          %p1108 = pneg %p153
        $region77: #{hdc_module_forward.14} parent=70 // pred_check_branch
          %1110 = sbr.rel (%p1108) target = $region79
        $region78: #{hdc_module_forward.14} parent=70 // pred_region
          %p1111 = scmp.lt.s32.totalorder %s23, 1
          %s1112 = scalar_select %p1111, %s23, 1
          %p1113 = scmp.lt.s32.totalorder %s24, 1
          %s1114 = scalar_select %p1113, %s24, 1
          %s1115 = smul.addr %s1112, 2
          %s1116 = sadd.s32 %s1114, %s1115
          %s1117 = smul.addr %s1116, 8
          %s1118 = scalar_lea.vmem %s4, %s1117
        $region79: #{hdc_module_forward.14} parent=70 // pred_fallthru
          _
        // Predicated region
        $region80: #{hdc_module_forward.14} parent=70 // pred_check
          %p1119 = pneg %p181
        $region81: #{hdc_module_forward.14} parent=70 // pred_check_branch
          %1121 = sbr.rel (%p1119) target = $region83
        $region82: #{hdc_module_forward.14} parent=70 // pred_region
          %p1122 = scmp.lt.s32.totalorder %s23, 1
          %s1123 = scalar_select %p1122, %s23, 1
          %p1124 = scmp.lt.s32.totalorder %s24, 1
          %s1125 = scalar_select %p1124, %s24, 1
          %s1126 = smul.addr %s1123, 2
          %s1127 = sadd.s32 %s1125, %s1126
          %s1128 = smul.addr %s1127, 8
          %s1129 = scalar_lea.vmem %s5, %s1128
        $region83: #{hdc_module_forward.14} parent=70 // pred_fallthru
          _
      $region71: #{hdc_module_forward.14} parent=5 // pred_fallthru
        _
    $region6: #{hdc_module_forward.14} parent=1 // loop_footer
      %s16 = sadd.s32 1, %s12
    $region7: #{hdc_module_forward.14} parent=1 // loop_footer_branch
      %11 = sbr.rel target = $region3
    $region8: #{hdc_module_forward.14} parent=1 // loop_exit
      _

// kernel: hdc_module_forward.17
$region0: #{hdc_module_forward.17}
  #allocation0 [shape = 'u32[]', space=smem, size = 0x4, offset = 0x4, fixed_abs, tag = 'smem constant byte address 0x4 - core index']
  #allocation1 [shape = 'u32[144,128]{1,0:T(1,128)}', space=vmem, size = 0x12000, scoped, tag = 'internal scratch']
  %s0 = inlined_call_operand.vmem [shape: f32[2,2,4096], index: 0, kind: input, shape index: {}]
  %s1 = inlined_call_operand.vmem [shape: f32[2,1], index: 1, kind: input, shape index: {}]
  %s2 = inlined_call_operand.vmem [shape: f32[2,1], index: 2, kind: input, shape index: {}]
  %s3 = inlined_call_operand.vmem [shape: f32[2,2,4096], index: 3, kind: input, shape index: {}]
  %s4 = inlined_call_operand.vmem [shape: f32[2,2,4096], index: 4, kind: output, shape index: {0}]
  %s5 = inlined_call_operand.vmem [shape: f32[2,2,4096], index: 5, kind: output, shape index: {1}]
  %6 = xla_tuple %s4, %s5
  %s7 = sld [smem:[#allocation0]]
  $region57: #{hdc_module_forward.17} parent=0
    _
  %s9 = ssub.s32 1, %s7
  %s10 = scalar_select 0, %s9, %s7
  loop: start=0, step=1, limit=6
  $region2: #{hdc_module_forward.17} parent=0 // loop_pre_header
    _
  $region3: #{hdc_module_forward.17} parent=0 // loop_header
    %s12 = sphi 0, %s16
    %p13 = scmp.ge.s32.totalorder %s12, 6
    %s19 = sphi 0, %s31
    %s20 = sphi 0, %s27
    %s21 = sphi 0, %s19
    %s22 = sphi 0, %s20
    %s23 = sphi 0, %s21
    %s24 = sphi 0, %s22
    %s36 = sphi 0, %s38
    %s39 = sphi 0, %s36
    %s40 = sphi 0, %s39
    %s56 = sphi 0, %s40
    %s60 = sphi 0, %s60
    %s62 = sphi 0, %s60
    %s63 = sphi 0, %s62
    %s77 = sphi 0, %s63
    %s81 = sphi 0, %s81
    %s83 = sphi 0, %s81
    %s84 = sphi 0, %s83
    %s98 = sphi 0, %s84
    %s106 = sphi 0, %s108
    %s109 = sphi 0, %s106
    %s110 = sphi 0, %s109
    %s126 = sphi 0, %s110
    %s134 = sphi 0, %s136
    %s137 = sphi 0, %s134
    %s138 = sphi 0, %s137
    %s154 = sphi 0, %s138
    %s162 = sphi 0, %s164
    %s165 = sphi 0, %s162
    %s166 = sphi 0, %s165
    %s182 = sphi 0, %s166
  $region4: #{hdc_module_forward.17} parent=0 // loop_header_branch
    %15 = sbr.rel (%p13) target = $region8
  $region5: #{hdc_module_forward.17} parent=0 // loop_body
    %s17 = ssub.s32 %s12, 1
    %s18 = ssub.s32 %s12, 2
    %s25 = sadd.s32 1, %s20
    %p26 = scmp.ge.s32.totalorder %s25, 2
    %s27 = scalar_select %p26, 0, %s25
    %s28 = sadd.s32 1, %s19
    %s29 = scalar_select %p26, %s28, %s19
    %p30 = scmp.ge.s32.totalorder %s29, 2
    %s31 = scalar_select %p30, 0, %s29
    %s32 = ssub.s32 %s19, %s31
    %s33 = ssub.s32 %s20, %s27
    %s34 = sor.u32 %s32, %s33
    %p35 = scmp.eq.s32.totalorder %s34, 0
    %s37 = sadd.s32 %s36, 1
    %s38 = scalar_select %p35, %s36, %s37
    %p41 = pneg %p35
    %p42 = scmp.eq.s32.totalorder %s12, 3
    %p43 = por %p41, %p42
    %p44 = scmp.ne.s32.totalorder %s36, %s39
    %p45 = scmp.eq.s32.totalorder %s12, 0
    %p46 = por %p44, %p45
    %p47 = scmp.ne.s32.totalorder %s36, %s39
    %p48 = scmp.eq.s32.totalorder %s17, 3
    %p49 = por %p47, %p48
    %p50 = scmp.ne.s32.totalorder %s39, %s40
    %p51 = scmp.eq.s32.totalorder %s17, 0
    %p52 = por %p50, %p51
    %p53 = scmp.ne.s32.totalorder %s39, %s40
    %p54 = scmp.eq.s32.totalorder %s18, 3
    %p55 = por %p53, %p54
    %p57 = scmp.ne.s32.totalorder %s40, %s56
    %p58 = scmp.eq.s32.totalorder %s18, 0
    %p59 = por %p57, %p58
    %s61 = sadd.s32 %s60, 1
    %p64 = scmp.eq.s32.totalorder %s12, 3
    %p65 = scmp.ne.s32.totalorder %s60, %s62
    %p66 = scmp.eq.s32.totalorder %s12, 0
    %p67 = por %p65, %p66
    %p68 = scmp.ne.s32.totalorder %s60, %s62
    %p69 = scmp.eq.s32.totalorder %s17, 3
    %p70 = por %p68, %p69
    %p71 = scmp.ne.s32.totalorder %s62, %s63
    %p72 = scmp.eq.s32.totalorder %s17, 0
    %p73 = por %p71, %p72
    %p74 = scmp.ne.s32.totalorder %s62, %s63
    %p75 = scmp.eq.s32.totalorder %s18, 3
    %p76 = por %p74, %p75
    %p78 = scmp.ne.s32.totalorder %s63, %s77
    %p79 = scmp.eq.s32.totalorder %s18, 0
    %p80 = por %p78, %p79
    %s82 = sadd.s32 %s81, 1
    %p85 = scmp.eq.s32.totalorder %s12, 3
    %p86 = scmp.ne.s32.totalorder %s81, %s83
    %p87 = scmp.eq.s32.totalorder %s12, 0
    %p88 = por %p86, %p87
    %p89 = scmp.ne.s32.totalorder %s81, %s83
    %p90 = scmp.eq.s32.totalorder %s17, 3
    %p91 = por %p89, %p90
    %p92 = scmp.ne.s32.totalorder %s83, %s84
    %p93 = scmp.eq.s32.totalorder %s17, 0
    %p94 = por %p92, %p93
    %p95 = scmp.ne.s32.totalorder %s83, %s84
    %p96 = scmp.eq.s32.totalorder %s18, 3
    %p97 = por %p95, %p96
    %p99 = scmp.ne.s32.totalorder %s84, %s98
    %p100 = scmp.eq.s32.totalorder %s18, 0
    %p101 = por %p99, %p100
    %s102 = ssub.s32 %s19, %s31
    %s103 = ssub.s32 %s20, %s27
    %s104 = sor.u32 %s102, %s103
    %p105 = scmp.eq.s32.totalorder %s104, 0
    %s107 = sadd.s32 %s106, 1
    %s108 = scalar_select %p105, %s106, %s107
    %p111 = pneg %p105
    %p112 = scmp.eq.s32.totalorder %s12, 3
    %p113 = por %p111, %p112
    %p114 = scmp.ne.s32.totalorder %s106, %s109
    %p115 = scmp.eq.s32.totalorder %s12, 0
    %p116 = por %p114, %p115
    %p117 = scmp.ne.s32.totalorder %s106, %s109
    %p118 = scmp.eq.s32.totalorder %s17, 3
    %p119 = por %p117, %p118
    %p120 = scmp.ne.s32.totalorder %s109, %s110
    %p121 = scmp.eq.s32.totalorder %s17, 0
    %p122 = por %p120, %p121
    %p123 = scmp.ne.s32.totalorder %s109, %s110
    %p124 = scmp.eq.s32.totalorder %s18, 3
    %p125 = por %p123, %p124
    %p127 = scmp.ne.s32.totalorder %s110, %s126
    %p128 = scmp.eq.s32.totalorder %s18, 0
    %p129 = por %p127, %p128
    %s130 = ssub.s32 %s19, %s31
    %s131 = ssub.s32 %s20, %s27
    %s132 = sor.u32 %s130, %s131
    %p133 = scmp.eq.s32.totalorder %s132, 0
    %s135 = sadd.s32 %s134, 1
    %s136 = scalar_select %p133, %s134, %s135
    %p139 = pneg %p133
    %p140 = scmp.eq.s32.totalorder %s12, 3
    %p141 = por %p139, %p140
    %p142 = scmp.ne.s32.totalorder %s134, %s137
    %p143 = scmp.eq.s32.totalorder %s12, 0
    %p144 = por %p142, %p143
    %p145 = scmp.ne.s32.totalorder %s134, %s137
    %p146 = scmp.eq.s32.totalorder %s17, 3
    %p147 = por %p145, %p146
    %p148 = scmp.ne.s32.totalorder %s137, %s138
    %p149 = scmp.eq.s32.totalorder %s17, 0
    %p150 = por %p148, %p149
    %p151 = scmp.ne.s32.totalorder %s137, %s138
    %p152 = scmp.eq.s32.totalorder %s18, 3
    %p153 = por %p151, %p152
    %p155 = scmp.ne.s32.totalorder %s138, %s154
    %p156 = scmp.eq.s32.totalorder %s18, 0
    %p157 = por %p155, %p156
    %s158 = ssub.s32 %s19, %s31
    %s159 = ssub.s32 %s20, %s27
    %s160 = sor.u32 %s158, %s159
    %p161 = scmp.eq.s32.totalorder %s160, 0
    %s163 = sadd.s32 %s162, 1
    %s164 = scalar_select %p161, %s162, %s163
    %p167 = pneg %p161
    %p168 = scmp.eq.s32.totalorder %s12, 3
    %p169 = por %p167, %p168
    %p170 = scmp.ne.s32.totalorder %s162, %s165
    %p171 = scmp.eq.s32.totalorder %s12, 0
    %p172 = por %p170, %p171
    %p173 = scmp.ne.s32.totalorder %s162, %s165
    %p174 = scmp.eq.s32.totalorder %s17, 3
    %p175 = por %p173, %p174
    %p176 = scmp.ne.s32.totalorder %s165, %s166
    %p177 = scmp.eq.s32.totalorder %s17, 0
    %p178 = por %p176, %p177
    %p179 = scmp.ne.s32.totalorder %s165, %s166
    %p180 = scmp.eq.s32.totalorder %s18, 3
    %p181 = por %p179, %p180
    %p183 = scmp.ne.s32.totalorder %s166, %s182
    %p184 = scmp.eq.s32.totalorder %s18, 0
    %p185 = por %p183, %p184
    %p186 = scmp.le.s32.totalorder 1, %s12
    %p187 = scmp.lt.s32.totalorder %s12, 5
    %p188 = pnand %p186, %p187
    %p189 = pneg %p188
    // Predicated region
    $region9: #{hdc_module_forward.17} parent=5 // pred_check
      _
    $region10: #{hdc_module_forward.17} parent=5 // pred_check_branch
      %191 = sbr.rel (%p188) target = $region12
    $region11: #{hdc_module_forward.17} parent=5 // pred_region
      %s192 = ssub.s32 %s12, 1
      // Predicated region
      $region13: #{hdc_module_forward.17} parent=11 // pred_check
        %p193 = pneg %p73
      $region14: #{hdc_module_forward.17} parent=11 // pred_check_branch
        %195 = sbr.rel (%p193) target = $region16
      $region15: #{hdc_module_forward.17} parent=11 // pred_region
        _
      $region16: #{hdc_module_forward.17} parent=11 // pred_fallthru
        _
      // Predicated region
      $region17: #{hdc_module_forward.17} parent=11 // pred_check
        %p196 = pneg %p94
      $region18: #{hdc_module_forward.17} parent=11 // pred_check_branch
        %198 = sbr.rel (%p196) target = $region20
      $region19: #{hdc_module_forward.17} parent=11 // pred_region
        _
      $region20: #{hdc_module_forward.17} parent=11 // pred_fallthru
        _
    $region12: #{hdc_module_forward.17} parent=5 // pred_fallthru
      _
    %p199 = scmp.lt.s32.totalorder %s12, 4
    // Predicated region
    $region21: #{hdc_module_forward.17} parent=5 // pred_check
      %p200 = pneg %p199
    $region22: #{hdc_module_forward.17} parent=5 // pred_check_branch
      %202 = sbr.rel (%p200) target = $region24
    $region23: #{hdc_module_forward.17} parent=5 // pred_region
      // Predicated region
      $region25: #{hdc_module_forward.17} parent=23 // pred_check
        %p203 = pneg %p46
      $region26: #{hdc_module_forward.17} parent=23 // pred_check_branch
        %205 = sbr.rel (%p203) target = $region28
      $region27: #{hdc_module_forward.17} parent=23 // pred_region
        %s206 = smul.u32 16, %s20
        %p207 = scmp.lt.s32.totalorder %s19, 1
        %s208 = scalar_select %p207, %s19, 1
        %p209 = scmp.lt.s32.totalorder %s206, 31
        %s210 = scalar_select %p209, %s206, 31
        %s211 = smul.addr %s208, 32
        %s212 = sadd.s32 %s210, %s211
        %s213 = smul.addr %s212, 2
        %s214 = scalar_lea.vmem %s0, %s213
        %s215 = smul.u32 16, %s20
      $region28: #{hdc_module_forward.17} parent=23 // pred_fallthru
        _
      // Predicated region
      $region29: #{hdc_module_forward.17} parent=23 // pred_check
        %p216 = pneg %p116
      $region30: #{hdc_module_forward.17} parent=23 // pred_check_branch
        %218 = sbr.rel (%p216) target = $region32
      $region31: #{hdc_module_forward.17} parent=23 // pred_region
        %s219 = smul.u32 16, %s20
        %p220 = scmp.lt.s32.totalorder %s19, 1
        %s221 = scalar_select %p220, %s19, 1
        %p222 = scmp.lt.s32.totalorder %s219, 31
        %s223 = scalar_select %p222, %s219, 31
        %s224 = smul.addr %s221, 32
        %s225 = sadd.s32 %s223, %s224
        %s226 = smul.addr %s225, 2
        %s227 = scalar_lea.vmem %s3, %s226
        %s228 = smul.u32 16, %s20
      $region32: #{hdc_module_forward.17} parent=23 // pred_fallthru
        _
    $region24: #{hdc_module_forward.17} parent=5 // pred_fallthru
      _
    %p229 = scmp.le.s32.totalorder 1, %s12
    %p230 = scmp.lt.s32.totalorder %s12, 5
    %p231 = pnand %p229, %p230
    %p232 = pneg %p231
    // Predicated region
    $region33: #{hdc_module_forward.17} parent=5 // pred_check
      _
    $region34: #{hdc_module_forward.17} parent=5 // pred_check_branch
      %234 = sbr.rel (%p231) target = $region36
    $region35: #{hdc_module_forward.17} parent=5 // pred_region
      %s235 = ssub.s32 %s12, 1
      %s236 = smul.u32 16, %s22
      %p237 = scmp.lt.s32.totalorder %s21, 1
      %s238 = scalar_select %p237, %s21, 1
      %p239 = scmp.lt.s32.totalorder %s236, 31
      %s240 = scalar_select %p239, %s236, 31
      %s241 = smul.addr %s238, 32
      %s242 = sadd.s32 %s240, %s241
      %s243 = smul.addr %s242, 2
      %s244 = scalar_lea.vmem %s0, %s243
      %p245 = pneg %p52
      %p246 = pneg %p49
      %p247 = pneg %p73
      %p248 = pneg %p70
      %p249 = pneg %p94
      %p250 = pneg %p91
      %s251 = smul.u32 16, %s22
      %p252 = scmp.lt.s32.totalorder %s21, 1
      %s253 = scalar_select %p252, %s21, 1
      %p254 = scmp.lt.s32.totalorder %s251, 31
      %s255 = scalar_select %p254, %s251, 31
      %s256 = smul.addr %s253, 32
      %s257 = sadd.s32 %s255, %s256
      %s258 = smul.addr %s257, 2
      %s259 = scalar_lea.vmem %s3, %s258
      %p260 = pneg %p122
      %p261 = pneg %p119
      %p262 = pneg %p150
      %p263 = pneg %p147
      %s264 = smul.u32 16, %s22
      %p265 = scmp.lt.s32.totalorder %s21, 1
      %s266 = scalar_select %p265, %s21, 1
      %p267 = scmp.lt.s32.totalorder %s264, 31
      %s268 = scalar_select %p267, %s264, 31
      %s269 = smul.addr %s266, 32
      %s270 = sadd.s32 %s268, %s269
      %s271 = smul.addr %s270, 2
      %s272 = scalar_lea.vmem %s4, %s271
      %p273 = pneg %p178
      %p274 = pneg %p175
      %s275 = smul.u32 16, %s22
      %p276 = scmp.lt.s32.totalorder %s21, 1
      %s277 = scalar_select %p276, %s21, 1
      %p278 = scmp.lt.s32.totalorder %s275, 31
      %s279 = scalar_select %p278, %s275, 31
      %s280 = smul.addr %s277, 32
      %s281 = sadd.s32 %s279, %s280
      %s282 = smul.addr %s281, 2
      %s283 = scalar_lea.vmem %s5, %s282
      %s284 = smul.u32 16, %s22
      %p285 = scmp.lt.s32.totalorder %s21, 1
      %s286 = scalar_select %p285, %s21, 1
      %p287 = scmp.lt.s32.totalorder %s284, 31
      %s288 = scalar_select %p287, %s284, 31
      %s289 = smul.addr %s286, 32
      %s290 = sadd.s32 %s288, %s289
      %s291 = smul.addr %s290, 2
      %s292 = scalar_lea.vmem %s0, %s291
      %s293 = smul.u32 16, %s22
      %s294 = smul.u32 16, %s22
      %p295 = scmp.lt.s32.totalorder %s21, 1
      %s296 = scalar_select %p295, %s21, 1
      %p297 = scmp.lt.s32.totalorder %s294, 31
      %s298 = scalar_select %p297, %s294, 31
      %s299 = smul.addr %s296, 32
      %s300 = sadd.s32 %s298, %s299
      %s301 = smul.addr %s300, 2
      %s302 = scalar_lea.vmem %s3, %s301
      %s303 = smul.u32 16, %s22
      %s304 = smul.u32 16, %s22
      %p305 = scmp.lt.s32.totalorder %s21, 1
      %s306 = scalar_select %p305, %s21, 1
      %p307 = scmp.lt.s32.totalorder %s304, 31
      %s308 = scalar_select %p307, %s304, 31
      %s309 = smul.addr %s306, 32
      %s310 = sadd.s32 %s308, %s309
      %s311 = smul.addr %s310, 2
      %s312 = scalar_lea.vmem %s4, %s311
      %s313 = smul.u32 16, %s22
      %s314 = smul.u32 16, %s22
      %p315 = scmp.lt.s32.totalorder %s21, 1
      %s316 = scalar_select %p315, %s21, 1
      %p317 = scmp.lt.s32.totalorder %s314, 31
      %s318 = scalar_select %p317, %s314, 31
      %s319 = smul.addr %s316, 32
      %s320 = sadd.s32 %s318, %s319
      %s321 = smul.addr %s320, 2
      %s322 = scalar_lea.vmem %s5, %s321
      %s323 = smul.u32 16, %s22
      %v324 = vld [vmem:[%s292] sm:$0xff]
      %v325 = vld [vmem:[%s292 + $0x8] sm:$0xff]
      %v326 = vld [vmem:[%s292 + $0x10] sm:$0xff]
      %v327 = vld [vmem:[%s292 + $0x18] sm:$0xff]
      %v328 = vld [vmem:[%s1] sm:$0x3]
      %330 = vset.pattern.permute.xlu0 0
      %331 = vperm.xlu0 %330, %v328
      %v332 = vpop.permute.xlu0 %331
      %v334 = vunpack.c.l.s4 269488144
      %v335 = vunpack.c.0.s8 %v334
      %v336 = vlaneseq
      %v337 = vshrl.u32 %v336, 7
      %v338 = vsub.s32 %v335, %v337
      %v339 = vrot.slane %v332, %v338
      %v341 = vmul.f32 %v324, %v339
      %v342 = vmul.f32 %v325, %v339
      %v343 = vmul.f32 %v326, %v339
      %v344 = vmul.f32 %v327, %v339
      %v345 = vld [vmem:[%s2] sm:$0x3]
      %347 = vset.pattern.permute.xlu0 0
      %348 = vperm.xlu0 %347, %v345
      %v349 = vpop.permute.xlu0 %348
      %v351 = vunpack.c.l.s4 269488144
      %v352 = vunpack.c.0.s8 %v351
      %v353 = vlaneseq
      %v354 = vshrl.u32 %v353, 7
      %v355 = vsub.s32 %v352, %v354
      %v356 = vrot.slane %v349, %v355
      %v358 = vadd.f32 %v341, %v356
      %v359 = vadd.f32 %v342, %v356
      %v360 = vadd.f32 %v343, %v356
      %v361 = vadd.f32 %v344, %v356
      %v362 = vmax.f32 %v358, 0.0
      %v363 = vmax.f32 %v359, 0.0
      %v364 = vmax.f32 %v360, 0.0
      %v365 = vmax.f32 %v361, 0.0
      %366 = vst [vmem:[%s312] sm:$0xff] %v362
      %367 = vst [vmem:[%s312 + $0x8] sm:$0xff] %v363
      %368 = vst [vmem:[%s312 + $0x10] sm:$0xff] %v364
      %369 = vst [vmem:[%s312 + $0x18] sm:$0xff] %v365
      %v370 = vld [vmem:[%s302] sm:$0xff]
      %v371 = vld [vmem:[%s302 + $0x8] sm:$0xff]
      %v372 = vld [vmem:[%s302 + $0x10] sm:$0xff]
      %v373 = vld [vmem:[%s302 + $0x18] sm:$0xff]
      %v374 = vadd.f32 %v362, %v370
      %v375 = vadd.f32 %v363, %v371
      %v376 = vadd.f32 %v364, %v372
      %v377 = vadd.f32 %v365, %v373
      %378 = vst [vmem:[%s322] sm:$0xff] %v374
      %379 = vst [vmem:[%s322 + $0x8] sm:$0xff] %v375
      %380 = vst [vmem:[%s322 + $0x10] sm:$0xff] %v376
      %381 = vst [vmem:[%s322 + $0x18] sm:$0xff] %v377
      %s382 = smul.u32 16, %s22
      %p383 = scmp.lt.s32.totalorder %s21, 1
      %s384 = scalar_select %p383, %s21, 1
      %p385 = scmp.lt.s32.totalorder %s382, 31
      %s386 = scalar_select %p385, %s382, 31
      %s387 = smul.addr %s384, 32
      %s388 = sadd.s32 %s386, %s387
      %s389 = smul.addr %s388, 2
      %s390 = scalar_lea.vmem %s4, %s389
      %s391 = smul.u32 16, %s22
      %p392 = scmp.lt.s32.totalorder %s21, 1
      %s393 = scalar_select %p392, %s21, 1
      %p394 = scmp.lt.s32.totalorder %s391, 31
      %s395 = scalar_select %p394, %s391, 31
      %s396 = smul.addr %s393, 32
      %s397 = sadd.s32 %s395, %s396
      %s398 = smul.addr %s397, 2
      %s399 = scalar_lea.vmem %s5, %s398
      // Predicated region
      $region37: #{hdc_module_forward.17} parent=35 // pred_check
        %p400 = pneg %p147
      $region38: #{hdc_module_forward.17} parent=35 // pred_check_branch
        %402 = sbr.rel (%p400) target = $region40
      $region39: #{hdc_module_forward.17} parent=35 // pred_region
        %s403 = smul.u32 16, %s22
      $region40: #{hdc_module_forward.17} parent=35 // pred_fallthru
        _
      // Predicated region
      $region41: #{hdc_module_forward.17} parent=35 // pred_check
        %p404 = pneg %p175
      $region42: #{hdc_module_forward.17} parent=35 // pred_check_branch
        %406 = sbr.rel (%p404) target = $region44
      $region43: #{hdc_module_forward.17} parent=35 // pred_region
        %s407 = smul.u32 16, %s22
      $region44: #{hdc_module_forward.17} parent=35 // pred_fallthru
        _
    $region36: #{hdc_module_forward.17} parent=5 // pred_fallthru
      _
    %p408 = scmp.le.s32.totalorder 2, %s12
    // Predicated region
    $region45: #{hdc_module_forward.17} parent=5 // pred_check
      %p409 = pneg %p408
    $region46: #{hdc_module_forward.17} parent=5 // pred_check_branch
      %411 = sbr.rel (%p409) target = $region48
    $region47: #{hdc_module_forward.17} parent=5 // pred_region
      %s412 = ssub.s32 %s12, 2
      // Predicated region
      $region49: #{hdc_module_forward.17} parent=47 // pred_check
        %p413 = pneg %p153
      $region50: #{hdc_module_forward.17} parent=47 // pred_check_branch
        %415 = sbr.rel (%p413) target = $region52
      $region51: #{hdc_module_forward.17} parent=47 // pred_region
        %s416 = smul.u32 16, %s24
        %p417 = scmp.lt.s32.totalorder %s23, 1
        %s418 = scalar_select %p417, %s23, 1
        %p419 = scmp.lt.s32.totalorder %s416, 31
        %s420 = scalar_select %p419, %s416, 31
        %s421 = smul.addr %s418, 32
        %s422 = sadd.s32 %s420, %s421
        %s423 = smul.addr %s422, 2
        %s424 = scalar_lea.vmem %s4, %s423
      $region52: #{hdc_module_forward.17} parent=47 // pred_fallthru
        _
      // Predicated region
      $region53: #{hdc_module_forward.17} parent=47 // pred_check
        %p425 = pneg %p181
      $region54: #{hdc_module_forward.17} parent=47 // pred_check_branch
        %427 = sbr.rel (%p425) target = $region56
      $region55: #{hdc_module_forward.17} parent=47 // pred_region
        %s428 = smul.u32 16, %s24
        %p429 = scmp.lt.s32.totalorder %s23, 1
        %s430 = scalar_select %p429, %s23, 1
        %p431 = scmp.lt.s32.totalorder %s428, 31
        %s432 = scalar_select %p431, %s428, 31
        %s433 = smul.addr %s430, 32
        %s434 = sadd.s32 %s432, %s433
        %s435 = smul.addr %s434, 2
        %s436 = scalar_lea.vmem %s5, %s435
      $region56: #{hdc_module_forward.17} parent=47 // pred_fallthru
        _
    $region48: #{hdc_module_forward.17} parent=5 // pred_fallthru
      _
  $region6: #{hdc_module_forward.17} parent=0 // loop_footer
    %s16 = sadd.s32 1, %s12
  $region7: #{hdc_module_forward.17} parent=0 // loop_footer_branch
    %11 = sbr.rel target = $region3
  $region8: #{hdc_module_forward.17} parent=0 // loop_exit
    _

// kernel: hdc_module_forward.16
$region0: #{hdc_module_forward.16}
  #allocation0 [shape = 'u32[]', space=smem, size = 0x4, offset = 0x4, fixed_abs, tag = 'smem constant byte address 0x4 - core index']
  #allocation1 [shape = 'u32[144,128]{1,0:T(1,128)}', space=vmem, size = 0x12000, scoped, tag = 'internal scratch']
  %s0 = inlined_call_operand.vmem [shape: f32[2,18,2,288], index: 0, kind: input, shape index: {}, may-alias: {0,1,2}]
  %s1 = inlined_call_operand.vmem [shape: f32[2,18,2,288], index: 1, kind: input, shape index: {}, may-alias: {0,1,2}]
  %s2 = inlined_call_operand.vmem [shape: f32[2,18,2,288], index: 2, kind: input, shape index: {}, may-alias: {0,1,2}]
  %s3 = inlined_call_operand.vmem [shape: f32[9,2,2], index: 3, kind: input, shape index: {}]
  %s4 = inlined_call_operand.vmem [shape: f32[2,1], index: 4, kind: input, shape index: {}]
  %s5 = inlined_call_operand.vmem [shape: f32[2,2,4096], index: 5, kind: output, shape index: {0}]
  %s6 = inlined_call_operand.vmem [shape: f32[2,16,2,1], index: 6, kind: output, shape index: {1}]
  %s7 = inlined_call_operand.vmem [shape: f32[2,16,2,1], index: 7, kind: output, shape index: {2}]
  %8 = xla_tuple %s5, %s6, %s7
  %s9 = sld [smem:[#allocation0]]
  $region69: #{hdc_module_forward.16} parent=0
    _
  %s11 = ssub.s32 1, %s9
  %s12 = scalar_select 0, %s11, %s9
  loop: start=0, step=1, limit=34
  $region2: #{hdc_module_forward.16} parent=0 // loop_pre_header
    _
  $region3: #{hdc_module_forward.16} parent=0 // loop_header
    %s14 = sphi 0, %s18
    %p15 = scmp.ge.s32.totalorder %s14, 34
    %s21 = sphi 0, %s33
    %s22 = sphi 0, %s29
    %s23 = sphi 0, %s21
    %s24 = sphi 0, %s22
    %s25 = sphi 0, %s23
    %s26 = sphi 0, %s24
    %s38 = sphi 0, %s40
    %s41 = sphi 0, %s38
    %s42 = sphi 0, %s41
    %s58 = sphi 0, %s42
    %s68 = sphi 0, %s70
    %s71 = sphi 0, %s68
    %s72 = sphi 0, %s71
    %s88 = sphi 0, %s72
    %s98 = sphi 0, %s100
    %s101 = sphi 0, %s98
    %s102 = sphi 0, %s101
    %s118 = sphi 0, %s102
    %s122 = sphi 0, %s122
    %s124 = sphi 0, %s122
    %s125 = sphi 0, %s124
    %s139 = sphi 0, %s125
    %s143 = sphi 0, %s143
    %s145 = sphi 0, %s143
    %s146 = sphi 0, %s145
    %s160 = sphi 0, %s146
    %s168 = sphi 0, %s170
    %s171 = sphi 0, %s168
    %s172 = sphi 0, %s171
    %s188 = sphi 0, %s172
    %s196 = sphi 0, %s198
    %s199 = sphi 0, %s196
    %s200 = sphi 0, %s199
    %s216 = sphi 0, %s200
    %s224 = sphi 0, %s226
    %s227 = sphi 0, %s224
    %s228 = sphi 0, %s227
    %s244 = sphi 0, %s228
  $region4: #{hdc_module_forward.16} parent=0 // loop_header_branch
    %17 = sbr.rel (%p15) target = $region8
  $region5: #{hdc_module_forward.16} parent=0 // loop_body
    %s19 = ssub.s32 %s14, 1
    %s20 = ssub.s32 %s14, 2
    %s27 = sadd.s32 1, %s22
    %p28 = scmp.ge.s32.totalorder %s27, 16
    %s29 = scalar_select %p28, 0, %s27
    %s30 = sadd.s32 1, %s21
    %s31 = scalar_select %p28, %s30, %s21
    %p32 = scmp.ge.s32.totalorder %s31, 2
    %s33 = scalar_select %p32, 0, %s31
    %s34 = ssub.s32 %s21, %s33
    %s35 = ssub.s32 %s22, %s29
    %s36 = sor.u32 %s34, %s35
    %p37 = scmp.eq.s32.totalorder %s36, 0
    %s39 = sadd.s32 %s38, 1
    %s40 = scalar_select %p37, %s38, %s39
    %p43 = pneg %p37
    %p44 = scmp.eq.s32.totalorder %s14, 31
    %p45 = por %p43, %p44
    %p46 = scmp.ne.s32.totalorder %s38, %s41
    %p47 = scmp.eq.s32.totalorder %s14, 0
    %p48 = por %p46, %p47
    %p49 = scmp.ne.s32.totalorder %s38, %s41
    %p50 = scmp.eq.s32.totalorder %s19, 31
    %p51 = por %p49, %p50
    %p52 = scmp.ne.s32.totalorder %s41, %s42
    %p53 = scmp.eq.s32.totalorder %s19, 0
    %p54 = por %p52, %p53
    %p55 = scmp.ne.s32.totalorder %s41, %s42
    %p56 = scmp.eq.s32.totalorder %s20, 31
    %p57 = por %p55, %p56
    %p59 = scmp.ne.s32.totalorder %s42, %s58
    %p60 = scmp.eq.s32.totalorder %s20, 0
    %p61 = por %p59, %p60
    %s62 = sadd.s32 %s22, 1
    %s63 = sadd.s32 %s29, 1
    %s64 = ssub.s32 %s21, %s33
    %s65 = ssub.s32 %s62, %s63
    %s66 = sor.u32 %s64, %s65
    %p67 = scmp.eq.s32.totalorder %s66, 0
    %s69 = sadd.s32 %s68, 1
    %s70 = scalar_select %p67, %s68, %s69
    %p73 = pneg %p67
    %p74 = scmp.eq.s32.totalorder %s14, 31
    %p75 = por %p73, %p74
    %p76 = scmp.ne.s32.totalorder %s68, %s71
    %p77 = scmp.eq.s32.totalorder %s14, 0
    %p78 = por %p76, %p77
    %p79 = scmp.ne.s32.totalorder %s68, %s71
    %p80 = scmp.eq.s32.totalorder %s19, 31
    %p81 = por %p79, %p80
    %p82 = scmp.ne.s32.totalorder %s71, %s72
    %p83 = scmp.eq.s32.totalorder %s19, 0
    %p84 = por %p82, %p83
    %p85 = scmp.ne.s32.totalorder %s71, %s72
    %p86 = scmp.eq.s32.totalorder %s20, 31
    %p87 = por %p85, %p86
    %p89 = scmp.ne.s32.totalorder %s72, %s88
    %p90 = scmp.eq.s32.totalorder %s20, 0
    %p91 = por %p89, %p90
    %s92 = sadd.s32 %s22, 2
    %s93 = sadd.s32 %s29, 2
    %s94 = ssub.s32 %s21, %s33
    %s95 = ssub.s32 %s92, %s93
    %s96 = sor.u32 %s94, %s95
    %p97 = scmp.eq.s32.totalorder %s96, 0
    %s99 = sadd.s32 %s98, 1
    %s100 = scalar_select %p97, %s98, %s99
    %p103 = pneg %p97
    %p104 = scmp.eq.s32.totalorder %s14, 31
    %p105 = por %p103, %p104
    %p106 = scmp.ne.s32.totalorder %s98, %s101
    %p107 = scmp.eq.s32.totalorder %s14, 0
    %p108 = por %p106, %p107
    %p109 = scmp.ne.s32.totalorder %s98, %s101
    %p110 = scmp.eq.s32.totalorder %s19, 31
    %p111 = por %p109, %p110
    %p112 = scmp.ne.s32.totalorder %s101, %s102
    %p113 = scmp.eq.s32.totalorder %s19, 0
    %p114 = por %p112, %p113
    %p115 = scmp.ne.s32.totalorder %s101, %s102
    %p116 = scmp.eq.s32.totalorder %s20, 31
    %p117 = por %p115, %p116
    %p119 = scmp.ne.s32.totalorder %s102, %s118
    %p120 = scmp.eq.s32.totalorder %s20, 0
    %p121 = por %p119, %p120
    %s123 = sadd.s32 %s122, 1
    %p126 = scmp.eq.s32.totalorder %s14, 31
    %p127 = scmp.ne.s32.totalorder %s122, %s124
    %p128 = scmp.eq.s32.totalorder %s14, 0
    %p129 = por %p127, %p128
    %p130 = scmp.ne.s32.totalorder %s122, %s124
    %p131 = scmp.eq.s32.totalorder %s19, 31
    %p132 = por %p130, %p131
    %p133 = scmp.ne.s32.totalorder %s124, %s125
    %p134 = scmp.eq.s32.totalorder %s19, 0
    %p135 = por %p133, %p134
    %p136 = scmp.ne.s32.totalorder %s124, %s125
    %p137 = scmp.eq.s32.totalorder %s20, 31
    %p138 = por %p136, %p137
    %p140 = scmp.ne.s32.totalorder %s125, %s139
    %p141 = scmp.eq.s32.totalorder %s20, 0
    %p142 = por %p140, %p141
    %s144 = sadd.s32 %s143, 1
    %p147 = scmp.eq.s32.totalorder %s14, 31
    %p148 = scmp.ne.s32.totalorder %s143, %s145
    %p149 = scmp.eq.s32.totalorder %s14, 0
    %p150 = por %p148, %p149
    %p151 = scmp.ne.s32.totalorder %s143, %s145
    %p152 = scmp.eq.s32.totalorder %s19, 31
    %p153 = por %p151, %p152
    %p154 = scmp.ne.s32.totalorder %s145, %s146
    %p155 = scmp.eq.s32.totalorder %s19, 0
    %p156 = por %p154, %p155
    %p157 = scmp.ne.s32.totalorder %s145, %s146
    %p158 = scmp.eq.s32.totalorder %s20, 31
    %p159 = por %p157, %p158
    %p161 = scmp.ne.s32.totalorder %s146, %s160
    %p162 = scmp.eq.s32.totalorder %s20, 0
    %p163 = por %p161, %p162
    %s164 = ssub.s32 %s21, %s33
    %s165 = ssub.s32 %s22, %s29
    %s166 = sor.u32 %s164, %s165
    %p167 = scmp.eq.s32.totalorder %s166, 0
    %s169 = sadd.s32 %s168, 1
    %s170 = scalar_select %p167, %s168, %s169
    %p173 = pneg %p167
    %p174 = scmp.eq.s32.totalorder %s14, 31
    %p175 = por %p173, %p174
    %p176 = scmp.ne.s32.totalorder %s168, %s171
    %p177 = scmp.eq.s32.totalorder %s14, 0
    %p178 = por %p176, %p177
    %p179 = scmp.ne.s32.totalorder %s168, %s171
    %p180 = scmp.eq.s32.totalorder %s19, 31
    %p181 = por %p179, %p180
    %p182 = scmp.ne.s32.totalorder %s171, %s172
    %p183 = scmp.eq.s32.totalorder %s19, 0
    %p184 = por %p182, %p183
    %p185 = scmp.ne.s32.totalorder %s171, %s172
    %p186 = scmp.eq.s32.totalorder %s20, 31
    %p187 = por %p185, %p186
    %p189 = scmp.ne.s32.totalorder %s172, %s188
    %p190 = scmp.eq.s32.totalorder %s20, 0
    %p191 = por %p189, %p190
    %s192 = ssub.s32 %s21, %s33
    %s193 = ssub.s32 %s22, %s29
    %s194 = sor.u32 %s192, %s193
    %p195 = scmp.eq.s32.totalorder %s194, 0
    %s197 = sadd.s32 %s196, 1
    %s198 = scalar_select %p195, %s196, %s197
    %p201 = pneg %p195
    %p202 = scmp.eq.s32.totalorder %s14, 31
    %p203 = por %p201, %p202
    %p204 = scmp.ne.s32.totalorder %s196, %s199
    %p205 = scmp.eq.s32.totalorder %s14, 0
    %p206 = por %p204, %p205
    %p207 = scmp.ne.s32.totalorder %s196, %s199
    %p208 = scmp.eq.s32.totalorder %s19, 31
    %p209 = por %p207, %p208
    %p210 = scmp.ne.s32.totalorder %s199, %s200
    %p211 = scmp.eq.s32.totalorder %s19, 0
    %p212 = por %p210, %p211
    %p213 = scmp.ne.s32.totalorder %s199, %s200
    %p214 = scmp.eq.s32.totalorder %s20, 31
    %p215 = por %p213, %p214
    %p217 = scmp.ne.s32.totalorder %s200, %s216
    %p218 = scmp.eq.s32.totalorder %s20, 0
    %p219 = por %p217, %p218
    %s220 = ssub.s32 %s21, %s33
    %s221 = ssub.s32 %s22, %s29
    %s222 = sor.u32 %s220, %s221
    %p223 = scmp.eq.s32.totalorder %s222, 0
    %s225 = sadd.s32 %s224, 1
    %s226 = scalar_select %p223, %s224, %s225
    %p229 = pneg %p223
    %p230 = scmp.eq.s32.totalorder %s14, 31
    %p231 = por %p229, %p230
    %p232 = scmp.ne.s32.totalorder %s224, %s227
    %p233 = scmp.eq.s32.totalorder %s14, 0
    %p234 = por %p232, %p233
    %p235 = scmp.ne.s32.totalorder %s224, %s227
    %p236 = scmp.eq.s32.totalorder %s19, 31
    %p237 = por %p235, %p236
    %p238 = scmp.ne.s32.totalorder %s227, %s228
    %p239 = scmp.eq.s32.totalorder %s19, 0
    %p240 = por %p238, %p239
    %p241 = scmp.ne.s32.totalorder %s227, %s228
    %p242 = scmp.eq.s32.totalorder %s20, 31
    %p243 = por %p241, %p242
    %p245 = scmp.ne.s32.totalorder %s228, %s244
    %p246 = scmp.eq.s32.totalorder %s20, 0
    %p247 = por %p245, %p246
    %p248 = scmp.le.s32.totalorder 1, %s14
    %p249 = scmp.lt.s32.totalorder %s14, 33
    %p250 = pnand %p248, %p249
    %p251 = pneg %p250
    // Predicated region
    $region9: #{hdc_module_forward.16} parent=5 // pred_check
      _
    $region10: #{hdc_module_forward.16} parent=5 // pred_check_branch
      %253 = sbr.rel (%p250) target = $region12
    $region11: #{hdc_module_forward.16} parent=5 // pred_region
      %s254 = ssub.s32 %s14, 1
      // Predicated region
      $region13: #{hdc_module_forward.16} parent=11 // pred_check
        %p255 = pneg %p135
      $region14: #{hdc_module_forward.16} parent=11 // pred_check_branch
        %257 = sbr.rel (%p255) target = $region16
      $region15: #{hdc_module_forward.16} parent=11 // pred_region
        _
      $region16: #{hdc_module_forward.16} parent=11 // pred_fallthru
        _
      // Predicated region
      $region17: #{hdc_module_forward.16} parent=11 // pred_check
        %p258 = pneg %p156
      $region18: #{hdc_module_forward.16} parent=11 // pred_check_branch
        %260 = sbr.rel (%p258) target = $region20
      $region19: #{hdc_module_forward.16} parent=11 // pred_region
        _
      $region20: #{hdc_module_forward.16} parent=11 // pred_fallthru
        _
    $region12: #{hdc_module_forward.16} parent=5 // pred_fallthru
      _
    %p261 = scmp.lt.s32.totalorder %s14, 32
    // Predicated region
    $region21: #{hdc_module_forward.16} parent=5 // pred_check
      %p262 = pneg %p261
    $region22: #{hdc_module_forward.16} parent=5 // pred_check_branch
      %264 = sbr.rel (%p262) target = $region24
    $region23: #{hdc_module_forward.16} parent=5 // pred_region
      // Predicated region
      $region25: #{hdc_module_forward.16} parent=23 // pred_check
        %p265 = pneg %p48
      $region26: #{hdc_module_forward.16} parent=23 // pred_check_branch
        %267 = sbr.rel (%p265) target = $region28
      $region27: #{hdc_module_forward.16} parent=23 // pred_region
        %p268 = scmp.lt.s32.totalorder %s21, 1
        %s269 = scalar_select %p268, %s21, 1
        %p270 = scmp.lt.s32.totalorder %s22, 17
        %s271 = scalar_select %p270, %s22, 17
        %s272 = smul.addr %s271, 3
        %s273 = smul.addr %s269, 54
        %s274 = sadd.s32 %s272, %s273
        %s275 = smul.addr %s274, 2
        %s276 = scalar_lea.vmem %s0, %s275
      $region28: #{hdc_module_forward.16} parent=23 // pred_fallthru
        _
      // Predicated region
      $region29: #{hdc_module_forward.16} parent=23 // pred_check
        %p277 = pneg %p78
      $region30: #{hdc_module_forward.16} parent=23 // pred_check_branch
        %279 = sbr.rel (%p277) target = $region32
      $region31: #{hdc_module_forward.16} parent=23 // pred_region
        %s280 = sadd.s32 %s22, 1
        %p281 = scmp.lt.s32.totalorder %s21, 1
        %s282 = scalar_select %p281, %s21, 1
        %p283 = scmp.lt.s32.totalorder %s280, 17
        %s284 = scalar_select %p283, %s280, 17
        %s285 = smul.addr %s284, 3
        %s286 = smul.addr %s282, 54
        %s287 = sadd.s32 %s285, %s286
        %s288 = smul.addr %s287, 2
        %s289 = scalar_lea.vmem %s1, %s288
        %s290 = sadd.s32 %s22, 1
      $region32: #{hdc_module_forward.16} parent=23 // pred_fallthru
        _
      // Predicated region
      $region33: #{hdc_module_forward.16} parent=23 // pred_check
        %p291 = pneg %p108
      $region34: #{hdc_module_forward.16} parent=23 // pred_check_branch
        %293 = sbr.rel (%p291) target = $region36
      $region35: #{hdc_module_forward.16} parent=23 // pred_region
        %s294 = sadd.s32 %s22, 2
        %p295 = scmp.lt.s32.totalorder %s21, 1
        %s296 = scalar_select %p295, %s21, 1
        %p297 = scmp.lt.s32.totalorder %s294, 17
        %s298 = scalar_select %p297, %s294, 17
        %s299 = smul.addr %s298, 3
        %s300 = smul.addr %s296, 54
        %s301 = sadd.s32 %s299, %s300
        %s302 = smul.addr %s301, 2
        %s303 = scalar_lea.vmem %s2, %s302
        %s304 = sadd.s32 %s22, 2
      $region36: #{hdc_module_forward.16} parent=23 // pred_fallthru
        _
    $region24: #{hdc_module_forward.16} parent=5 // pred_fallthru
      _
    %p305 = scmp.le.s32.totalorder 1, %s14
    %p306 = scmp.lt.s32.totalorder %s14, 33
    %p307 = pnand %p305, %p306
    %p308 = pneg %p307
    // Predicated region
    $region37: #{hdc_module_forward.16} parent=5 // pred_check
      _
    $region38: #{hdc_module_forward.16} parent=5 // pred_check_branch
      %310 = sbr.rel (%p307) target = $region40
    $region39: #{hdc_module_forward.16} parent=5 // pred_region
      %s311 = ssub.s32 %s14, 1
      %p312 = scmp.lt.s32.totalorder %s23, 1
      %s313 = scalar_select %p312, %s23, 1
      %p314 = scmp.lt.s32.totalorder %s24, 17
      %s315 = scalar_select %p314, %s24, 17
      %s316 = smul.addr %s315, 3
      %s317 = smul.addr %s313, 54
      %s318 = sadd.s32 %s316, %s317
      %s319 = smul.addr %s318, 2
      %s320 = scalar_lea.vmem %s0, %s319
      %p321 = pneg %p54
      %p322 = pneg %p51
      %s323 = sadd.s32 %s24, 1
      %p324 = scmp.lt.s32.totalorder %s23, 1
      %s325 = scalar_select %p324, %s23, 1
      %p326 = scmp.lt.s32.totalorder %s323, 17
      %s327 = scalar_select %p326, %s323, 17
      %s328 = smul.addr %s327, 3
      %s329 = smul.addr %s325, 54
      %s330 = sadd.s32 %s328, %s329
      %s331 = smul.addr %s330, 2
      %s332 = scalar_lea.vmem %s1, %s331
      %p333 = pneg %p84
      %p334 = pneg %p81
      %s335 = sadd.s32 %s24, 2
      %p336 = scmp.lt.s32.totalorder %s23, 1
      %s337 = scalar_select %p336, %s23, 1
      %p338 = scmp.lt.s32.totalorder %s335, 17
      %s339 = scalar_select %p338, %s335, 17
      %s340 = smul.addr %s339, 3
      %s341 = smul.addr %s337, 54
      %s342 = sadd.s32 %s340, %s341
      %s343 = smul.addr %s342, 2
      %s344 = scalar_lea.vmem %s2, %s343
      %p345 = pneg %p114
      %p346 = pneg %p111
      %p347 = pneg %p135
      %p348 = pneg %p132
      %p349 = pneg %p156
      %p350 = pneg %p153
      %p351 = pneg %p184
      %p352 = pneg %p181
      %s353 = smul.u32 2, %s24
      %p354 = scmp.lt.s32.totalorder %s23, 1
      %s355 = scalar_select %p354, %s23, 1
      %p356 = scmp.lt.s32.totalorder %s353, 31
      %s357 = scalar_select %p356, %s353, 31
      %s358 = smul.addr %s355, 32
      %s359 = sadd.s32 %s357, %s358
      %s360 = smul.addr %s359, 2
      %s361 = scalar_lea.vmem %s5, %s360
      %p362 = pneg %p212
      %p363 = pneg %p209
      %p364 = scmp.lt.s32.totalorder %s23, 1
      %s365 = scalar_select %p364, %s23, 1
      %p366 = scmp.lt.s32.totalorder %s24, 15
      %s367 = scalar_select %p366, %s24, 15
      %s368 = smul.addr %s365, 16
      %s369 = sadd.s32 %s367, %s368
      %s370 = smul.addr %s369, 2
      %s371 = scalar_lea.vmem %s6, %s370
      %p372 = pneg %p240
      %p373 = pneg %p237
      %p374 = scmp.lt.s32.totalorder %s23, 1
      %s375 = scalar_select %p374, %s23, 1
      %p376 = scmp.lt.s32.totalorder %s24, 15
      %s377 = scalar_select %p376, %s24, 15
      %s378 = smul.addr %s375, 16
      %s379 = sadd.s32 %s377, %s378
      %s380 = smul.addr %s379, 2
      %s381 = scalar_lea.vmem %s7, %s380
      %p382 = scmp.lt.s32.totalorder %s23, 1
      %s383 = scalar_select %p382, %s23, 1
      %p384 = scmp.lt.s32.totalorder %s24, 17
      %s385 = scalar_select %p384, %s24, 17
      %s386 = smul.addr %s385, 3
      %s387 = smul.addr %s383, 54
      %s388 = sadd.s32 %s386, %s387
      %s389 = smul.addr %s388, 2
      %s390 = scalar_lea.vmem %s0, %s389
      %s391 = sadd.s32 %s24, 1
      %p392 = scmp.lt.s32.totalorder %s23, 1
      %s393 = scalar_select %p392, %s23, 1
      %p394 = scmp.lt.s32.totalorder %s391, 17
      %s395 = scalar_select %p394, %s391, 17
      %s396 = smul.addr %s395, 3
      %s397 = smul.addr %s393, 54
      %s398 = sadd.s32 %s396, %s397
      %s399 = smul.addr %s398, 2
      %s400 = scalar_lea.vmem %s1, %s399
      %s401 = sadd.s32 %s24, 1
      %s402 = sadd.s32 %s24, 2
      %p403 = scmp.lt.s32.totalorder %s23, 1
      %s404 = scalar_select %p403, %s23, 1
      %p405 = scmp.lt.s32.totalorder %s402, 17
      %s406 = scalar_select %p405, %s402, 17
      %s407 = smul.addr %s406, 3
      %s408 = smul.addr %s404, 54
      %s409 = sadd.s32 %s407, %s408
      %s410 = smul.addr %s409, 2
      %s411 = scalar_lea.vmem %s2, %s410
      %s412 = sadd.s32 %s24, 2
      %s413 = smul.u32 2, %s24
      %p414 = scmp.lt.s32.totalorder %s23, 1
      %s415 = scalar_select %p414, %s23, 1
      %p416 = scmp.lt.s32.totalorder %s413, 31
      %s417 = scalar_select %p416, %s413, 31
      %s418 = smul.addr %s415, 32
      %s419 = sadd.s32 %s417, %s418
      %s420 = smul.addr %s419, 2
      %s421 = scalar_lea.vmem %s5, %s420
      %s422 = smul.u32 2, %s24
      %p423 = scmp.lt.s32.totalorder %s23, 1
      %s424 = scalar_select %p423, %s23, 1
      %p425 = scmp.lt.s32.totalorder %s24, 15
      %s426 = scalar_select %p425, %s24, 15
      %s427 = smul.addr %s424, 16
      %s428 = sadd.s32 %s426, %s427
      %s429 = smul.addr %s428, 2
      %s430 = scalar_lea.vmem %s6, %s429
      %p431 = scmp.lt.s32.totalorder %s23, 1
      %s432 = scalar_select %p431, %s23, 1
      %p433 = scmp.lt.s32.totalorder %s24, 15
      %s434 = scalar_select %p433, %s24, 15
      %s435 = smul.addr %s432, 16
      %s436 = sadd.s32 %s434, %s435
      %s437 = smul.addr %s436, 2
      %s438 = scalar_lea.vmem %s7, %s437
      %v439 = vld [vmem:[%s390] sm:$0x3f]
      %v440 = vld [vmem:[%s3] sm:$0x3]
      %s441 = scalar_lea.vmem %s3, 2
      %v442 = vld [vmem:[%s441] sm:$0x3]
      %v444 = vcombine.high %v439, %v439
      %v446 = vunpack.c.l.s4 1983009808
      %v447 = vunpack.c.0.s8 %v446
      %v448 = vlaneseq
      %v449 = vshrl.u32 %v448, 7
      %v450 = vsub.s32 %v447, %v449
      %v451 = vrot.slane %v439, %v450
      %v453 = vunpack.c.l.s4 1983009808
      %v454 = vunpack.c.0.s8 %v453
      %v455 = vlaneseq
      %v456 = vshrl.u32 %v455, 7
      %v457 = vsub.s32 %v454, %v456
      %v458 = vrot.slane %v444, %v457
      %v459 = vcombine.high %v451, %v451
      %460 = vrot.lane.b32.xlu0 %v451, 112
      %v461 = vpop.permute.xlu0 %460
      %462 = vrot.lane.b32.xlu0 %v459, 112
      %v463 = vpop.permute.xlu0 %462
      %464 = vrot.lane.b32.xlu0 %v458, 112
      %v465 = vpop.permute.xlu0 %464
      %vm466 = vcmask 916480
      %v467 = vsel %vm466, %v461, %v463
      %v468 = vsel %vm466, %v463, %v465
      %vm469 = vcmask 15360
      %v471 = vsel %vm469, %v442, 0
      %vm473 = vcmask 1041408
      %v474 = vsel %vm473, %v467, 0
      %v476 = vsel %vm473, %v468, 0
      %478 = vmatprep.subr.mxu0 %v476
      %479 = vmatpush1.msra.mxu0 %v474
      %480 = vmatprep.subr.mxu0 0.0
      %481 = vmatpush1.msra.mxu0 0.0
      %482 = vmatprep.subr.mxu0 0.0
      %483 = vmatpush1.msra.mxu0 0.0
      %484 = vmatprep.subr.mxu0 0.0
      %485 = vmatpush1.msra.mxu0 0.0
      %486 = vmatprep.subr.mxu0 0.0
      %487 = vmatpush1.msra.mxu0 0.0
      %488 = vmatprep.subr.mxu0 0.0
      %489 = vmatpush1.msra.mxu0 0.0
      %490 = vmatprep.subr.mxu0 0.0
      %491 = vmatpush1.msra.mxu0 0.0
      %492 = vmatprep.subr.mxu0 0.0
      %493 = vmatpush1.msra.mxu0 0.0
      %494 = vmatprep.subr.mxu0 0.0
      %495 = vmatpush1.msra.mxu0 0.0
      %496 = vmatprep.subr.mxu0 0.0
      %497 = vmatpush1.msra.mxu0 0.0
      %498 = vmatprep.subr.mxu0 0.0
      %499 = vmatpush1.msra.mxu0 0.0
      %500 = vmatprep.subr.mxu0 0.0
      %501 = vmatpush1.msra.mxu0 0.0
      %502 = vmatprep.subr.mxu0 0.0
      %503 = vmatpush1.msra.mxu0 0.0
      %504 = vmatprep.subr.mxu0 0.0
      %505 = vmatpush1.msra.mxu0 0.0
      %506 = vmatprep.subr.mxu0 0.0
      %507 = vmatpush1.msra.mxu0 0.0
      %508 = vmatprep.subr.mxu0 0.0
      %509 = vmatpush1.msra.mxu0 0.0
      %510 = vmatprep.subr.mxu0 0.0
      %511 = vmatpush1.msra.mxu0 0.0
      %512 = vmatprep.subr.mxu0 0.0
      %513 = vmatpush1.msra.mxu0 0.0
      %514 = vmatprep.subr.mxu0 0.0
      %515 = vmatpush1.msra.mxu0 0.0
      %516 = vmatprep.subr.mxu0 0.0
      %517 = vmatpush1.msra.mxu0 0.0
      %518 = vmatprep.subr.mxu0 0.0
      %519 = vmatpush1.msra.mxu0 0.0
      %520 = vmatprep.subr.mxu0 0.0
      %521 = vmatpush1.msra.mxu0 0.0
      %522 = vmatprep.subr.mxu0 0.0
      %523 = vmatpush1.msra.mxu0 0.0
      %524 = vmatprep.subr.mxu0 0.0
      %525 = vmatpush1.msra.mxu0 0.0
      %526 = vmatprep.subr.mxu0 0.0
      %527 = vmatpush1.msra.mxu0 0.0
      %528 = vmatprep.subr.mxu0 0.0
      %529 = vmatpush1.msra.mxu0 0.0
      %530 = vmatprep.subr.mxu0 0.0
      %531 = vmatpush1.msra.mxu0 0.0
      %532 = vmatprep.subr.mxu0 0.0
      %533 = vmatpush1.msra.mxu0 0.0
      %534 = vmatprep.subr.mxu0 0.0
      %535 = vmatpush1.msra.mxu0 0.0
      %536 = vmatprep.subr.mxu0 0.0
      %537 = vmatpush1.msra.mxu0 0.0
      %538 = vmatprep.subr.mxu0 0.0
      %539 = vmatpush1.msra.mxu0 0.0
      %540 = vmatprep.subr.mxu0 0.0
      %541 = vmatpush1.msra.mxu0 0.0
      %542 = vmatprep.mubr.f32.mxu0 0.0
      %543 = vmatmul.mubr.f32.gmra.mrb[0].mxu0 %v471
      %v544 = vpop.f32.mrb[0].mxu0
      %v545 = vadd.f32 0.0, %v544
      %v546 = vpop.f32.mrb[0].mxu0
      %v547 = vadd.f32 0.0, %v546
      %548 = vdwg.mxu0
      %v550 = vsel %vm469, %v440, 0
      %v552 = vsel %vm473, %v451, 0
      %v554 = vsel %vm473, %v459, 0
      %556 = vmatprep.subr.mxu0 %v554
      %557 = vmatpush1.msra.mxu0 %v552
      %558 = vmatprep.subr.mxu0 0.0
      %559 = vmatpush1.msra.mxu0 0.0
      %560 = vmatprep.subr.mxu0 0.0
      %561 = vmatpush1.msra.mxu0 0.0
      %562 = vmatprep.subr.mxu0 0.0
      %563 = vmatpush1.msra.mxu0 0.0
      %564 = vmatprep.subr.mxu0 0.0
      %565 = vmatpush1.msra.mxu0 0.0
      %566 = vmatprep.subr.mxu0 0.0
      %567 = vmatpush1.msra.mxu0 0.0
      %568 = vmatprep.subr.mxu0 0.0
      %569 = vmatpush1.msra.mxu0 0.0
      %570 = vmatprep.subr.mxu0 0.0
      %571 = vmatpush1.msra.mxu0 0.0
      %572 = vmatprep.subr.mxu0 0.0
      %573 = vmatpush1.msra.mxu0 0.0
      %574 = vmatprep.subr.mxu0 0.0
      %575 = vmatpush1.msra.mxu0 0.0
      %576 = vmatprep.subr.mxu0 0.0
      %577 = vmatpush1.msra.mxu0 0.0
      %578 = vmatprep.subr.mxu0 0.0
      %579 = vmatpush1.msra.mxu0 0.0
      %580 = vmatprep.subr.mxu0 0.0
      %581 = vmatpush1.msra.mxu0 0.0
      %582 = vmatprep.subr.mxu0 0.0
      %583 = vmatpush1.msra.mxu0 0.0
      %584 = vmatprep.subr.mxu0 0.0
      %585 = vmatpush1.msra.mxu0 0.0
      %586 = vmatprep.subr.mxu0 0.0
      %587 = vmatpush1.msra.mxu0 0.0
      %588 = vmatprep.subr.mxu0 0.0
      %589 = vmatpush1.msra.mxu0 0.0
      %590 = vmatprep.subr.mxu0 0.0
      %591 = vmatpush1.msra.mxu0 0.0
      %592 = vmatprep.subr.mxu0 0.0
      %593 = vmatpush1.msra.mxu0 0.0
      %594 = vmatprep.subr.mxu0 0.0
      %595 = vmatpush1.msra.mxu0 0.0
      %596 = vmatprep.subr.mxu0 0.0
      %597 = vmatpush1.msra.mxu0 0.0
      %598 = vmatprep.subr.mxu0 0.0
      %599 = vmatpush1.msra.mxu0 0.0
      %600 = vmatprep.subr.mxu0 0.0
      %601 = vmatpush1.msra.mxu0 0.0
      %602 = vmatprep.subr.mxu0 0.0
      %603 = vmatpush1.msra.mxu0 0.0
      %604 = vmatprep.subr.mxu0 0.0
      %605 = vmatpush1.msra.mxu0 0.0
      %606 = vmatprep.subr.mxu0 0.0
      %607 = vmatpush1.msra.mxu0 0.0
      %608 = vmatprep.subr.mxu0 0.0
      %609 = vmatpush1.msra.mxu0 0.0
      %610 = vmatprep.subr.mxu0 0.0
      %611 = vmatpush1.msra.mxu0 0.0
      %612 = vmatprep.subr.mxu0 0.0
      %613 = vmatpush1.msra.mxu0 0.0
      %614 = vmatprep.subr.mxu0 0.0
      %615 = vmatpush1.msra.mxu0 0.0
      %616 = vmatprep.subr.mxu0 0.0
      %617 = vmatpush1.msra.mxu0 0.0
      %618 = vmatprep.subr.mxu0 0.0
      %619 = vmatpush1.msra.mxu0 0.0
      %620 = vmatprep.mubr.f32.mxu0 0.0
      %621 = vmatmul.mubr.f32.gmra.mrb[0].mxu0 %v550
      %v622 = vpop.f32.mrb[0].mxu0
      %v623 = vadd.f32 %v545, %v622
      %v624 = vpop.f32.mrb[0].mxu0
      %v625 = vadd.f32 %v547, %v624
      %626 = vdwg.mxu0
      %s627 = scalar_lea.vmem %s3, 4
      %v628 = vld [vmem:[%s627] sm:$0x3]
      %629 = vrot.lane.b32.xlu0 %v451, 96
      %v630 = vpop.permute.xlu0 %629
      %631 = vrot.lane.b32.xlu0 %v459, 96
      %v632 = vpop.permute.xlu0 %631
      %633 = vrot.lane.b32.xlu0 %v458, 96
      %v634 = vpop.permute.xlu0 %633
      %vm635 = vcmask 785408
      %v636 = vsel %vm635, %v630, %v632
      %v637 = vsel %vm635, %v632, %v634
      %v639 = vsel %vm469, %v628, 0
      %v641 = vsel %vm473, %v636, 0
      %v643 = vsel %vm473, %v637, 0
      %645 = vmatprep.subr.mxu0 %v643
      %646 = vmatpush1.msra.mxu0 %v641
      %647 = vmatprep.subr.mxu0 0.0
      %648 = vmatpush1.msra.mxu0 0.0
      %649 = vmatprep.subr.mxu0 0.0
      %650 = vmatpush1.msra.mxu0 0.0
      %651 = vmatprep.subr.mxu0 0.0
      %652 = vmatpush1.msra.mxu0 0.0
      %653 = vmatprep.subr.mxu0 0.0
      %654 = vmatpush1.msra.mxu0 0.0
      %655 = vmatprep.subr.mxu0 0.0
      %656 = vmatpush1.msra.mxu0 0.0
      %657 = vmatprep.subr.mxu0 0.0
      %658 = vmatpush1.msra.mxu0 0.0
      %659 = vmatprep.subr.mxu0 0.0
      %660 = vmatpush1.msra.mxu0 0.0
      %661 = vmatprep.subr.mxu0 0.0
      %662 = vmatpush1.msra.mxu0 0.0
      %663 = vmatprep.subr.mxu0 0.0
      %664 = vmatpush1.msra.mxu0 0.0
      %665 = vmatprep.subr.mxu0 0.0
      %666 = vmatpush1.msra.mxu0 0.0
      %667 = vmatprep.subr.mxu0 0.0
      %668 = vmatpush1.msra.mxu0 0.0
      %669 = vmatprep.subr.mxu0 0.0
      %670 = vmatpush1.msra.mxu0 0.0
      %671 = vmatprep.subr.mxu0 0.0
      %672 = vmatpush1.msra.mxu0 0.0
      %673 = vmatprep.subr.mxu0 0.0
      %674 = vmatpush1.msra.mxu0 0.0
      %675 = vmatprep.subr.mxu0 0.0
      %676 = vmatpush1.msra.mxu0 0.0
      %677 = vmatprep.subr.mxu0 0.0
      %678 = vmatpush1.msra.mxu0 0.0
      %679 = vmatprep.subr.mxu0 0.0
      %680 = vmatpush1.msra.mxu0 0.0
      %681 = vmatprep.subr.mxu0 0.0
      %682 = vmatpush1.msra.mxu0 0.0
      %683 = vmatprep.subr.mxu0 0.0
      %684 = vmatpush1.msra.mxu0 0.0
      %685 = vmatprep.subr.mxu0 0.0
      %686 = vmatpush1.msra.mxu0 0.0
      %687 = vmatprep.subr.mxu0 0.0
      %688 = vmatpush1.msra.mxu0 0.0
      %689 = vmatprep.subr.mxu0 0.0
      %690 = vmatpush1.msra.mxu0 0.0
      %691 = vmatprep.subr.mxu0 0.0
      %692 = vmatpush1.msra.mxu0 0.0
      %693 = vmatprep.subr.mxu0 0.0
      %694 = vmatpush1.msra.mxu0 0.0
      %695 = vmatprep.subr.mxu0 0.0
      %696 = vmatpush1.msra.mxu0 0.0
      %697 = vmatprep.subr.mxu0 0.0
      %698 = vmatpush1.msra.mxu0 0.0
      %699 = vmatprep.subr.mxu0 0.0
      %700 = vmatpush1.msra.mxu0 0.0
      %701 = vmatprep.subr.mxu0 0.0
      %702 = vmatpush1.msra.mxu0 0.0
      %703 = vmatprep.subr.mxu0 0.0
      %704 = vmatpush1.msra.mxu0 0.0
      %705 = vmatprep.subr.mxu0 0.0
      %706 = vmatpush1.msra.mxu0 0.0
      %707 = vmatprep.subr.mxu0 0.0
      %708 = vmatpush1.msra.mxu0 0.0
      %709 = vmatprep.mubr.f32.mxu0 0.0
      %710 = vmatmul.mubr.f32.gmra.mrb[0].mxu0 %v639
      %v711 = vpop.f32.mrb[0].mxu0
      %v712 = vadd.f32 0.0, %v711
      %v713 = vpop.f32.mrb[0].mxu0
      %v714 = vadd.f32 0.0, %v713
      %715 = vdwg.mxu0
      %v716 = vadd.f32 %v623, %v712
      %v717 = vadd.f32 %v625, %v714
      %v718 = vld [vmem:[%s400] sm:$0x3f]
      %s719 = scalar_lea.vmem %s3, 6
      %v720 = vld [vmem:[%s719] sm:$0x3]
      %v723 = vunpack.c.l.s4 1983009808
      %v724 = vunpack.c.0.s8 %v723
      %v725 = vlaneseq
      %v726 = vshrl.u32 %v725, 7
      %v727 = vsub.s32 %v724, %v726
      %v728 = vrot.slane %v718, %v727
      %v729 = vcombine.high %v728, %v728
      %v731 = vsel %vm469, %v720, 0
      %v733 = vsel %vm473, %v728, 0
      %v735 = vsel %vm473, %v729, 0
      %737 = vmatprep.subr.mxu0 %v735
      %738 = vmatpush1.msra.mxu0 %v733
      %739 = vmatprep.subr.mxu0 0.0
      %740 = vmatpush1.msra.mxu0 0.0
      %741 = vmatprep.subr.mxu0 0.0
      %742 = vmatpush1.msra.mxu0 0.0
      %743 = vmatprep.subr.mxu0 0.0
      %744 = vmatpush1.msra.mxu0 0.0
      %745 = vmatprep.subr.mxu0 0.0
      %746 = vmatpush1.msra.mxu0 0.0
      %747 = vmatprep.subr.mxu0 0.0
      %748 = vmatpush1.msra.mxu0 0.0
      %749 = vmatprep.subr.mxu0 0.0
      %750 = vmatpush1.msra.mxu0 0.0
      %751 = vmatprep.subr.mxu0 0.0
      %752 = vmatpush1.msra.mxu0 0.0
      %753 = vmatprep.subr.mxu0 0.0
      %754 = vmatpush1.msra.mxu0 0.0
      %755 = vmatprep.subr.mxu0 0.0
      %756 = vmatpush1.msra.mxu0 0.0
      %757 = vmatprep.subr.mxu0 0.0
      %758 = vmatpush1.msra.mxu0 0.0
      %759 = vmatprep.subr.mxu0 0.0
      %760 = vmatpush1.msra.mxu0 0.0
      %761 = vmatprep.subr.mxu0 0.0
      %762 = vmatpush1.msra.mxu0 0.0
      %763 = vmatprep.subr.mxu0 0.0
      %764 = vmatpush1.msra.mxu0 0.0
      %765 = vmatprep.subr.mxu0 0.0
      %766 = vmatpush1.msra.mxu0 0.0
      %767 = vmatprep.subr.mxu0 0.0
      %768 = vmatpush1.msra.mxu0 0.0
      %769 = vmatprep.subr.mxu0 0.0
      %770 = vmatpush1.msra.mxu0 0.0
      %771 = vmatprep.subr.mxu0 0.0
      %772 = vmatpush1.msra.mxu0 0.0
      %773 = vmatprep.subr.mxu0 0.0
      %774 = vmatpush1.msra.mxu0 0.0
      %775 = vmatprep.subr.mxu0 0.0
      %776 = vmatpush1.msra.mxu0 0.0
      %777 = vmatprep.subr.mxu0 0.0
      %778 = vmatpush1.msra.mxu0 0.0
      %779 = vmatprep.subr.mxu0 0.0
      %780 = vmatpush1.msra.mxu0 0.0
      %781 = vmatprep.subr.mxu0 0.0
      %782 = vmatpush1.msra.mxu0 0.0
      %783 = vmatprep.subr.mxu0 0.0
      %784 = vmatpush1.msra.mxu0 0.0
      %785 = vmatprep.subr.mxu0 0.0
      %786 = vmatpush1.msra.mxu0 0.0
      %787 = vmatprep.subr.mxu0 0.0
      %788 = vmatpush1.msra.mxu0 0.0
      %789 = vmatprep.subr.mxu0 0.0
      %790 = vmatpush1.msra.mxu0 0.0
      %791 = vmatprep.subr.mxu0 0.0
      %792 = vmatpush1.msra.mxu0 0.0
      %793 = vmatprep.subr.mxu0 0.0
      %794 = vmatpush1.msra.mxu0 0.0
      %795 = vmatprep.subr.mxu0 0.0
      %796 = vmatpush1.msra.mxu0 0.0
      %797 = vmatprep.subr.mxu0 0.0
      %798 = vmatpush1.msra.mxu0 0.0
      %799 = vmatprep.subr.mxu0 0.0
      %800 = vmatpush1.msra.mxu0 0.0
      %801 = vmatprep.mubr.f32.mxu0 0.0
      %802 = vmatmul.mubr.f32.gmra.mrb[0].mxu0 %v731
      %v803 = vpop.f32.mrb[0].mxu0
      %v804 = vadd.f32 0.0, %v803
      %v805 = vpop.f32.mrb[0].mxu0
      %v806 = vadd.f32 0.0, %v805
      %807 = vdwg.mxu0
      %v808 = vadd.f32 %v716, %v804
      %v809 = vadd.f32 %v717, %v806
      %s810 = scalar_lea.vmem %s3, 8
      %v811 = vld [vmem:[%s810] sm:$0x3]
      %v812 = vcombine.high %v718, %v718
      %v814 = vunpack.c.l.s4 1983009808
      %v815 = vunpack.c.0.s8 %v814
      %v816 = vlaneseq
      %v817 = vshrl.u32 %v816, 7
      %v818 = vsub.s32 %v815, %v817
      %v819 = vrot.slane %v812, %v818
      %820 = vrot.lane.b32.xlu0 %v728, 112
      %v821 = vpop.permute.xlu0 %820
      %822 = vrot.lane.b32.xlu0 %v729, 112
      %v823 = vpop.permute.xlu0 %822
      %824 = vrot.lane.b32.xlu0 %v819, 112
      %v825 = vpop.permute.xlu0 %824
      %v826 = vsel %vm466, %v821, %v823
      %v827 = vsel %vm466, %v823, %v825
      %v829 = vsel %vm469, %v811, 0
      %v831 = vsel %vm473, %v826, 0
      %v833 = vsel %vm473, %v827, 0
      %835 = vmatprep.subr.mxu0 %v833
      %836 = vmatpush1.msra.mxu0 %v831
      %837 = vmatprep.subr.mxu0 0.0
      %838 = vmatpush1.msra.mxu0 0.0
      %839 = vmatprep.subr.mxu0 0.0
      %840 = vmatpush1.msra.mxu0 0.0
      %841 = vmatprep.subr.mxu0 0.0
      %842 = vmatpush1.msra.mxu0 0.0
      %843 = vmatprep.subr.mxu0 0.0
      %844 = vmatpush1.msra.mxu0 0.0
      %845 = vmatprep.subr.mxu0 0.0
      %846 = vmatpush1.msra.mxu0 0.0
      %847 = vmatprep.subr.mxu0 0.0
      %848 = vmatpush1.msra.mxu0 0.0
      %849 = vmatprep.subr.mxu0 0.0
      %850 = vmatpush1.msra.mxu0 0.0
      %851 = vmatprep.subr.mxu0 0.0
      %852 = vmatpush1.msra.mxu0 0.0
      %853 = vmatprep.subr.mxu0 0.0
      %854 = vmatpush1.msra.mxu0 0.0
      %855 = vmatprep.subr.mxu0 0.0
      %856 = vmatpush1.msra.mxu0 0.0
      %857 = vmatprep.subr.mxu0 0.0
      %858 = vmatpush1.msra.mxu0 0.0
      %859 = vmatprep.subr.mxu0 0.0
      %860 = vmatpush1.msra.mxu0 0.0
      %861 = vmatprep.subr.mxu0 0.0
      %862 = vmatpush1.msra.mxu0 0.0
      %863 = vmatprep.subr.mxu0 0.0
      %864 = vmatpush1.msra.mxu0 0.0
      %865 = vmatprep.subr.mxu0 0.0
      %866 = vmatpush1.msra.mxu0 0.0
      %867 = vmatprep.subr.mxu0 0.0
      %868 = vmatpush1.msra.mxu0 0.0
      %869 = vmatprep.subr.mxu0 0.0
      %870 = vmatpush1.msra.mxu0 0.0
      %871 = vmatprep.subr.mxu0 0.0
      %872 = vmatpush1.msra.mxu0 0.0
      %873 = vmatprep.subr.mxu0 0.0
      %874 = vmatpush1.msra.mxu0 0.0
      %875 = vmatprep.subr.mxu0 0.0
      %876 = vmatpush1.msra.mxu0 0.0
      %877 = vmatprep.subr.mxu0 0.0
      %878 = vmatpush1.msra.mxu0 0.0
      %879 = vmatprep.subr.mxu0 0.0
      %880 = vmatpush1.msra.mxu0 0.0
      %881 = vmatprep.subr.mxu0 0.0
      %882 = vmatpush1.msra.mxu0 0.0
      %883 = vmatprep.subr.mxu0 0.0
      %884 = vmatpush1.msra.mxu0 0.0
      %885 = vmatprep.subr.mxu0 0.0
      %886 = vmatpush1.msra.mxu0 0.0
      %887 = vmatprep.subr.mxu0 0.0
      %888 = vmatpush1.msra.mxu0 0.0
      %889 = vmatprep.subr.mxu0 0.0
      %890 = vmatpush1.msra.mxu0 0.0
      %891 = vmatprep.subr.mxu0 0.0
      %892 = vmatpush1.msra.mxu0 0.0
      %893 = vmatprep.subr.mxu0 0.0
      %894 = vmatpush1.msra.mxu0 0.0
      %895 = vmatprep.subr.mxu0 0.0
      %896 = vmatpush1.msra.mxu0 0.0
      %897 = vmatprep.subr.mxu0 0.0
      %898 = vmatpush1.msra.mxu0 0.0
      %899 = vmatprep.mubr.f32.mxu0 0.0
      %900 = vmatmul.mubr.f32.gmra.mrb[0].mxu0 %v829
      %v901 = vpop.f32.mrb[0].mxu0
      %v902 = vadd.f32 0.0, %v901
      %v903 = vpop.f32.mrb[0].mxu0
      %v904 = vadd.f32 0.0, %v903
      %905 = vdwg.mxu0
      %v906 = vadd.f32 %v808, %v902
      %v907 = vadd.f32 %v809, %v904
      %s908 = scalar_lea.vmem %s3, 10
      %v909 = vld [vmem:[%s908] sm:$0x3]
      %910 = vrot.lane.b32.xlu0 %v728, 96
      %v911 = vpop.permute.xlu0 %910
      %912 = vrot.lane.b32.xlu0 %v729, 96
      %v913 = vpop.permute.xlu0 %912
      %914 = vrot.lane.b32.xlu0 %v819, 96
      %v915 = vpop.permute.xlu0 %914
      %v916 = vsel %vm635, %v911, %v913
      %v917 = vsel %vm635, %v913, %v915
      %v919 = vsel %vm469, %v909, 0
      %v921 = vsel %vm473, %v916, 0
      %v923 = vsel %vm473, %v917, 0
      %925 = vmatprep.subr.mxu0 %v923
      %926 = vmatpush1.msra.mxu0 %v921
      %927 = vmatprep.subr.mxu0 0.0
      %928 = vmatpush1.msra.mxu0 0.0
      %929 = vmatprep.subr.mxu0 0.0
      %930 = vmatpush1.msra.mxu0 0.0
      %931 = vmatprep.subr.mxu0 0.0
      %932 = vmatpush1.msra.mxu0 0.0
      %933 = vmatprep.subr.mxu0 0.0
      %934 = vmatpush1.msra.mxu0 0.0
      %935 = vmatprep.subr.mxu0 0.0
      %936 = vmatpush1.msra.mxu0 0.0
      %937 = vmatprep.subr.mxu0 0.0
      %938 = vmatpush1.msra.mxu0 0.0
      %939 = vmatprep.subr.mxu0 0.0
      %940 = vmatpush1.msra.mxu0 0.0
      %941 = vmatprep.subr.mxu0 0.0
      %942 = vmatpush1.msra.mxu0 0.0
      %943 = vmatprep.subr.mxu0 0.0
      %944 = vmatpush1.msra.mxu0 0.0
      %945 = vmatprep.subr.mxu0 0.0
      %946 = vmatpush1.msra.mxu0 0.0
      %947 = vmatprep.subr.mxu0 0.0
      %948 = vmatpush1.msra.mxu0 0.0
      %949 = vmatprep.subr.mxu0 0.0
      %950 = vmatpush1.msra.mxu0 0.0
      %951 = vmatprep.subr.mxu0 0.0
      %952 = vmatpush1.msra.mxu0 0.0
      %953 = vmatprep.subr.mxu0 0.0
      %954 = vmatpush1.msra.mxu0 0.0
      %955 = vmatprep.subr.mxu0 0.0
      %956 = vmatpush1.msra.mxu0 0.0
      %957 = vmatprep.subr.mxu0 0.0
      %958 = vmatpush1.msra.mxu0 0.0
      %959 = vmatprep.subr.mxu0 0.0
      %960 = vmatpush1.msra.mxu0 0.0
      %961 = vmatprep.subr.mxu0 0.0
      %962 = vmatpush1.msra.mxu0 0.0
      %963 = vmatprep.subr.mxu0 0.0
      %964 = vmatpush1.msra.mxu0 0.0
      %965 = vmatprep.subr.mxu0 0.0
      %966 = vmatpush1.msra.mxu0 0.0
      %967 = vmatprep.subr.mxu0 0.0
      %968 = vmatpush1.msra.mxu0 0.0
      %969 = vmatprep.subr.mxu0 0.0
      %970 = vmatpush1.msra.mxu0 0.0
      %971 = vmatprep.subr.mxu0 0.0
      %972 = vmatpush1.msra.mxu0 0.0
      %973 = vmatprep.subr.mxu0 0.0
      %974 = vmatpush1.msra.mxu0 0.0
      %975 = vmatprep.subr.mxu0 0.0
      %976 = vmatpush1.msra.mxu0 0.0
      %977 = vmatprep.subr.mxu0 0.0
      %978 = vmatpush1.msra.mxu0 0.0
      %979 = vmatprep.subr.mxu0 0.0
      %980 = vmatpush1.msra.mxu0 0.0
      %981 = vmatprep.subr.mxu0 0.0
      %982 = vmatpush1.msra.mxu0 0.0
      %983 = vmatprep.subr.mxu0 0.0
      %984 = vmatpush1.msra.mxu0 0.0
      %985 = vmatprep.subr.mxu0 0.0
      %986 = vmatpush1.msra.mxu0 0.0
      %987 = vmatprep.subr.mxu0 0.0
      %988 = vmatpush1.msra.mxu0 0.0
      %989 = vmatprep.mubr.f32.mxu0 0.0
      %990 = vmatmul.mubr.f32.gmra.mrb[0].mxu0 %v919
      %v991 = vpop.f32.mrb[0].mxu0
      %v992 = vadd.f32 0.0, %v991
      %v993 = vpop.f32.mrb[0].mxu0
      %v994 = vadd.f32 0.0, %v993
      %995 = vdwg.mxu0
      %v996 = vadd.f32 %v906, %v992
      %v997 = vadd.f32 %v907, %v994
      %v998 = vld [vmem:[%s411] sm:$0x3f]
      %s999 = scalar_lea.vmem %s3, 12
      %v1000 = vld [vmem:[%s999] sm:$0x3]
      %v1003 = vunpack.c.l.s4 1983009808
      %v1004 = vunpack.c.0.s8 %v1003
      %v1005 = vlaneseq
      %v1006 = vshrl.u32 %v1005, 7
      %v1007 = vsub.s32 %v1004, %v1006
      %v1008 = vrot.slane %v998, %v1007
      %v1009 = vcombine.high %v1008, %v1008
      %v1011 = vsel %vm469, %v1000, 0
      %v1013 = vsel %vm473, %v1008, 0
      %v1015 = vsel %vm473, %v1009, 0
      %1017 = vmatprep.subr.mxu0 %v1015
      %1018 = vmatpush1.msra.mxu0 %v1013
      %1019 = vmatprep.subr.mxu0 0.0
      %1020 = vmatpush1.msra.mxu0 0.0
      %1021 = vmatprep.subr.mxu0 0.0
      %1022 = vmatpush1.msra.mxu0 0.0
      %1023 = vmatprep.subr.mxu0 0.0
      %1024 = vmatpush1.msra.mxu0 0.0
      %1025 = vmatprep.subr.mxu0 0.0
      %1026 = vmatpush1.msra.mxu0 0.0
      %1027 = vmatprep.subr.mxu0 0.0
      %1028 = vmatpush1.msra.mxu0 0.0
      %1029 = vmatprep.subr.mxu0 0.0
      %1030 = vmatpush1.msra.mxu0 0.0
      %1031 = vmatprep.subr.mxu0 0.0
      %1032 = vmatpush1.msra.mxu0 0.0
      %1033 = vmatprep.subr.mxu0 0.0
      %1034 = vmatpush1.msra.mxu0 0.0
      %1035 = vmatprep.subr.mxu0 0.0
      %1036 = vmatpush1.msra.mxu0 0.0
      %1037 = vmatprep.subr.mxu0 0.0
      %1038 = vmatpush1.msra.mxu0 0.0
      %1039 = vmatprep.subr.mxu0 0.0
      %1040 = vmatpush1.msra.mxu0 0.0
      %1041 = vmatprep.subr.mxu0 0.0
      %1042 = vmatpush1.msra.mxu0 0.0
      %1043 = vmatprep.subr.mxu0 0.0
      %1044 = vmatpush1.msra.mxu0 0.0
      %1045 = vmatprep.subr.mxu0 0.0
      %1046 = vmatpush1.msra.mxu0 0.0
      %1047 = vmatprep.subr.mxu0 0.0
      %1048 = vmatpush1.msra.mxu0 0.0
      %1049 = vmatprep.subr.mxu0 0.0
      %1050 = vmatpush1.msra.mxu0 0.0
      %1051 = vmatprep.subr.mxu0 0.0
      %1052 = vmatpush1.msra.mxu0 0.0
      %1053 = vmatprep.subr.mxu0 0.0
      %1054 = vmatpush1.msra.mxu0 0.0
      %1055 = vmatprep.subr.mxu0 0.0
      %1056 = vmatpush1.msra.mxu0 0.0
      %1057 = vmatprep.subr.mxu0 0.0
      %1058 = vmatpush1.msra.mxu0 0.0
      %1059 = vmatprep.subr.mxu0 0.0
      %1060 = vmatpush1.msra.mxu0 0.0
      %1061 = vmatprep.subr.mxu0 0.0
      %1062 = vmatpush1.msra.mxu0 0.0
      %1063 = vmatprep.subr.mxu0 0.0
      %1064 = vmatpush1.msra.mxu0 0.0
      %1065 = vmatprep.subr.mxu0 0.0
      %1066 = vmatpush1.msra.mxu0 0.0
      %1067 = vmatprep.subr.mxu0 0.0
      %1068 = vmatpush1.msra.mxu0 0.0
      %1069 = vmatprep.subr.mxu0 0.0
      %1070 = vmatpush1.msra.mxu0 0.0
      %1071 = vmatprep.subr.mxu0 0.0
      %1072 = vmatpush1.msra.mxu0 0.0
      %1073 = vmatprep.subr.mxu0 0.0
      %1074 = vmatpush1.msra.mxu0 0.0
      %1075 = vmatprep.subr.mxu0 0.0
      %1076 = vmatpush1.msra.mxu0 0.0
      %1077 = vmatprep.subr.mxu0 0.0
      %1078 = vmatpush1.msra.mxu0 0.0
      %1079 = vmatprep.subr.mxu0 0.0
      %1080 = vmatpush1.msra.mxu0 0.0
      %1081 = vmatprep.mubr.f32.mxu0 0.0
      %1082 = vmatmul.mubr.f32.gmra.mrb[0].mxu0 %v1011
      %v1083 = vpop.f32.mrb[0].mxu0
      %v1084 = vadd.f32 0.0, %v1083
      %v1085 = vpop.f32.mrb[0].mxu0
      %v1086 = vadd.f32 0.0, %v1085
      %1087 = vdwg.mxu0
      %v1088 = vadd.f32 %v996, %v1084
      %v1089 = vadd.f32 %v997, %v1086
      %s1090 = scalar_lea.vmem %s3, 14
      %v1091 = vld [vmem:[%s1090] sm:$0x3]
      %v1092 = vcombine.high %v998, %v998
      %v1094 = vunpack.c.l.s4 1983009808
      %v1095 = vunpack.c.0.s8 %v1094
      %v1096 = vlaneseq
      %v1097 = vshrl.u32 %v1096, 7
      %v1098 = vsub.s32 %v1095, %v1097
      %v1099 = vrot.slane %v1092, %v1098
      %1100 = vrot.lane.b32.xlu0 %v1008, 112
      %v1101 = vpop.permute.xlu0 %1100
      %1102 = vrot.lane.b32.xlu0 %v1009, 112
      %v1103 = vpop.permute.xlu0 %1102
      %1104 = vrot.lane.b32.xlu0 %v1099, 112
      %v1105 = vpop.permute.xlu0 %1104
      %v1106 = vsel %vm466, %v1101, %v1103
      %v1107 = vsel %vm466, %v1103, %v1105
      %v1109 = vsel %vm469, %v1091, 0
      %v1111 = vsel %vm473, %v1106, 0
      %v1113 = vsel %vm473, %v1107, 0
      %1115 = vmatprep.subr.mxu0 %v1113
      %1116 = vmatpush1.msra.mxu0 %v1111
      %1117 = vmatprep.subr.mxu0 0.0
      %1118 = vmatpush1.msra.mxu0 0.0
      %1119 = vmatprep.subr.mxu0 0.0
      %1120 = vmatpush1.msra.mxu0 0.0
      %1121 = vmatprep.subr.mxu0 0.0
      %1122 = vmatpush1.msra.mxu0 0.0
      %1123 = vmatprep.subr.mxu0 0.0
      %1124 = vmatpush1.msra.mxu0 0.0
      %1125 = vmatprep.subr.mxu0 0.0
      %1126 = vmatpush1.msra.mxu0 0.0
      %1127 = vmatprep.subr.mxu0 0.0
      %1128 = vmatpush1.msra.mxu0 0.0
      %1129 = vmatprep.subr.mxu0 0.0
      %1130 = vmatpush1.msra.mxu0 0.0
      %1131 = vmatprep.subr.mxu0 0.0
      %1132 = vmatpush1.msra.mxu0 0.0
      %1133 = vmatprep.subr.mxu0 0.0
      %1134 = vmatpush1.msra.mxu0 0.0
      %1135 = vmatprep.subr.mxu0 0.0
      %1136 = vmatpush1.msra.mxu0 0.0
      %1137 = vmatprep.subr.mxu0 0.0
      %1138 = vmatpush1.msra.mxu0 0.0
      %1139 = vmatprep.subr.mxu0 0.0
      %1140 = vmatpush1.msra.mxu0 0.0
      %1141 = vmatprep.subr.mxu0 0.0
      %1142 = vmatpush1.msra.mxu0 0.0
      %1143 = vmatprep.subr.mxu0 0.0
      %1144 = vmatpush1.msra.mxu0 0.0
      %1145 = vmatprep.subr.mxu0 0.0
      %1146 = vmatpush1.msra.mxu0 0.0
      %1147 = vmatprep.subr.mxu0 0.0
      %1148 = vmatpush1.msra.mxu0 0.0
      %1149 = vmatprep.subr.mxu0 0.0
      %1150 = vmatpush1.msra.mxu0 0.0
      %1151 = vmatprep.subr.mxu0 0.0
      %1152 = vmatpush1.msra.mxu0 0.0
      %1153 = vmatprep.subr.mxu0 0.0
      %1154 = vmatpush1.msra.mxu0 0.0
      %1155 = vmatprep.subr.mxu0 0.0
      %1156 = vmatpush1.msra.mxu0 0.0
      %1157 = vmatprep.subr.mxu0 0.0
      %1158 = vmatpush1.msra.mxu0 0.0
      %1159 = vmatprep.subr.mxu0 0.0
      %1160 = vmatpush1.msra.mxu0 0.0
      %1161 = vmatprep.subr.mxu0 0.0
      %1162 = vmatpush1.msra.mxu0 0.0
      %1163 = vmatprep.subr.mxu0 0.0
      %1164 = vmatpush1.msra.mxu0 0.0
      %1165 = vmatprep.subr.mxu0 0.0
      %1166 = vmatpush1.msra.mxu0 0.0
      %1167 = vmatprep.subr.mxu0 0.0
      %1168 = vmatpush1.msra.mxu0 0.0
      %1169 = vmatprep.subr.mxu0 0.0
      %1170 = vmatpush1.msra.mxu0 0.0
      %1171 = vmatprep.subr.mxu0 0.0
      %1172 = vmatpush1.msra.mxu0 0.0
      %1173 = vmatprep.subr.mxu0 0.0
      %1174 = vmatpush1.msra.mxu0 0.0
      %1175 = vmatprep.subr.mxu0 0.0
      %1176 = vmatpush1.msra.mxu0 0.0
      %1177 = vmatprep.subr.mxu0 0.0
      %1178 = vmatpush1.msra.mxu0 0.0
      %1179 = vmatprep.mubr.f32.mxu0 0.0
      %1180 = vmatmul.mubr.f32.gmra.mrb[0].mxu0 %v1109
      %v1181 = vpop.f32.mrb[0].mxu0
      %v1182 = vadd.f32 0.0, %v1181
      %v1183 = vpop.f32.mrb[0].mxu0
      %v1184 = vadd.f32 0.0, %v1183
      %1185 = vdwg.mxu0
      %v1186 = vadd.f32 %v1088, %v1182
      %v1187 = vadd.f32 %v1089, %v1184
      %s1188 = scalar_lea.vmem %s3, 16
      %v1189 = vld [vmem:[%s1188] sm:$0x3]
      %1190 = vrot.lane.b32.xlu0 %v1008, 96
      %v1191 = vpop.permute.xlu0 %1190
      %1192 = vrot.lane.b32.xlu0 %v1009, 96
      %v1193 = vpop.permute.xlu0 %1192
      %1194 = vrot.lane.b32.xlu0 %v1099, 96
      %v1195 = vpop.permute.xlu0 %1194
      %v1196 = vsel %vm635, %v1191, %v1193
      %v1197 = vsel %vm635, %v1193, %v1195
      %v1199 = vsel %vm469, %v1189, 0
      %v1201 = vsel %vm473, %v1196, 0
      %v1203 = vsel %vm473, %v1197, 0
      %1205 = vmatprep.subr.mxu0 %v1203
      %1206 = vmatpush1.msra.mxu0 %v1201
      %1207 = vmatprep.subr.mxu0 0.0
      %1208 = vmatpush1.msra.mxu0 0.0
      %1209 = vmatprep.subr.mxu0 0.0
      %1210 = vmatpush1.msra.mxu0 0.0
      %1211 = vmatprep.subr.mxu0 0.0
      %1212 = vmatpush1.msra.mxu0 0.0
      %1213 = vmatprep.subr.mxu0 0.0
      %1214 = vmatpush1.msra.mxu0 0.0
      %1215 = vmatprep.subr.mxu0 0.0
      %1216 = vmatpush1.msra.mxu0 0.0
      %1217 = vmatprep.subr.mxu0 0.0
      %1218 = vmatpush1.msra.mxu0 0.0
      %1219 = vmatprep.subr.mxu0 0.0
      %1220 = vmatpush1.msra.mxu0 0.0
      %1221 = vmatprep.subr.mxu0 0.0
      %1222 = vmatpush1.msra.mxu0 0.0
      %1223 = vmatprep.subr.mxu0 0.0
      %1224 = vmatpush1.msra.mxu0 0.0
      %1225 = vmatprep.subr.mxu0 0.0
      %1226 = vmatpush1.msra.mxu0 0.0
      %1227 = vmatprep.subr.mxu0 0.0
      %1228 = vmatpush1.msra.mxu0 0.0
      %1229 = vmatprep.subr.mxu0 0.0
      %1230 = vmatpush1.msra.mxu0 0.0
      %1231 = vmatprep.subr.mxu0 0.0
      %1232 = vmatpush1.msra.mxu0 0.0
      %1233 = vmatprep.subr.mxu0 0.0
      %1234 = vmatpush1.msra.mxu0 0.0
      %1235 = vmatprep.subr.mxu0 0.0
      %1236 = vmatpush1.msra.mxu0 0.0
      %1237 = vmatprep.subr.mxu0 0.0
      %1238 = vmatpush1.msra.mxu0 0.0
      %1239 = vmatprep.subr.mxu0 0.0
      %1240 = vmatpush1.msra.mxu0 0.0
      %1241 = vmatprep.subr.mxu0 0.0
      %1242 = vmatpush1.msra.mxu0 0.0
      %1243 = vmatprep.subr.mxu0 0.0
      %1244 = vmatpush1.msra.mxu0 0.0
      %1245 = vmatprep.subr.mxu0 0.0
      %1246 = vmatpush1.msra.mxu0 0.0
      %1247 = vmatprep.subr.mxu0 0.0
      %1248 = vmatpush1.msra.mxu0 0.0
      %1249 = vmatprep.subr.mxu0 0.0
      %1250 = vmatpush1.msra.mxu0 0.0
      %1251 = vmatprep.subr.mxu0 0.0
      %1252 = vmatpush1.msra.mxu0 0.0
      %1253 = vmatprep.subr.mxu0 0.0
      %1254 = vmatpush1.msra.mxu0 0.0
      %1255 = vmatprep.subr.mxu0 0.0
      %1256 = vmatpush1.msra.mxu0 0.0
      %1257 = vmatprep.subr.mxu0 0.0
      %1258 = vmatpush1.msra.mxu0 0.0
      %1259 = vmatprep.subr.mxu0 0.0
      %1260 = vmatpush1.msra.mxu0 0.0
      %1261 = vmatprep.subr.mxu0 0.0
      %1262 = vmatpush1.msra.mxu0 0.0
      %1263 = vmatprep.subr.mxu0 0.0
      %1264 = vmatpush1.msra.mxu0 0.0
      %1265 = vmatprep.subr.mxu0 0.0
      %1266 = vmatpush1.msra.mxu0 0.0
      %1267 = vmatprep.subr.mxu0 0.0
      %1268 = vmatpush1.msra.mxu0 0.0
      %1269 = vmatprep.mubr.f32.mxu0 0.0
      %1270 = vmatmul.mubr.f32.gmra.mrb[0].mxu0 %v1199
      %v1271 = vpop.f32.mrb[0].mxu0
      %v1272 = vadd.f32 0.0, %v1271
      %v1273 = vpop.f32.mrb[0].mxu0
      %v1274 = vadd.f32 0.0, %v1273
      %1275 = vdwg.mxu0
      %v1276 = vadd.f32 %v1186, %v1272
      %v1277 = vadd.f32 %v1187, %v1274
      %v1278 = vld [vmem:[%s4] sm:$0x3]
      %1280 = vset.pattern.permute.xlu0 0
      %1281 = vperm.xlu0 %1280, %v1278
      %v1282 = vpop.permute.xlu0 %1281
      %v1284 = vadd.f32 %v1276, %v1282
      %v1285 = vadd.f32 %v1277, %v1282
      %v1288 = vcombine.low %v1284, %v1285
      %v1290 = vunpack.c.l.s4 1983009808
      %v1291 = vunpack.c.0.s8 %v1290
      %v1292 = vlaneseq
      %v1293 = vshrl.u32 %v1292, 7
      %v1294 = vsub.s32 %v1291, %v1293
      %v1295 = vrot.slane %v1288, %v1294
      %1297 = vst [vmem:[%s421] sm:$0xf] %v1295
      %v1298 = vsel %vm473, %v1284, 0.0
      %v1299 = vsel %vm473, %v1285, 0.0
      %v1300 = vadd.f32 %v1298, %v1299
      %1301 = vadd.xlane.f32.xlu0 %v1300
      %v1302 = vpop.xlane.xlu0 %1301
      %vm1303 = vcmask 1024
      %1304 = vst.msk [vmem:[%s430] sm:$0x3] %vm1303, %v1302
      %v1305 = vmul.f32 %v1284, %v1284
      %v1306 = vmul.f32 %v1285, %v1285
      %v1307 = vsel %vm473, %v1305, 0.0
      %v1308 = vsel %vm473, %v1306, 0.0
      %v1309 = vadd.f32 %v1307, %v1308
      %1310 = vadd.xlane.f32.xlu0 %v1309
      %v1311 = vpop.xlane.xlu0 %1310
      %1312 = vst.msk [vmem:[%s438] sm:$0x3] %vm1303, %v1311
      %s1313 = smul.u32 2, %s24
      %p1314 = scmp.lt.s32.totalorder %s23, 1
      %s1315 = scalar_select %p1314, %s23, 1
      %p1316 = scmp.lt.s32.totalorder %s1313, 31
      %s1317 = scalar_select %p1316, %s1313, 31
      %s1318 = smul.addr %s1315, 32
      %s1319 = sadd.s32 %s1317, %s1318
      %s1320 = smul.addr %s1319, 2
      %s1321 = scalar_lea.vmem %s5, %s1320
      %p1322 = scmp.lt.s32.totalorder %s23, 1
      %s1323 = scalar_select %p1322, %s23, 1
      %p1324 = scmp.lt.s32.totalorder %s24, 15
      %s1325 = scalar_select %p1324, %s24, 15
      %s1326 = smul.addr %s1323, 16
      %s1327 = sadd.s32 %s1325, %s1326
      %s1328 = smul.addr %s1327, 2
      %s1329 = scalar_lea.vmem %s6, %s1328
      %p1330 = scmp.lt.s32.totalorder %s23, 1
      %s1331 = scalar_select %p1330, %s23, 1
      %p1332 = scmp.lt.s32.totalorder %s24, 15
      %s1333 = scalar_select %p1332, %s24, 15
      %s1334 = smul.addr %s1331, 16
      %s1335 = sadd.s32 %s1333, %s1334
      %s1336 = smul.addr %s1335, 2
      %s1337 = scalar_lea.vmem %s7, %s1336
      // Predicated region
      $region41: #{hdc_module_forward.16} parent=39 // pred_check
        %p1338 = pneg %p181
      $region42: #{hdc_module_forward.16} parent=39 // pred_check_branch
        %1340 = sbr.rel (%p1338) target = $region44
      $region43: #{hdc_module_forward.16} parent=39 // pred_region
        %s1341 = smul.u32 2, %s24
      $region44: #{hdc_module_forward.16} parent=39 // pred_fallthru
        _
      // Predicated region
      $region45: #{hdc_module_forward.16} parent=39 // pred_check
        %p1342 = pneg %p209
      $region46: #{hdc_module_forward.16} parent=39 // pred_check_branch
        %1344 = sbr.rel (%p1342) target = $region48
      $region47: #{hdc_module_forward.16} parent=39 // pred_region
        _
      $region48: #{hdc_module_forward.16} parent=39 // pred_fallthru
        _
      // Predicated region
      $region49: #{hdc_module_forward.16} parent=39 // pred_check
        %p1345 = pneg %p237
      $region50: #{hdc_module_forward.16} parent=39 // pred_check_branch
        %1347 = sbr.rel (%p1345) target = $region52
      $region51: #{hdc_module_forward.16} parent=39 // pred_region
        _
      $region52: #{hdc_module_forward.16} parent=39 // pred_fallthru
        _
    $region40: #{hdc_module_forward.16} parent=5 // pred_fallthru
      _
    %p1348 = scmp.le.s32.totalorder 2, %s14
    // Predicated region
    $region53: #{hdc_module_forward.16} parent=5 // pred_check
      %p1349 = pneg %p1348
    $region54: #{hdc_module_forward.16} parent=5 // pred_check_branch
      %1351 = sbr.rel (%p1349) target = $region56
    $region55: #{hdc_module_forward.16} parent=5 // pred_region
      %s1352 = ssub.s32 %s14, 2
      // Predicated region
      $region57: #{hdc_module_forward.16} parent=55 // pred_check
        %p1353 = pneg %p187
      $region58: #{hdc_module_forward.16} parent=55 // pred_check_branch
        %1355 = sbr.rel (%p1353) target = $region60
      $region59: #{hdc_module_forward.16} parent=55 // pred_region
        %s1356 = smul.u32 2, %s26
        %p1357 = scmp.lt.s32.totalorder %s25, 1
        %s1358 = scalar_select %p1357, %s25, 1
        %p1359 = scmp.lt.s32.totalorder %s1356, 31
        %s1360 = scalar_select %p1359, %s1356, 31
        %s1361 = smul.addr %s1358, 32
        %s1362 = sadd.s32 %s1360, %s1361
        %s1363 = smul.addr %s1362, 2
        %s1364 = scalar_lea.vmem %s5, %s1363
      $region60: #{hdc_module_forward.16} parent=55 // pred_fallthru
        _
      // Predicated region
      $region61: #{hdc_module_forward.16} parent=55 // pred_check
        %p1365 = pneg %p215
      $region62: #{hdc_module_forward.16} parent=55 // pred_check_branch
        %1367 = sbr.rel (%p1365) target = $region64
      $region63: #{hdc_module_forward.16} parent=55 // pred_region
        %p1368 = scmp.lt.s32.totalorder %s25, 1
        %s1369 = scalar_select %p1368, %s25, 1
        %p1370 = scmp.lt.s32.totalorder %s26, 15
        %s1371 = scalar_select %p1370, %s26, 15
        %s1372 = smul.addr %s1369, 16
        %s1373 = sadd.s32 %s1371, %s1372
        %s1374 = smul.addr %s1373, 2
        %s1375 = scalar_lea.vmem %s6, %s1374
      $region64: #{hdc_module_forward.16} parent=55 // pred_fallthru
        _
      // Predicated region
      $region65: #{hdc_module_forward.16} parent=55 // pred_check
        %p1376 = pneg %p243
      $region66: #{hdc_module_forward.16} parent=55 // pred_check_branch
        %1378 = sbr.rel (%p1376) target = $region68
      $region67: #{hdc_module_forward.16} parent=55 // pred_region
        %p1379 = scmp.lt.s32.totalorder %s25, 1
        %s1380 = scalar_select %p1379, %s25, 1
        %p1381 = scmp.lt.s32.totalorder %s26, 15
        %s1382 = scalar_select %p1381, %s26, 15
        %s1383 = smul.addr %s1380, 16
        %s1384 = sadd.s32 %s1382, %s1383
        %s1385 = smul.addr %s1384, 2
        %s1386 = scalar_lea.vmem %s7, %s1385
      $region68: #{hdc_module_forward.16} parent=55 // pred_fallthru
        _
    $region56: #{hdc_module_forward.16} parent=5 // pred_fallthru
      _
  $region6: #{hdc_module_forward.16} parent=0 // loop_footer
    %s18 = sadd.s32 1, %s14
  $region7: #{hdc_module_forward.16} parent=0 // loop_footer_branch
    %13 = sbr.rel target = $region3
  $region8: #{hdc_module_forward.16} parent=0 // loop_exit
    _

// kernel: hdc_module_forward.21
$region0: #{hdc_module_forward.21}
  #allocation0 [shape = 'u32[]', space=smem, size = 0x4, offset = 0x4, fixed_abs, tag = 'smem constant byte address 0x4 - core index']
  #allocation1 [shape = 'u32[144,128]{1,0:T(1,128)}', space=vmem, size = 0x12000, scoped, tag = 'internal scratch']
  %s0 = inlined_call_operand.vmem [shape: f32[2,2,4096], index: 0, kind: input, shape index: {}]
  %s1 = inlined_call_operand.vmem [shape: f32[2,1], index: 1, kind: input, shape index: {}]
  %s2 = inlined_call_operand.vmem [shape: f32[2,1], index: 2, kind: input, shape index: {}]
  %s3 = inlined_call_operand.vmem [shape: f32[2,2,4096], index: 3, kind: output, shape index: {}]
  %s4 = sld [smem:[#allocation0]]
  $region45: #{hdc_module_forward.21} parent=0
    _
  %s6 = ssub.s32 1, %s4
  %s7 = scalar_select 0, %s6, %s4
  loop: start=0, step=1, limit=6
  $region2: #{hdc_module_forward.21} parent=0 // loop_pre_header
    _
  $region3: #{hdc_module_forward.21} parent=0 // loop_header
    %s9 = sphi 0, %s13
    %p10 = scmp.ge.s32.totalorder %s9, 6
    %s16 = sphi 0, %s28
    %s17 = sphi 0, %s24
    %s18 = sphi 0, %s16
    %s19 = sphi 0, %s17
    %s20 = sphi 0, %s18
    %s21 = sphi 0, %s19
    %s33 = sphi 0, %s35
    %s36 = sphi 0, %s33
    %s37 = sphi 0, %s36
    %s53 = sphi 0, %s37
    %s57 = sphi 0, %s57
    %s59 = sphi 0, %s57
    %s60 = sphi 0, %s59
    %s74 = sphi 0, %s60
    %s78 = sphi 0, %s78
    %s80 = sphi 0, %s78
    %s81 = sphi 0, %s80
    %s95 = sphi 0, %s81
    %s103 = sphi 0, %s105
    %s106 = sphi 0, %s103
    %s107 = sphi 0, %s106
    %s123 = sphi 0, %s107
  $region4: #{hdc_module_forward.21} parent=0 // loop_header_branch
    %12 = sbr.rel (%p10) target = $region8
  $region5: #{hdc_module_forward.21} parent=0 // loop_body
    %s14 = ssub.s32 %s9, 1
    %s15 = ssub.s32 %s9, 2
    %s22 = sadd.s32 1, %s17
    %p23 = scmp.ge.s32.totalorder %s22, 2
    %s24 = scalar_select %p23, 0, %s22
    %s25 = sadd.s32 1, %s16
    %s26 = scalar_select %p23, %s25, %s16
    %p27 = scmp.ge.s32.totalorder %s26, 2
    %s28 = scalar_select %p27, 0, %s26
    %s29 = ssub.s32 %s16, %s28
    %s30 = ssub.s32 %s17, %s24
    %s31 = sor.u32 %s29, %s30
    %p32 = scmp.eq.s32.totalorder %s31, 0
    %s34 = sadd.s32 %s33, 1
    %s35 = scalar_select %p32, %s33, %s34
    %p38 = pneg %p32
    %p39 = scmp.eq.s32.totalorder %s9, 3
    %p40 = por %p38, %p39
    %p41 = scmp.ne.s32.totalorder %s33, %s36
    %p42 = scmp.eq.s32.totalorder %s9, 0
    %p43 = por %p41, %p42
    %p44 = scmp.ne.s32.totalorder %s33, %s36
    %p45 = scmp.eq.s32.totalorder %s14, 3
    %p46 = por %p44, %p45
    %p47 = scmp.ne.s32.totalorder %s36, %s37
    %p48 = scmp.eq.s32.totalorder %s14, 0
    %p49 = por %p47, %p48
    %p50 = scmp.ne.s32.totalorder %s36, %s37
    %p51 = scmp.eq.s32.totalorder %s15, 3
    %p52 = por %p50, %p51
    %p54 = scmp.ne.s32.totalorder %s37, %s53
    %p55 = scmp.eq.s32.totalorder %s15, 0
    %p56 = por %p54, %p55
    %s58 = sadd.s32 %s57, 1
    %p61 = scmp.eq.s32.totalorder %s9, 3
    %p62 = scmp.ne.s32.totalorder %s57, %s59
    %p63 = scmp.eq.s32.totalorder %s9, 0
    %p64 = por %p62, %p63
    %p65 = scmp.ne.s32.totalorder %s57, %s59
    %p66 = scmp.eq.s32.totalorder %s14, 3
    %p67 = por %p65, %p66
    %p68 = scmp.ne.s32.totalorder %s59, %s60
    %p69 = scmp.eq.s32.totalorder %s14, 0
    %p70 = por %p68, %p69
    %p71 = scmp.ne.s32.totalorder %s59, %s60
    %p72 = scmp.eq.s32.totalorder %s15, 3
    %p73 = por %p71, %p72
    %p75 = scmp.ne.s32.totalorder %s60, %s74
    %p76 = scmp.eq.s32.totalorder %s15, 0
    %p77 = por %p75, %p76
    %s79 = sadd.s32 %s78, 1
    %p82 = scmp.eq.s32.totalorder %s9, 3
    %p83 = scmp.ne.s32.totalorder %s78, %s80
    %p84 = scmp.eq.s32.totalorder %s9, 0
    %p85 = por %p83, %p84
    %p86 = scmp.ne.s32.totalorder %s78, %s80
    %p87 = scmp.eq.s32.totalorder %s14, 3
    %p88 = por %p86, %p87
    %p89 = scmp.ne.s32.totalorder %s80, %s81
    %p90 = scmp.eq.s32.totalorder %s14, 0
    %p91 = por %p89, %p90
    %p92 = scmp.ne.s32.totalorder %s80, %s81
    %p93 = scmp.eq.s32.totalorder %s15, 3
    %p94 = por %p92, %p93
    %p96 = scmp.ne.s32.totalorder %s81, %s95
    %p97 = scmp.eq.s32.totalorder %s15, 0
    %p98 = por %p96, %p97
    %s99 = ssub.s32 %s16, %s28
    %s100 = ssub.s32 %s17, %s24
    %s101 = sor.u32 %s99, %s100
    %p102 = scmp.eq.s32.totalorder %s101, 0
    %s104 = sadd.s32 %s103, 1
    %s105 = scalar_select %p102, %s103, %s104
    %p108 = pneg %p102
    %p109 = scmp.eq.s32.totalorder %s9, 3
    %p110 = por %p108, %p109
    %p111 = scmp.ne.s32.totalorder %s103, %s106
    %p112 = scmp.eq.s32.totalorder %s9, 0
    %p113 = por %p111, %p112
    %p114 = scmp.ne.s32.totalorder %s103, %s106
    %p115 = scmp.eq.s32.totalorder %s14, 3
    %p116 = por %p114, %p115
    %p117 = scmp.ne.s32.totalorder %s106, %s107
    %p118 = scmp.eq.s32.totalorder %s14, 0
    %p119 = por %p117, %p118
    %p120 = scmp.ne.s32.totalorder %s106, %s107
    %p121 = scmp.eq.s32.totalorder %s15, 3
    %p122 = por %p120, %p121
    %p124 = scmp.ne.s32.totalorder %s107, %s123
    %p125 = scmp.eq.s32.totalorder %s15, 0
    %p126 = por %p124, %p125
    %p127 = scmp.le.s32.totalorder 1, %s9
    %p128 = scmp.lt.s32.totalorder %s9, 5
    %p129 = pnand %p127, %p128
    %p130 = pneg %p129
    // Predicated region
    $region9: #{hdc_module_forward.21} parent=5 // pred_check
      _
    $region10: #{hdc_module_forward.21} parent=5 // pred_check_branch
      %132 = sbr.rel (%p129) target = $region12
    $region11: #{hdc_module_forward.21} parent=5 // pred_region
      %s133 = ssub.s32 %s9, 1
      // Predicated region
      $region13: #{hdc_module_forward.21} parent=11 // pred_check
        %p134 = pneg %p70
      $region14: #{hdc_module_forward.21} parent=11 // pred_check_branch
        %136 = sbr.rel (%p134) target = $region16
      $region15: #{hdc_module_forward.21} parent=11 // pred_region
        _
      $region16: #{hdc_module_forward.21} parent=11 // pred_fallthru
        _
      // Predicated region
      $region17: #{hdc_module_forward.21} parent=11 // pred_check
        %p137 = pneg %p91
      $region18: #{hdc_module_forward.21} parent=11 // pred_check_branch
        %139 = sbr.rel (%p137) target = $region20
      $region19: #{hdc_module_forward.21} parent=11 // pred_region
        _
      $region20: #{hdc_module_forward.21} parent=11 // pred_fallthru
        _
    $region12: #{hdc_module_forward.21} parent=5 // pred_fallthru
      _
    %p140 = scmp.lt.s32.totalorder %s9, 4
    // Predicated region
    $region21: #{hdc_module_forward.21} parent=5 // pred_check
      %p141 = pneg %p140
    $region22: #{hdc_module_forward.21} parent=5 // pred_check_branch
      %143 = sbr.rel (%p141) target = $region24
    $region23: #{hdc_module_forward.21} parent=5 // pred_region
      // Predicated region
      $region25: #{hdc_module_forward.21} parent=23 // pred_check
        %p144 = pneg %p43
      $region26: #{hdc_module_forward.21} parent=23 // pred_check_branch
        %146 = sbr.rel (%p144) target = $region28
      $region27: #{hdc_module_forward.21} parent=23 // pred_region
        %s147 = smul.u32 16, %s17
        %p148 = scmp.lt.s32.totalorder %s16, 1
        %s149 = scalar_select %p148, %s16, 1
        %p150 = scmp.lt.s32.totalorder %s147, 31
        %s151 = scalar_select %p150, %s147, 31
        %s152 = smul.addr %s149, 32
        %s153 = sadd.s32 %s151, %s152
        %s154 = smul.addr %s153, 2
        %s155 = scalar_lea.vmem %s0, %s154
        %s156 = smul.u32 16, %s17
      $region28: #{hdc_module_forward.21} parent=23 // pred_fallthru
        _
    $region24: #{hdc_module_forward.21} parent=5 // pred_fallthru
      _
    %p157 = scmp.le.s32.totalorder 1, %s9
    %p158 = scmp.lt.s32.totalorder %s9, 5
    %p159 = pnand %p157, %p158
    %p160 = pneg %p159
    // Predicated region
    $region29: #{hdc_module_forward.21} parent=5 // pred_check
      _
    $region30: #{hdc_module_forward.21} parent=5 // pred_check_branch
      %162 = sbr.rel (%p159) target = $region32
    $region31: #{hdc_module_forward.21} parent=5 // pred_region
      %s163 = ssub.s32 %s9, 1
      %s164 = smul.u32 16, %s19
      %p165 = scmp.lt.s32.totalorder %s18, 1
      %s166 = scalar_select %p165, %s18, 1
      %p167 = scmp.lt.s32.totalorder %s164, 31
      %s168 = scalar_select %p167, %s164, 31
      %s169 = smul.addr %s166, 32
      %s170 = sadd.s32 %s168, %s169
      %s171 = smul.addr %s170, 2
      %s172 = scalar_lea.vmem %s0, %s171
      %p173 = pneg %p49
      %p174 = pneg %p46
      %p175 = pneg %p70
      %p176 = pneg %p67
      %p177 = pneg %p91
      %p178 = pneg %p88
      %p179 = pneg %p119
      %p180 = pneg %p116
      %s181 = smul.u32 16, %s19
      %p182 = scmp.lt.s32.totalorder %s18, 1
      %s183 = scalar_select %p182, %s18, 1
      %p184 = scmp.lt.s32.totalorder %s181, 31
      %s185 = scalar_select %p184, %s181, 31
      %s186 = smul.addr %s183, 32
      %s187 = sadd.s32 %s185, %s186
      %s188 = smul.addr %s187, 2
      %s189 = scalar_lea.vmem %s3, %s188
      %s190 = smul.u32 16, %s19
      %p191 = scmp.lt.s32.totalorder %s18, 1
      %s192 = scalar_select %p191, %s18, 1
      %p193 = scmp.lt.s32.totalorder %s190, 31
      %s194 = scalar_select %p193, %s190, 31
      %s195 = smul.addr %s192, 32
      %s196 = sadd.s32 %s194, %s195
      %s197 = smul.addr %s196, 2
      %s198 = scalar_lea.vmem %s0, %s197
      %s199 = smul.u32 16, %s19
      %s200 = smul.u32 16, %s19
      %p201 = scmp.lt.s32.totalorder %s18, 1
      %s202 = scalar_select %p201, %s18, 1
      %p203 = scmp.lt.s32.totalorder %s200, 31
      %s204 = scalar_select %p203, %s200, 31
      %s205 = smul.addr %s202, 32
      %s206 = sadd.s32 %s204, %s205
      %s207 = smul.addr %s206, 2
      %s208 = scalar_lea.vmem %s3, %s207
      %s209 = smul.u32 16, %s19
      %v210 = vld [vmem:[%s198] sm:$0xff]
      %v211 = vld [vmem:[%s198 + $0x8] sm:$0xff]
      %v212 = vld [vmem:[%s198 + $0x10] sm:$0xff]
      %v213 = vld [vmem:[%s198 + $0x18] sm:$0xff]
      %v214 = vld [vmem:[%s1] sm:$0x3]
      %216 = vset.pattern.permute.xlu0 0
      %217 = vperm.xlu0 %216, %v214
      %v218 = vpop.permute.xlu0 %217
      %v220 = vunpack.c.l.s4 269488144
      %v221 = vunpack.c.0.s8 %v220
      %v222 = vlaneseq
      %v223 = vshrl.u32 %v222, 7
      %v224 = vsub.s32 %v221, %v223
      %v225 = vrot.slane %v218, %v224
      %v227 = vmul.f32 %v210, %v225
      %v228 = vmul.f32 %v211, %v225
      %v229 = vmul.f32 %v212, %v225
      %v230 = vmul.f32 %v213, %v225
      %v231 = vld [vmem:[%s2] sm:$0x3]
      %233 = vset.pattern.permute.xlu0 0
      %234 = vperm.xlu0 %233, %v231
      %v235 = vpop.permute.xlu0 %234
      %v237 = vunpack.c.l.s4 269488144
      %v238 = vunpack.c.0.s8 %v237
      %v239 = vlaneseq
      %v240 = vshrl.u32 %v239, 7
      %v241 = vsub.s32 %v238, %v240
      %v242 = vrot.slane %v235, %v241
      %v244 = vadd.f32 %v227, %v242
      %v245 = vadd.f32 %v228, %v242
      %v246 = vadd.f32 %v229, %v242
      %v247 = vadd.f32 %v230, %v242
      %v248 = vmax.f32 %v244, 0.0
      %v249 = vmax.f32 %v245, 0.0
      %v250 = vmax.f32 %v246, 0.0
      %v251 = vmax.f32 %v247, 0.0
      %252 = vst [vmem:[%s208] sm:$0xff] %v248
      %253 = vst [vmem:[%s208 + $0x8] sm:$0xff] %v249
      %254 = vst [vmem:[%s208 + $0x10] sm:$0xff] %v250
      %255 = vst [vmem:[%s208 + $0x18] sm:$0xff] %v251
      %s256 = smul.u32 16, %s19
      %p257 = scmp.lt.s32.totalorder %s18, 1
      %s258 = scalar_select %p257, %s18, 1
      %p259 = scmp.lt.s32.totalorder %s256, 31
      %s260 = scalar_select %p259, %s256, 31
      %s261 = smul.addr %s258, 32
      %s262 = sadd.s32 %s260, %s261
      %s263 = smul.addr %s262, 2
      %s264 = scalar_lea.vmem %s3, %s263
      // Predicated region
      $region33: #{hdc_module_forward.21} parent=31 // pred_check
        %p265 = pneg %p116
      $region34: #{hdc_module_forward.21} parent=31 // pred_check_branch
        %267 = sbr.rel (%p265) target = $region36
      $region35: #{hdc_module_forward.21} parent=31 // pred_region
        %s268 = smul.u32 16, %s19
      $region36: #{hdc_module_forward.21} parent=31 // pred_fallthru
        _
    $region32: #{hdc_module_forward.21} parent=5 // pred_fallthru
      _
    %p269 = scmp.le.s32.totalorder 2, %s9
    // Predicated region
    $region37: #{hdc_module_forward.21} parent=5 // pred_check
      %p270 = pneg %p269
    $region38: #{hdc_module_forward.21} parent=5 // pred_check_branch
      %272 = sbr.rel (%p270) target = $region40
    $region39: #{hdc_module_forward.21} parent=5 // pred_region
      %s273 = ssub.s32 %s9, 2
      // Predicated region
      $region41: #{hdc_module_forward.21} parent=39 // pred_check
        %p274 = pneg %p122
      $region42: #{hdc_module_forward.21} parent=39 // pred_check_branch
        %276 = sbr.rel (%p274) target = $region44
      $region43: #{hdc_module_forward.21} parent=39 // pred_region
        %s277 = smul.u32 16, %s21
        %p278 = scmp.lt.s32.totalorder %s20, 1
        %s279 = scalar_select %p278, %s20, 1
        %p280 = scmp.lt.s32.totalorder %s277, 31
        %s281 = scalar_select %p280, %s277, 31
        %s282 = smul.addr %s279, 32
        %s283 = sadd.s32 %s281, %s282
        %s284 = smul.addr %s283, 2
        %s285 = scalar_lea.vmem %s3, %s284
      $region44: #{hdc_module_forward.21} parent=39 // pred_fallthru
        _
    $region40: #{hdc_module_forward.21} parent=5 // pred_fallthru
      _
  $region6: #{hdc_module_forward.21} parent=0 // loop_footer
    %s13 = sadd.s32 1, %s9
  $region7: #{hdc_module_forward.21} parent=0 // loop_footer_branch
    %8 = sbr.rel target = $region3
  $region8: #{hdc_module_forward.21} parent=0 // loop_exit
    _

// kernel: hdc_module_forward.24
$region0: #{hdc_module_forward.24}
  #allocation0 [shape = 'u32[]', space=smem, size = 0x4, offset = 0x4, fixed_abs, tag = 'smem constant byte address 0x4 - core index']
  #allocation1 [shape = 'u32[144,128]{1,0:T(1,128)}', space=vmem, size = 0x12000, scoped, tag = 'internal scratch']
  %s0 = inlined_call_operand.vmem [shape: f32[2,8,4096], index: 0, kind: input, shape index: {}]
  %s1 = inlined_call_operand.vmem [shape: f32[8,8], index: 1, kind: input, shape index: {}]
  %s2 = inlined_call_operand.vmem [shape: f32[8,1], index: 2, kind: input, shape index: {}]
  %s3 = inlined_call_operand.vmem [shape: f32[2,8,4096], index: 3, kind: output, shape index: {0}]
  %s4 = inlined_call_operand.vmem [shape: f32[2,2,8,1], index: 4, kind: output, shape index: {1}]
  %s5 = inlined_call_operand.vmem [shape: f32[2,2,8,1], index: 5, kind: output, shape index: {2}]
  %6 = xla_tuple %s3, %s4, %s5
  %s7 = sld [smem:[#allocation0]]
  $region61: #{hdc_module_forward.24} parent=0
    _
  %s9 = ssub.s32 1, %s7
  %s10 = scalar_select 0, %s9, %s7
  loop: start=0, step=1, limit=6
  $region2: #{hdc_module_forward.24} parent=0 // loop_pre_header
    _
  $region3: #{hdc_module_forward.24} parent=0 // loop_header
    %s12 = sphi 0, %s16
    %p13 = scmp.ge.s32.totalorder %s12, 6
    %s19 = sphi 0, %s31
    %s20 = sphi 0, %s27
    %s21 = sphi 0, %s19
    %s22 = sphi 0, %s20
    %s23 = sphi 0, %s21
    %s24 = sphi 0, %s22
    %s36 = sphi 0, %s38
    %s39 = sphi 0, %s36
    %s40 = sphi 0, %s39
    %s56 = sphi 0, %s40
    %s60 = sphi 0, %s60
    %s62 = sphi 0, %s60
    %s63 = sphi 0, %s62
    %s77 = sphi 0, %s63
    %s81 = sphi 0, %s81
    %s83 = sphi 0, %s81
    %s84 = sphi 0, %s83
    %s98 = sphi 0, %s84
    %s106 = sphi 0, %s108
    %s109 = sphi 0, %s106
    %s110 = sphi 0, %s109
    %s126 = sphi 0, %s110
    %s134 = sphi 0, %s136
    %s137 = sphi 0, %s134
    %s138 = sphi 0, %s137
    %s154 = sphi 0, %s138
    %s162 = sphi 0, %s164
    %s165 = sphi 0, %s162
    %s166 = sphi 0, %s165
    %s182 = sphi 0, %s166
  $region4: #{hdc_module_forward.24} parent=0 // loop_header_branch
    %15 = sbr.rel (%p13) target = $region8
  $region5: #{hdc_module_forward.24} parent=0 // loop_body
    %s17 = ssub.s32 %s12, 1
    %s18 = ssub.s32 %s12, 2
    %s25 = sadd.s32 1, %s20
    %p26 = scmp.ge.s32.totalorder %s25, 2
    %s27 = scalar_select %p26, 0, %s25
    %s28 = sadd.s32 1, %s19
    %s29 = scalar_select %p26, %s28, %s19
    %p30 = scmp.ge.s32.totalorder %s29, 2
    %s31 = scalar_select %p30, 0, %s29
    %s32 = ssub.s32 %s19, %s31
    %s33 = ssub.s32 %s20, %s27
    %s34 = sor.u32 %s32, %s33
    %p35 = scmp.eq.s32.totalorder %s34, 0
    %s37 = sadd.s32 %s36, 1
    %s38 = scalar_select %p35, %s36, %s37
    %p41 = pneg %p35
    %p42 = scmp.eq.s32.totalorder %s12, 3
    %p43 = por %p41, %p42
    %p44 = scmp.ne.s32.totalorder %s36, %s39
    %p45 = scmp.eq.s32.totalorder %s12, 0
    %p46 = por %p44, %p45
    %p47 = scmp.ne.s32.totalorder %s36, %s39
    %p48 = scmp.eq.s32.totalorder %s17, 3
    %p49 = por %p47, %p48
    %p50 = scmp.ne.s32.totalorder %s39, %s40
    %p51 = scmp.eq.s32.totalorder %s17, 0
    %p52 = por %p50, %p51
    %p53 = scmp.ne.s32.totalorder %s39, %s40
    %p54 = scmp.eq.s32.totalorder %s18, 3
    %p55 = por %p53, %p54
    %p57 = scmp.ne.s32.totalorder %s40, %s56
    %p58 = scmp.eq.s32.totalorder %s18, 0
    %p59 = por %p57, %p58
    %s61 = sadd.s32 %s60, 1
    %p64 = scmp.eq.s32.totalorder %s12, 3
    %p65 = scmp.ne.s32.totalorder %s60, %s62
    %p66 = scmp.eq.s32.totalorder %s12, 0
    %p67 = por %p65, %p66
    %p68 = scmp.ne.s32.totalorder %s60, %s62
    %p69 = scmp.eq.s32.totalorder %s17, 3
    %p70 = por %p68, %p69
    %p71 = scmp.ne.s32.totalorder %s62, %s63
    %p72 = scmp.eq.s32.totalorder %s17, 0
    %p73 = por %p71, %p72
    %p74 = scmp.ne.s32.totalorder %s62, %s63
    %p75 = scmp.eq.s32.totalorder %s18, 3
    %p76 = por %p74, %p75
    %p78 = scmp.ne.s32.totalorder %s63, %s77
    %p79 = scmp.eq.s32.totalorder %s18, 0
    %p80 = por %p78, %p79
    %s82 = sadd.s32 %s81, 1
    %p85 = scmp.eq.s32.totalorder %s12, 3
    %p86 = scmp.ne.s32.totalorder %s81, %s83
    %p87 = scmp.eq.s32.totalorder %s12, 0
    %p88 = por %p86, %p87
    %p89 = scmp.ne.s32.totalorder %s81, %s83
    %p90 = scmp.eq.s32.totalorder %s17, 3
    %p91 = por %p89, %p90
    %p92 = scmp.ne.s32.totalorder %s83, %s84
    %p93 = scmp.eq.s32.totalorder %s17, 0
    %p94 = por %p92, %p93
    %p95 = scmp.ne.s32.totalorder %s83, %s84
    %p96 = scmp.eq.s32.totalorder %s18, 3
    %p97 = por %p95, %p96
    %p99 = scmp.ne.s32.totalorder %s84, %s98
    %p100 = scmp.eq.s32.totalorder %s18, 0
    %p101 = por %p99, %p100
    %s102 = ssub.s32 %s19, %s31
    %s103 = ssub.s32 %s20, %s27
    %s104 = sor.u32 %s102, %s103
    %p105 = scmp.eq.s32.totalorder %s104, 0
    %s107 = sadd.s32 %s106, 1
    %s108 = scalar_select %p105, %s106, %s107
    %p111 = pneg %p105
    %p112 = scmp.eq.s32.totalorder %s12, 3
    %p113 = por %p111, %p112
    %p114 = scmp.ne.s32.totalorder %s106, %s109
    %p115 = scmp.eq.s32.totalorder %s12, 0
    %p116 = por %p114, %p115
    %p117 = scmp.ne.s32.totalorder %s106, %s109
    %p118 = scmp.eq.s32.totalorder %s17, 3
    %p119 = por %p117, %p118
    %p120 = scmp.ne.s32.totalorder %s109, %s110
    %p121 = scmp.eq.s32.totalorder %s17, 0
    %p122 = por %p120, %p121
    %p123 = scmp.ne.s32.totalorder %s109, %s110
    %p124 = scmp.eq.s32.totalorder %s18, 3
    %p125 = por %p123, %p124
    %p127 = scmp.ne.s32.totalorder %s110, %s126
    %p128 = scmp.eq.s32.totalorder %s18, 0
    %p129 = por %p127, %p128
    %s130 = ssub.s32 %s19, %s31
    %s131 = ssub.s32 %s20, %s27
    %s132 = sor.u32 %s130, %s131
    %p133 = scmp.eq.s32.totalorder %s132, 0
    %s135 = sadd.s32 %s134, 1
    %s136 = scalar_select %p133, %s134, %s135
    %p139 = pneg %p133
    %p140 = scmp.eq.s32.totalorder %s12, 3
    %p141 = por %p139, %p140
    %p142 = scmp.ne.s32.totalorder %s134, %s137
    %p143 = scmp.eq.s32.totalorder %s12, 0
    %p144 = por %p142, %p143
    %p145 = scmp.ne.s32.totalorder %s134, %s137
    %p146 = scmp.eq.s32.totalorder %s17, 3
    %p147 = por %p145, %p146
    %p148 = scmp.ne.s32.totalorder %s137, %s138
    %p149 = scmp.eq.s32.totalorder %s17, 0
    %p150 = por %p148, %p149
    %p151 = scmp.ne.s32.totalorder %s137, %s138
    %p152 = scmp.eq.s32.totalorder %s18, 3
    %p153 = por %p151, %p152
    %p155 = scmp.ne.s32.totalorder %s138, %s154
    %p156 = scmp.eq.s32.totalorder %s18, 0
    %p157 = por %p155, %p156
    %s158 = ssub.s32 %s19, %s31
    %s159 = ssub.s32 %s20, %s27
    %s160 = sor.u32 %s158, %s159
    %p161 = scmp.eq.s32.totalorder %s160, 0
    %s163 = sadd.s32 %s162, 1
    %s164 = scalar_select %p161, %s162, %s163
    %p167 = pneg %p161
    %p168 = scmp.eq.s32.totalorder %s12, 3
    %p169 = por %p167, %p168
    %p170 = scmp.ne.s32.totalorder %s162, %s165
    %p171 = scmp.eq.s32.totalorder %s12, 0
    %p172 = por %p170, %p171
    %p173 = scmp.ne.s32.totalorder %s162, %s165
    %p174 = scmp.eq.s32.totalorder %s17, 3
    %p175 = por %p173, %p174
    %p176 = scmp.ne.s32.totalorder %s165, %s166
    %p177 = scmp.eq.s32.totalorder %s17, 0
    %p178 = por %p176, %p177
    %p179 = scmp.ne.s32.totalorder %s165, %s166
    %p180 = scmp.eq.s32.totalorder %s18, 3
    %p181 = por %p179, %p180
    %p183 = scmp.ne.s32.totalorder %s166, %s182
    %p184 = scmp.eq.s32.totalorder %s18, 0
    %p185 = por %p183, %p184
    %p186 = scmp.le.s32.totalorder 1, %s12
    %p187 = scmp.lt.s32.totalorder %s12, 5
    %p188 = pnand %p186, %p187
    %p189 = pneg %p188
    // Predicated region
    $region9: #{hdc_module_forward.24} parent=5 // pred_check
      _
    $region10: #{hdc_module_forward.24} parent=5 // pred_check_branch
      %191 = sbr.rel (%p188) target = $region12
    $region11: #{hdc_module_forward.24} parent=5 // pred_region
      %s192 = ssub.s32 %s12, 1
      // Predicated region
      $region13: #{hdc_module_forward.24} parent=11 // pred_check
        %p193 = pneg %p73
      $region14: #{hdc_module_forward.24} parent=11 // pred_check_branch
        %195 = sbr.rel (%p193) target = $region16
      $region15: #{hdc_module_forward.24} parent=11 // pred_region
        _
      $region16: #{hdc_module_forward.24} parent=11 // pred_fallthru
        _
      // Predicated region
      $region17: #{hdc_module_forward.24} parent=11 // pred_check
        %p196 = pneg %p94
      $region18: #{hdc_module_forward.24} parent=11 // pred_check_branch
        %198 = sbr.rel (%p196) target = $region20
      $region19: #{hdc_module_forward.24} parent=11 // pred_region
        _
      $region20: #{hdc_module_forward.24} parent=11 // pred_fallthru
        _
    $region12: #{hdc_module_forward.24} parent=5 // pred_fallthru
      _
    %p199 = scmp.lt.s32.totalorder %s12, 4
    // Predicated region
    $region21: #{hdc_module_forward.24} parent=5 // pred_check
      %p200 = pneg %p199
    $region22: #{hdc_module_forward.24} parent=5 // pred_check_branch
      %202 = sbr.rel (%p200) target = $region24
    $region23: #{hdc_module_forward.24} parent=5 // pred_region
      // Predicated region
      $region25: #{hdc_module_forward.24} parent=23 // pred_check
        %p203 = pneg %p46
      $region26: #{hdc_module_forward.24} parent=23 // pred_check_branch
        %205 = sbr.rel (%p203) target = $region28
      $region27: #{hdc_module_forward.24} parent=23 // pred_region
        %s206 = smul.u32 16, %s20
        %p207 = scmp.lt.s32.totalorder %s19, 1
        %s208 = scalar_select %p207, %s19, 1
        %p209 = scmp.lt.s32.totalorder %s206, 31
        %s210 = scalar_select %p209, %s206, 31
        %s211 = smul.addr %s208, 32
        %s212 = sadd.s32 %s210, %s211
        %s213 = smul.addr %s212, 8
        %s214 = scalar_lea.vmem %s0, %s213
        %s215 = smul.u32 16, %s20
      $region28: #{hdc_module_forward.24} parent=23 // pred_fallthru
        _
    $region24: #{hdc_module_forward.24} parent=5 // pred_fallthru
      _
    %p216 = scmp.le.s32.totalorder 1, %s12
    %p217 = scmp.lt.s32.totalorder %s12, 5
    %p218 = pnand %p216, %p217
    %p219 = pneg %p218
    // Predicated region
    $region29: #{hdc_module_forward.24} parent=5 // pred_check
      _
    $region30: #{hdc_module_forward.24} parent=5 // pred_check_branch
      %221 = sbr.rel (%p218) target = $region32
    $region31: #{hdc_module_forward.24} parent=5 // pred_region
      %s222 = ssub.s32 %s12, 1
      %s223 = smul.u32 16, %s22
      %p224 = scmp.lt.s32.totalorder %s21, 1
      %s225 = scalar_select %p224, %s21, 1
      %p226 = scmp.lt.s32.totalorder %s223, 31
      %s227 = scalar_select %p226, %s223, 31
      %s228 = smul.addr %s225, 32
      %s229 = sadd.s32 %s227, %s228
      %s230 = smul.addr %s229, 8
      %s231 = scalar_lea.vmem %s0, %s230
      %p232 = pneg %p52
      %p233 = pneg %p49
      %p234 = pneg %p73
      %p235 = pneg %p70
      %p236 = pneg %p94
      %p237 = pneg %p91
      %p238 = pneg %p122
      %p239 = pneg %p119
      %s240 = smul.u32 16, %s22
      %p241 = scmp.lt.s32.totalorder %s21, 1
      %s242 = scalar_select %p241, %s21, 1
      %p243 = scmp.lt.s32.totalorder %s240, 31
      %s244 = scalar_select %p243, %s240, 31
      %s245 = smul.addr %s242, 32
      %s246 = sadd.s32 %s244, %s245
      %s247 = smul.addr %s246, 8
      %s248 = scalar_lea.vmem %s3, %s247
      %p249 = pneg %p150
      %p250 = pneg %p147
      %p251 = scmp.lt.s32.totalorder %s21, 1
      %s252 = scalar_select %p251, %s21, 1
      %p253 = scmp.lt.s32.totalorder %s22, 1
      %s254 = scalar_select %p253, %s22, 1
      %s255 = smul.addr %s252, 2
      %s256 = sadd.s32 %s254, %s255
      %s257 = smul.addr %s256, 8
      %s258 = scalar_lea.vmem %s4, %s257
      %p259 = pneg %p178
      %p260 = pneg %p175
      %p261 = scmp.lt.s32.totalorder %s21, 1
      %s262 = scalar_select %p261, %s21, 1
      %p263 = scmp.lt.s32.totalorder %s22, 1
      %s264 = scalar_select %p263, %s22, 1
      %s265 = smul.addr %s262, 2
      %s266 = sadd.s32 %s264, %s265
      %s267 = smul.addr %s266, 8
      %s268 = scalar_lea.vmem %s5, %s267
      %s269 = smul.u32 16, %s22
      %p270 = scmp.lt.s32.totalorder %s21, 1
      %s271 = scalar_select %p270, %s21, 1
      %p272 = scmp.lt.s32.totalorder %s269, 31
      %s273 = scalar_select %p272, %s269, 31
      %s274 = smul.addr %s271, 32
      %s275 = sadd.s32 %s273, %s274
      %s276 = smul.addr %s275, 8
      %s277 = scalar_lea.vmem %s0, %s276
      %s278 = smul.u32 16, %s22
      %s279 = smul.u32 16, %s22
      %p280 = scmp.lt.s32.totalorder %s21, 1
      %s281 = scalar_select %p280, %s21, 1
      %p282 = scmp.lt.s32.totalorder %s279, 31
      %s283 = scalar_select %p282, %s279, 31
      %s284 = smul.addr %s281, 32
      %s285 = sadd.s32 %s283, %s284
      %s286 = smul.addr %s285, 8
      %s287 = scalar_lea.vmem %s3, %s286
      %s288 = smul.u32 16, %s22
      %p289 = scmp.lt.s32.totalorder %s21, 1
      %s290 = scalar_select %p289, %s21, 1
      %p291 = scmp.lt.s32.totalorder %s22, 1
      %s292 = scalar_select %p291, %s22, 1
      %s293 = smul.addr %s290, 2
      %s294 = sadd.s32 %s292, %s293
      %s295 = smul.addr %s294, 8
      %s296 = scalar_lea.vmem %s4, %s295
      %p297 = scmp.lt.s32.totalorder %s21, 1
      %s298 = scalar_select %p297, %s21, 1
      %p299 = scmp.lt.s32.totalorder %s22, 1
      %s300 = scalar_select %p299, %s22, 1
      %s301 = smul.addr %s298, 2
      %s302 = sadd.s32 %s300, %s301
      %s303 = smul.addr %s302, 8
      %s304 = scalar_lea.vmem %s5, %s303
      %v305 = vld [vmem:[%s1] sm:$0xff]
      %v306 = vld [vmem:[%s277] sm:$0xff]
      %v307 = vld [vmem:[%s277 + $0x8] sm:$0xff]
      %v308 = vld [vmem:[%s277 + $0x10] sm:$0xff]
      %v309 = vld [vmem:[%s277 + $0x18] sm:$0xff]
      %v310 = vld [vmem:[%s277 + $0x20] sm:$0xff]
      %v311 = vld [vmem:[%s277 + $0x28] sm:$0xff]
      %v312 = vld [vmem:[%s277 + $0x30] sm:$0xff]
      %v313 = vld [vmem:[%s277 + $0x38] sm:$0xff]
      %v314 = vld [vmem:[%s277 + $0x40] sm:$0xff]
      %v315 = vld [vmem:[%s277 + $0x48] sm:$0xff]
      %v316 = vld [vmem:[%s277 + $0x50] sm:$0xff]
      %v317 = vld [vmem:[%s277 + $0x58] sm:$0xff]
      %v318 = vld [vmem:[%s277 + $0x60] sm:$0xff]
      %v319 = vld [vmem:[%s277 + $0x68] sm:$0xff]
      %v320 = vld [vmem:[%s277 + $0x70] sm:$0xff]
      %v321 = vld [vmem:[%s277 + $0x78] sm:$0xff]
      %v322 = vld [vmem:[%s2] sm:$0xff]
      %324 = vset.pattern.permute.xlu0 0
      %325 = vperm.xlu0 %324, %v322
      %v326 = vpop.permute.xlu0 %325
      %vm328 = vcmask 64512
      %v330 = vsel %vm328, %v305, 0
      %332 = vmatprep.subr.mxu0 %v307
      %333 = vmatpush1.msra.mxu0 %v306
      %334 = vmatprep.subr.mxu0 0.0
      %335 = vmatpush1.msra.mxu0 0.0
      %336 = vmatprep.subr.mxu0 0.0
      %337 = vmatpush1.msra.mxu0 0.0
      %338 = vmatprep.subr.mxu0 0.0
      %339 = vmatpush1.msra.mxu0 0.0
      %340 = vmatprep.subr.mxu0 0.0
      %341 = vmatpush1.msra.mxu0 0.0
      %342 = vmatprep.subr.mxu0 0.0
      %343 = vmatpush1.msra.mxu0 0.0
      %344 = vmatprep.subr.mxu0 0.0
      %345 = vmatpush1.msra.mxu0 0.0
      %346 = vmatprep.subr.mxu0 0.0
      %347 = vmatpush1.msra.mxu0 0.0
      %348 = vmatprep.subr.mxu0 0.0
      %349 = vmatpush1.msra.mxu0 0.0
      %350 = vmatprep.subr.mxu0 0.0
      %351 = vmatpush1.msra.mxu0 0.0
      %352 = vmatprep.subr.mxu0 0.0
      %353 = vmatpush1.msra.mxu0 0.0
      %354 = vmatprep.subr.mxu0 0.0
      %355 = vmatpush1.msra.mxu0 0.0
      %356 = vmatprep.subr.mxu0 0.0
      %357 = vmatpush1.msra.mxu0 0.0
      %358 = vmatprep.subr.mxu0 0.0
      %359 = vmatpush1.msra.mxu0 0.0
      %360 = vmatprep.subr.mxu0 0.0
      %361 = vmatpush1.msra.mxu0 0.0
      %362 = vmatprep.subr.mxu0 0.0
      %363 = vmatpush1.msra.mxu0 0.0
      %364 = vmatprep.subr.mxu0 0.0
      %365 = vmatpush1.msra.mxu0 0.0
      %366 = vmatprep.subr.mxu0 0.0
      %367 = vmatpush1.msra.mxu0 0.0
      %368 = vmatprep.subr.mxu0 0.0
      %369 = vmatpush1.msra.mxu0 0.0
      %370 = vmatprep.subr.mxu0 0.0
      %371 = vmatpush1.msra.mxu0 0.0
      %372 = vmatprep.subr.mxu0 0.0
      %373 = vmatpush1.msra.mxu0 0.0
      %374 = vmatprep.subr.mxu0 0.0
      %375 = vmatpush1.msra.mxu0 0.0
      %376 = vmatprep.subr.mxu0 0.0
      %377 = vmatpush1.msra.mxu0 0.0
      %378 = vmatprep.subr.mxu0 0.0
      %379 = vmatpush1.msra.mxu0 0.0
      %380 = vmatprep.subr.mxu0 0.0
      %381 = vmatpush1.msra.mxu0 0.0
      %382 = vmatprep.subr.mxu0 0.0
      %383 = vmatpush1.msra.mxu0 0.0
      %384 = vmatprep.subr.mxu0 0.0
      %385 = vmatpush1.msra.mxu0 0.0
      %386 = vmatprep.subr.mxu0 0.0
      %387 = vmatpush1.msra.mxu0 0.0
      %388 = vmatprep.subr.mxu0 0.0
      %389 = vmatpush1.msra.mxu0 0.0
      %390 = vmatprep.subr.mxu0 0.0
      %391 = vmatpush1.msra.mxu0 0.0
      %392 = vmatprep.subr.mxu0 0.0
      %393 = vmatpush1.msra.mxu0 0.0
      %394 = vmatprep.subr.mxu0 0.0
      %395 = vmatpush1.msra.mxu0 0.0
      %396 = vmatprep.mubr.f32.mxu0 0.0
      %397 = vmatmul.mubr.f32.gmra.mrb[0].mxu0 %v330
      %v398 = vpop.f32.mrb[0].mxu0
      %v399 = vadd.f32 %v326, %v398
      %v400 = vpop.f32.mrb[0].mxu0
      %v401 = vadd.f32 %v326, %v400
      %402 = vdwg.mxu0
      %403 = vmatprep.subr.mxu0 %v309
      %404 = vmatpush1.msra.mxu0 %v308
      %405 = vmatprep.subr.mxu0 0.0
      %406 = vmatpush1.msra.mxu0 0.0
      %407 = vmatprep.subr.mxu0 0.0
      %408 = vmatpush1.msra.mxu0 0.0
      %409 = vmatprep.subr.mxu0 0.0
      %410 = vmatpush1.msra.mxu0 0.0
      %411 = vmatprep.subr.mxu0 0.0
      %412 = vmatpush1.msra.mxu0 0.0
      %413 = vmatprep.subr.mxu0 0.0
      %414 = vmatpush1.msra.mxu0 0.0
      %415 = vmatprep.subr.mxu0 0.0
      %416 = vmatpush1.msra.mxu0 0.0
      %417 = vmatprep.subr.mxu0 0.0
      %418 = vmatpush1.msra.mxu0 0.0
      %419 = vmatprep.subr.mxu0 0.0
      %420 = vmatpush1.msra.mxu0 0.0
      %421 = vmatprep.subr.mxu0 0.0
      %422 = vmatpush1.msra.mxu0 0.0
      %423 = vmatprep.subr.mxu0 0.0
      %424 = vmatpush1.msra.mxu0 0.0
      %425 = vmatprep.subr.mxu0 0.0
      %426 = vmatpush1.msra.mxu0 0.0
      %427 = vmatprep.subr.mxu0 0.0
      %428 = vmatpush1.msra.mxu0 0.0
      %429 = vmatprep.subr.mxu0 0.0
      %430 = vmatpush1.msra.mxu0 0.0
      %431 = vmatprep.subr.mxu0 0.0
      %432 = vmatpush1.msra.mxu0 0.0
      %433 = vmatprep.subr.mxu0 0.0
      %434 = vmatpush1.msra.mxu0 0.0
      %435 = vmatprep.subr.mxu0 0.0
      %436 = vmatpush1.msra.mxu0 0.0
      %437 = vmatprep.subr.mxu0 0.0
      %438 = vmatpush1.msra.mxu0 0.0
      %439 = vmatprep.subr.mxu0 0.0
      %440 = vmatpush1.msra.mxu0 0.0
      %441 = vmatprep.subr.mxu0 0.0
      %442 = vmatpush1.msra.mxu0 0.0
      %443 = vmatprep.subr.mxu0 0.0
      %444 = vmatpush1.msra.mxu0 0.0
      %445 = vmatprep.subr.mxu0 0.0
      %446 = vmatpush1.msra.mxu0 0.0
      %447 = vmatprep.subr.mxu0 0.0
      %448 = vmatpush1.msra.mxu0 0.0
      %449 = vmatprep.subr.mxu0 0.0
      %450 = vmatpush1.msra.mxu0 0.0
      %451 = vmatprep.subr.mxu0 0.0
      %452 = vmatpush1.msra.mxu0 0.0
      %453 = vmatprep.subr.mxu0 0.0
      %454 = vmatpush1.msra.mxu0 0.0
      %455 = vmatprep.subr.mxu0 0.0
      %456 = vmatpush1.msra.mxu0 0.0
      %457 = vmatprep.subr.mxu0 0.0
      %458 = vmatpush1.msra.mxu0 0.0
      %459 = vmatprep.subr.mxu0 0.0
      %460 = vmatpush1.msra.mxu0 0.0
      %461 = vmatprep.subr.mxu0 0.0
      %462 = vmatpush1.msra.mxu0 0.0
      %463 = vmatprep.subr.mxu0 0.0
      %464 = vmatpush1.msra.mxu0 0.0
      %465 = vmatprep.subr.mxu0 0.0
      %466 = vmatpush1.msra.mxu0 0.0
      %467 = vmatprep.mubr.f32.mxu0 0.0
      %468 = vmatmul.mubr.f32.gmra.mrb[0].mxu0 %v330
      %v469 = vpop.f32.mrb[0].mxu0
      %v470 = vadd.f32 %v326, %v469
      %v471 = vpop.f32.mrb[0].mxu0
      %v472 = vadd.f32 %v326, %v471
      %473 = vdwg.mxu0
      %474 = vmatprep.subr.mxu0 %v311
      %475 = vmatpush1.msra.mxu0 %v310
      %476 = vmatprep.subr.mxu0 0.0
      %477 = vmatpush1.msra.mxu0 0.0
      %478 = vmatprep.subr.mxu0 0.0
      %479 = vmatpush1.msra.mxu0 0.0
      %480 = vmatprep.subr.mxu0 0.0
      %481 = vmatpush1.msra.mxu0 0.0
      %482 = vmatprep.subr.mxu0 0.0
      %483 = vmatpush1.msra.mxu0 0.0
      %484 = vmatprep.subr.mxu0 0.0
      %485 = vmatpush1.msra.mxu0 0.0
      %486 = vmatprep.subr.mxu0 0.0
      %487 = vmatpush1.msra.mxu0 0.0
      %488 = vmatprep.subr.mxu0 0.0
      %489 = vmatpush1.msra.mxu0 0.0
      %490 = vmatprep.subr.mxu0 0.0
      %491 = vmatpush1.msra.mxu0 0.0
      %492 = vmatprep.subr.mxu0 0.0
      %493 = vmatpush1.msra.mxu0 0.0
      %494 = vmatprep.subr.mxu0 0.0
      %495 = vmatpush1.msra.mxu0 0.0
      %496 = vmatprep.subr.mxu0 0.0
      %497 = vmatpush1.msra.mxu0 0.0
      %498 = vmatprep.subr.mxu0 0.0
      %499 = vmatpush1.msra.mxu0 0.0
      %500 = vmatprep.subr.mxu0 0.0
      %501 = vmatpush1.msra.mxu0 0.0
      %502 = vmatprep.subr.mxu0 0.0
      %503 = vmatpush1.msra.mxu0 0.0
      %504 = vmatprep.subr.mxu0 0.0
      %505 = vmatpush1.msra.mxu0 0.0
      %506 = vmatprep.subr.mxu0 0.0
      %507 = vmatpush1.msra.mxu0 0.0
      %508 = vmatprep.subr.mxu0 0.0
      %509 = vmatpush1.msra.mxu0 0.0
      %510 = vmatprep.subr.mxu0 0.0
      %511 = vmatpush1.msra.mxu0 0.0
      %512 = vmatprep.subr.mxu0 0.0
      %513 = vmatpush1.msra.mxu0 0.0
      %514 = vmatprep.subr.mxu0 0.0
      %515 = vmatpush1.msra.mxu0 0.0
      %516 = vmatprep.subr.mxu0 0.0
      %517 = vmatpush1.msra.mxu0 0.0
      %518 = vmatprep.subr.mxu0 0.0
      %519 = vmatpush1.msra.mxu0 0.0
      %520 = vmatprep.subr.mxu0 0.0
      %521 = vmatpush1.msra.mxu0 0.0
      %522 = vmatprep.subr.mxu0 0.0
      %523 = vmatpush1.msra.mxu0 0.0
      %524 = vmatprep.subr.mxu0 0.0
      %525 = vmatpush1.msra.mxu0 0.0
      %526 = vmatprep.subr.mxu0 0.0
      %527 = vmatpush1.msra.mxu0 0.0
      %528 = vmatprep.subr.mxu0 0.0
      %529 = vmatpush1.msra.mxu0 0.0
      %530 = vmatprep.subr.mxu0 0.0
      %531 = vmatpush1.msra.mxu0 0.0
      %532 = vmatprep.subr.mxu0 0.0
      %533 = vmatpush1.msra.mxu0 0.0
      %534 = vmatprep.subr.mxu0 0.0
      %535 = vmatpush1.msra.mxu0 0.0
      %536 = vmatprep.subr.mxu0 0.0
      %537 = vmatpush1.msra.mxu0 0.0
      %538 = vmatprep.mubr.f32.mxu0 0.0
      %539 = vmatmul.mubr.f32.gmra.mrb[0].mxu0 %v330
      %v540 = vpop.f32.mrb[0].mxu0
      %v541 = vadd.f32 %v326, %v540
      %v542 = vpop.f32.mrb[0].mxu0
      %v543 = vadd.f32 %v326, %v542
      %544 = vdwg.mxu0
      %545 = vmatprep.subr.mxu0 %v313
      %546 = vmatpush1.msra.mxu0 %v312
      %547 = vmatprep.subr.mxu0 0.0
      %548 = vmatpush1.msra.mxu0 0.0
      %549 = vmatprep.subr.mxu0 0.0
      %550 = vmatpush1.msra.mxu0 0.0
      %551 = vmatprep.subr.mxu0 0.0
      %552 = vmatpush1.msra.mxu0 0.0
      %553 = vmatprep.subr.mxu0 0.0
      %554 = vmatpush1.msra.mxu0 0.0
      %555 = vmatprep.subr.mxu0 0.0
      %556 = vmatpush1.msra.mxu0 0.0
      %557 = vmatprep.subr.mxu0 0.0
      %558 = vmatpush1.msra.mxu0 0.0
      %559 = vmatprep.subr.mxu0 0.0
      %560 = vmatpush1.msra.mxu0 0.0
      %561 = vmatprep.subr.mxu0 0.0
      %562 = vmatpush1.msra.mxu0 0.0
      %563 = vmatprep.subr.mxu0 0.0
      %564 = vmatpush1.msra.mxu0 0.0
      %565 = vmatprep.subr.mxu0 0.0
      %566 = vmatpush1.msra.mxu0 0.0
      %567 = vmatprep.subr.mxu0 0.0
      %568 = vmatpush1.msra.mxu0 0.0
      %569 = vmatprep.subr.mxu0 0.0
      %570 = vmatpush1.msra.mxu0 0.0
      %571 = vmatprep.subr.mxu0 0.0
      %572 = vmatpush1.msra.mxu0 0.0
      %573 = vmatprep.subr.mxu0 0.0
      %574 = vmatpush1.msra.mxu0 0.0
      %575 = vmatprep.subr.mxu0 0.0
      %576 = vmatpush1.msra.mxu0 0.0
      %577 = vmatprep.subr.mxu0 0.0
      %578 = vmatpush1.msra.mxu0 0.0
      %579 = vmatprep.subr.mxu0 0.0
      %580 = vmatpush1.msra.mxu0 0.0
      %581 = vmatprep.subr.mxu0 0.0
      %582 = vmatpush1.msra.mxu0 0.0
      %583 = vmatprep.subr.mxu0 0.0
      %584 = vmatpush1.msra.mxu0 0.0
      %585 = vmatprep.subr.mxu0 0.0
      %586 = vmatpush1.msra.mxu0 0.0
      %587 = vmatprep.subr.mxu0 0.0
      %588 = vmatpush1.msra.mxu0 0.0
      %589 = vmatprep.subr.mxu0 0.0
      %590 = vmatpush1.msra.mxu0 0.0
      %591 = vmatprep.subr.mxu0 0.0
      %592 = vmatpush1.msra.mxu0 0.0
      %593 = vmatprep.subr.mxu0 0.0
      %594 = vmatpush1.msra.mxu0 0.0
      %595 = vmatprep.subr.mxu0 0.0
      %596 = vmatpush1.msra.mxu0 0.0
      %597 = vmatprep.subr.mxu0 0.0
      %598 = vmatpush1.msra.mxu0 0.0
      %599 = vmatprep.subr.mxu0 0.0
      %600 = vmatpush1.msra.mxu0 0.0
      %601 = vmatprep.subr.mxu0 0.0
      %602 = vmatpush1.msra.mxu0 0.0
      %603 = vmatprep.subr.mxu0 0.0
      %604 = vmatpush1.msra.mxu0 0.0
      %605 = vmatprep.subr.mxu0 0.0
      %606 = vmatpush1.msra.mxu0 0.0
      %607 = vmatprep.subr.mxu0 0.0
      %608 = vmatpush1.msra.mxu0 0.0
      %609 = vmatprep.mubr.f32.mxu0 0.0
      %610 = vmatmul.mubr.f32.gmra.mrb[0].mxu0 %v330
      %v611 = vpop.f32.mrb[0].mxu0
      %v612 = vadd.f32 %v326, %v611
      %v613 = vpop.f32.mrb[0].mxu0
      %v614 = vadd.f32 %v326, %v613
      %615 = vdwg.mxu0
      %616 = vmatprep.subr.mxu0 %v315
      %617 = vmatpush1.msra.mxu0 %v314
      %618 = vmatprep.subr.mxu0 0.0
      %619 = vmatpush1.msra.mxu0 0.0
      %620 = vmatprep.subr.mxu0 0.0
      %621 = vmatpush1.msra.mxu0 0.0
      %622 = vmatprep.subr.mxu0 0.0
      %623 = vmatpush1.msra.mxu0 0.0
      %624 = vmatprep.subr.mxu0 0.0
      %625 = vmatpush1.msra.mxu0 0.0
      %626 = vmatprep.subr.mxu0 0.0
      %627 = vmatpush1.msra.mxu0 0.0
      %628 = vmatprep.subr.mxu0 0.0
      %629 = vmatpush1.msra.mxu0 0.0
      %630 = vmatprep.subr.mxu0 0.0
      %631 = vmatpush1.msra.mxu0 0.0
      %632 = vmatprep.subr.mxu0 0.0
      %633 = vmatpush1.msra.mxu0 0.0
      %634 = vmatprep.subr.mxu0 0.0
      %635 = vmatpush1.msra.mxu0 0.0
      %636 = vmatprep.subr.mxu0 0.0
      %637 = vmatpush1.msra.mxu0 0.0
      %638 = vmatprep.subr.mxu0 0.0
      %639 = vmatpush1.msra.mxu0 0.0
      %640 = vmatprep.subr.mxu0 0.0
      %641 = vmatpush1.msra.mxu0 0.0
      %642 = vmatprep.subr.mxu0 0.0
      %643 = vmatpush1.msra.mxu0 0.0
      %644 = vmatprep.subr.mxu0 0.0
      %645 = vmatpush1.msra.mxu0 0.0
      %646 = vmatprep.subr.mxu0 0.0
      %647 = vmatpush1.msra.mxu0 0.0
      %648 = vmatprep.subr.mxu0 0.0
      %649 = vmatpush1.msra.mxu0 0.0
      %650 = vmatprep.subr.mxu0 0.0
      %651 = vmatpush1.msra.mxu0 0.0
      %652 = vmatprep.subr.mxu0 0.0
      %653 = vmatpush1.msra.mxu0 0.0
      %654 = vmatprep.subr.mxu0 0.0
      %655 = vmatpush1.msra.mxu0 0.0
      %656 = vmatprep.subr.mxu0 0.0
      %657 = vmatpush1.msra.mxu0 0.0
      %658 = vmatprep.subr.mxu0 0.0
      %659 = vmatpush1.msra.mxu0 0.0
      %660 = vmatprep.subr.mxu0 0.0
      %661 = vmatpush1.msra.mxu0 0.0
      %662 = vmatprep.subr.mxu0 0.0
      %663 = vmatpush1.msra.mxu0 0.0
      %664 = vmatprep.subr.mxu0 0.0
      %665 = vmatpush1.msra.mxu0 0.0
      %666 = vmatprep.subr.mxu0 0.0
      %667 = vmatpush1.msra.mxu0 0.0
      %668 = vmatprep.subr.mxu0 0.0
      %669 = vmatpush1.msra.mxu0 0.0
      %670 = vmatprep.subr.mxu0 0.0
      %671 = vmatpush1.msra.mxu0 0.0
      %672 = vmatprep.subr.mxu0 0.0
      %673 = vmatpush1.msra.mxu0 0.0
      %674 = vmatprep.subr.mxu0 0.0
      %675 = vmatpush1.msra.mxu0 0.0
      %676 = vmatprep.subr.mxu0 0.0
      %677 = vmatpush1.msra.mxu0 0.0
      %678 = vmatprep.subr.mxu0 0.0
      %679 = vmatpush1.msra.mxu0 0.0
      %680 = vmatprep.mubr.f32.mxu0 0.0
      %681 = vmatmul.mubr.f32.gmra.mrb[0].mxu0 %v330
      %v682 = vpop.f32.mrb[0].mxu0
      %v683 = vadd.f32 %v326, %v682
      %v684 = vpop.f32.mrb[0].mxu0
      %v685 = vadd.f32 %v326, %v684
      %686 = vdwg.mxu0
      %687 = vmatprep.subr.mxu0 %v317
      %688 = vmatpush1.msra.mxu0 %v316
      %689 = vmatprep.subr.mxu0 0.0
      %690 = vmatpush1.msra.mxu0 0.0
      %691 = vmatprep.subr.mxu0 0.0
      %692 = vmatpush1.msra.mxu0 0.0
      %693 = vmatprep.subr.mxu0 0.0
      %694 = vmatpush1.msra.mxu0 0.0
      %695 = vmatprep.subr.mxu0 0.0
      %696 = vmatpush1.msra.mxu0 0.0
      %697 = vmatprep.subr.mxu0 0.0
      %698 = vmatpush1.msra.mxu0 0.0
      %699 = vmatprep.subr.mxu0 0.0
      %700 = vmatpush1.msra.mxu0 0.0
      %701 = vmatprep.subr.mxu0 0.0
      %702 = vmatpush1.msra.mxu0 0.0
      %703 = vmatprep.subr.mxu0 0.0
      %704 = vmatpush1.msra.mxu0 0.0
      %705 = vmatprep.subr.mxu0 0.0
      %706 = vmatpush1.msra.mxu0 0.0
      %707 = vmatprep.subr.mxu0 0.0
      %708 = vmatpush1.msra.mxu0 0.0
      %709 = vmatprep.subr.mxu0 0.0
      %710 = vmatpush1.msra.mxu0 0.0
      %711 = vmatprep.subr.mxu0 0.0
      %712 = vmatpush1.msra.mxu0 0.0
      %713 = vmatprep.subr.mxu0 0.0
      %714 = vmatpush1.msra.mxu0 0.0
      %715 = vmatprep.subr.mxu0 0.0
      %716 = vmatpush1.msra.mxu0 0.0
      %717 = vmatprep.subr.mxu0 0.0
      %718 = vmatpush1.msra.mxu0 0.0
      %719 = vmatprep.subr.mxu0 0.0
      %720 = vmatpush1.msra.mxu0 0.0
      %721 = vmatprep.subr.mxu0 0.0
      %722 = vmatpush1.msra.mxu0 0.0
      %723 = vmatprep.subr.mxu0 0.0
      %724 = vmatpush1.msra.mxu0 0.0
      %725 = vmatprep.subr.mxu0 0.0
      %726 = vmatpush1.msra.mxu0 0.0
      %727 = vmatprep.subr.mxu0 0.0
      %728 = vmatpush1.msra.mxu0 0.0
      %729 = vmatprep.subr.mxu0 0.0
      %730 = vmatpush1.msra.mxu0 0.0
      %731 = vmatprep.subr.mxu0 0.0
      %732 = vmatpush1.msra.mxu0 0.0
      %733 = vmatprep.subr.mxu0 0.0
      %734 = vmatpush1.msra.mxu0 0.0
      %735 = vmatprep.subr.mxu0 0.0
      %736 = vmatpush1.msra.mxu0 0.0
      %737 = vmatprep.subr.mxu0 0.0
      %738 = vmatpush1.msra.mxu0 0.0
      %739 = vmatprep.subr.mxu0 0.0
      %740 = vmatpush1.msra.mxu0 0.0
      %741 = vmatprep.subr.mxu0 0.0
      %742 = vmatpush1.msra.mxu0 0.0
      %743 = vmatprep.subr.mxu0 0.0
      %744 = vmatpush1.msra.mxu0 0.0
      %745 = vmatprep.subr.mxu0 0.0
      %746 = vmatpush1.msra.mxu0 0.0
      %747 = vmatprep.subr.mxu0 0.0
      %748 = vmatpush1.msra.mxu0 0.0
      %749 = vmatprep.subr.mxu0 0.0
      %750 = vmatpush1.msra.mxu0 0.0
      %751 = vmatprep.mubr.f32.mxu0 0.0
      %752 = vmatmul.mubr.f32.gmra.mrb[0].mxu0 %v330
      %v753 = vpop.f32.mrb[0].mxu0
      %v754 = vadd.f32 %v326, %v753
      %v755 = vpop.f32.mrb[0].mxu0
      %v756 = vadd.f32 %v326, %v755
      %757 = vdwg.mxu0
      %758 = vmatprep.subr.mxu0 %v319
      %759 = vmatpush1.msra.mxu0 %v318
      %760 = vmatprep.subr.mxu0 0.0
      %761 = vmatpush1.msra.mxu0 0.0
      %762 = vmatprep.subr.mxu0 0.0
      %763 = vmatpush1.msra.mxu0 0.0
      %764 = vmatprep.subr.mxu0 0.0
      %765 = vmatpush1.msra.mxu0 0.0
      %766 = vmatprep.subr.mxu0 0.0
      %767 = vmatpush1.msra.mxu0 0.0
      %768 = vmatprep.subr.mxu0 0.0
      %769 = vmatpush1.msra.mxu0 0.0
      %770 = vmatprep.subr.mxu0 0.0
      %771 = vmatpush1.msra.mxu0 0.0
      %772 = vmatprep.subr.mxu0 0.0
      %773 = vmatpush1.msra.mxu0 0.0
      %774 = vmatprep.subr.mxu0 0.0
      %775 = vmatpush1.msra.mxu0 0.0
      %776 = vmatprep.subr.mxu0 0.0
      %777 = vmatpush1.msra.mxu0 0.0
      %778 = vmatprep.subr.mxu0 0.0
      %779 = vmatpush1.msra.mxu0 0.0
      %780 = vmatprep.subr.mxu0 0.0
      %781 = vmatpush1.msra.mxu0 0.0
      %782 = vmatprep.subr.mxu0 0.0
      %783 = vmatpush1.msra.mxu0 0.0
      %784 = vmatprep.subr.mxu0 0.0
      %785 = vmatpush1.msra.mxu0 0.0
      %786 = vmatprep.subr.mxu0 0.0
      %787 = vmatpush1.msra.mxu0 0.0
      %788 = vmatprep.subr.mxu0 0.0
      %789 = vmatpush1.msra.mxu0 0.0
      %790 = vmatprep.subr.mxu0 0.0
      %791 = vmatpush1.msra.mxu0 0.0
      %792 = vmatprep.subr.mxu0 0.0
      %793 = vmatpush1.msra.mxu0 0.0
      %794 = vmatprep.subr.mxu0 0.0
      %795 = vmatpush1.msra.mxu0 0.0
      %796 = vmatprep.subr.mxu0 0.0
      %797 = vmatpush1.msra.mxu0 0.0
      %798 = vmatprep.subr.mxu0 0.0
      %799 = vmatpush1.msra.mxu0 0.0
      %800 = vmatprep.subr.mxu0 0.0
      %801 = vmatpush1.msra.mxu0 0.0
      %802 = vmatprep.subr.mxu0 0.0
      %803 = vmatpush1.msra.mxu0 0.0
      %804 = vmatprep.subr.mxu0 0.0
      %805 = vmatpush1.msra.mxu0 0.0
      %806 = vmatprep.subr.mxu0 0.0
      %807 = vmatpush1.msra.mxu0 0.0
      %808 = vmatprep.subr.mxu0 0.0
      %809 = vmatpush1.msra.mxu0 0.0
      %810 = vmatprep.subr.mxu0 0.0
      %811 = vmatpush1.msra.mxu0 0.0
      %812 = vmatprep.subr.mxu0 0.0
      %813 = vmatpush1.msra.mxu0 0.0
      %814 = vmatprep.subr.mxu0 0.0
      %815 = vmatpush1.msra.mxu0 0.0
      %816 = vmatprep.subr.mxu0 0.0
      %817 = vmatpush1.msra.mxu0 0.0
      %818 = vmatprep.subr.mxu0 0.0
      %819 = vmatpush1.msra.mxu0 0.0
      %820 = vmatprep.subr.mxu0 0.0
      %821 = vmatpush1.msra.mxu0 0.0
      %822 = vmatprep.mubr.f32.mxu0 0.0
      %823 = vmatmul.mubr.f32.gmra.mrb[0].mxu0 %v330
      %v824 = vpop.f32.mrb[0].mxu0
      %v825 = vadd.f32 %v326, %v824
      %v826 = vpop.f32.mrb[0].mxu0
      %v827 = vadd.f32 %v326, %v826
      %828 = vdwg.mxu0
      %829 = vmatprep.subr.mxu0 %v321
      %830 = vmatpush1.msra.mxu0 %v320
      %831 = vmatprep.subr.mxu0 0.0
      %832 = vmatpush1.msra.mxu0 0.0
      %833 = vmatprep.subr.mxu0 0.0
      %834 = vmatpush1.msra.mxu0 0.0
      %835 = vmatprep.subr.mxu0 0.0
      %836 = vmatpush1.msra.mxu0 0.0
      %837 = vmatprep.subr.mxu0 0.0
      %838 = vmatpush1.msra.mxu0 0.0
      %839 = vmatprep.subr.mxu0 0.0
      %840 = vmatpush1.msra.mxu0 0.0
      %841 = vmatprep.subr.mxu0 0.0
      %842 = vmatpush1.msra.mxu0 0.0
      %843 = vmatprep.subr.mxu0 0.0
      %844 = vmatpush1.msra.mxu0 0.0
      %845 = vmatprep.subr.mxu0 0.0
      %846 = vmatpush1.msra.mxu0 0.0
      %847 = vmatprep.subr.mxu0 0.0
      %848 = vmatpush1.msra.mxu0 0.0
      %849 = vmatprep.subr.mxu0 0.0
      %850 = vmatpush1.msra.mxu0 0.0
      %851 = vmatprep.subr.mxu0 0.0
      %852 = vmatpush1.msra.mxu0 0.0
      %853 = vmatprep.subr.mxu0 0.0
      %854 = vmatpush1.msra.mxu0 0.0
      %855 = vmatprep.subr.mxu0 0.0
      %856 = vmatpush1.msra.mxu0 0.0
      %857 = vmatprep.subr.mxu0 0.0
      %858 = vmatpush1.msra.mxu0 0.0
      %859 = vmatprep.subr.mxu0 0.0
      %860 = vmatpush1.msra.mxu0 0.0
      %861 = vmatprep.subr.mxu0 0.0
      %862 = vmatpush1.msra.mxu0 0.0
      %863 = vmatprep.subr.mxu0 0.0
      %864 = vmatpush1.msra.mxu0 0.0
      %865 = vmatprep.subr.mxu0 0.0
      %866 = vmatpush1.msra.mxu0 0.0
      %867 = vmatprep.subr.mxu0 0.0
      %868 = vmatpush1.msra.mxu0 0.0
      %869 = vmatprep.subr.mxu0 0.0
      %870 = vmatpush1.msra.mxu0 0.0
      %871 = vmatprep.subr.mxu0 0.0
      %872 = vmatpush1.msra.mxu0 0.0
      %873 = vmatprep.subr.mxu0 0.0
      %874 = vmatpush1.msra.mxu0 0.0
      %875 = vmatprep.subr.mxu0 0.0
      %876 = vmatpush1.msra.mxu0 0.0
      %877 = vmatprep.subr.mxu0 0.0
      %878 = vmatpush1.msra.mxu0 0.0
      %879 = vmatprep.subr.mxu0 0.0
      %880 = vmatpush1.msra.mxu0 0.0
      %881 = vmatprep.subr.mxu0 0.0
      %882 = vmatpush1.msra.mxu0 0.0
      %883 = vmatprep.subr.mxu0 0.0
      %884 = vmatpush1.msra.mxu0 0.0
      %885 = vmatprep.subr.mxu0 0.0
      %886 = vmatpush1.msra.mxu0 0.0
      %887 = vmatprep.subr.mxu0 0.0
      %888 = vmatpush1.msra.mxu0 0.0
      %889 = vmatprep.subr.mxu0 0.0
      %890 = vmatpush1.msra.mxu0 0.0
      %891 = vmatprep.subr.mxu0 0.0
      %892 = vmatpush1.msra.mxu0 0.0
      %893 = vmatprep.mubr.f32.mxu0 0.0
      %894 = vmatmul.mubr.f32.gmra.mrb[0].mxu0 %v330
      %v895 = vpop.f32.mrb[0].mxu0
      %v896 = vadd.f32 %v326, %v895
      %v897 = vpop.f32.mrb[0].mxu0
      %v898 = vadd.f32 %v326, %v897
      %899 = vdwg.mxu0
      %900 = vst [vmem:[%s287] sm:$0xff] %v399
      %901 = vst [vmem:[%s287 + $0x8] sm:$0xff] %v401
      %902 = vst [vmem:[%s287 + $0x10] sm:$0xff] %v470
      %903 = vst [vmem:[%s287 + $0x18] sm:$0xff] %v472
      %904 = vst [vmem:[%s287 + $0x20] sm:$0xff] %v541
      %905 = vst [vmem:[%s287 + $0x28] sm:$0xff] %v543
      %906 = vst [vmem:[%s287 + $0x30] sm:$0xff] %v612
      %907 = vst [vmem:[%s287 + $0x38] sm:$0xff] %v614
      %908 = vst [vmem:[%s287 + $0x40] sm:$0xff] %v683
      %909 = vst [vmem:[%s287 + $0x48] sm:$0xff] %v685
      %910 = vst [vmem:[%s287 + $0x50] sm:$0xff] %v754
      %911 = vst [vmem:[%s287 + $0x58] sm:$0xff] %v756
      %912 = vst [vmem:[%s287 + $0x60] sm:$0xff] %v825
      %913 = vst [vmem:[%s287 + $0x68] sm:$0xff] %v827
      %914 = vst [vmem:[%s287 + $0x70] sm:$0xff] %v896
      %915 = vst [vmem:[%s287 + $0x78] sm:$0xff] %v898
      %v916 = vadd.f32 %v399, %v401
      %v917 = vadd.f32 %v916, %v470
      %v918 = vadd.f32 %v917, %v472
      %v919 = vadd.f32 %v918, %v541
      %v920 = vadd.f32 %v919, %v543
      %v921 = vadd.f32 %v920, %v612
      %v922 = vadd.f32 %v921, %v614
      %v923 = vadd.f32 %v922, %v683
      %v924 = vadd.f32 %v923, %v685
      %v925 = vadd.f32 %v924, %v754
      %v926 = vadd.f32 %v925, %v756
      %v927 = vadd.f32 %v926, %v825
      %v928 = vadd.f32 %v927, %v827
      %v929 = vadd.f32 %v928, %v896
      %v930 = vadd.f32 %v929, %v898
      %931 = vadd.xlane.f32.xlu0 %v930
      %v932 = vpop.xlane.xlu0 %931
      %vm933 = vcmask 7168
      %934 = vst.msk [vmem:[%s296] sm:$0xff] %vm933, %v932
      %v935 = vmul.f32 %v399, %v399
      %v936 = vmul.f32 %v401, %v401
      %v937 = vmul.f32 %v470, %v470
      %v938 = vmul.f32 %v472, %v472
      %v939 = vmul.f32 %v541, %v541
      %v940 = vmul.f32 %v543, %v543
      %v941 = vmul.f32 %v612, %v612
      %v942 = vmul.f32 %v614, %v614
      %v943 = vmul.f32 %v683, %v683
      %v944 = vmul.f32 %v685, %v685
      %v945 = vmul.f32 %v754, %v754
      %v946 = vmul.f32 %v756, %v756
      %v947 = vmul.f32 %v825, %v825
      %v948 = vmul.f32 %v827, %v827
      %v949 = vmul.f32 %v896, %v896
      %v950 = vmul.f32 %v898, %v898
      %v951 = vadd.f32 %v935, %v936
      %v952 = vadd.f32 %v951, %v937
      %v953 = vadd.f32 %v952, %v938
      %v954 = vadd.f32 %v953, %v939
      %v955 = vadd.f32 %v954, %v940
      %v956 = vadd.f32 %v955, %v941
      %v957 = vadd.f32 %v956, %v942
      %v958 = vadd.f32 %v957, %v943
      %v959 = vadd.f32 %v958, %v944
      %v960 = vadd.f32 %v959, %v945
      %v961 = vadd.f32 %v960, %v946
      %v962 = vadd.f32 %v961, %v947
      %v963 = vadd.f32 %v962, %v948
      %v964 = vadd.f32 %v963, %v949
      %v965 = vadd.f32 %v964, %v950
      %966 = vadd.xlane.f32.xlu0 %v965
      %v967 = vpop.xlane.xlu0 %966
      %968 = vst.msk [vmem:[%s304] sm:$0xff] %vm933, %v967
      %s969 = smul.u32 16, %s22
      %p970 = scmp.lt.s32.totalorder %s21, 1
      %s971 = scalar_select %p970, %s21, 1
      %p972 = scmp.lt.s32.totalorder %s969, 31
      %s973 = scalar_select %p972, %s969, 31
      %s974 = smul.addr %s971, 32
      %s975 = sadd.s32 %s973, %s974
      %s976 = smul.addr %s975, 8
      %s977 = scalar_lea.vmem %s3, %s976
      %p978 = scmp.lt.s32.totalorder %s21, 1
      %s979 = scalar_select %p978, %s21, 1
      %p980 = scmp.lt.s32.totalorder %s22, 1
      %s981 = scalar_select %p980, %s22, 1
      %s982 = smul.addr %s979, 2
      %s983 = sadd.s32 %s981, %s982
      %s984 = smul.addr %s983, 8
      %s985 = scalar_lea.vmem %s4, %s984
      %p986 = scmp.lt.s32.totalorder %s21, 1
      %s987 = scalar_select %p986, %s21, 1
      %p988 = scmp.lt.s32.totalorder %s22, 1
      %s989 = scalar_select %p988, %s22, 1
      %s990 = smul.addr %s987, 2
      %s991 = sadd.s32 %s989, %s990
      %s992 = smul.addr %s991, 8
      %s993 = scalar_lea.vmem %s5, %s992
      // Predicated region
      $region33: #{hdc_module_forward.24} parent=31 // pred_check
        %p994 = pneg %p119
      $region34: #{hdc_module_forward.24} parent=31 // pred_check_branch
        %996 = sbr.rel (%p994) target = $region36
      $region35: #{hdc_module_forward.24} parent=31 // pred_region
        %s997 = smul.u32 16, %s22
      $region36: #{hdc_module_forward.24} parent=31 // pred_fallthru
        _
      // Predicated region
      $region37: #{hdc_module_forward.24} parent=31 // pred_check
        %p998 = pneg %p147
      $region38: #{hdc_module_forward.24} parent=31 // pred_check_branch
        %1000 = sbr.rel (%p998) target = $region40
      $region39: #{hdc_module_forward.24} parent=31 // pred_region
        _
      $region40: #{hdc_module_forward.24} parent=31 // pred_fallthru
        _
      // Predicated region
      $region41: #{hdc_module_forward.24} parent=31 // pred_check
        %p1001 = pneg %p175
      $region42: #{hdc_module_forward.24} parent=31 // pred_check_branch
        %1003 = sbr.rel (%p1001) target = $region44
      $region43: #{hdc_module_forward.24} parent=31 // pred_region
        _
      $region44: #{hdc_module_forward.24} parent=31 // pred_fallthru
        _
    $region32: #{hdc_module_forward.24} parent=5 // pred_fallthru
      _
    %p1004 = scmp.le.s32.totalorder 2, %s12
    // Predicated region
    $region45: #{hdc_module_forward.24} parent=5 // pred_check
      %p1005 = pneg %p1004
    $region46: #{hdc_module_forward.24} parent=5 // pred_check_branch
      %1007 = sbr.rel (%p1005) target = $region48
    $region47: #{hdc_module_forward.24} parent=5 // pred_region
      %s1008 = ssub.s32 %s12, 2
      // Predicated region
      $region49: #{hdc_module_forward.24} parent=47 // pred_check
        %p1009 = pneg %p125
      $region50: #{hdc_module_forward.24} parent=47 // pred_check_branch
        %1011 = sbr.rel (%p1009) target = $region52
      $region51: #{hdc_module_forward.24} parent=47 // pred_region
        %s1012 = smul.u32 16, %s24
        %p1013 = scmp.lt.s32.totalorder %s23, 1
        %s1014 = scalar_select %p1013, %s23, 1
        %p1015 = scmp.lt.s32.totalorder %s1012, 31
        %s1016 = scalar_select %p1015, %s1012, 31
        %s1017 = smul.addr %s1014, 32
        %s1018 = sadd.s32 %s1016, %s1017
        %s1019 = smul.addr %s1018, 8
        %s1020 = scalar_lea.vmem %s3, %s1019
      $region52: #{hdc_module_forward.24} parent=47 // pred_fallthru
        _
      // Predicated region
      $region53: #{hdc_module_forward.24} parent=47 // pred_check
        %p1021 = pneg %p153
      $region54: #{hdc_module_forward.24} parent=47 // pred_check_branch
        %1023 = sbr.rel (%p1021) target = $region56
      $region55: #{hdc_module_forward.24} parent=47 // pred_region
        %p1024 = scmp.lt.s32.totalorder %s23, 1
        %s1025 = scalar_select %p1024, %s23, 1
        %p1026 = scmp.lt.s32.totalorder %s24, 1
        %s1027 = scalar_select %p1026, %s24, 1
        %s1028 = smul.addr %s1025, 2
        %s1029 = sadd.s32 %s1027, %s1028
        %s1030 = smul.addr %s1029, 8
        %s1031 = scalar_lea.vmem %s4, %s1030
      $region56: #{hdc_module_forward.24} parent=47 // pred_fallthru
        _
      // Predicated region
      $region57: #{hdc_module_forward.24} parent=47 // pred_check
        %p1032 = pneg %p181
      $region58: #{hdc_module_forward.24} parent=47 // pred_check_branch
        %1034 = sbr.rel (%p1032) target = $region60
      $region59: #{hdc_module_forward.24} parent=47 // pred_region
        %p1035 = scmp.lt.s32.totalorder %s23, 1
        %s1036 = scalar_select %p1035, %s23, 1
        %p1037 = scmp.lt.s32.totalorder %s24, 1
        %s1038 = scalar_select %p1037, %s24, 1
        %s1039 = smul.addr %s1036, 2
        %s1040 = sadd.s32 %s1038, %s1039
        %s1041 = smul.addr %s1040, 8
        %s1042 = scalar_lea.vmem %s5, %s1041
      $region60: #{hdc_module_forward.24} parent=47 // pred_fallthru
        _
    $region48: #{hdc_module_forward.24} parent=5 // pred_fallthru
      _
  $region6: #{hdc_module_forward.24} parent=0 // loop_footer
    %s16 = sadd.s32 1, %s12
  $region7: #{hdc_module_forward.24} parent=0 // loop_footer_branch
    %11 = sbr.rel target = $region3
  $region8: #{hdc_module_forward.24} parent=0 // loop_exit
    _

// kernel: hdc_module_forward.25
$region0: #{hdc_module_forward.25}
  #allocation0 [shape = 'u32[]', space=smem, size = 0x4, offset = 0x4, fixed_abs, tag = 'smem constant byte address 0x4 - core index']
  #allocation1 [shape = 'u32[144,128]{1,0:T(1,128)}', space=vmem, size = 0x12000, scoped, tag = 'internal scratch']
  %s0 = inlined_call_operand.vmem [shape: f32[2,8,4096], index: 0, kind: input, shape index: {}]
  %s1 = inlined_call_operand.vmem [shape: f32[8,1], index: 1, kind: input, shape index: {}]
  %s2 = inlined_call_operand.vmem [shape: f32[8,1], index: 2, kind: input, shape index: {}]
  %s3 = inlined_call_operand.vmem [shape: f32[2,8,4096], index: 3, kind: input, shape index: {}]
  %s4 = inlined_call_operand.hbm [shape: f32[2,8,4096], index: 4, kind: output, shape index: {0}]
  %s5 = inlined_call_operand.vmem [shape: f32[2,8,4096], index: 5, kind: output, shape index: {1}]
  %6 = xla_tuple %s4, %s5
  %s7 = sld [smem:[#allocation0]]
  $region57: #{hdc_module_forward.25} parent=0
    _
  %s9 = ssub.s32 1, %s7
  %s10 = scalar_select 0, %s9, %s7
  $region1: #{hdc_module_forward.25} parent=0
    #allocation2 [shape = 'u8[131072]{0}', space=vmem, size = 0x20000, scoped, tag = 'output window, operand 0']
    #allocation3 [shape = 's32[2]{0}', space=sflag, size = 0x8, scoped, tag = 'scoped memory for hdc_module_forward.25']
    %11 = vsyncpa [#allocation3], 0
    %s12 = scalar_lea.sflag [#allocation3], 1
    %13 = vsyncpa %s12, 0
    loop: start=0, step=1, limit=6
    $region2: #{hdc_module_forward.25} parent=1 // loop_pre_header
      _
    $region3: #{hdc_module_forward.25} parent=1 // loop_header
      %s15 = sphi 0, %s19
      %p16 = scmp.ge.s32.totalorder %s15, 6
      %s22 = sphi 0, %s34
      %s23 = sphi 0, %s30
      %s24 = sphi 0, %s22
      %s25 = sphi 0, %s23
      %s26 = sphi 0, %s24
      %s27 = sphi 0, %s25
      %s39 = sphi 0, %s41
      %s42 = sphi 0, %s39
      %s43 = sphi 0, %s42
      %s59 = sphi 0, %s43
      %s63 = sphi 0, %s63
      %s65 = sphi 0, %s63
      %s66 = sphi 0, %s65
      %s80 = sphi 0, %s66
      %s84 = sphi 0, %s84
      %s86 = sphi 0, %s84
      %s87 = sphi 0, %s86
      %s101 = sphi 0, %s87
      %s109 = sphi 0, %s111
      %s112 = sphi 0, %s109
      %s113 = sphi 0, %s112
      %s129 = sphi 0, %s113
      %s137 = sphi 0, %s139
      %s140 = sphi 0, %s137
      %s141 = sphi 0, %s140
      %s157 = sphi 0, %s141
      %s165 = sphi 0, %s167
      %s168 = sphi 0, %s165
      %s169 = sphi 0, %s168
      %s185 = sphi 0, %s169
    $region4: #{hdc_module_forward.25} parent=1 // loop_header_branch
      %18 = sbr.rel (%p16) target = $region8
    $region5: #{hdc_module_forward.25} parent=1 // loop_body
      %s20 = ssub.s32 %s15, 1
      %s21 = ssub.s32 %s15, 2
      %s28 = sadd.s32 1, %s23
      %p29 = scmp.ge.s32.totalorder %s28, 2
      %s30 = scalar_select %p29, 0, %s28
      %s31 = sadd.s32 1, %s22
      %s32 = scalar_select %p29, %s31, %s22
      %p33 = scmp.ge.s32.totalorder %s32, 2
      %s34 = scalar_select %p33, 0, %s32
      %s35 = ssub.s32 %s22, %s34
      %s36 = ssub.s32 %s23, %s30
      %s37 = sor.u32 %s35, %s36
      %p38 = scmp.eq.s32.totalorder %s37, 0
      %s40 = sadd.s32 %s39, 1
      %s41 = scalar_select %p38, %s39, %s40
      %p44 = pneg %p38
      %p45 = scmp.eq.s32.totalorder %s15, 3
      %p46 = por %p44, %p45
      %p47 = scmp.ne.s32.totalorder %s39, %s42
      %p48 = scmp.eq.s32.totalorder %s15, 0
      %p49 = por %p47, %p48
      %p50 = scmp.ne.s32.totalorder %s39, %s42
      %p51 = scmp.eq.s32.totalorder %s20, 3
      %p52 = por %p50, %p51
      %p53 = scmp.ne.s32.totalorder %s42, %s43
      %p54 = scmp.eq.s32.totalorder %s20, 0
      %p55 = por %p53, %p54
      %p56 = scmp.ne.s32.totalorder %s42, %s43
      %p57 = scmp.eq.s32.totalorder %s21, 3
      %p58 = por %p56, %p57
      %p60 = scmp.ne.s32.totalorder %s43, %s59
      %p61 = scmp.eq.s32.totalorder %s21, 0
      %p62 = por %p60, %p61
      %s64 = sadd.s32 %s63, 1
      %p67 = scmp.eq.s32.totalorder %s15, 3
      %p68 = scmp.ne.s32.totalorder %s63, %s65
      %p69 = scmp.eq.s32.totalorder %s15, 0
      %p70 = por %p68, %p69
      %p71 = scmp.ne.s32.totalorder %s63, %s65
      %p72 = scmp.eq.s32.totalorder %s20, 3
      %p73 = por %p71, %p72
      %p74 = scmp.ne.s32.totalorder %s65, %s66
      %p75 = scmp.eq.s32.totalorder %s20, 0
      %p76 = por %p74, %p75
      %p77 = scmp.ne.s32.totalorder %s65, %s66
      %p78 = scmp.eq.s32.totalorder %s21, 3
      %p79 = por %p77, %p78
      %p81 = scmp.ne.s32.totalorder %s66, %s80
      %p82 = scmp.eq.s32.totalorder %s21, 0
      %p83 = por %p81, %p82
      %s85 = sadd.s32 %s84, 1
      %p88 = scmp.eq.s32.totalorder %s15, 3
      %p89 = scmp.ne.s32.totalorder %s84, %s86
      %p90 = scmp.eq.s32.totalorder %s15, 0
      %p91 = por %p89, %p90
      %p92 = scmp.ne.s32.totalorder %s84, %s86
      %p93 = scmp.eq.s32.totalorder %s20, 3
      %p94 = por %p92, %p93
      %p95 = scmp.ne.s32.totalorder %s86, %s87
      %p96 = scmp.eq.s32.totalorder %s20, 0
      %p97 = por %p95, %p96
      %p98 = scmp.ne.s32.totalorder %s86, %s87
      %p99 = scmp.eq.s32.totalorder %s21, 3
      %p100 = por %p98, %p99
      %p102 = scmp.ne.s32.totalorder %s87, %s101
      %p103 = scmp.eq.s32.totalorder %s21, 0
      %p104 = por %p102, %p103
      %s105 = ssub.s32 %s22, %s34
      %s106 = ssub.s32 %s23, %s30
      %s107 = sor.u32 %s105, %s106
      %p108 = scmp.eq.s32.totalorder %s107, 0
      %s110 = sadd.s32 %s109, 1
      %s111 = scalar_select %p108, %s109, %s110
      %p114 = pneg %p108
      %p115 = scmp.eq.s32.totalorder %s15, 3
      %p116 = por %p114, %p115
      %p117 = scmp.ne.s32.totalorder %s109, %s112
      %p118 = scmp.eq.s32.totalorder %s15, 0
      %p119 = por %p117, %p118
      %p120 = scmp.ne.s32.totalorder %s109, %s112
      %p121 = scmp.eq.s32.totalorder %s20, 3
      %p122 = por %p120, %p121
      %p123 = scmp.ne.s32.totalorder %s112, %s113
      %p124 = scmp.eq.s32.totalorder %s20, 0
      %p125 = por %p123, %p124
      %p126 = scmp.ne.s32.totalorder %s112, %s113
      %p127 = scmp.eq.s32.totalorder %s21, 3
      %p128 = por %p126, %p127
      %p130 = scmp.ne.s32.totalorder %s113, %s129
      %p131 = scmp.eq.s32.totalorder %s21, 0
      %p132 = por %p130, %p131
      %s133 = ssub.s32 %s22, %s34
      %s134 = ssub.s32 %s23, %s30
      %s135 = sor.u32 %s133, %s134
      %p136 = scmp.eq.s32.totalorder %s135, 0
      %s138 = sadd.s32 %s137, 1
      %s139 = scalar_select %p136, %s137, %s138
      %p142 = pneg %p136
      %p143 = scmp.eq.s32.totalorder %s15, 3
      %p144 = por %p142, %p143
      %p145 = scmp.ne.s32.totalorder %s137, %s140
      %p146 = scmp.eq.s32.totalorder %s15, 0
      %p147 = por %p145, %p146
      %p148 = scmp.ne.s32.totalorder %s137, %s140
      %p149 = scmp.eq.s32.totalorder %s20, 3
      %p150 = por %p148, %p149
      %p151 = scmp.ne.s32.totalorder %s140, %s141
      %p152 = scmp.eq.s32.totalorder %s20, 0
      %p153 = por %p151, %p152
      %p154 = scmp.ne.s32.totalorder %s140, %s141
      %p155 = scmp.eq.s32.totalorder %s21, 3
      %p156 = por %p154, %p155
      %p158 = scmp.ne.s32.totalorder %s141, %s157
      %p159 = scmp.eq.s32.totalorder %s21, 0
      %p160 = por %p158, %p159
      %s161 = ssub.s32 %s22, %s34
      %s162 = ssub.s32 %s23, %s30
      %s163 = sor.u32 %s161, %s162
      %p164 = scmp.eq.s32.totalorder %s163, 0
      %s166 = sadd.s32 %s165, 1
      %s167 = scalar_select %p164, %s165, %s166
      %p170 = pneg %p164
      %p171 = scmp.eq.s32.totalorder %s15, 3
      %p172 = por %p170, %p171
      %p173 = scmp.ne.s32.totalorder %s165, %s168
      %p174 = scmp.eq.s32.totalorder %s15, 0
      %p175 = por %p173, %p174
      %p176 = scmp.ne.s32.totalorder %s165, %s168
      %p177 = scmp.eq.s32.totalorder %s20, 3
      %p178 = por %p176, %p177
      %p179 = scmp.ne.s32.totalorder %s168, %s169
      %p180 = scmp.eq.s32.totalorder %s20, 0
      %p181 = por %p179, %p180
      %p182 = scmp.ne.s32.totalorder %s168, %s169
      %p183 = scmp.eq.s32.totalorder %s21, 3
      %p184 = por %p182, %p183
      %p186 = scmp.ne.s32.totalorder %s169, %s185
      %p187 = scmp.eq.s32.totalorder %s21, 0
      %p188 = por %p186, %p187
      %p189 = scmp.le.s32.totalorder 1, %s15
      %p190 = scmp.lt.s32.totalorder %s15, 5
      %p191 = pnand %p189, %p190
      %p192 = pneg %p191
      // Predicated region
      $region9: #{hdc_module_forward.25} parent=5 // pred_check
        _
      $region10: #{hdc_module_forward.25} parent=5 // pred_check_branch
        %194 = sbr.rel (%p191) target = $region12
      $region11: #{hdc_module_forward.25} parent=5 // pred_region
        %s195 = ssub.s32 %s15, 1
        // Predicated region
        $region13: #{hdc_module_forward.25} parent=11 // pred_check
          %p196 = pneg %p76
        $region14: #{hdc_module_forward.25} parent=11 // pred_check_branch
          %198 = sbr.rel (%p196) target = $region16
        $region15: #{hdc_module_forward.25} parent=11 // pred_region
          _
        $region16: #{hdc_module_forward.25} parent=11 // pred_fallthru
          _
        // Predicated region
        $region17: #{hdc_module_forward.25} parent=11 // pred_check
          %p199 = pneg %p97
        $region18: #{hdc_module_forward.25} parent=11 // pred_check_branch
          %201 = sbr.rel (%p199) target = $region20
        $region19: #{hdc_module_forward.25} parent=11 // pred_region
          _
        $region20: #{hdc_module_forward.25} parent=11 // pred_fallthru
          _
      $region12: #{hdc_module_forward.25} parent=5 // pred_fallthru
        _
      %p202 = scmp.lt.s32.totalorder %s15, 4
      // Predicated region
      $region21: #{hdc_module_forward.25} parent=5 // pred_check
        %p203 = pneg %p202
      $region22: #{hdc_module_forward.25} parent=5 // pred_check_branch
        %205 = sbr.rel (%p203) target = $region24
      $region23: #{hdc_module_forward.25} parent=5 // pred_region
        // Predicated region
        $region25: #{hdc_module_forward.25} parent=23 // pred_check
          %p206 = pneg %p49
        $region26: #{hdc_module_forward.25} parent=23 // pred_check_branch
          %208 = sbr.rel (%p206) target = $region28
        $region27: #{hdc_module_forward.25} parent=23 // pred_region
          %s209 = smul.u32 16, %s23
          %p210 = scmp.lt.s32.totalorder %s22, 1
          %s211 = scalar_select %p210, %s22, 1
          %p212 = scmp.lt.s32.totalorder %s209, 31
          %s213 = scalar_select %p212, %s209, 31
          %s214 = smul.addr %s211, 32
          %s215 = sadd.s32 %s213, %s214
          %s216 = smul.addr %s215, 8
          %s217 = scalar_lea.vmem %s0, %s216
          %s218 = smul.u32 16, %s23
        $region28: #{hdc_module_forward.25} parent=23 // pred_fallthru
          _
        // Predicated region
        $region29: #{hdc_module_forward.25} parent=23 // pred_check
          %p219 = pneg %p119
        $region30: #{hdc_module_forward.25} parent=23 // pred_check_branch
          %221 = sbr.rel (%p219) target = $region32
        $region31: #{hdc_module_forward.25} parent=23 // pred_region
          %s222 = smul.u32 16, %s23
          %p223 = scmp.lt.s32.totalorder %s22, 1
          %s224 = scalar_select %p223, %s22, 1
          %p225 = scmp.lt.s32.totalorder %s222, 31
          %s226 = scalar_select %p225, %s222, 31
          %s227 = smul.addr %s224, 32
          %s228 = sadd.s32 %s226, %s227
          %s229 = smul.addr %s228, 8
          %s230 = scalar_lea.vmem %s3, %s229
          %s231 = smul.u32 16, %s23
        $region32: #{hdc_module_forward.25} parent=23 // pred_fallthru
          _
      $region24: #{hdc_module_forward.25} parent=5 // pred_fallthru
        _
      %p232 = scmp.le.s32.totalorder 1, %s15
      %p233 = scmp.lt.s32.totalorder %s15, 5
      %p234 = pnand %p232, %p233
      %p235 = pneg %p234
      // Predicated region
      $region33: #{hdc_module_forward.25} parent=5 // pred_check
        _
      $region34: #{hdc_module_forward.25} parent=5 // pred_check_branch
        %237 = sbr.rel (%p234) target = $region36
      $region35: #{hdc_module_forward.25} parent=5 // pred_region
        %s238 = ssub.s32 %s15, 1
        %s239 = smul.u32 16, %s25
        %p240 = scmp.lt.s32.totalorder %s24, 1
        %s241 = scalar_select %p240, %s24, 1
        %p242 = scmp.lt.s32.totalorder %s239, 31
        %s243 = scalar_select %p242, %s239, 31
        %s244 = smul.addr %s241, 32
        %s245 = sadd.s32 %s243, %s244
        %s246 = smul.addr %s245, 8
        %s247 = scalar_lea.vmem %s0, %s246
        %p248 = pneg %p55
        %p249 = pneg %p52
        %p250 = pneg %p76
        %p251 = pneg %p73
        %p252 = pneg %p97
        %p253 = pneg %p94
        %s254 = smul.u32 16, %s25
        %p255 = scmp.lt.s32.totalorder %s24, 1
        %s256 = scalar_select %p255, %s24, 1
        %p257 = scmp.lt.s32.totalorder %s254, 31
        %s258 = scalar_select %p257, %s254, 31
        %s259 = smul.addr %s256, 32
        %s260 = sadd.s32 %s258, %s259
        %s261 = smul.addr %s260, 8
        %s262 = scalar_lea.vmem %s3, %s261
        %p263 = pneg %p125
        %p264 = pneg %p122
        %p265 = pneg %p153
        %p266 = pneg %p150
        %s267 = sand.u32 %s140, 1
        %s268 = scalar_lea.sflag [#allocation3], %s267
        %s269 = sand.u32 %s140, 1
        %s270 = smul.addr %s269, 128
        %s271 = scalar_lea.vmem [#allocation2], %s270
        %p272 = pneg %p181
        %p273 = pneg %p178
        %s274 = smul.u32 16, %s25
        %p275 = scmp.lt.s32.totalorder %s24, 1
        %s276 = scalar_select %p275, %s24, 1
        %p277 = scmp.lt.s32.totalorder %s274, 31
        %s278 = scalar_select %p277, %s274, 31
        %s279 = smul.addr %s276, 32
        %s280 = sadd.s32 %s278, %s279
        %s281 = smul.addr %s280, 8
        %s282 = scalar_lea.vmem %s5, %s281
        %s283 = smul.u32 16, %s25
        %p284 = scmp.lt.s32.totalorder %s24, 1
        %s285 = scalar_select %p284, %s24, 1
        %p286 = scmp.lt.s32.totalorder %s283, 31
        %s287 = scalar_select %p286, %s283, 31
        %s288 = smul.addr %s285, 32
        %s289 = sadd.s32 %s287, %s288
        %s290 = smul.addr %s289, 8
        %s291 = scalar_lea.vmem %s0, %s290
        %s292 = smul.u32 16, %s25
        %s293 = smul.u32 16, %s25
        %p294 = scmp.lt.s32.totalorder %s24, 1
        %s295 = scalar_select %p294, %s24, 1
        %p296 = scmp.lt.s32.totalorder %s293, 31
        %s297 = scalar_select %p296, %s293, 31
        %s298 = smul.addr %s295, 32
        %s299 = sadd.s32 %s297, %s298
        %s300 = smul.addr %s299, 8
        %s301 = scalar_lea.vmem %s3, %s300
        %s302 = smul.u32 16, %s25
        %s303 = smul.u32 16, %s25
        %s304 = smul.u32 16, %s25
        %p305 = scmp.lt.s32.totalorder %s24, 1
        %s306 = scalar_select %p305, %s24, 1
        %p307 = scmp.lt.s32.totalorder %s304, 31
        %s308 = scalar_select %p307, %s304, 31
        %s309 = smul.addr %s306, 32
        %s310 = sadd.s32 %s308, %s309
        %s311 = smul.addr %s310, 8
        %s312 = scalar_lea.vmem %s5, %s311
        %s313 = smul.u32 16, %s25
        %v314 = vld [vmem:[%s291] sm:$0xff]
        %v315 = vld [vmem:[%s291 + $0x8] sm:$0xff]
        %v316 = vld [vmem:[%s291 + $0x10] sm:$0xff]
        %v317 = vld [vmem:[%s291 + $0x18] sm:$0xff]
        %v318 = vld [vmem:[%s291 + $0x20] sm:$0xff]
        %v319 = vld [vmem:[%s291 + $0x28] sm:$0xff]
        %v320 = vld [vmem:[%s291 + $0x30] sm:$0xff]
        %v321 = vld [vmem:[%s291 + $0x38] sm:$0xff]
        %v322 = vld [vmem:[%s291 + $0x40] sm:$0xff]
        %v323 = vld [vmem:[%s291 + $0x48] sm:$0xff]
        %v324 = vld [vmem:[%s291 + $0x50] sm:$0xff]
        %v325 = vld [vmem:[%s291 + $0x58] sm:$0xff]
        %v326 = vld [vmem:[%s291 + $0x60] sm:$0xff]
        %v327 = vld [vmem:[%s291 + $0x68] sm:$0xff]
        %v328 = vld [vmem:[%s291 + $0x70] sm:$0xff]
        %v329 = vld [vmem:[%s291 + $0x78] sm:$0xff]
        %v330 = vld [vmem:[%s1] sm:$0xff]
        %332 = vset.pattern.permute.xlu0 0
        %333 = vperm.xlu0 %332, %v330
        %v334 = vpop.permute.xlu0 %333
        %v336 = vmul.f32 %v314, %v334
        %v337 = vmul.f32 %v315, %v334
        %v338 = vmul.f32 %v316, %v334
        %v339 = vmul.f32 %v317, %v334
        %v340 = vmul.f32 %v318, %v334
        %v341 = vmul.f32 %v319, %v334
        %v342 = vmul.f32 %v320, %v334
        %v343 = vmul.f32 %v321, %v334
        %v344 = vmul.f32 %v322, %v334
        %v345 = vmul.f32 %v323, %v334
        %v346 = vmul.f32 %v324, %v334
        %v347 = vmul.f32 %v325, %v334
        %v348 = vmul.f32 %v326, %v334
        %v349 = vmul.f32 %v327, %v334
        %v350 = vmul.f32 %v328, %v334
        %v351 = vmul.f32 %v329, %v334
        %v352 = vld [vmem:[%s2] sm:$0xff]
        %354 = vset.pattern.permute.xlu0 0
        %355 = vperm.xlu0 %354, %v352
        %v356 = vpop.permute.xlu0 %355
        %v358 = vadd.f32 %v336, %v356
        %v359 = vadd.f32 %v337, %v356
        %v360 = vadd.f32 %v338, %v356
        %v361 = vadd.f32 %v339, %v356
        %v362 = vadd.f32 %v340, %v356
        %v363 = vadd.f32 %v341, %v356
        %v364 = vadd.f32 %v342, %v356
        %v365 = vadd.f32 %v343, %v356
        %v366 = vadd.f32 %v344, %v356
        %v367 = vadd.f32 %v345, %v356
        %v368 = vadd.f32 %v346, %v356
        %v369 = vadd.f32 %v347, %v356
        %v370 = vadd.f32 %v348, %v356
        %v371 = vadd.f32 %v349, %v356
        %v372 = vadd.f32 %v350, %v356
        %v373 = vadd.f32 %v351, %v356
        %v374 = vmax.f32 %v358, 0.0
        %v375 = vmax.f32 %v359, 0.0
        %v376 = vmax.f32 %v360, 0.0
        %v377 = vmax.f32 %v361, 0.0
        %v378 = vmax.f32 %v362, 0.0
        %v379 = vmax.f32 %v363, 0.0
        %v380 = vmax.f32 %v364, 0.0
        %v381 = vmax.f32 %v365, 0.0
        %v382 = vmax.f32 %v366, 0.0
        %v383 = vmax.f32 %v367, 0.0
        %v384 = vmax.f32 %v368, 0.0
        %v385 = vmax.f32 %v369, 0.0
        %v386 = vmax.f32 %v370, 0.0
        %v387 = vmax.f32 %v371, 0.0
        %v388 = vmax.f32 %v372, 0.0
        %v389 = vmax.f32 %v373, 0.0
        %390 = vst [vmem:[%s271] sm:$0xff] %v374
        %391 = vst [vmem:[%s271 + $0x8] sm:$0xff] %v375
        %392 = vst [vmem:[%s271 + $0x10] sm:$0xff] %v376
        %393 = vst [vmem:[%s271 + $0x18] sm:$0xff] %v377
        %394 = vst [vmem:[%s271 + $0x20] sm:$0xff] %v378
        %395 = vst [vmem:[%s271 + $0x28] sm:$0xff] %v379
        %396 = vst [vmem:[%s271 + $0x30] sm:$0xff] %v380
        %397 = vst [vmem:[%s271 + $0x38] sm:$0xff] %v381
        %398 = vst [vmem:[%s271 + $0x40] sm:$0xff] %v382
        %399 = vst [vmem:[%s271 + $0x48] sm:$0xff] %v383
        %400 = vst [vmem:[%s271 + $0x50] sm:$0xff] %v384
        %401 = vst [vmem:[%s271 + $0x58] sm:$0xff] %v385
        %402 = vst [vmem:[%s271 + $0x60] sm:$0xff] %v386
        %403 = vst [vmem:[%s271 + $0x68] sm:$0xff] %v387
        %404 = vst [vmem:[%s271 + $0x70] sm:$0xff] %v388
        %405 = vst [vmem:[%s271 + $0x78] sm:$0xff] %v389
        %v406 = vld [vmem:[%s301] sm:$0xff]
        %v407 = vld [vmem:[%s301 + $0x8] sm:$0xff]
        %v408 = vld [vmem:[%s301 + $0x10] sm:$0xff]
        %v409 = vld [vmem:[%s301 + $0x18] sm:$0xff]
        %v410 = vld [vmem:[%s301 + $0x20] sm:$0xff]
        %v411 = vld [vmem:[%s301 + $0x28] sm:$0xff]
        %v412 = vld [vmem:[%s301 + $0x30] sm:$0xff]
        %v413 = vld [vmem:[%s301 + $0x38] sm:$0xff]
        %v414 = vld [vmem:[%s301 + $0x40] sm:$0xff]
        %v415 = vld [vmem:[%s301 + $0x48] sm:$0xff]
        %v416 = vld [vmem:[%s301 + $0x50] sm:$0xff]
        %v417 = vld [vmem:[%s301 + $0x58] sm:$0xff]
        %v418 = vld [vmem:[%s301 + $0x60] sm:$0xff]
        %v419 = vld [vmem:[%s301 + $0x68] sm:$0xff]
        %v420 = vld [vmem:[%s301 + $0x70] sm:$0xff]
        %v421 = vld [vmem:[%s301 + $0x78] sm:$0xff]
        %v422 = vadd.f32 %v374, %v406
        %v423 = vadd.f32 %v375, %v407
        %v424 = vadd.f32 %v376, %v408
        %v425 = vadd.f32 %v377, %v409
        %v426 = vadd.f32 %v378, %v410
        %v427 = vadd.f32 %v379, %v411
        %v428 = vadd.f32 %v380, %v412
        %v429 = vadd.f32 %v381, %v413
        %v430 = vadd.f32 %v382, %v414
        %v431 = vadd.f32 %v383, %v415
        %v432 = vadd.f32 %v384, %v416
        %v433 = vadd.f32 %v385, %v417
        %v434 = vadd.f32 %v386, %v418
        %v435 = vadd.f32 %v387, %v419
        %v436 = vadd.f32 %v388, %v420
        %v437 = vadd.f32 %v389, %v421
        %438 = vst [vmem:[%s312] sm:$0xff] %v422
        %439 = vst [vmem:[%s312 + $0x8] sm:$0xff] %v423
        %440 = vst [vmem:[%s312 + $0x10] sm:$0xff] %v424
        %441 = vst [vmem:[%s312 + $0x18] sm:$0xff] %v425
        %442 = vst [vmem:[%s312 + $0x20] sm:$0xff] %v426
        %443 = vst [vmem:[%s312 + $0x28] sm:$0xff] %v427
        %444 = vst [vmem:[%s312 + $0x30] sm:$0xff] %v428
        %445 = vst [vmem:[%s312 + $0x38] sm:$0xff] %v429
        %446 = vst [vmem:[%s312 + $0x40] sm:$0xff] %v430
        %447 = vst [vmem:[%s312 + $0x48] sm:$0xff] %v431
        %448 = vst [vmem:[%s312 + $0x50] sm:$0xff] %v432
        %449 = vst [vmem:[%s312 + $0x58] sm:$0xff] %v433
        %450 = vst [vmem:[%s312 + $0x60] sm:$0xff] %v434
        %451 = vst [vmem:[%s312 + $0x68] sm:$0xff] %v435
        %452 = vst [vmem:[%s312 + $0x70] sm:$0xff] %v436
        %453 = vst [vmem:[%s312 + $0x78] sm:$0xff] %v437
        %s454 = sand.u32 %s140, 1
        %s455 = scalar_lea.sflag [#allocation3], %s454
        %s456 = sand.u32 %s140, 1
        %s457 = smul.addr %s456, 128
        %s458 = scalar_lea.vmem [#allocation2], %s457
        %s459 = smul.u32 16, %s25
        %p460 = scmp.lt.s32.totalorder %s24, 1
        %s461 = scalar_select %p460, %s24, 1
        %p462 = scmp.lt.s32.totalorder %s459, 31
        %s463 = scalar_select %p462, %s459, 31
        %s464 = smul.addr %s461, 32
        %s465 = sadd.s32 %s463, %s464
        %s466 = smul.addr %s465, 8
        %s467 = scalar_lea.vmem %s5, %s466
        // Predicated region
        $region37: #{hdc_module_forward.25} parent=35 // pred_check
          %p468 = pneg %p150
        $region38: #{hdc_module_forward.25} parent=35 // pred_check_branch
          %470 = sbr.rel (%p468) target = $region40
        $region39: #{hdc_module_forward.25} parent=35 // pred_region
          %s471 = smul.u32 16, %s25
          %s473 = ssub.s32 2048, 2048
          %474 = vsyncadd %s455, %s473
          %s475 = smul.addr %s24, 32
          %s476 = sadd.s32 %s471, %s475
          %s477 = smul.addr %s476, 128
          %s478 = scalar_lea.hbm %s4, %s477
          %s480 = sshll.u32 %s458, 4
          %s481 = int_to_ptr.vmem [resolvable:$true] %s480
          %483 = dma.vmem_to_hbm [thread:$0]  %s481, 2048, %s478, %s455
        $region40: #{hdc_module_forward.25} parent=35 // pred_fallthru
          _
        // Predicated region
        $region41: #{hdc_module_forward.25} parent=35 // pred_check
          %p484 = pneg %p178
        $region42: #{hdc_module_forward.25} parent=35 // pred_check_branch
          %486 = sbr.rel (%p484) target = $region44
        $region43: #{hdc_module_forward.25} parent=35 // pred_region
          %s487 = smul.u32 16, %s25
        $region44: #{hdc_module_forward.25} parent=35 // pred_fallthru
          _
      $region36: #{hdc_module_forward.25} parent=5 // pred_fallthru
        _
      %p488 = scmp.le.s32.totalorder 2, %s15
      // Predicated region
      $region45: #{hdc_module_forward.25} parent=5 // pred_check
        %p489 = pneg %p488
      $region46: #{hdc_module_forward.25} parent=5 // pred_check_branch
        %491 = sbr.rel (%p489) target = $region48
      $region47: #{hdc_module_forward.25} parent=5 // pred_region
        %s492 = ssub.s32 %s15, 2
        // Predicated region
        $region49: #{hdc_module_forward.25} parent=47 // pred_check
          %p493 = pneg %p156
        $region50: #{hdc_module_forward.25} parent=47 // pred_check_branch
          %495 = sbr.rel (%p493) target = $region52
        $region51: #{hdc_module_forward.25} parent=47 // pred_region
          %s496 = sand.u32 %s141, 1
          %s497 = scalar_lea.sflag [#allocation3], %s496
          %s498 = sand.u32 %s141, 1
          %s499 = smul.addr %s498, 128
          %s500 = scalar_lea.vmem [#allocation2], %s499
          %501 = dma.done %s497, 2048
        $region52: #{hdc_module_forward.25} parent=47 // pred_fallthru
          _
        // Predicated region
        $region53: #{hdc_module_forward.25} parent=47 // pred_check
          %p502 = pneg %p184
        $region54: #{hdc_module_forward.25} parent=47 // pred_check_branch
          %504 = sbr.rel (%p502) target = $region56
        $region55: #{hdc_module_forward.25} parent=47 // pred_region
          %s505 = smul.u32 16, %s27
          %p506 = scmp.lt.s32.totalorder %s26, 1
          %s507 = scalar_select %p506, %s26, 1
          %p508 = scmp.lt.s32.totalorder %s505, 31
          %s509 = scalar_select %p508, %s505, 31
          %s510 = smul.addr %s507, 32
          %s511 = sadd.s32 %s509, %s510
          %s512 = smul.addr %s511, 8
          %s513 = scalar_lea.vmem %s5, %s512
        $region56: #{hdc_module_forward.25} parent=47 // pred_fallthru
          _
      $region48: #{hdc_module_forward.25} parent=5 // pred_fallthru
        _
    $region6: #{hdc_module_forward.25} parent=1 // loop_footer
      %s19 = sadd.s32 1, %s15
    $region7: #{hdc_module_forward.25} parent=1 // loop_footer_branch
      %14 = sbr.rel target = $region3
    $region8: #{hdc_module_forward.25} parent=1 // loop_exit
      _
    %514 = vsyncpa [#allocation3], 1
    %s515 = scalar_lea.sflag [#allocation3], 1
    %516 = vsyncpa %s515, 1

// kernel: hdc_module_forward.26
$region0: #{hdc_module_forward.26}
  #allocation0 [shape = 'u32[]', space=smem, size = 0x4, offset = 0x4, fixed_abs, tag = 'smem constant byte address 0x4 - core index']
  #allocation1 [shape = 'u32[144,128]{1,0:T(1,128)}', space=vmem, size = 0x12000, scoped, tag = 'internal scratch']
  %s0 = inlined_call_operand.vmem [shape: f32[2,16,8,288], index: 0, kind: input, shape index: {}]
  %s1 = inlined_call_operand.vmem [shape: f32[2,16,8,288], index: 1, kind: input, shape index: {}]
  %s2 = inlined_call_operand.vmem [shape: f32[2,16,8,288], index: 2, kind: input, shape index: {}]
  %s3 = inlined_call_operand.vmem [shape: f32[9,8,8], index: 3, kind: input, shape index: {}]
  %s4 = inlined_call_operand.vmem [shape: f32[8,1], index: 4, kind: input, shape index: {}]
  %s5 = inlined_call_operand.vmem [shape: f32[2,8,4096], index: 5, kind: output, shape index: {0}]
  %s6 = inlined_call_operand.vmem [shape: f32[2,16,8,1], index: 6, kind: output, shape index: {1}]
  %s7 = inlined_call_operand.vmem [shape: f32[2,16,8,1], index: 7, kind: output, shape index: {2}]
  %8 = xla_tuple %s5, %s6, %s7
  %s9 = sld [smem:[#allocation0]]
  $region69: #{hdc_module_forward.26} parent=0
    _
  %s11 = ssub.s32 1, %s9
  %s12 = scalar_select 0, %s11, %s9
  loop: start=0, step=1, limit=34
  $region2: #{hdc_module_forward.26} parent=0 // loop_pre_header
    _
  $region3: #{hdc_module_forward.26} parent=0 // loop_header
    %s14 = sphi 0, %s18
    %p15 = scmp.ge.s32.totalorder %s14, 34
    %s21 = sphi 0, %s33
    %s22 = sphi 0, %s29
    %s23 = sphi 0, %s21
    %s24 = sphi 0, %s22
    %s25 = sphi 0, %s23
    %s26 = sphi 0, %s24
    %s38 = sphi 0, %s40
    %s41 = sphi 0, %s38
    %s42 = sphi 0, %s41
    %s58 = sphi 0, %s42
    %s66 = sphi 0, %s68
    %s69 = sphi 0, %s66
    %s70 = sphi 0, %s69
    %s86 = sphi 0, %s70
    %s94 = sphi 0, %s96
    %s97 = sphi 0, %s94
    %s98 = sphi 0, %s97
    %s114 = sphi 0, %s98
    %s118 = sphi 0, %s118
    %s120 = sphi 0, %s118
    %s121 = sphi 0, %s120
    %s135 = sphi 0, %s121
    %s139 = sphi 0, %s139
    %s141 = sphi 0, %s139
    %s142 = sphi 0, %s141
    %s156 = sphi 0, %s142
    %s164 = sphi 0, %s166
    %s167 = sphi 0, %s164
    %s168 = sphi 0, %s167
    %s184 = sphi 0, %s168
    %s192 = sphi 0, %s194
    %s195 = sphi 0, %s192
    %s196 = sphi 0, %s195
    %s212 = sphi 0, %s196
    %s220 = sphi 0, %s222
    %s223 = sphi 0, %s220
    %s224 = sphi 0, %s223
    %s240 = sphi 0, %s224
  $region4: #{hdc_module_forward.26} parent=0 // loop_header_branch
    %17 = sbr.rel (%p15) target = $region8
  $region5: #{hdc_module_forward.26} parent=0 // loop_body
    %s19 = ssub.s32 %s14, 1
    %s20 = ssub.s32 %s14, 2
    %s27 = sadd.s32 1, %s22
    %p28 = scmp.ge.s32.totalorder %s27, 16
    %s29 = scalar_select %p28, 0, %s27
    %s30 = sadd.s32 1, %s21
    %s31 = scalar_select %p28, %s30, %s21
    %p32 = scmp.ge.s32.totalorder %s31, 2
    %s33 = scalar_select %p32, 0, %s31
    %s34 = ssub.s32 %s21, %s33
    %s35 = ssub.s32 %s22, %s29
    %s36 = sor.u32 %s34, %s35
    %p37 = scmp.eq.s32.totalorder %s36, 0
    %s39 = sadd.s32 %s38, 1
    %s40 = scalar_select %p37, %s38, %s39
    %p43 = pneg %p37
    %p44 = scmp.eq.s32.totalorder %s14, 31
    %p45 = por %p43, %p44
    %p46 = scmp.ne.s32.totalorder %s38, %s41
    %p47 = scmp.eq.s32.totalorder %s14, 0
    %p48 = por %p46, %p47
    %p49 = scmp.ne.s32.totalorder %s38, %s41
    %p50 = scmp.eq.s32.totalorder %s19, 31
    %p51 = por %p49, %p50
    %p52 = scmp.ne.s32.totalorder %s41, %s42
    %p53 = scmp.eq.s32.totalorder %s19, 0
    %p54 = por %p52, %p53
    %p55 = scmp.ne.s32.totalorder %s41, %s42
    %p56 = scmp.eq.s32.totalorder %s20, 31
    %p57 = por %p55, %p56
    %p59 = scmp.ne.s32.totalorder %s42, %s58
    %p60 = scmp.eq.s32.totalorder %s20, 0
    %p61 = por %p59, %p60
    %s62 = ssub.s32 %s21, %s33
    %s63 = ssub.s32 %s22, %s29
    %s64 = sor.u32 %s62, %s63
    %p65 = scmp.eq.s32.totalorder %s64, 0
    %s67 = sadd.s32 %s66, 1
    %s68 = scalar_select %p65, %s66, %s67
    %p71 = pneg %p65
    %p72 = scmp.eq.s32.totalorder %s14, 31
    %p73 = por %p71, %p72
    %p74 = scmp.ne.s32.totalorder %s66, %s69
    %p75 = scmp.eq.s32.totalorder %s14, 0
    %p76 = por %p74, %p75
    %p77 = scmp.ne.s32.totalorder %s66, %s69
    %p78 = scmp.eq.s32.totalorder %s19, 31
    %p79 = por %p77, %p78
    %p80 = scmp.ne.s32.totalorder %s69, %s70
    %p81 = scmp.eq.s32.totalorder %s19, 0
    %p82 = por %p80, %p81
    %p83 = scmp.ne.s32.totalorder %s69, %s70
    %p84 = scmp.eq.s32.totalorder %s20, 31
    %p85 = por %p83, %p84
    %p87 = scmp.ne.s32.totalorder %s70, %s86
    %p88 = scmp.eq.s32.totalorder %s20, 0
    %p89 = por %p87, %p88
    %s90 = ssub.s32 %s21, %s33
    %s91 = ssub.s32 %s22, %s29
    %s92 = sor.u32 %s90, %s91
    %p93 = scmp.eq.s32.totalorder %s92, 0
    %s95 = sadd.s32 %s94, 1
    %s96 = scalar_select %p93, %s94, %s95
    %p99 = pneg %p93
    %p100 = scmp.eq.s32.totalorder %s14, 31
    %p101 = por %p99, %p100
    %p102 = scmp.ne.s32.totalorder %s94, %s97
    %p103 = scmp.eq.s32.totalorder %s14, 0
    %p104 = por %p102, %p103
    %p105 = scmp.ne.s32.totalorder %s94, %s97
    %p106 = scmp.eq.s32.totalorder %s19, 31
    %p107 = por %p105, %p106
    %p108 = scmp.ne.s32.totalorder %s97, %s98
    %p109 = scmp.eq.s32.totalorder %s19, 0
    %p110 = por %p108, %p109
    %p111 = scmp.ne.s32.totalorder %s97, %s98
    %p112 = scmp.eq.s32.totalorder %s20, 31
    %p113 = por %p111, %p112
    %p115 = scmp.ne.s32.totalorder %s98, %s114
    %p116 = scmp.eq.s32.totalorder %s20, 0
    %p117 = por %p115, %p116
    %s119 = sadd.s32 %s118, 1
    %p122 = scmp.eq.s32.totalorder %s14, 31
    %p123 = scmp.ne.s32.totalorder %s118, %s120
    %p124 = scmp.eq.s32.totalorder %s14, 0
    %p125 = por %p123, %p124
    %p126 = scmp.ne.s32.totalorder %s118, %s120
    %p127 = scmp.eq.s32.totalorder %s19, 31
    %p128 = por %p126, %p127
    %p129 = scmp.ne.s32.totalorder %s120, %s121
    %p130 = scmp.eq.s32.totalorder %s19, 0
    %p131 = por %p129, %p130
    %p132 = scmp.ne.s32.totalorder %s120, %s121
    %p133 = scmp.eq.s32.totalorder %s20, 31
    %p134 = por %p132, %p133
    %p136 = scmp.ne.s32.totalorder %s121, %s135
    %p137 = scmp.eq.s32.totalorder %s20, 0
    %p138 = por %p136, %p137
    %s140 = sadd.s32 %s139, 1
    %p143 = scmp.eq.s32.totalorder %s14, 31
    %p144 = scmp.ne.s32.totalorder %s139, %s141
    %p145 = scmp.eq.s32.totalorder %s14, 0
    %p146 = por %p144, %p145
    %p147 = scmp.ne.s32.totalorder %s139, %s141
    %p148 = scmp.eq.s32.totalorder %s19, 31
    %p149 = por %p147, %p148
    %p150 = scmp.ne.s32.totalorder %s141, %s142
    %p151 = scmp.eq.s32.totalorder %s19, 0
    %p152 = por %p150, %p151
    %p153 = scmp.ne.s32.totalorder %s141, %s142
    %p154 = scmp.eq.s32.totalorder %s20, 31
    %p155 = por %p153, %p154
    %p157 = scmp.ne.s32.totalorder %s142, %s156
    %p158 = scmp.eq.s32.totalorder %s20, 0
    %p159 = por %p157, %p158
    %s160 = ssub.s32 %s21, %s33
    %s161 = ssub.s32 %s22, %s29
    %s162 = sor.u32 %s160, %s161
    %p163 = scmp.eq.s32.totalorder %s162, 0
    %s165 = sadd.s32 %s164, 1
    %s166 = scalar_select %p163, %s164, %s165
    %p169 = pneg %p163
    %p170 = scmp.eq.s32.totalorder %s14, 31
    %p171 = por %p169, %p170
    %p172 = scmp.ne.s32.totalorder %s164, %s167
    %p173 = scmp.eq.s32.totalorder %s14, 0
    %p174 = por %p172, %p173
    %p175 = scmp.ne.s32.totalorder %s164, %s167
    %p176 = scmp.eq.s32.totalorder %s19, 31
    %p177 = por %p175, %p176
    %p178 = scmp.ne.s32.totalorder %s167, %s168
    %p179 = scmp.eq.s32.totalorder %s19, 0
    %p180 = por %p178, %p179
    %p181 = scmp.ne.s32.totalorder %s167, %s168
    %p182 = scmp.eq.s32.totalorder %s20, 31
    %p183 = por %p181, %p182
    %p185 = scmp.ne.s32.totalorder %s168, %s184
    %p186 = scmp.eq.s32.totalorder %s20, 0
    %p187 = por %p185, %p186
    %s188 = ssub.s32 %s21, %s33
    %s189 = ssub.s32 %s22, %s29
    %s190 = sor.u32 %s188, %s189
    %p191 = scmp.eq.s32.totalorder %s190, 0
    %s193 = sadd.s32 %s192, 1
    %s194 = scalar_select %p191, %s192, %s193
    %p197 = pneg %p191
    %p198 = scmp.eq.s32.totalorder %s14, 31
    %p199 = por %p197, %p198
    %p200 = scmp.ne.s32.totalorder %s192, %s195
    %p201 = scmp.eq.s32.totalorder %s14, 0
    %p202 = por %p200, %p201
    %p203 = scmp.ne.s32.totalorder %s192, %s195
    %p204 = scmp.eq.s32.totalorder %s19, 31
    %p205 = por %p203, %p204
    %p206 = scmp.ne.s32.totalorder %s195, %s196
    %p207 = scmp.eq.s32.totalorder %s19, 0
    %p208 = por %p206, %p207
    %p209 = scmp.ne.s32.totalorder %s195, %s196
    %p210 = scmp.eq.s32.totalorder %s20, 31
    %p211 = por %p209, %p210
    %p213 = scmp.ne.s32.totalorder %s196, %s212
    %p214 = scmp.eq.s32.totalorder %s20, 0
    %p215 = por %p213, %p214
    %s216 = ssub.s32 %s21, %s33
    %s217 = ssub.s32 %s22, %s29
    %s218 = sor.u32 %s216, %s217
    %p219 = scmp.eq.s32.totalorder %s218, 0
    %s221 = sadd.s32 %s220, 1
    %s222 = scalar_select %p219, %s220, %s221
    %p225 = pneg %p219
    %p226 = scmp.eq.s32.totalorder %s14, 31
    %p227 = por %p225, %p226
    %p228 = scmp.ne.s32.totalorder %s220, %s223
    %p229 = scmp.eq.s32.totalorder %s14, 0
    %p230 = por %p228, %p229
    %p231 = scmp.ne.s32.totalorder %s220, %s223
    %p232 = scmp.eq.s32.totalorder %s19, 31
    %p233 = por %p231, %p232
    %p234 = scmp.ne.s32.totalorder %s223, %s224
    %p235 = scmp.eq.s32.totalorder %s19, 0
    %p236 = por %p234, %p235
    %p237 = scmp.ne.s32.totalorder %s223, %s224
    %p238 = scmp.eq.s32.totalorder %s20, 31
    %p239 = por %p237, %p238
    %p241 = scmp.ne.s32.totalorder %s224, %s240
    %p242 = scmp.eq.s32.totalorder %s20, 0
    %p243 = por %p241, %p242
    %p244 = scmp.le.s32.totalorder 1, %s14
    %p245 = scmp.lt.s32.totalorder %s14, 33
    %p246 = pnand %p244, %p245
    %p247 = pneg %p246
    // Predicated region
    $region9: #{hdc_module_forward.26} parent=5 // pred_check
      _
    $region10: #{hdc_module_forward.26} parent=5 // pred_check_branch
      %249 = sbr.rel (%p246) target = $region12
    $region11: #{hdc_module_forward.26} parent=5 // pred_region
      %s250 = ssub.s32 %s14, 1
      // Predicated region
      $region13: #{hdc_module_forward.26} parent=11 // pred_check
        %p251 = pneg %p131
      $region14: #{hdc_module_forward.26} parent=11 // pred_check_branch
        %253 = sbr.rel (%p251) target = $region16
      $region15: #{hdc_module_forward.26} parent=11 // pred_region
        _
      $region16: #{hdc_module_forward.26} parent=11 // pred_fallthru
        _
      // Predicated region
      $region17: #{hdc_module_forward.26} parent=11 // pred_check
        %p254 = pneg %p152
      $region18: #{hdc_module_forward.26} parent=11 // pred_check_branch
        %256 = sbr.rel (%p254) target = $region20
      $region19: #{hdc_module_forward.26} parent=11 // pred_region
        _
      $region20: #{hdc_module_forward.26} parent=11 // pred_fallthru
        _
    $region12: #{hdc_module_forward.26} parent=5 // pred_fallthru
      _
    %p257 = scmp.lt.s32.totalorder %s14, 32
    // Predicated region
    $region21: #{hdc_module_forward.26} parent=5 // pred_check
      %p258 = pneg %p257
    $region22: #{hdc_module_forward.26} parent=5 // pred_check_branch
      %260 = sbr.rel (%p258) target = $region24
    $region23: #{hdc_module_forward.26} parent=5 // pred_region
      // Predicated region
      $region25: #{hdc_module_forward.26} parent=23 // pred_check
        %p261 = pneg %p48
      $region26: #{hdc_module_forward.26} parent=23 // pred_check_branch
        %263 = sbr.rel (%p261) target = $region28
      $region27: #{hdc_module_forward.26} parent=23 // pred_region
        %p264 = scmp.lt.s32.totalorder %s21, 1
        %s265 = scalar_select %p264, %s21, 1
        %p266 = scmp.lt.s32.totalorder %s22, 15
        %s267 = scalar_select %p266, %s22, 15
        %s268 = smul.addr %s267, 3
        %s269 = smul.addr %s265, 48
        %s270 = sadd.s32 %s268, %s269
        %s271 = smul.addr %s270, 8
        %s272 = scalar_lea.vmem %s0, %s271
      $region28: #{hdc_module_forward.26} parent=23 // pred_fallthru
        _
      // Predicated region
      $region29: #{hdc_module_forward.26} parent=23 // pred_check
        %p273 = pneg %p76
      $region30: #{hdc_module_forward.26} parent=23 // pred_check_branch
        %275 = sbr.rel (%p273) target = $region32
      $region31: #{hdc_module_forward.26} parent=23 // pred_region
        %p276 = scmp.lt.s32.totalorder %s21, 1
        %s277 = scalar_select %p276, %s21, 1
        %p278 = scmp.lt.s32.totalorder %s22, 15
        %s279 = scalar_select %p278, %s22, 15
        %s280 = smul.addr %s279, 3
        %s281 = smul.addr %s277, 48
        %s282 = sadd.s32 %s280, %s281
        %s283 = smul.addr %s282, 8
        %s284 = scalar_lea.vmem %s1, %s283
      $region32: #{hdc_module_forward.26} parent=23 // pred_fallthru
        _
      // Predicated region
      $region33: #{hdc_module_forward.26} parent=23 // pred_check
        %p285 = pneg %p104
      $region34: #{hdc_module_forward.26} parent=23 // pred_check_branch
        %287 = sbr.rel (%p285) target = $region36
      $region35: #{hdc_module_forward.26} parent=23 // pred_region
        %p288 = scmp.lt.s32.totalorder %s21, 1
        %s289 = scalar_select %p288, %s21, 1
        %p290 = scmp.lt.s32.totalorder %s22, 15
        %s291 = scalar_select %p290, %s22, 15
        %s292 = smul.addr %s291, 3
        %s293 = smul.addr %s289, 48
        %s294 = sadd.s32 %s292, %s293
        %s295 = smul.addr %s294, 8
        %s296 = scalar_lea.vmem %s2, %s295
      $region36: #{hdc_module_forward.26} parent=23 // pred_fallthru
        _
    $region24: #{hdc_module_forward.26} parent=5 // pred_fallthru
      _
    %p297 = scmp.le.s32.totalorder 1, %s14
    %p298 = scmp.lt.s32.totalorder %s14, 33
    %p299 = pnand %p297, %p298
    %p300 = pneg %p299
    // Predicated region
    $region37: #{hdc_module_forward.26} parent=5 // pred_check
      _
    $region38: #{hdc_module_forward.26} parent=5 // pred_check_branch
      %302 = sbr.rel (%p299) target = $region40
    $region39: #{hdc_module_forward.26} parent=5 // pred_region
      %s303 = ssub.s32 %s14, 1
      %p304 = scmp.lt.s32.totalorder %s23, 1
      %s305 = scalar_select %p304, %s23, 1
      %p306 = scmp.lt.s32.totalorder %s24, 15
      %s307 = scalar_select %p306, %s24, 15
      %s308 = smul.addr %s307, 3
      %s309 = smul.addr %s305, 48
      %s310 = sadd.s32 %s308, %s309
      %s311 = smul.addr %s310, 8
      %s312 = scalar_lea.vmem %s0, %s311
      %p313 = pneg %p54
      %p314 = pneg %p51
      %p315 = scmp.lt.s32.totalorder %s23, 1
      %s316 = scalar_select %p315, %s23, 1
      %p317 = scmp.lt.s32.totalorder %s24, 15
      %s318 = scalar_select %p317, %s24, 15
      %s319 = smul.addr %s318, 3
      %s320 = smul.addr %s316, 48
      %s321 = sadd.s32 %s319, %s320
      %s322 = smul.addr %s321, 8
      %s323 = scalar_lea.vmem %s1, %s322
      %p324 = pneg %p82
      %p325 = pneg %p79
      %p326 = scmp.lt.s32.totalorder %s23, 1
      %s327 = scalar_select %p326, %s23, 1
      %p328 = scmp.lt.s32.totalorder %s24, 15
      %s329 = scalar_select %p328, %s24, 15
      %s330 = smul.addr %s329, 3
      %s331 = smul.addr %s327, 48
      %s332 = sadd.s32 %s330, %s331
      %s333 = smul.addr %s332, 8
      %s334 = scalar_lea.vmem %s2, %s333
      %p335 = pneg %p110
      %p336 = pneg %p107
      %p337 = pneg %p131
      %p338 = pneg %p128
      %p339 = pneg %p152
      %p340 = pneg %p149
      %p341 = pneg %p180
      %p342 = pneg %p177
      %s343 = smul.u32 2, %s24
      %p344 = scmp.lt.s32.totalorder %s23, 1
      %s345 = scalar_select %p344, %s23, 1
      %p346 = scmp.lt.s32.totalorder %s343, 31
      %s347 = scalar_select %p346, %s343, 31
      %s348 = smul.addr %s345, 32
      %s349 = sadd.s32 %s347, %s348
      %s350 = smul.addr %s349, 8
      %s351 = scalar_lea.vmem %s5, %s350
      %p352 = pneg %p208
      %p353 = pneg %p205
      %p354 = scmp.lt.s32.totalorder %s23, 1
      %s355 = scalar_select %p354, %s23, 1
      %p356 = scmp.lt.s32.totalorder %s24, 15
      %s357 = scalar_select %p356, %s24, 15
      %s358 = smul.addr %s355, 16
      %s359 = sadd.s32 %s357, %s358
      %s360 = smul.addr %s359, 8
      %s361 = scalar_lea.vmem %s6, %s360
      %p362 = pneg %p236
      %p363 = pneg %p233
      %p364 = scmp.lt.s32.totalorder %s23, 1
      %s365 = scalar_select %p364, %s23, 1
      %p366 = scmp.lt.s32.totalorder %s24, 15
      %s367 = scalar_select %p366, %s24, 15
      %s368 = smul.addr %s365, 16
      %s369 = sadd.s32 %s367, %s368
      %s370 = smul.addr %s369, 8
      %s371 = scalar_lea.vmem %s7, %s370
      %p372 = scmp.lt.s32.totalorder %s23, 1
      %s373 = scalar_select %p372, %s23, 1
      %p374 = scmp.lt.s32.totalorder %s24, 15
      %s375 = scalar_select %p374, %s24, 15
      %s376 = smul.addr %s375, 3
      %s377 = smul.addr %s373, 48
      %s378 = sadd.s32 %s376, %s377
      %s379 = smul.addr %s378, 8
      %s380 = scalar_lea.vmem %s0, %s379
      %p381 = scmp.lt.s32.totalorder %s23, 1
      %s382 = scalar_select %p381, %s23, 1
      %p383 = scmp.lt.s32.totalorder %s24, 15
      %s384 = scalar_select %p383, %s24, 15
      %s385 = smul.addr %s384, 3
      %s386 = smul.addr %s382, 48
      %s387 = sadd.s32 %s385, %s386
      %s388 = smul.addr %s387, 8
      %s389 = scalar_lea.vmem %s1, %s388
      %p390 = scmp.lt.s32.totalorder %s23, 1
      %s391 = scalar_select %p390, %s23, 1
      %p392 = scmp.lt.s32.totalorder %s24, 15
      %s393 = scalar_select %p392, %s24, 15
      %s394 = smul.addr %s393, 3
      %s395 = smul.addr %s391, 48
      %s396 = sadd.s32 %s394, %s395
      %s397 = smul.addr %s396, 8
      %s398 = scalar_lea.vmem %s2, %s397
      %s399 = smul.u32 2, %s24
      %p400 = scmp.lt.s32.totalorder %s23, 1
      %s401 = scalar_select %p400, %s23, 1
      %p402 = scmp.lt.s32.totalorder %s399, 31
      %s403 = scalar_select %p402, %s399, 31
      %s404 = smul.addr %s401, 32
      %s405 = sadd.s32 %s403, %s404
      %s406 = smul.addr %s405, 8
      %s407 = scalar_lea.vmem %s5, %s406
      %s408 = smul.u32 2, %s24
      %p409 = scmp.lt.s32.totalorder %s23, 1
      %s410 = scalar_select %p409, %s23, 1
      %p411 = scmp.lt.s32.totalorder %s24, 15
      %s412 = scalar_select %p411, %s24, 15
      %s413 = smul.addr %s410, 16
      %s414 = sadd.s32 %s412, %s413
      %s415 = smul.addr %s414, 8
      %s416 = scalar_lea.vmem %s6, %s415
      %p417 = scmp.lt.s32.totalorder %s23, 1
      %s418 = scalar_select %p417, %s23, 1
      %p419 = scmp.lt.s32.totalorder %s24, 15
      %s420 = scalar_select %p419, %s24, 15
      %s421 = smul.addr %s418, 16
      %s422 = sadd.s32 %s420, %s421
      %s423 = smul.addr %s422, 8
      %s424 = scalar_lea.vmem %s7, %s423
      %v425 = vld [vmem:[%s380] sm:$0xff]
      %v426 = vld [vmem:[%s380 + $0x8] sm:$0xff]
      %v427 = vld [vmem:[%s380 + $0x10] sm:$0xff]
      %v428 = vld [vmem:[%s3] sm:$0xff]
      %s429 = scalar_lea.vmem %s3, 8
      %v430 = vld [vmem:[%s429] sm:$0xff]
      %434 = vrot.lane.b32.xlu0 %v425, 112
      %v435 = vpop.permute.xlu0 %434
      %436 = vrot.lane.b32.xlu0 %v426, 112
      %v437 = vpop.permute.xlu0 %436
      %438 = vrot.lane.b32.xlu0 %v427, 112
      %v439 = vpop.permute.xlu0 %438
      %vm440 = vcmask 916480
      %v441 = vsel %vm440, %v435, %v437
      %v442 = vsel %vm440, %v437, %v439
      %vm445 = vcmask 64512
      %v447 = vsel %vm445, %v430, 0
      %449 = vmatprep.subr.mxu0 %v442
      %450 = vmatpush1.msra.mxu0 %v441
      %451 = vmatprep.subr.mxu0 0.0
      %452 = vmatpush1.msra.mxu0 0.0
      %453 = vmatprep.subr.mxu0 0.0
      %454 = vmatpush1.msra.mxu0 0.0
      %455 = vmatprep.subr.mxu0 0.0
      %456 = vmatpush1.msra.mxu0 0.0
      %457 = vmatprep.subr.mxu0 0.0
      %458 = vmatpush1.msra.mxu0 0.0
      %459 = vmatprep.subr.mxu0 0.0
      %460 = vmatpush1.msra.mxu0 0.0
      %461 = vmatprep.subr.mxu0 0.0
      %462 = vmatpush1.msra.mxu0 0.0
      %463 = vmatprep.subr.mxu0 0.0
      %464 = vmatpush1.msra.mxu0 0.0
      %465 = vmatprep.subr.mxu0 0.0
      %466 = vmatpush1.msra.mxu0 0.0
      %467 = vmatprep.subr.mxu0 0.0
      %468 = vmatpush1.msra.mxu0 0.0
      %469 = vmatprep.subr.mxu0 0.0
      %470 = vmatpush1.msra.mxu0 0.0
      %471 = vmatprep.subr.mxu0 0.0
      %472 = vmatpush1.msra.mxu0 0.0
      %473 = vmatprep.subr.mxu0 0.0
      %474 = vmatpush1.msra.mxu0 0.0
      %475 = vmatprep.subr.mxu0 0.0
      %476 = vmatpush1.msra.mxu0 0.0
      %477 = vmatprep.subr.mxu0 0.0
      %478 = vmatpush1.msra.mxu0 0.0
      %479 = vmatprep.subr.mxu0 0.0
      %480 = vmatpush1.msra.mxu0 0.0
      %481 = vmatprep.subr.mxu0 0.0
      %482 = vmatpush1.msra.mxu0 0.0
      %483 = vmatprep.subr.mxu0 0.0
      %484 = vmatpush1.msra.mxu0 0.0
      %485 = vmatprep.subr.mxu0 0.0
      %486 = vmatpush1.msra.mxu0 0.0
      %487 = vmatprep.subr.mxu0 0.0
      %488 = vmatpush1.msra.mxu0 0.0
      %489 = vmatprep.subr.mxu0 0.0
      %490 = vmatpush1.msra.mxu0 0.0
      %491 = vmatprep.subr.mxu0 0.0
      %492 = vmatpush1.msra.mxu0 0.0
      %493 = vmatprep.subr.mxu0 0.0
      %494 = vmatpush1.msra.mxu0 0.0
      %495 = vmatprep.subr.mxu0 0.0
      %496 = vmatpush1.msra.mxu0 0.0
      %497 = vmatprep.subr.mxu0 0.0
      %498 = vmatpush1.msra.mxu0 0.0
      %499 = vmatprep.subr.mxu0 0.0
      %500 = vmatpush1.msra.mxu0 0.0
      %501 = vmatprep.subr.mxu0 0.0
      %502 = vmatpush1.msra.mxu0 0.0
      %503 = vmatprep.subr.mxu0 0.0
      %504 = vmatpush1.msra.mxu0 0.0
      %505 = vmatprep.subr.mxu0 0.0
      %506 = vmatpush1.msra.mxu0 0.0
      %507 = vmatprep.subr.mxu0 0.0
      %508 = vmatpush1.msra.mxu0 0.0
      %509 = vmatprep.subr.mxu0 0.0
      %510 = vmatpush1.msra.mxu0 0.0
      %511 = vmatprep.subr.mxu0 0.0
      %512 = vmatpush1.msra.mxu0 0.0
      %513 = vmatprep.mubr.f32.mxu0 0.0
      %514 = vmatmul.mubr.f32.gmra.mrb[0].mxu0 %v447
      %v515 = vpop.f32.mrb[0].mxu0
      %v516 = vadd.f32 0.0, %v515
      %v517 = vpop.f32.mrb[0].mxu0
      %v518 = vadd.f32 0.0, %v517
      %519 = vdwg.mxu0
      %v521 = vsel %vm445, %v428, 0
      %523 = vmatprep.subr.mxu0 %v426
      %524 = vmatpush1.msra.mxu0 %v425
      %525 = vmatprep.subr.mxu0 0.0
      %526 = vmatpush1.msra.mxu0 0.0
      %527 = vmatprep.subr.mxu0 0.0
      %528 = vmatpush1.msra.mxu0 0.0
      %529 = vmatprep.subr.mxu0 0.0
      %530 = vmatpush1.msra.mxu0 0.0
      %531 = vmatprep.subr.mxu0 0.0
      %532 = vmatpush1.msra.mxu0 0.0
      %533 = vmatprep.subr.mxu0 0.0
      %534 = vmatpush1.msra.mxu0 0.0
      %535 = vmatprep.subr.mxu0 0.0
      %536 = vmatpush1.msra.mxu0 0.0
      %537 = vmatprep.subr.mxu0 0.0
      %538 = vmatpush1.msra.mxu0 0.0
      %539 = vmatprep.subr.mxu0 0.0
      %540 = vmatpush1.msra.mxu0 0.0
      %541 = vmatprep.subr.mxu0 0.0
      %542 = vmatpush1.msra.mxu0 0.0
      %543 = vmatprep.subr.mxu0 0.0
      %544 = vmatpush1.msra.mxu0 0.0
      %545 = vmatprep.subr.mxu0 0.0
      %546 = vmatpush1.msra.mxu0 0.0
      %547 = vmatprep.subr.mxu0 0.0
      %548 = vmatpush1.msra.mxu0 0.0
      %549 = vmatprep.subr.mxu0 0.0
      %550 = vmatpush1.msra.mxu0 0.0
      %551 = vmatprep.subr.mxu0 0.0
      %552 = vmatpush1.msra.mxu0 0.0
      %553 = vmatprep.subr.mxu0 0.0
      %554 = vmatpush1.msra.mxu0 0.0
      %555 = vmatprep.subr.mxu0 0.0
      %556 = vmatpush1.msra.mxu0 0.0
      %557 = vmatprep.subr.mxu0 0.0
      %558 = vmatpush1.msra.mxu0 0.0
      %559 = vmatprep.subr.mxu0 0.0
      %560 = vmatpush1.msra.mxu0 0.0
      %561 = vmatprep.subr.mxu0 0.0
      %562 = vmatpush1.msra.mxu0 0.0
      %563 = vmatprep.subr.mxu0 0.0
      %564 = vmatpush1.msra.mxu0 0.0
      %565 = vmatprep.subr.mxu0 0.0
      %566 = vmatpush1.msra.mxu0 0.0
      %567 = vmatprep.subr.mxu0 0.0
      %568 = vmatpush1.msra.mxu0 0.0
      %569 = vmatprep.subr.mxu0 0.0
      %570 = vmatpush1.msra.mxu0 0.0
      %571 = vmatprep.subr.mxu0 0.0
      %572 = vmatpush1.msra.mxu0 0.0
      %573 = vmatprep.subr.mxu0 0.0
      %574 = vmatpush1.msra.mxu0 0.0
      %575 = vmatprep.subr.mxu0 0.0
      %576 = vmatpush1.msra.mxu0 0.0
      %577 = vmatprep.subr.mxu0 0.0
      %578 = vmatpush1.msra.mxu0 0.0
      %579 = vmatprep.subr.mxu0 0.0
      %580 = vmatpush1.msra.mxu0 0.0
      %581 = vmatprep.subr.mxu0 0.0
      %582 = vmatpush1.msra.mxu0 0.0
      %583 = vmatprep.subr.mxu0 0.0
      %584 = vmatpush1.msra.mxu0 0.0
      %585 = vmatprep.subr.mxu0 0.0
      %586 = vmatpush1.msra.mxu0 0.0
      %587 = vmatprep.mubr.f32.mxu0 0.0
      %588 = vmatmul.mubr.f32.gmra.mrb[0].mxu0 %v521
      %v589 = vpop.f32.mrb[0].mxu0
      %v590 = vadd.f32 %v516, %v589
      %v591 = vpop.f32.mrb[0].mxu0
      %v592 = vadd.f32 %v518, %v591
      %593 = vdwg.mxu0
      %s594 = scalar_lea.vmem %s3, 16
      %v595 = vld [vmem:[%s594] sm:$0xff]
      %596 = vrot.lane.b32.xlu0 %v425, 96
      %v597 = vpop.permute.xlu0 %596
      %598 = vrot.lane.b32.xlu0 %v426, 96
      %v599 = vpop.permute.xlu0 %598
      %600 = vrot.lane.b32.xlu0 %v427, 96
      %v601 = vpop.permute.xlu0 %600
      %vm602 = vcmask 785408
      %v603 = vsel %vm602, %v597, %v599
      %v604 = vsel %vm602, %v599, %v601
      %v608 = vsel %vm445, %v595, 0
      %610 = vmatprep.subr.mxu0 %v604
      %611 = vmatpush1.msra.mxu0 %v603
      %612 = vmatprep.subr.mxu0 0.0
      %613 = vmatpush1.msra.mxu0 0.0
      %614 = vmatprep.subr.mxu0 0.0
      %615 = vmatpush1.msra.mxu0 0.0
      %616 = vmatprep.subr.mxu0 0.0
      %617 = vmatpush1.msra.mxu0 0.0
      %618 = vmatprep.subr.mxu0 0.0
      %619 = vmatpush1.msra.mxu0 0.0
      %620 = vmatprep.subr.mxu0 0.0
      %621 = vmatpush1.msra.mxu0 0.0
      %622 = vmatprep.subr.mxu0 0.0
      %623 = vmatpush1.msra.mxu0 0.0
      %624 = vmatprep.subr.mxu0 0.0
      %625 = vmatpush1.msra.mxu0 0.0
      %626 = vmatprep.subr.mxu0 0.0
      %627 = vmatpush1.msra.mxu0 0.0
      %628 = vmatprep.subr.mxu0 0.0
      %629 = vmatpush1.msra.mxu0 0.0
      %630 = vmatprep.subr.mxu0 0.0
      %631 = vmatpush1.msra.mxu0 0.0
      %632 = vmatprep.subr.mxu0 0.0
      %633 = vmatpush1.msra.mxu0 0.0
      %634 = vmatprep.subr.mxu0 0.0
      %635 = vmatpush1.msra.mxu0 0.0
      %636 = vmatprep.subr.mxu0 0.0
      %637 = vmatpush1.msra.mxu0 0.0
      %638 = vmatprep.subr.mxu0 0.0
      %639 = vmatpush1.msra.mxu0 0.0
      %640 = vmatprep.subr.mxu0 0.0
      %641 = vmatpush1.msra.mxu0 0.0
      %642 = vmatprep.subr.mxu0 0.0
      %643 = vmatpush1.msra.mxu0 0.0
      %644 = vmatprep.subr.mxu0 0.0
      %645 = vmatpush1.msra.mxu0 0.0
      %646 = vmatprep.subr.mxu0 0.0
      %647 = vmatpush1.msra.mxu0 0.0
      %648 = vmatprep.subr.mxu0 0.0
      %649 = vmatpush1.msra.mxu0 0.0
      %650 = vmatprep.subr.mxu0 0.0
      %651 = vmatpush1.msra.mxu0 0.0
      %652 = vmatprep.subr.mxu0 0.0
      %653 = vmatpush1.msra.mxu0 0.0
      %654 = vmatprep.subr.mxu0 0.0
      %655 = vmatpush1.msra.mxu0 0.0
      %656 = vmatprep.subr.mxu0 0.0
      %657 = vmatpush1.msra.mxu0 0.0
      %658 = vmatprep.subr.mxu0 0.0
      %659 = vmatpush1.msra.mxu0 0.0
      %660 = vmatprep.subr.mxu0 0.0
      %661 = vmatpush1.msra.mxu0 0.0
      %662 = vmatprep.subr.mxu0 0.0
      %663 = vmatpush1.msra.mxu0 0.0
      %664 = vmatprep.subr.mxu0 0.0
      %665 = vmatpush1.msra.mxu0 0.0
      %666 = vmatprep.subr.mxu0 0.0
      %667 = vmatpush1.msra.mxu0 0.0
      %668 = vmatprep.subr.mxu0 0.0
      %669 = vmatpush1.msra.mxu0 0.0
      %670 = vmatprep.subr.mxu0 0.0
      %671 = vmatpush1.msra.mxu0 0.0
      %672 = vmatprep.subr.mxu0 0.0
      %673 = vmatpush1.msra.mxu0 0.0
      %674 = vmatprep.mubr.f32.mxu0 0.0
      %675 = vmatmul.mubr.f32.gmra.mrb[0].mxu0 %v608
      %v676 = vpop.f32.mrb[0].mxu0
      %v677 = vadd.f32 0.0, %v676
      %v678 = vpop.f32.mrb[0].mxu0
      %v679 = vadd.f32 0.0, %v678
      %680 = vdwg.mxu0
      %v681 = vadd.f32 %v590, %v677
      %v682 = vadd.f32 %v592, %v679
      %v683 = vld [vmem:[%s389] sm:$0xff]
      %v684 = vld [vmem:[%s389 + $0x8] sm:$0xff]
      %v685 = vld [vmem:[%s389 + $0x10] sm:$0xff]
      %s686 = scalar_lea.vmem %s3, 24
      %v687 = vld [vmem:[%s686] sm:$0xff]
      %v689 = vsel %vm445, %v687, 0
      %691 = vmatprep.subr.mxu0 %v684
      %692 = vmatpush1.msra.mxu0 %v683
      %693 = vmatprep.subr.mxu0 0.0
      %694 = vmatpush1.msra.mxu0 0.0
      %695 = vmatprep.subr.mxu0 0.0
      %696 = vmatpush1.msra.mxu0 0.0
      %697 = vmatprep.subr.mxu0 0.0
      %698 = vmatpush1.msra.mxu0 0.0
      %699 = vmatprep.subr.mxu0 0.0
      %700 = vmatpush1.msra.mxu0 0.0
      %701 = vmatprep.subr.mxu0 0.0
      %702 = vmatpush1.msra.mxu0 0.0
      %703 = vmatprep.subr.mxu0 0.0
      %704 = vmatpush1.msra.mxu0 0.0
      %705 = vmatprep.subr.mxu0 0.0
      %706 = vmatpush1.msra.mxu0 0.0
      %707 = vmatprep.subr.mxu0 0.0
      %708 = vmatpush1.msra.mxu0 0.0
      %709 = vmatprep.subr.mxu0 0.0
      %710 = vmatpush1.msra.mxu0 0.0
      %711 = vmatprep.subr.mxu0 0.0
      %712 = vmatpush1.msra.mxu0 0.0
      %713 = vmatprep.subr.mxu0 0.0
      %714 = vmatpush1.msra.mxu0 0.0
      %715 = vmatprep.subr.mxu0 0.0
      %716 = vmatpush1.msra.mxu0 0.0
      %717 = vmatprep.subr.mxu0 0.0
      %718 = vmatpush1.msra.mxu0 0.0
      %719 = vmatprep.subr.mxu0 0.0
      %720 = vmatpush1.msra.mxu0 0.0
      %721 = vmatprep.subr.mxu0 0.0
      %722 = vmatpush1.msra.mxu0 0.0
      %723 = vmatprep.subr.mxu0 0.0
      %724 = vmatpush1.msra.mxu0 0.0
      %725 = vmatprep.subr.mxu0 0.0
      %726 = vmatpush1.msra.mxu0 0.0
      %727 = vmatprep.subr.mxu0 0.0
      %728 = vmatpush1.msra.mxu0 0.0
      %729 = vmatprep.subr.mxu0 0.0
      %730 = vmatpush1.msra.mxu0 0.0
      %731 = vmatprep.subr.mxu0 0.0
      %732 = vmatpush1.msra.mxu0 0.0
      %733 = vmatprep.subr.mxu0 0.0
      %734 = vmatpush1.msra.mxu0 0.0
      %735 = vmatprep.subr.mxu0 0.0
      %736 = vmatpush1.msra.mxu0 0.0
      %737 = vmatprep.subr.mxu0 0.0
      %738 = vmatpush1.msra.mxu0 0.0
      %739 = vmatprep.subr.mxu0 0.0
      %740 = vmatpush1.msra.mxu0 0.0
      %741 = vmatprep.subr.mxu0 0.0
      %742 = vmatpush1.msra.mxu0 0.0
      %743 = vmatprep.subr.mxu0 0.0
      %744 = vmatpush1.msra.mxu0 0.0
      %745 = vmatprep.subr.mxu0 0.0
      %746 = vmatpush1.msra.mxu0 0.0
      %747 = vmatprep.subr.mxu0 0.0
      %748 = vmatpush1.msra.mxu0 0.0
      %749 = vmatprep.subr.mxu0 0.0
      %750 = vmatpush1.msra.mxu0 0.0
      %751 = vmatprep.subr.mxu0 0.0
      %752 = vmatpush1.msra.mxu0 0.0
      %753 = vmatprep.subr.mxu0 0.0
      %754 = vmatpush1.msra.mxu0 0.0
      %755 = vmatprep.mubr.f32.mxu0 0.0
      %756 = vmatmul.mubr.f32.gmra.mrb[0].mxu0 %v689
      %v757 = vpop.f32.mrb[0].mxu0
      %v758 = vadd.f32 0.0, %v757
      %v759 = vpop.f32.mrb[0].mxu0
      %v760 = vadd.f32 0.0, %v759
      %761 = vdwg.mxu0
      %v762 = vadd.f32 %v681, %v758
      %v763 = vadd.f32 %v682, %v760
      %s764 = scalar_lea.vmem %s3, 32
      %v765 = vld [vmem:[%s764] sm:$0xff]
      %769 = vrot.lane.b32.xlu0 %v683, 112
      %v770 = vpop.permute.xlu0 %769
      %771 = vrot.lane.b32.xlu0 %v684, 112
      %v772 = vpop.permute.xlu0 %771
      %773 = vrot.lane.b32.xlu0 %v685, 112
      %v774 = vpop.permute.xlu0 %773
      %v775 = vsel %vm440, %v770, %v772
      %v776 = vsel %vm440, %v772, %v774
      %v780 = vsel %vm445, %v765, 0
      %782 = vmatprep.subr.mxu0 %v776
      %783 = vmatpush1.msra.mxu0 %v775
      %784 = vmatprep.subr.mxu0 0.0
      %785 = vmatpush1.msra.mxu0 0.0
      %786 = vmatprep.subr.mxu0 0.0
      %787 = vmatpush1.msra.mxu0 0.0
      %788 = vmatprep.subr.mxu0 0.0
      %789 = vmatpush1.msra.mxu0 0.0
      %790 = vmatprep.subr.mxu0 0.0
      %791 = vmatpush1.msra.mxu0 0.0
      %792 = vmatprep.subr.mxu0 0.0
      %793 = vmatpush1.msra.mxu0 0.0
      %794 = vmatprep.subr.mxu0 0.0
      %795 = vmatpush1.msra.mxu0 0.0
      %796 = vmatprep.subr.mxu0 0.0
      %797 = vmatpush1.msra.mxu0 0.0
      %798 = vmatprep.subr.mxu0 0.0
      %799 = vmatpush1.msra.mxu0 0.0
      %800 = vmatprep.subr.mxu0 0.0
      %801 = vmatpush1.msra.mxu0 0.0
      %802 = vmatprep.subr.mxu0 0.0
      %803 = vmatpush1.msra.mxu0 0.0
      %804 = vmatprep.subr.mxu0 0.0
      %805 = vmatpush1.msra.mxu0 0.0
      %806 = vmatprep.subr.mxu0 0.0
      %807 = vmatpush1.msra.mxu0 0.0
      %808 = vmatprep.subr.mxu0 0.0
      %809 = vmatpush1.msra.mxu0 0.0
      %810 = vmatprep.subr.mxu0 0.0
      %811 = vmatpush1.msra.mxu0 0.0
      %812 = vmatprep.subr.mxu0 0.0
      %813 = vmatpush1.msra.mxu0 0.0
      %814 = vmatprep.subr.mxu0 0.0
      %815 = vmatpush1.msra.mxu0 0.0
      %816 = vmatprep.subr.mxu0 0.0
      %817 = vmatpush1.msra.mxu0 0.0
      %818 = vmatprep.subr.mxu0 0.0
      %819 = vmatpush1.msra.mxu0 0.0
      %820 = vmatprep.subr.mxu0 0.0
      %821 = vmatpush1.msra.mxu0 0.0
      %822 = vmatprep.subr.mxu0 0.0
      %823 = vmatpush1.msra.mxu0 0.0
      %824 = vmatprep.subr.mxu0 0.0
      %825 = vmatpush1.msra.mxu0 0.0
      %826 = vmatprep.subr.mxu0 0.0
      %827 = vmatpush1.msra.mxu0 0.0
      %828 = vmatprep.subr.mxu0 0.0
      %829 = vmatpush1.msra.mxu0 0.0
      %830 = vmatprep.subr.mxu0 0.0
      %831 = vmatpush1.msra.mxu0 0.0
      %832 = vmatprep.subr.mxu0 0.0
      %833 = vmatpush1.msra.mxu0 0.0
      %834 = vmatprep.subr.mxu0 0.0
      %835 = vmatpush1.msra.mxu0 0.0
      %836 = vmatprep.subr.mxu0 0.0
      %837 = vmatpush1.msra.mxu0 0.0
      %838 = vmatprep.subr.mxu0 0.0
      %839 = vmatpush1.msra.mxu0 0.0
      %840 = vmatprep.subr.mxu0 0.0
      %841 = vmatpush1.msra.mxu0 0.0
      %842 = vmatprep.subr.mxu0 0.0
      %843 = vmatpush1.msra.mxu0 0.0
      %844 = vmatprep.subr.mxu0 0.0
      %845 = vmatpush1.msra.mxu0 0.0
      %846 = vmatprep.mubr.f32.mxu0 0.0
      %847 = vmatmul.mubr.f32.gmra.mrb[0].mxu0 %v780
      %v848 = vpop.f32.mrb[0].mxu0
      %v849 = vadd.f32 0.0, %v848
      %v850 = vpop.f32.mrb[0].mxu0
      %v851 = vadd.f32 0.0, %v850
      %852 = vdwg.mxu0
      %v853 = vadd.f32 %v762, %v849
      %v854 = vadd.f32 %v763, %v851
      %s855 = scalar_lea.vmem %s3, 40
      %v856 = vld [vmem:[%s855] sm:$0xff]
      %857 = vrot.lane.b32.xlu0 %v683, 96
      %v858 = vpop.permute.xlu0 %857
      %859 = vrot.lane.b32.xlu0 %v684, 96
      %v860 = vpop.permute.xlu0 %859
      %861 = vrot.lane.b32.xlu0 %v685, 96
      %v862 = vpop.permute.xlu0 %861
      %v863 = vsel %vm602, %v858, %v860
      %v864 = vsel %vm602, %v860, %v862
      %v868 = vsel %vm445, %v856, 0
      %870 = vmatprep.subr.mxu0 %v864
      %871 = vmatpush1.msra.mxu0 %v863
      %872 = vmatprep.subr.mxu0 0.0
      %873 = vmatpush1.msra.mxu0 0.0
      %874 = vmatprep.subr.mxu0 0.0
      %875 = vmatpush1.msra.mxu0 0.0
      %876 = vmatprep.subr.mxu0 0.0
      %877 = vmatpush1.msra.mxu0 0.0
      %878 = vmatprep.subr.mxu0 0.0
      %879 = vmatpush1.msra.mxu0 0.0
      %880 = vmatprep.subr.mxu0 0.0
      %881 = vmatpush1.msra.mxu0 0.0
      %882 = vmatprep.subr.mxu0 0.0
      %883 = vmatpush1.msra.mxu0 0.0
      %884 = vmatprep.subr.mxu0 0.0
      %885 = vmatpush1.msra.mxu0 0.0
      %886 = vmatprep.subr.mxu0 0.0
      %887 = vmatpush1.msra.mxu0 0.0
      %888 = vmatprep.subr.mxu0 0.0
      %889 = vmatpush1.msra.mxu0 0.0
      %890 = vmatprep.subr.mxu0 0.0
      %891 = vmatpush1.msra.mxu0 0.0
      %892 = vmatprep.subr.mxu0 0.0
      %893 = vmatpush1.msra.mxu0 0.0
      %894 = vmatprep.subr.mxu0 0.0
      %895 = vmatpush1.msra.mxu0 0.0
      %896 = vmatprep.subr.mxu0 0.0
      %897 = vmatpush1.msra.mxu0 0.0
      %898 = vmatprep.subr.mxu0 0.0
      %899 = vmatpush1.msra.mxu0 0.0
      %900 = vmatprep.subr.mxu0 0.0
      %901 = vmatpush1.msra.mxu0 0.0
      %902 = vmatprep.subr.mxu0 0.0
      %903 = vmatpush1.msra.mxu0 0.0
      %904 = vmatprep.subr.mxu0 0.0
      %905 = vmatpush1.msra.mxu0 0.0
      %906 = vmatprep.subr.mxu0 0.0
      %907 = vmatpush1.msra.mxu0 0.0
      %908 = vmatprep.subr.mxu0 0.0
      %909 = vmatpush1.msra.mxu0 0.0
      %910 = vmatprep.subr.mxu0 0.0
      %911 = vmatpush1.msra.mxu0 0.0
      %912 = vmatprep.subr.mxu0 0.0
      %913 = vmatpush1.msra.mxu0 0.0
      %914 = vmatprep.subr.mxu0 0.0
      %915 = vmatpush1.msra.mxu0 0.0
      %916 = vmatprep.subr.mxu0 0.0
      %917 = vmatpush1.msra.mxu0 0.0
      %918 = vmatprep.subr.mxu0 0.0
      %919 = vmatpush1.msra.mxu0 0.0
      %920 = vmatprep.subr.mxu0 0.0
      %921 = vmatpush1.msra.mxu0 0.0
      %922 = vmatprep.subr.mxu0 0.0
      %923 = vmatpush1.msra.mxu0 0.0
      %924 = vmatprep.subr.mxu0 0.0
      %925 = vmatpush1.msra.mxu0 0.0
      %926 = vmatprep.subr.mxu0 0.0
      %927 = vmatpush1.msra.mxu0 0.0
      %928 = vmatprep.subr.mxu0 0.0
      %929 = vmatpush1.msra.mxu0 0.0
      %930 = vmatprep.subr.mxu0 0.0
      %931 = vmatpush1.msra.mxu0 0.0
      %932 = vmatprep.subr.mxu0 0.0
      %933 = vmatpush1.msra.mxu0 0.0
      %934 = vmatprep.mubr.f32.mxu0 0.0
      %935 = vmatmul.mubr.f32.gmra.mrb[0].mxu0 %v868
      %v936 = vpop.f32.mrb[0].mxu0
      %v937 = vadd.f32 0.0, %v936
      %v938 = vpop.f32.mrb[0].mxu0
      %v939 = vadd.f32 0.0, %v938
      %940 = vdwg.mxu0
      %v941 = vadd.f32 %v853, %v937
      %v942 = vadd.f32 %v854, %v939
      %v943 = vld [vmem:[%s398] sm:$0xff]
      %v944 = vld [vmem:[%s398 + $0x8] sm:$0xff]
      %v945 = vld [vmem:[%s398 + $0x10] sm:$0xff]
      %s946 = scalar_lea.vmem %s3, 48
      %v947 = vld [vmem:[%s946] sm:$0xff]
      %v949 = vsel %vm445, %v947, 0
      %951 = vmatprep.subr.mxu0 %v944
      %952 = vmatpush1.msra.mxu0 %v943
      %953 = vmatprep.subr.mxu0 0.0
      %954 = vmatpush1.msra.mxu0 0.0
      %955 = vmatprep.subr.mxu0 0.0
      %956 = vmatpush1.msra.mxu0 0.0
      %957 = vmatprep.subr.mxu0 0.0
      %958 = vmatpush1.msra.mxu0 0.0
      %959 = vmatprep.subr.mxu0 0.0
      %960 = vmatpush1.msra.mxu0 0.0
      %961 = vmatprep.subr.mxu0 0.0
      %962 = vmatpush1.msra.mxu0 0.0
      %963 = vmatprep.subr.mxu0 0.0
      %964 = vmatpush1.msra.mxu0 0.0
      %965 = vmatprep.subr.mxu0 0.0
      %966 = vmatpush1.msra.mxu0 0.0
      %967 = vmatprep.subr.mxu0 0.0
      %968 = vmatpush1.msra.mxu0 0.0
      %969 = vmatprep.subr.mxu0 0.0
      %970 = vmatpush1.msra.mxu0 0.0
      %971 = vmatprep.subr.mxu0 0.0
      %972 = vmatpush1.msra.mxu0 0.0
      %973 = vmatprep.subr.mxu0 0.0
      %974 = vmatpush1.msra.mxu0 0.0
      %975 = vmatprep.subr.mxu0 0.0
      %976 = vmatpush1.msra.mxu0 0.0
      %977 = vmatprep.subr.mxu0 0.0
      %978 = vmatpush1.msra.mxu0 0.0
      %979 = vmatprep.subr.mxu0 0.0
      %980 = vmatpush1.msra.mxu0 0.0
      %981 = vmatprep.subr.mxu0 0.0
      %982 = vmatpush1.msra.mxu0 0.0
      %983 = vmatprep.subr.mxu0 0.0
      %984 = vmatpush1.msra.mxu0 0.0
      %985 = vmatprep.subr.mxu0 0.0
      %986 = vmatpush1.msra.mxu0 0.0
      %987 = vmatprep.subr.mxu0 0.0
      %988 = vmatpush1.msra.mxu0 0.0
      %989 = vmatprep.subr.mxu0 0.0
      %990 = vmatpush1.msra.mxu0 0.0
      %991 = vmatprep.subr.mxu0 0.0
      %992 = vmatpush1.msra.mxu0 0.0
      %993 = vmatprep.subr.mxu0 0.0
      %994 = vmatpush1.msra.mxu0 0.0
      %995 = vmatprep.subr.mxu0 0.0
      %996 = vmatpush1.msra.mxu0 0.0
      %997 = vmatprep.subr.mxu0 0.0
      %998 = vmatpush1.msra.mxu0 0.0
      %999 = vmatprep.subr.mxu0 0.0
      %1000 = vmatpush1.msra.mxu0 0.0
      %1001 = vmatprep.subr.mxu0 0.0
      %1002 = vmatpush1.msra.mxu0 0.0
      %1003 = vmatprep.subr.mxu0 0.0
      %1004 = vmatpush1.msra.mxu0 0.0
      %1005 = vmatprep.subr.mxu0 0.0
      %1006 = vmatpush1.msra.mxu0 0.0
      %1007 = vmatprep.subr.mxu0 0.0
      %1008 = vmatpush1.msra.mxu0 0.0
      %1009 = vmatprep.subr.mxu0 0.0
      %1010 = vmatpush1.msra.mxu0 0.0
      %1011 = vmatprep.subr.mxu0 0.0
      %1012 = vmatpush1.msra.mxu0 0.0
      %1013 = vmatprep.subr.mxu0 0.0
      %1014 = vmatpush1.msra.mxu0 0.0
      %1015 = vmatprep.mubr.f32.mxu0 0.0
      %1016 = vmatmul.mubr.f32.gmra.mrb[0].mxu0 %v949
      %v1017 = vpop.f32.mrb[0].mxu0
      %v1018 = vadd.f32 0.0, %v1017
      %v1019 = vpop.f32.mrb[0].mxu0
      %v1020 = vadd.f32 0.0, %v1019
      %1021 = vdwg.mxu0
      %v1022 = vadd.f32 %v941, %v1018
      %v1023 = vadd.f32 %v942, %v1020
      %s1024 = scalar_lea.vmem %s3, 56
      %v1025 = vld [vmem:[%s1024] sm:$0xff]
      %1029 = vrot.lane.b32.xlu0 %v943, 112
      %v1030 = vpop.permute.xlu0 %1029
      %1031 = vrot.lane.b32.xlu0 %v944, 112
      %v1032 = vpop.permute.xlu0 %1031
      %1033 = vrot.lane.b32.xlu0 %v945, 112
      %v1034 = vpop.permute.xlu0 %1033
      %v1035 = vsel %vm440, %v1030, %v1032
      %v1036 = vsel %vm440, %v1032, %v1034
      %v1040 = vsel %vm445, %v1025, 0
      %1042 = vmatprep.subr.mxu0 %v1036
      %1043 = vmatpush1.msra.mxu0 %v1035
      %1044 = vmatprep.subr.mxu0 0.0
      %1045 = vmatpush1.msra.mxu0 0.0
      %1046 = vmatprep.subr.mxu0 0.0
      %1047 = vmatpush1.msra.mxu0 0.0
      %1048 = vmatprep.subr.mxu0 0.0
      %1049 = vmatpush1.msra.mxu0 0.0
      %1050 = vmatprep.subr.mxu0 0.0
      %1051 = vmatpush1.msra.mxu0 0.0
      %1052 = vmatprep.subr.mxu0 0.0
      %1053 = vmatpush1.msra.mxu0 0.0
      %1054 = vmatprep.subr.mxu0 0.0
      %1055 = vmatpush1.msra.mxu0 0.0
      %1056 = vmatprep.subr.mxu0 0.0
      %1057 = vmatpush1.msra.mxu0 0.0
      %1058 = vmatprep.subr.mxu0 0.0
      %1059 = vmatpush1.msra.mxu0 0.0
      %1060 = vmatprep.subr.mxu0 0.0
      %1061 = vmatpush1.msra.mxu0 0.0
      %1062 = vmatprep.subr.mxu0 0.0
      %1063 = vmatpush1.msra.mxu0 0.0
      %1064 = vmatprep.subr.mxu0 0.0
      %1065 = vmatpush1.msra.mxu0 0.0
      %1066 = vmatprep.subr.mxu0 0.0
      %1067 = vmatpush1.msra.mxu0 0.0
      %1068 = vmatprep.subr.mxu0 0.0
      %1069 = vmatpush1.msra.mxu0 0.0
      %1070 = vmatprep.subr.mxu0 0.0
      %1071 = vmatpush1.msra.mxu0 0.0
      %1072 = vmatprep.subr.mxu0 0.0
      %1073 = vmatpush1.msra.mxu0 0.0
      %1074 = vmatprep.subr.mxu0 0.0
      %1075 = vmatpush1.msra.mxu0 0.0
      %1076 = vmatprep.subr.mxu0 0.0
      %1077 = vmatpush1.msra.mxu0 0.0
      %1078 = vmatprep.subr.mxu0 0.0
      %1079 = vmatpush1.msra.mxu0 0.0
      %1080 = vmatprep.subr.mxu0 0.0
      %1081 = vmatpush1.msra.mxu0 0.0
      %1082 = vmatprep.subr.mxu0 0.0
      %1083 = vmatpush1.msra.mxu0 0.0
      %1084 = vmatprep.subr.mxu0 0.0
      %1085 = vmatpush1.msra.mxu0 0.0
      %1086 = vmatprep.subr.mxu0 0.0
      %1087 = vmatpush1.msra.mxu0 0.0
      %1088 = vmatprep.subr.mxu0 0.0
      %1089 = vmatpush1.msra.mxu0 0.0
      %1090 = vmatprep.subr.mxu0 0.0
      %1091 = vmatpush1.msra.mxu0 0.0
      %1092 = vmatprep.subr.mxu0 0.0
      %1093 = vmatpush1.msra.mxu0 0.0
      %1094 = vmatprep.subr.mxu0 0.0
      %1095 = vmatpush1.msra.mxu0 0.0
      %1096 = vmatprep.subr.mxu0 0.0
      %1097 = vmatpush1.msra.mxu0 0.0
      %1098 = vmatprep.subr.mxu0 0.0
      %1099 = vmatpush1.msra.mxu0 0.0
      %1100 = vmatprep.subr.mxu0 0.0
      %1101 = vmatpush1.msra.mxu0 0.0
      %1102 = vmatprep.subr.mxu0 0.0
      %1103 = vmatpush1.msra.mxu0 0.0
      %1104 = vmatprep.subr.mxu0 0.0
      %1105 = vmatpush1.msra.mxu0 0.0
      %1106 = vmatprep.mubr.f32.mxu0 0.0
      %1107 = vmatmul.mubr.f32.gmra.mrb[0].mxu0 %v1040
      %v1108 = vpop.f32.mrb[0].mxu0
      %v1109 = vadd.f32 0.0, %v1108
      %v1110 = vpop.f32.mrb[0].mxu0
      %v1111 = vadd.f32 0.0, %v1110
      %1112 = vdwg.mxu0
      %v1113 = vadd.f32 %v1022, %v1109
      %v1114 = vadd.f32 %v1023, %v1111
      %s1115 = scalar_lea.vmem %s3, 64
      %v1116 = vld [vmem:[%s1115] sm:$0xff]
      %1117 = vrot.lane.b32.xlu0 %v943, 96
      %v1118 = vpop.permute.xlu0 %1117
      %1119 = vrot.lane.b32.xlu0 %v944, 96
      %v1120 = vpop.permute.xlu0 %1119
      %1121 = vrot.lane.b32.xlu0 %v945, 96
      %v1122 = vpop.permute.xlu0 %1121
      %v1123 = vsel %vm602, %v1118, %v1120
      %v1124 = vsel %vm602, %v1120, %v1122
      %v1128 = vsel %vm445, %v1116, 0
      %1130 = vmatprep.subr.mxu0 %v1124
      %1131 = vmatpush1.msra.mxu0 %v1123
      %1132 = vmatprep.subr.mxu0 0.0
      %1133 = vmatpush1.msra.mxu0 0.0
      %1134 = vmatprep.subr.mxu0 0.0
      %1135 = vmatpush1.msra.mxu0 0.0
      %1136 = vmatprep.subr.mxu0 0.0
      %1137 = vmatpush1.msra.mxu0 0.0
      %1138 = vmatprep.subr.mxu0 0.0
      %1139 = vmatpush1.msra.mxu0 0.0
      %1140 = vmatprep.subr.mxu0 0.0
      %1141 = vmatpush1.msra.mxu0 0.0
      %1142 = vmatprep.subr.mxu0 0.0
      %1143 = vmatpush1.msra.mxu0 0.0
      %1144 = vmatprep.subr.mxu0 0.0
      %1145 = vmatpush1.msra.mxu0 0.0
      %1146 = vmatprep.subr.mxu0 0.0
      %1147 = vmatpush1.msra.mxu0 0.0
      %1148 = vmatprep.subr.mxu0 0.0
      %1149 = vmatpush1.msra.mxu0 0.0
      %1150 = vmatprep.subr.mxu0 0.0
      %1151 = vmatpush1.msra.mxu0 0.0
      %1152 = vmatprep.subr.mxu0 0.0
      %1153 = vmatpush1.msra.mxu0 0.0
      %1154 = vmatprep.subr.mxu0 0.0
      %1155 = vmatpush1.msra.mxu0 0.0
      %1156 = vmatprep.subr.mxu0 0.0
      %1157 = vmatpush1.msra.mxu0 0.0
      %1158 = vmatprep.subr.mxu0 0.0
      %1159 = vmatpush1.msra.mxu0 0.0
      %1160 = vmatprep.subr.mxu0 0.0
      %1161 = vmatpush1.msra.mxu0 0.0
      %1162 = vmatprep.subr.mxu0 0.0
      %1163 = vmatpush1.msra.mxu0 0.0
      %1164 = vmatprep.subr.mxu0 0.0
      %1165 = vmatpush1.msra.mxu0 0.0
      %1166 = vmatprep.subr.mxu0 0.0
      %1167 = vmatpush1.msra.mxu0 0.0
      %1168 = vmatprep.subr.mxu0 0.0
      %1169 = vmatpush1.msra.mxu0 0.0
      %1170 = vmatprep.subr.mxu0 0.0
      %1171 = vmatpush1.msra.mxu0 0.0
      %1172 = vmatprep.subr.mxu0 0.0
      %1173 = vmatpush1.msra.mxu0 0.0
      %1174 = vmatprep.subr.mxu0 0.0
      %1175 = vmatpush1.msra.mxu0 0.0
      %1176 = vmatprep.subr.mxu0 0.0
      %1177 = vmatpush1.msra.mxu0 0.0
      %1178 = vmatprep.subr.mxu0 0.0
      %1179 = vmatpush1.msra.mxu0 0.0
      %1180 = vmatprep.subr.mxu0 0.0
      %1181 = vmatpush1.msra.mxu0 0.0
      %1182 = vmatprep.subr.mxu0 0.0
      %1183 = vmatpush1.msra.mxu0 0.0
      %1184 = vmatprep.subr.mxu0 0.0
      %1185 = vmatpush1.msra.mxu0 0.0
      %1186 = vmatprep.subr.mxu0 0.0
      %1187 = vmatpush1.msra.mxu0 0.0
      %1188 = vmatprep.subr.mxu0 0.0
      %1189 = vmatpush1.msra.mxu0 0.0
      %1190 = vmatprep.subr.mxu0 0.0
      %1191 = vmatpush1.msra.mxu0 0.0
      %1192 = vmatprep.subr.mxu0 0.0
      %1193 = vmatpush1.msra.mxu0 0.0
      %1194 = vmatprep.mubr.f32.mxu0 0.0
      %1195 = vmatmul.mubr.f32.gmra.mrb[0].mxu0 %v1128
      %v1196 = vpop.f32.mrb[0].mxu0
      %v1197 = vadd.f32 0.0, %v1196
      %v1198 = vpop.f32.mrb[0].mxu0
      %v1199 = vadd.f32 0.0, %v1198
      %1200 = vdwg.mxu0
      %v1201 = vadd.f32 %v1113, %v1197
      %v1202 = vadd.f32 %v1114, %v1199
      %v1203 = vld [vmem:[%s4] sm:$0xff]
      %1205 = vset.pattern.permute.xlu0 0
      %1206 = vperm.xlu0 %1205, %v1203
      %v1207 = vpop.permute.xlu0 %1206
      %v1209 = vadd.f32 %v1201, %v1207
      %v1210 = vadd.f32 %v1202, %v1207
      %1211 = vst [vmem:[%s407] sm:$0xff] %v1209
      %1212 = vst [vmem:[%s407 + $0x8] sm:$0xff] %v1210
      %v1213 = vadd.f32 %v1209, %v1210
      %1214 = vadd.xlane.f32.xlu0 %v1213
      %v1215 = vpop.xlane.xlu0 %1214
      %vm1216 = vcmask 7168
      %1217 = vst.msk [vmem:[%s416] sm:$0xff] %vm1216, %v1215
      %v1218 = vmul.f32 %v1209, %v1209
      %v1219 = vmul.f32 %v1210, %v1210
      %v1220 = vadd.f32 %v1218, %v1219
      %1221 = vadd.xlane.f32.xlu0 %v1220
      %v1222 = vpop.xlane.xlu0 %1221
      %1223 = vst.msk [vmem:[%s424] sm:$0xff] %vm1216, %v1222
      %s1224 = smul.u32 2, %s24
      %p1225 = scmp.lt.s32.totalorder %s23, 1
      %s1226 = scalar_select %p1225, %s23, 1
      %p1227 = scmp.lt.s32.totalorder %s1224, 31
      %s1228 = scalar_select %p1227, %s1224, 31
      %s1229 = smul.addr %s1226, 32
      %s1230 = sadd.s32 %s1228, %s1229
      %s1231 = smul.addr %s1230, 8
      %s1232 = scalar_lea.vmem %s5, %s1231
      %p1233 = scmp.lt.s32.totalorder %s23, 1
      %s1234 = scalar_select %p1233, %s23, 1
      %p1235 = scmp.lt.s32.totalorder %s24, 15
      %s1236 = scalar_select %p1235, %s24, 15
      %s1237 = smul.addr %s1234, 16
      %s1238 = sadd.s32 %s1236, %s1237
      %s1239 = smul.addr %s1238, 8
      %s1240 = scalar_lea.vmem %s6, %s1239
      %p1241 = scmp.lt.s32.totalorder %s23, 1
      %s1242 = scalar_select %p1241, %s23, 1
      %p1243 = scmp.lt.s32.totalorder %s24, 15
      %s1244 = scalar_select %p1243, %s24, 15
      %s1245 = smul.addr %s1242, 16
      %s1246 = sadd.s32 %s1244, %s1245
      %s1247 = smul.addr %s1246, 8
      %s1248 = scalar_lea.vmem %s7, %s1247
      // Predicated region
      $region41: #{hdc_module_forward.26} parent=39 // pred_check
        %p1249 = pneg %p177
      $region42: #{hdc_module_forward.26} parent=39 // pred_check_branch
        %1251 = sbr.rel (%p1249) target = $region44
      $region43: #{hdc_module_forward.26} parent=39 // pred_region
        %s1252 = smul.u32 2, %s24
      $region44: #{hdc_module_forward.26} parent=39 // pred_fallthru
        _
      // Predicated region
      $region45: #{hdc_module_forward.26} parent=39 // pred_check
        %p1253 = pneg %p205
      $region46: #{hdc_module_forward.26} parent=39 // pred_check_branch
        %1255 = sbr.rel (%p1253) target = $region48
      $region47: #{hdc_module_forward.26} parent=39 // pred_region
        _
      $region48: #{hdc_module_forward.26} parent=39 // pred_fallthru
        _
      // Predicated region
      $region49: #{hdc_module_forward.26} parent=39 // pred_check
        %p1256 = pneg %p233
      $region50: #{hdc_module_forward.26} parent=39 // pred_check_branch
        %1258 = sbr.rel (%p1256) target = $region52
      $region51: #{hdc_module_forward.26} parent=39 // pred_region
        _
      $region52: #{hdc_module_forward.26} parent=39 // pred_fallthru
        _
    $region40: #{hdc_module_forward.26} parent=5 // pred_fallthru
      _
    %p1259 = scmp.le.s32.totalorder 2, %s14
    // Predicated region
    $region53: #{hdc_module_forward.26} parent=5 // pred_check
      %p1260 = pneg %p1259
    $region54: #{hdc_module_forward.26} parent=5 // pred_check_branch
      %1262 = sbr.rel (%p1260) target = $region56
    $region55: #{hdc_module_forward.26} parent=5 // pred_region
      %s1263 = ssub.s32 %s14, 2
      // Predicated region
      $region57: #{hdc_module_forward.26} parent=55 // pred_check
        %p1264 = pneg %p183
      $region58: #{hdc_module_forward.26} parent=55 // pred_check_branch
        %1266 = sbr.rel (%p1264) target = $region60
      $region59: #{hdc_module_forward.26} parent=55 // pred_region
        %s1267 = smul.u32 2, %s26
        %p1268 = scmp.lt.s32.totalorder %s25, 1
        %s1269 = scalar_select %p1268, %s25, 1
        %p1270 = scmp.lt.s32.totalorder %s1267, 31
        %s1271 = scalar_select %p1270, %s1267, 31
        %s1272 = smul.addr %s1269, 32
        %s1273 = sadd.s32 %s1271, %s1272
        %s1274 = smul.addr %s1273, 8
        %s1275 = scalar_lea.vmem %s5, %s1274
      $region60: #{hdc_module_forward.26} parent=55 // pred_fallthru
        _
      // Predicated region
      $region61: #{hdc_module_forward.26} parent=55 // pred_check
        %p1276 = pneg %p211
      $region62: #{hdc_module_forward.26} parent=55 // pred_check_branch
        %1278 = sbr.rel (%p1276) target = $region64
      $region63: #{hdc_module_forward.26} parent=55 // pred_region
        %p1279 = scmp.lt.s32.totalorder %s25, 1
        %s1280 = scalar_select %p1279, %s25, 1
        %p1281 = scmp.lt.s32.totalorder %s26, 15
        %s1282 = scalar_select %p1281, %s26, 15
        %s1283 = smul.addr %s1280, 16
        %s1284 = sadd.s32 %s1282, %s1283
        %s1285 = smul.addr %s1284, 8
        %s1286 = scalar_lea.vmem %s6, %s1285
      $region64: #{hdc_module_forward.26} parent=55 // pred_fallthru
        _
      // Predicated region
      $region65: #{hdc_module_forward.26} parent=55 // pred_check
        %p1287 = pneg %p239
      $region66: #{hdc_module_forward.26} parent=55 // pred_check_branch
        %1289 = sbr.rel (%p1287) target = $region68
      $region67: #{hdc_module_forward.26} parent=55 // pred_region
        %p1290 = scmp.lt.s32.totalorder %s25, 1
        %s1291 = scalar_select %p1290, %s25, 1
        %p1292 = scmp.lt.s32.totalorder %s26, 15
        %s1293 = scalar_select %p1292, %s26, 15
        %s1294 = smul.addr %s1291, 16
        %s1295 = sadd.s32 %s1293, %s1294
        %s1296 = smul.addr %s1295, 8
        %s1297 = scalar_lea.vmem %s7, %s1296
      $region68: #{hdc_module_forward.26} parent=55 // pred_fallthru
        _
    $region56: #{hdc_module_forward.26} parent=5 // pred_fallthru
      _
  $region6: #{hdc_module_forward.26} parent=0 // loop_footer
    %s18 = sadd.s32 1, %s14
  $region7: #{hdc_module_forward.26} parent=0 // loop_footer_branch
    %13 = sbr.rel target = $region3
  $region8: #{hdc_module_forward.26} parent=0 // loop_exit
    _

</llo_original>
